<compile_context>
chip_gen: v7x
topology: tpu7x:2x2x1
jax: 0.10.0
libtpu: 0.0.40
codegen_flags: <defaults>
</compile_context>

<pallas_src>
import jax
import jax.numpy as jnp
from jax import lax
from jax.experimental import pallas as pl
from jax.experimental.pallas import tpu as pltpu


# ------------------------------------------------------------------ BiLSTM kernel
def _bilstm_kernel(x_ref, wih_f_ref, whh_f_ref, b_f_ref,
                   wih_r_ref, whh_r_ref, b_r_ref,
                   out_f_ref, out_r_ref):
    BB, T, D = x_ref.shape
    H = whh_f_ref.shape[0]

    whh_f = whh_f_ref[...]
    whh_r = whh_r_ref[...]

    # Hoist the input projection out of the recurrence: one (BB*T, D) x (D, 4H)
    # MXU matmul per direction instead of T tiny matmuls on the serial path.
    x2d = x_ref[...].reshape(BB * T, D)
    proj_f = (jnp.dot(x2d, wih_f_ref[...], preferred_element_type=jnp.float32)
              + b_f_ref[...]).reshape(BB, T, 4 * H)
    proj_r = (jnp.dot(x2d, wih_r_ref[...], preferred_element_type=jnp.float32)
              + b_r_ref[...]).reshape(BB, T, 4 * H)

    def cell(pre, h, c, whh):
        gates = pre + jnp.dot(h, whh, preferred_element_type=jnp.float32)
        sig = jax.nn.sigmoid(gates)                      # one full-width EUP pass
        i = sig[:, 0 * H:1 * H]
        f = sig[:, 1 * H:2 * H]
        o = sig[:, 3 * H:4 * H]
        g = jnp.tanh(gates[:, 2 * H:3 * H])
        c_new = f * c + i * g
        h_new = o * jnp.tanh(c_new)
        return h_new, c_new

    hf = jnp.zeros((BB, H), jnp.float32)
    cf = jnp.zeros((BB, H), jnp.float32)
    hr = jnp.zeros((BB, H), jnp.float32)
    cr = jnp.zeros((BB, H), jnp.float32)

    # Fully unrolled; forward and backward directions interleaved per step so
    # the two independent recurrences hide each other's MXU/EUP latency.
    for t in range(T):
        tb = T - 1 - t
        hf, cf = cell(proj_f[:, t, :], hf, cf, whh_f)
        hr, cr = cell(proj_r[:, tb, :], hr, cr, whh_r)
        out_f_ref[:, t:t + 1, :] = hf[:, None, :]
        out_r_ref[:, tb:tb + 1, :] = hr[:, None, :]


def bilstm(x, wih_f, whh_f, b_f, wih_r, whh_r, b_r):
    """x: (B, T, D) batch-major. Returns (out_fwd, out_bwd), each (B, T, H)."""
    B, T, D = x.shape
    H = whh_f.shape[1]
    # Split the batch into 2 independent blocks so the two v7x TensorCores can
    # each take one ("parallel" grid axis); degenerates to a 2-step loop on
    # v5e/v6e with negligible overhead.
    bb = B // 2 if (B % 2 == 0 and B >= 2) else B
    nblk = B // bb
    args = (x.astype(jnp.float32),
            wih_f.T, whh_f.T, b_f.reshape(1, -1),
            wih_r.T, whh_r.T, b_r.reshape(1, -1))
    in_specs = [
        pl.BlockSpec((bb, T, D), lambda i: (i, 0, 0)),
        pl.BlockSpec((D, 4 * H), lambda i: (0, 0)),
        pl.BlockSpec((H, 4 * H), lambda i: (0, 0)),
        pl.BlockSpec((1, 4 * H), lambda i: (0, 0)),
        pl.BlockSpec((D, 4 * H), lambda i: (0, 0)),
        pl.BlockSpec((H, 4 * H), lambda i: (0, 0)),
        pl.BlockSpec((1, 4 * H), lambda i: (0, 0)),
    ]
    out_shapes = (jax.ShapeDtypeStruct((B, T, H), jnp.float32),
                  jax.ShapeDtypeStruct((B, T, H), jnp.float32))
    out_specs = (pl.BlockSpec((bb, T, H), lambda i: (i, 0, 0)),
                 pl.BlockSpec((bb, T, H), lambda i: (i, 0, 0)))
    return pl.pallas_call(
        _bilstm_kernel,
        grid=(nblk,),
        in_specs=in_specs,
        out_specs=out_specs,
        out_shape=out_shapes,
        compiler_params=pltpu.CompilerParams(dimension_semantics=("parallel",)),
    )(*args)


# ------------------------------------------------------------------ matching kernel
def _matching_kernel(s1f_ref, s1b_ref, s2f_ref, s2b_ref,
                     wff_sq_t_ref, wfb_sq_t_ref, wmf_sq_ref, wmb_sq_ref,
                     waf_sq_t_ref, wxf_sq_t_ref,
                     s1_out_ref, s2_out_ref):
    eps = 1e-8
    f32 = jnp.float32
    s1f = s1f_ref[0]
    s1b = s1b_ref[0]
    s2f = s2f_ref[0]
    s2b = s2b_ref[0]
    T1, H = s1f.shape
    T2 = s2f.shape[0]

    wff_t = wff_sq_t_ref[...]        # (H, l) == (W_full_fwd ** 2).T
    wfb_t = wfb_sq_t_ref[...]
    wmf = wmf_sq_ref[...]            # (l, H) == W_maxpool_fwd ** 2
    wmb = wmb_sq_ref[...]
    waf_t = waf_sq_t_ref[...]
    wxf_t = wxf_sq_t_ref[...]
    l = wff_t.shape[1]
    # NOTE: the reference forward never uses m_attn_backward_W /
    # m_maxattn_backward_W, so they are (faithfully) not passed in at all.

    def dot_t(a, b):                 # a @ b.T, contracting the last dims (MXU)
        return lax.dot_general(a, b, (((1,), (1,)), ((), ())),
                               preferred_element_type=f32)

    def dot_tn(a, b):                # a.T @ b, contracting the first dims (MXU)
        return lax.dot_general(a, b, (((0,), (0,)), ((), ())),
                               preferred_element_type=f32)

    def cos_full(v1, v2, wsq_t):
        # cosine(W*v1, W*v2) per perspective as three MXU matmuls.
        # v1: (T, H); v2: (1, H) or (T, H); wsq_t: (H, l) -> (T, l)
        num = jnp.dot(v1 * v2, wsq_t, preferred_element_type=f32)
        w1 = jnp.dot(v1 * v1, wsq_t, preferred_element_type=f32)
        w2 = jnp.dot(v2 * v2, wsq_t, preferred_element_type=f32)
        # F.cosine_similarity clamps each norm with eps separately.
        denom = jnp.maximum(jnp.sqrt(w1), eps) * jnp.maximum(jnp.sqrt(w2), eps)
        return num / denom

    # Un-weighted L2 norms (the reference uses these, with no eps, for the
    # pairwise and attention cosines).
    n1f = jnp.sqrt(jnp.sum(s1f * s1f, axis=1))           # (T1,)
    n1b = jnp.sqrt(jnp.sum(s1b * s1b, axis=1))
    n2f = jnp.sqrt(jnp.sum(s2f * s2f, axis=1))           # (T2,)
    n2b = jnp.sqrt(jnp.sum(s2b * s2b, axis=1))

    # (1) full matching ----------------------------------------------------
    m_full_s1_f = cos_full(s1f, s2f[T2 - 1:T2, :], wff_t)
    m_full_s1_b = cos_full(s1b, s2b[0:1, :], wfb_t)
    m_full_s2_f = cos_full(s2f, s1f[T1 - 1:T1, :], wff_t)
    m_full_s2_b = cos_full(s2b, s1b[0:1, :], wfb_t)

    # (2) maxpool matching (reference pairs s1_fwd with s2_bwd) -------------
    def pairwise_maxes(v1, v2, wsq, n1, n2):
        # returns (max over T2 -> (T1, l), max over T1 -> (T2, l)) while keeping
        # each per-perspective (T1, T2) matrix lane-dense (no (T1,T2,l) stack).
        inv = 1.0 / (n1[:, None] * n2[None, :])           # no eps (faithful)
        cols, rows = [], []
        for k in range(l):
            ck = dot_t(v1 * wsq[k:k + 1, :], v2) * inv    # (T1, T2)
            cols.append(jnp.max(ck, axis=1, keepdims=True))
            rows.append(jnp.max(ck, axis=0, keepdims=True))
        return (jnp.concatenate(cols, axis=1),
                jnp.concatenate(rows, axis=0).T)

    m_maxpool_s1_f, m_maxpool_s2_f = pairwise_maxes(s1f, s2b, wmf, n1f, n2b)
    m_maxpool_s1_b, m_maxpool_s2_b = pairwise_maxes(s1b, s2b, wmb, n1b, n2b)

    # (3)/(4) attentive / max-attentive matching ----------------------------
    cosine_f = dot_t(s1f, s2f) / (n1f[:, None] * n2f[None, :])   # no eps (faithful)
    cosine_b = dot_t(s1b, s2b) / (n1b[:, None] * n2b[None, :])

    # Attentive means as matmuls: sum_t1 s1f*cos == cos.T @ s1f, etc.
    attn_mean_vec_s2_f = dot_tn(cosine_f, s1f) / jnp.sum(cosine_f, axis=0)[:, None]
    attn_mean_vec_s2_b = dot_tn(cosine_b, s1f) / jnp.sum(cosine_b, axis=0)[:, None]
    attn_mean_vec_s1_f = (jnp.dot(cosine_f, s2f, preferred_element_type=f32)
                          / jnp.sum(cosine_f, axis=1)[:, None])
    attn_mean_vec_s1_b = (jnp.dot(cosine_b, s2f, preferred_element_type=f32)
                          / jnp.sum(cosine_b, axis=1)[:, None])

    m_attn_s1_f = cos_full(s1f, attn_mean_vec_s1_f, waf_t)
    m_attn_s1_b = cos_full(s1b, attn_mean_vec_s1_b, waf_t)
    m_attn_s2_f = cos_full(s2f, attn_mean_vec_s2_f, waf_t)
    m_attn_s2_b = cos_full(s2b, attn_mean_vec_s2_b, waf_t)

    # Max-attentive keeps the (T1, T2, H) products only for the max reduce.
    attn_s1_f = s1f[:, None, :] * cosine_f[:, :, None]
    attn_s1_b = s1f[:, None, :] * cosine_b[:, :, None]
    attn_s2_f = s2f[None, :, :] * cosine_f[:, :, None]
    attn_s2_b = s2f[None, :, :] * cosine_b[:, :, None]
    attn_max_vec_s2_f = jnp.max(attn_s1_f, axis=0)        # (T2, H)
    attn_max_vec_s2_b = jnp.max(attn_s1_b, axis=0)
    attn_max_vec_s1_f = jnp.max(attn_s2_f, axis=1)        # (T1, H)
    attn_max_vec_s1_b = jnp.max(attn_s2_b, axis=1)

    m_maxattn_s1_f = cos_full(s1f, attn_max_vec_s1_f, wxf_t)
    m_maxattn_s1_b = cos_full(s1b, attn_max_vec_s1_b, wxf_t)
    m_maxattn_s2_f = cos_full(s2f, attn_max_vec_s2_f, wxf_t)
    m_maxattn_s2_b = cos_full(s2b, attn_max_vec_s2_b, wxf_t)

    # TODO(synk): output last dim is 8l=32 (< 128 lanes) because the
    # aggregation LSTM consumes exactly 8l features; padding would change
    # downstream semantics, so the sub-lane-width store is kept.
    s1_out_ref[0] = jnp.concatenate(
        [m_full_s1_f, m_maxpool_s1_f, m_attn_s1_f, m_maxattn_s1_f,
         m_full_s1_b, m_maxpool_s1_b, m_attn_s1_b, m_maxattn_s1_b], axis=1)
    s2_out_ref[0] = jnp.concatenate(
        [m_full_s2_f, m_maxpool_s2_f, m_attn_s2_f, m_maxattn_s2_f,
         m_full_s2_b, m_maxpool_s2_b, m_attn_s2_b, m_maxattn_s2_b], axis=1)


def matching(s1f, s1b, s2f, s2b, Ws):
    B, T1, H = s1f.shape
    T2 = s2f.shape[1]
    (w_full_f, w_full_b, w_max_f, w_max_b,
     w_attn_f, _w_attn_b, w_xattn_f, _w_xattn_b) = Ws
    l = w_full_f.shape[0]
    # Pre-square the perspective weights once; the kernel only ever needs W*W.
    wff_sq_t = (w_full_f * w_full_f).T
    wfb_sq_t = (w_full_b * w_full_b).T
    wmf_sq = w_max_f * w_max_f
    wmb_sq = w_max_b * w_max_b
    waf_sq_t = (w_attn_f * w_attn_f).T
    wxf_sq_t = (w_xattn_f * w_xattn_f).T

    seq_specs = [pl.BlockSpec((1, T1, H), lambda b: (b, 0, 0)),
                 pl.BlockSpec((1, T1, H), lambda b: (b, 0, 0)),
                 pl.BlockSpec((1, T2, H), lambda b: (b, 0, 0)),
                 pl.BlockSpec((1, T2, H), lambda b: (b, 0, 0))]
    w_specs = [pl.BlockSpec((H, l), lambda b: (0, 0)),
               pl.BlockSpec((H, l), lambda b: (0, 0)),
               pl.BlockSpec((l, H), lambda b: (0, 0)),
               pl.BlockSpec((l, H), lambda b: (0, 0)),
               pl.BlockSpec((H, l), lambda b: (0, 0)),
               pl.BlockSpec((H, l), lambda b: (0, 0))]
    out_shapes = (jax.ShapeDtypeStruct((B, T1, 8 * l), jnp.float32),
                  jax.ShapeDtypeStruct((B, T2, 8 * l), jnp.float32))
    out_specs = (pl.BlockSpec((1, T1, 8 * l), lambda b: (b, 0, 0)),
                 pl.BlockSpec((1, T2, 8 * l), lambda b: (b, 0, 0)))
    return pl.pallas_call(
        _matching_kernel,
        grid=(B,),
        in_specs=seq_specs + w_specs,
        out_specs=out_specs,
        out_shape=out_shapes,
        compiler_params=pltpu.CompilerParams(dimension_semantics=("parallel",)),
    )(s1f, s1b, s2f, s2b,
      wff_sq_t, wfb_sq_t, wmf_sq, wmb_sq, waf_sq_t, wxf_sq_t)


# ------------------------------------------------------------------ prediction kernel
def _prediction_kernel(x_ref, w1_ref, b1_ref, w2_ref, b2_ref, out_ref):
    x = x_ref[...]
    h = jnp.dot(x, w1_ref[...], preferred_element_type=jnp.float32) + b1_ref[...]
    h = jnp.maximum(h, 0.0)                               # ReLU; Dropout = identity
    logits = jnp.dot(h, w2_ref[...], preferred_element_type=jnp.float32) + b2_ref[...]
    m = jnp.max(logits, axis=1, keepdims=True)
    z = logits - m
    lse = jnp.log(jnp.sum(jnp.exp(z), axis=1, keepdims=True))
    out_ref[...] = z - lse                                # LogSoftmax(dim=1)


def predict(mv, W1, b1, W2, b2):
    B = mv.shape[0]
    C = W2.shape[0]
    args = (mv.astype(jnp.float32), W1.T, b1.reshape(1, -1), W2.T, b2.reshape(1, -1))
    in_specs = [pl.BlockSpec(a.shape, lambda i: (0,) * a.ndim) for a in args]
    return pl.pallas_call(
        _prediction_kernel,
        grid=(1,),
        in_specs=in_specs,
        out_specs=pl.BlockSpec((B, C), lambda i: (0, 0)),
        out_shape=jax.ShapeDtypeStruct((B, C), jnp.float32),
        compiler_params=pltpu.CompilerParams(dimension_semantics=("arbitrary",)),
    )(*args)


# ------------------------------------------------------------------ full forward
def _bilstm_pair(x1, x2, lstm_params):
    """Run one BiLSTM over both sentences; batch them into a single call."""
    if x1.shape == x2.shape:
        B = x1.shape[0]
        of, orv = bilstm(jnp.concatenate([x1, x2], axis=0), *lstm_params)
        return (of[:B], orv[:B]), (of[B:], orv[B:])
    return bilstm(x1, *lstm_params), bilstm(x2, *lstm_params)


def bimpm_forward(params, sent_a_ids, sent_b_ids):
    emb = params["embedding"]
    sent1 = jnp.take(emb, sent_a_ids, axis=0)             # (B, T, D) — XLA glue
    sent2 = jnp.take(emb, sent_b_ids, axis=0)

    (s1f, s1b), (s2f, s2b) = _bilstm_pair(sent1, sent2, params["ctx_lstm"])

    s1_comb, s2_comb = matching(s1f, s1b, s2f, s2b, params["match_W"])

    (a1f, a1b), (a2f, a2b) = _bilstm_pair(s1_comb, s2_comb, params["agg_lstm"])

    # torch h_n: forward final = out[:, -1, :H]; backward final = out[:, 0, H:]
    mv = jnp.concatenate(
        [a1f[:, -1, :], a1b[:, 0, :], a2f[:, -1, :], a2b[:, 0, :]], axis=1)  # (B, 4H)

    return predict(mv, *params["pred"])


# ------------------------------------------------------------------ parameter setup
def make_params(key, vocab, d, H, l, n_classes):
    ks = jax.random.split(key, 32)

    def lstm_params(k, in_dim, hid):
        k = jax.random.split(k, 6)
        s = 1.0 / jnp.sqrt(hid)
        wih_f = jax.random.uniform(k[0], (4 * hid, in_dim), jnp.float32, -s, s)
        whh_f = jax.random.uniform(k[1], (4 * hid, hid), jnp.float32, -s, s)
        b_f = jax.random.uniform(k[2], (4 * hid,), jnp.float32, -s, s)
        wih_r = jax.random.uniform(k[3], (4 * hid, in_dim), jnp.float32, -s, s)
        whh_r = jax.random.uniform(k[4], (4 * hid, hid), jnp.float32, -s, s)
        b_r = jax.random.uniform(k[5], (4 * hid,), jnp.float32, -s, s)
        return (wih_f, whh_f, b_f, wih_r, whh_r, b_r)

    params = {
        "embedding": jax.random.normal(ks[0], (vocab, d), jnp.float32),
        "ctx_lstm": lstm_params(ks[1], d, H),
        "agg_lstm": lstm_params(ks[2], 8 * l, H),
        # 8 perspective matrices, torch.rand -> uniform [0,1)
        "match_W": tuple(jax.random.uniform(ks[3 + i], (l, H), jnp.float32)
                         for i in range(8)),
        "pred": (
            jax.random.uniform(ks[12], (2 * H, 4 * H), jnp.float32,
                               -1.0 / jnp.sqrt(4 * H), 1.0 / jnp.sqrt(4 * H)),
            jax.random.uniform(ks[13], (2 * H,), jnp.float32,
                               -1.0 / jnp.sqrt(4 * H), 1.0 / jnp.sqrt(4 * H)),
            jax.random.uniform(ks[14], (n_classes, 2 * H), jnp.float32,
                               -1.0 / jnp.sqrt(2 * H), 1.0 / jnp.sqrt(2 * H)),
            jax.random.uniform(ks[15], (n_classes,), jnp.float32,
                               -1.0 / jnp.sqrt(2 * H), 1.0 / jnp.sqrt(2 * H)),
        ),
    }
    return params


if __name__ == "__main__":
    B, T, VOCAB = 2, 8, 50
    D, H, L, C = 32, 32, 4, 3   # n_word_dim, n_hidden_units, n_perspectives, n_classes

    key = jax.random.PRNGKey(0)
    kp, ka, kb = jax.random.split(key, 3)
    params = make_params(kp, VOCAB, D, H, L, C)
    sent_a = jax.random.randint(ka, (B, T), 0, VOCAB, dtype=jnp.int32)
    sent_b = jax.random.randint(kb, (B, T), 0, VOCAB, dtype=jnp.int32)

    out = jax.jit(bimpm_forward)(params, sent_a, sent_b)
    out = jax.block_until_ready(out)
    assert out.shape == (B, C), out.shape
    print("KERNEL_OK")
</pallas_src>

<mosaic_0001>
module attributes {stable_mosaic.version = 11 : i64} {
  func.func @_prediction_kernel(%arg0: i32, %arg1: memref<2x128xf32, #tpu.memory_space<vmem>>, %arg2: memref<128x64xf32, #tpu.memory_space<vmem>>, %arg3: memref<1x64xf32, #tpu.memory_space<vmem>>, %arg4: memref<64x3xf32, #tpu.memory_space<vmem>>, %arg5: memref<1x3xf32, #tpu.memory_space<vmem>>, %arg6: memref<2x3xf32, #tpu.memory_space<vmem>>) attributes {dimension_semantics = [#tpu.dimension_semantics<arbitrary>], iteration_bounds = array<i64: 1>, scalar_prefetch = 0 : i64, scratch_operands = 0 : i64, tpu.core_type = #tpu.core_type<tc>, window_params = [{pipeline_mode = #tpu.pipeline_mode<synchronous>, transform_indices = @transform_0, window_bounds = array<i64: 2, 128>}, {pipeline_mode = #tpu.pipeline_mode<synchronous>, transform_indices = @transform_1, window_bounds = array<i64: 128, 64>}, {pipeline_mode = #tpu.pipeline_mode<synchronous>, transform_indices = @transform_2, window_bounds = array<i64: 1, 64>}, {pipeline_mode = #tpu.pipeline_mode<synchronous>, transform_indices = @transform_3, window_bounds = array<i64: 64, 3>}, {pipeline_mode = #tpu.pipeline_mode<synchronous>, transform_indices = @transform_4, window_bounds = array<i64: 1, 3>}, {pipeline_mode = #tpu.pipeline_mode<synchronous>, transform_indices = @transform_5, window_bounds = array<i64: 2, 3>}]} {
    %c0 = arith.constant 0 : index
    %c0_0 = arith.constant 0 : index
    %0 = vector.load %arg1[%c0, %c0_0] : memref<2x128xf32, #tpu.memory_space<vmem>>, vector<2x128xf32>
    %c0_1 = arith.constant 0 : index
    %c0_2 = arith.constant 0 : index
    %1 = vector.load %arg2[%c0_1, %c0_2] : memref<128x64xf32, #tpu.memory_space<vmem>>, vector<128x64xf32>
    %cst = arith.constant dense<0.000000e+00> : vector<2x64xf32>
    %2 = tpu.matmul %0, %1, %cst {dimension_numbers = #tpu.dot_dimension_numbers<[1], [0], [0], [1], [0, 0, 1, 1], [], []>} : vector<2x128xf32>, vector<128x64xf32>, vector<2x64xf32> -> vector<2x64xf32>
    %c0_3 = arith.constant 0 : index
    %c0_4 = arith.constant 0 : index
    %3 = vector.load %arg3[%c0_3, %c0_4] : memref<1x64xf32, #tpu.memory_space<vmem>>, vector<1x64xf32>
    %4 = vector.broadcast %3 : vector<1x64xf32> to vector<2x64xf32>
    %5 = arith.addf %2, %4 : vector<2x64xf32>
    %cst_5 = arith.constant 0.000000e+00 : f32
    %6 = vector.broadcast %cst_5 : f32 to vector<2x64xf32>
    %7 = arith.maximumf %5, %6 : vector<2x64xf32>
    %c0_6 = arith.constant 0 : index
    %c0_7 = arith.constant 0 : index
    %8 = vector.load %arg4[%c0_6, %c0_7] : memref<64x3xf32, #tpu.memory_space<vmem>>, vector<64x3xf32>
    %cst_8 = arith.constant dense<0.000000e+00> : vector<2x3xf32>
    %9 = tpu.matmul %7, %8, %cst_8 {dimension_numbers = #tpu.dot_dimension_numbers<[1], [0], [0], [1], [0, 0, 1, 1], [], []>} : vector<2x64xf32>, vector<64x3xf32>, vector<2x3xf32> -> vector<2x3xf32>
    %c0_9 = arith.constant 0 : index
    %c0_10 = arith.constant 0 : index
    %10 = vector.load %arg5[%c0_9, %c0_10] : memref<1x3xf32, #tpu.memory_space<vmem>>, vector<1x3xf32>
    %11 = vector.broadcast %10 : vector<1x3xf32> to vector<2x3xf32>
    %12 = arith.addf %9, %11 : vector<2x3xf32>
    %cst_11 = arith.constant dense<0xFF800000> : vector<2xf32>
    %13 = vector.multi_reduction <maximumf>, %12, %cst_11 [1] : vector<2x3xf32> to vector<2xf32>
    %14 = vector.shape_cast %13 : vector<2xf32> to vector<2x1xf32>
    %15 = vector.broadcast %14 : vector<2x1xf32> to vector<2x3xf32>
    %16 = arith.subf %12, %15 : vector<2x3xf32>
    %17 = math.exp %16 : vector<2x3xf32>
    %cst_12 = arith.constant dense<0.000000e+00> : vector<2xf32>
    %18 = vector.multi_reduction <add>, %17, %cst_12 [1] : vector<2x3xf32> to vector<2xf32>
    %19 = vector.shape_cast %18 : vector<2xf32> to vector<2x1xf32>
    %20 = math.log %19 : vector<2x1xf32>
    %21 = vector.broadcast %20 : vector<2x1xf32> to vector<2x3xf32>
    %22 = arith.subf %16, %21 : vector<2x3xf32>
    %c0_13 = arith.constant 0 : index
    %c0_14 = arith.constant 0 : index
    %23 = vector.load %arg6[%c0_13, %c0_14] : memref<2x3xf32, #tpu.memory_space<vmem>>, vector<2x3xf32>
    tpu.vector_store %arg6[%c0_13, %c0_14], %22 {strides = array<i32>} : memref<2x3xf32, #tpu.memory_space<vmem>>, vector<2x3xf32>,
    return
  }
  func.func @transform_0(%arg0: i32) -> (i32, i32) {
    %c0_i32 = arith.constant 0 : i32
    %c0_i32_0 = arith.constant 0 : i32
    %c0_i32_1 = arith.constant 0 : i32
    return %c0_i32, %c0_i32_0 : i32, i32
  }
  func.func @transform_1(%arg0: i32) -> (i32, i32) {
    %c0_i32 = arith.constant 0 : i32
    %c0_i32_0 = arith.constant 0 : i32
    %c0_i32_1 = arith.constant 0 : i32
    return %c0_i32, %c0_i32_0 : i32, i32
  }
  func.func @transform_2(%arg0: i32) -> (i32, i32) {
    %c0_i32 = arith.constant 0 : i32
    %c0_i32_0 = arith.constant 0 : i32
    %c0_i32_1 = arith.constant 0 : i32
    return %c0_i32, %c0_i32_0 : i32, i32
  }
  func.func @transform_3(%arg0: i32) -> (i32, i32) {
    %c0_i32 = arith.constant 0 : i32
    %c0_i32_0 = arith.constant 0 : i32
    %c0_i32_1 = arith.constant 0 : i32
    return %c0_i32, %c0_i32_0 : i32, i32
  }
  func.func @transform_4(%arg0: i32) -> (i32, i32) {
    %c0_i32 = arith.constant 0 : i32
    %c0_i32_0 = arith.constant 0 : i32
    %c0_i32_1 = arith.constant 0 : i32
    return %c0_i32, %c0_i32_0 : i32, i32
  }
  func.func @transform_5(%arg0: i32) -> (i32, i32) {
    %c0_i32 = arith.constant 0 : i32
    %c0_i32_0 = arith.constant 0 : i32
    %c0_i32_1 = arith.constant 0 : i32
    return %c0_i32, %c0_i32_0 : i32, i32
  }
}

module attributes {stable_mosaic.version = 11 : i64} {
  func.func @_bilstm_kernel(%arg0: i32, %arg1: memref<2x8x32xf32, #tpu.memory_space<vmem>>, %arg2: memref<32x128xf32, #tpu.memory_space<vmem>>, %arg3: memref<32x128xf32, #tpu.memory_space<vmem>>, %arg4: memref<1x128xf32, #tpu.memory_space<vmem>>, %arg5: memref<32x128xf32, #tpu.memory_space<vmem>>, %arg6: memref<32x128xf32, #tpu.memory_space<vmem>>, %arg7: memref<1x128xf32, #tpu.memory_space<vmem>>, %arg8: memref<2x8x32xf32, #tpu.memory_space<vmem>>, %arg9: memref<2x8x32xf32, #tpu.memory_space<vmem>>) attributes {dimension_semantics = [#tpu.dimension_semantics<parallel>], iteration_bounds = array<i64: 2>, scalar_prefetch = 0 : i64, scratch_operands = 0 : i64, tpu.core_type = #tpu.core_type<tc>, window_params = [{transform_indices = @transform_0, window_bounds = array<i64: 2, 8, 32>}, {pipeline_mode = #tpu.pipeline_mode<synchronous>, transform_indices = @transform_1, window_bounds = array<i64: 32, 128>}, {pipeline_mode = #tpu.pipeline_mode<synchronous>, transform_indices = @transform_2, window_bounds = array<i64: 32, 128>}, {pipeline_mode = #tpu.pipeline_mode<synchronous>, transform_indices = @transform_3, window_bounds = array<i64: 1, 128>}, {pipeline_mode = #tpu.pipeline_mode<synchronous>, transform_indices = @transform_4, window_bounds = array<i64: 32, 128>}, {pipeline_mode = #tpu.pipeline_mode<synchronous>, transform_indices = @transform_5, window_bounds = array<i64: 32, 128>}, {pipeline_mode = #tpu.pipeline_mode<synchronous>, transform_indices = @transform_6, window_bounds = array<i64: 1, 128>}, {transform_indices = @transform_7, window_bounds = array<i64: 2, 8, 32>}, {transform_indices = @transform_8, window_bounds = array<i64: 2, 8, 32>}]} {
    %c0 = arith.constant 0 : index
    %c0_0 = arith.constant 0 : index
    %0 = vector.load %arg3[%c0, %c0_0] : memref<32x128xf32, #tpu.memory_space<vmem>>, vector<32x128xf32>
    %c0_1 = arith.constant 0 : index
    %c0_2 = arith.constant 0 : index
    %1 = vector.load %arg6[%c0_1, %c0_2] : memref<32x128xf32, #tpu.memory_space<vmem>>, vector<32x128xf32>
    %c0_3 = arith.constant 0 : index
    %c0_4 = arith.constant 0 : index
    %c0_5 = arith.constant 0 : index
    %2 = vector.load %arg1[%c0_3, %c0_4, %c0_5] : memref<2x8x32xf32, #tpu.memory_space<vmem>>, vector<2x8x32xf32>
    %3 = vector.shape_cast %2 : vector<2x8x32xf32> to vector<16x32xf32>
    %c0_6 = arith.constant 0 : index
    %c0_7 = arith.constant 0 : index
    %4 = vector.load %arg2[%c0_6, %c0_7] : memref<32x128xf32, #tpu.memory_space<vmem>>, vector<32x128xf32>
    %cst = arith.constant dense<0.000000e+00> : vector<16x128xf32>
    %5 = tpu.matmul %3, %4, %cst {dimension_numbers = #tpu.dot_dimension_numbers<[1], [0], [0], [1], [0, 0, 1, 1], [], []>} : vector<16x32xf32>, vector<32x128xf32>, vector<16x128xf32> -> vector<16x128xf32>
    %c0_8 = arith.constant 0 : index
    %c0_9 = arith.constant 0 : index
    %6 = vector.load %arg4[%c0_8, %c0_9] : memref<1x128xf32, #tpu.memory_space<vmem>>, vector<1x128xf32>
    %7 = vector.broadcast %6 : vector<1x128xf32> to vector<16x128xf32>
    %8 = arith.addf %5, %7 : vector<16x128xf32>
    %9 = vector.shape_cast %8 : vector<16x128xf32> to vector<2x8x128xf32>
    %c0_10 = arith.constant 0 : index
    %c0_11 = arith.constant 0 : index
    %10 = vector.load %arg5[%c0_10, %c0_11] : memref<32x128xf32, #tpu.memory_space<vmem>>, vector<32x128xf32>
    %cst_12 = arith.constant dense<0.000000e+00> : vector<16x128xf32>
    %11 = tpu.matmul %3, %10, %cst_12 {dimension_numbers = #tpu.dot_dimension_numbers<[1], [0], [0], [1], [0, 0, 1, 1], [], []>} : vector<16x32xf32>, vector<32x128xf32>, vector<16x128xf32> -> vector<16x128xf32>
    %c0_13 = arith.constant 0 : index
    %c0_14 = arith.constant 0 : index
    %12 = vector.load %arg7[%c0_13, %c0_14] : memref<1x128xf32, #tpu.memory_space<vmem>>, vector<1x128xf32>
    %13 = vector.broadcast %12 : vector<1x128xf32> to vector<16x128xf32>
    %14 = arith.addf %11, %13 : vector<16x128xf32>
    %15 = vector.shape_cast %14 : vector<16x128xf32> to vector<2x8x128xf32>
    %cst_15 = arith.constant 0.000000e+00 : f32
    %16 = vector.broadcast %cst_15 : f32 to vector<2x32xf32>
    %cst_16 = arith.constant 0.000000e+00 : f32
    %17 = vector.broadcast %cst_16 : f32 to vector<2x32xf32>
    %cst_17 = arith.constant 0.000000e+00 : f32
    %18 = vector.broadcast %cst_17 : f32 to vector<2x32xf32>
    %cst_18 = arith.constant 0.000000e+00 : f32
    %19 = vector.broadcast %cst_18 : f32 to vector<2x32xf32>
    %20 = vector.extract_strided_slice %9 {offsets = [0, 0, 0], sizes = [2, 1, 128], strides = [1, 1, 1]} : vector<2x8x128xf32> to vector<2x1x128xf32>
    %21 = vector.shape_cast %20 : vector<2x1x128xf32> to vector<2x128xf32>
    %cst_19 = arith.constant dense<0.000000e+00> : vector<2x128xf32>
    %22 = tpu.matmul %16, %0, %cst_19 {dimension_numbers = #tpu.dot_dimension_numbers<[1], [0], [0], [1], [0, 0, 1, 1], [], []>} : vector<2x32xf32>, vector<32x128xf32>, vector<2x128xf32> -> vector<2x128xf32>
    %23 = arith.addf %21, %22 : vector<2x128xf32>
    %24 = arith.negf %23 : vector<2x128xf32>
    %25 = math.exp %24 : vector<2x128xf32>
    %cst_20 = arith.constant 1.000000e+00 : f32
    %26 = vector.broadcast %cst_20 : f32 to vector<2x128xf32>
    %27 = arith.addf %26, %25 : vector<2x128xf32>
    %28 = arith.divf %26, %27 : vector<2x128xf32>
    %29 = vector.extract_strided_slice %28 {offsets = [0, 0], sizes = [2, 32], strides = [1, 1]} : vector<2x128xf32> to vector<2x32xf32>
    %30 = vector.extract_strided_slice %28 {offsets = [0, 32], sizes = [2, 32], strides = [1, 1]} : vector<2x128xf32> to vector<2x32xf32>
    %31 = vector.extract_strided_slice %28 {offsets = [0, 96], sizes = [2, 32], strides = [1, 1]} : vector<2x128xf32> to vector<2x32xf32>
    %32 = vector.extract_strided_slice %23 {offsets = [0, 64], sizes = [2, 32], strides = [1, 1]} : vector<2x128xf32> to vector<2x32xf32>
    %33 = math.tanh %32 : vector<2x32xf32>
    %34 = arith.mulf %30, %17 : vector<2x32xf32>
    %35 = arith.mulf %29, %33 : vector<2x32xf32>
    %36 = arith.addf %34, %35 : vector<2x32xf32>
    %37 = math.tanh %36 : vector<2x32xf32>
    %38 = arith.mulf %31, %37 : vector<2x32xf32>
    %39 = vector.extract_strided_slice %15 {offsets = [0, 7, 0], sizes = [2, 1, 128], strides = [1, 1, 1]} : vector<2x8x128xf32> to vector<2x1x128xf32>
    %40 = vector.shape_cast %39 : vector<2x1x128xf32> to vector<2x128xf32>
    %cst_21 = arith.constant dense<0.000000e+00> : vector<2x128xf32>
    %41 = tpu.matmul %18, %1, %cst_21 {dimension_numbers = #tpu.dot_dimension_numbers<[1], [0], [0], [1], [0, 0, 1, 1], [], []>} : vector<2x32xf32>, vector<32x128xf32>, vector<2x128xf32> -> vector<2x128xf32>
    %42 = arith.addf %40, %41 : vector<2x128xf32>
    %43 = arith.negf %42 : vector<2x128xf32>
    %44 = math.exp %43 : vector<2x128xf32>
    %cst_22 = arith.constant 1.000000e+00 : f32
    %45 = vector.broadcast %cst_22 : f32 to vector<2x128xf32>
    %46 = arith.addf %45, %44 : vector<2x128xf32>
    %47 = arith.divf %45, %46 : vector<2x128xf32>
    %48 = vector.extract_strided_slice %47 {offsets = [0, 0], sizes = [2, 32], strides = [1, 1]} : vector<2x128xf32> to vector<2x32xf32>
    %49 = vector.extract_strided_slice %47 {offsets = [0, 32], sizes = [2, 32], strides = [1, 1]} : vector<2x128xf32> to vector<2x32xf32>
    %50 = vector.extract_strided_slice %47 {offsets = [0, 96], sizes = [2, 32], strides = [1, 1]} : vector<2x128xf32> to vector<2x32xf32>
    %51 = vector.extract_strided_slice %42 {offsets = [0, 64], sizes = [2, 32], strides = [1, 1]} : vector<2x128xf32> to vector<2x32xf32>
    %52 = math.tanh %51 : vector<2x32xf32>
    %53 = arith.mulf %49, %19 : vector<2x32xf32>
    %54 = arith.mulf %48, %52 : vector<2x32xf32>
    %55 = arith.addf %53, %54 : vector<2x32xf32>
    %56 = math.tanh %55 : vector<2x32xf32>
    %57 = arith.mulf %50, %56 : vector<2x32xf32>
    %58 = vector.shape_cast %38 : vector<2x32xf32> to vector<2x1x32xf32>
    %c0_23 = arith.constant 0 : index
    %c0_24 = arith.constant 0 : index
    %c0_25 = arith.constant 0 : index
    %59 = vector.load %arg8[%c0_23, %c0_24, %c0_25] : memref<2x8x32xf32, #tpu.memory_space<vmem>>, vector<2x1x32xf32>
    tpu.vector_store %arg8[%c0_23, %c0_24, %c0_25], %58 {strides = array<i32>} : memref<2x8x32xf32, #tpu.memory_space<vmem>>, vector<2x1x32xf32>,
    %60 = vector.shape_cast %57 : vector<2x32xf32> to vector<2x1x32xf32>
    %c0_26 = arith.constant 0 : index
    %c7 = arith.constant 7 : index
    %c0_27 = arith.constant 0 : index
    %61 = vector.load %arg9[%c0_26, %c7, %c0_27] : memref<2x8x32xf32, #tpu.memory_space<vmem>>, vector<2x1x32xf32>
    tpu.vector_store %arg9[%c0_26, %c7, %c0_27], %60 {strides = array<i32>} : memref<2x8x32xf32, #tpu.memory_space<vmem>>, vector<2x1x32xf32>,
    %62 = vector.extract_strided_slice %9 {offsets = [0, 1, 0], sizes = [2, 1, 128], strides = [1, 1, 1]} : vector<2x8x128xf32> to vector<2x1x128xf32>
    %63 = vector.shape_cast %62 : vector<2x1x128xf32> to vector<2x128xf32>
    %cst_28 = arith.constant dense<0.000000e+00> : vector<2x128xf32>
    %64 = tpu.matmul %38, %0, %cst_28 {dimension_numbers = #tpu.dot_dimension_numbers<[1], [0], [0], [1], [0, 0, 1, 1], [], []>} : vector<2x32xf32>, vector<32x128xf32>, vector<2x128xf32> -> vector<2x128xf32>
    %65 = arith.addf %63, %64 : vector<2x128xf32>
    %66 = arith.negf %65 : vector<2x128xf32>
    %67 = math.exp %66 : vector<2x128xf32>
    %cst_29 = arith.constant 1.000000e+00 : f32
    %68 = vector.broadcast %cst_29 : f32 to vector<2x128xf32>
    %69 = arith.addf %68, %67 : vector<2x128xf32>
    %70 = arith.divf %68, %69 : vector<2x128xf32>
    %71 = vector.extract_strided_slice %70 {offsets = [0, 0], sizes = [2, 32], strides = [1, 1]} : vector<2x128xf32> to vector<2x32xf32>
    %72 = vector.extract_strided_slice %70 {offsets = [0, 32], sizes = [2, 32], strides = [1, 1]} : vector<2x128xf32> to vector<2x32xf32>
    %73 = vector.extract_strided_slice %70 {offsets = [0, 96], sizes = [2, 32], strides = [1, 1]} : vector<2x128xf32> to vector<2x32xf32>
    %74 = vector.extract_strided_slice %65 {offsets = [0, 64], sizes = [2, 32], strides = [1, 1]} : vector<2x128xf32> to vector<2x32xf32>
    %75 = math.tanh %74 : vector<2x32xf32>
    %76 = arith.mulf %72, %36 : vector<2x32xf32>
    %77 = arith.mulf %71, %75 : vector<2x32xf32>
    %78 = arith.addf %76, %77 : vector<2x32xf32>
    %79 = math.tanh %78 : vector<2x32xf32>
    %80 = arith.mulf %73, %79 : vector<2x32xf32>
    %81 = vector.extract_strided_slice %15 {offsets = [0, 6, 0], sizes = [2, 1, 128], strides = [1, 1, 1]} : vector<2x8x128xf32> to vector<2x1x128xf32>
    %82 = vector.shape_cast %81 : vector<2x1x128xf32> to vector<2x128xf32>
    %cst_30 = arith.constant dense<0.000000e+00> : vector<2x128xf32>
    %83 = tpu.matmul %57, %1, %cst_30 {dimension_numbers = #tpu.dot_dimension_numbers<[1], [0], [0], [1], [0, 0, 1, 1], [], []>} : vector<2x32xf32>, vector<32x128xf32>, vector<2x128xf32> -> vector<2x128xf32>
    %84 = arith.addf %82, %83 : vector<2x128xf32>
    %85 = arith.negf %84 : vector<2x128xf32>
    %86 = math.exp %85 : vector<2x128xf32>
    %cst_31 = arith.constant 1.000000e+00 : f32
    %87 = vector.broadcast %cst_31 : f32 to vector<2x128xf32>
    %88 = arith.addf %87, %86 : vector<2x128xf32>
    %89 = arith.divf %87, %88 : vector<2x128xf32>
    %90 = vector.extract_strided_slice %89 {offsets = [0, 0], sizes = [2, 32], strides = [1, 1]} : vector<2x128xf32> to vector<2x32xf32>
    %91 = vector.extract_strided_slice %89 {offsets = [0, 32], sizes = [2, 32], strides = [1, 1]} : vector<2x128xf32> to vector<2x32xf32>
    %92 = vector.extract_strided_slice %89 {offsets = [0, 96], sizes = [2, 32], strides = [1, 1]} : vector<2x128xf32> to vector<2x32xf32>
    %93 = vector.extract_strided_slice %84 {offsets = [0, 64], sizes = [2, 32], strides = [1, 1]} : vector<2x128xf32> to vector<2x32xf32>
    %94 = math.tanh %93 : vector<2x32xf32>
    %95 = arith.mulf %91, %55 : vector<2x32xf32>
    %96 = arith.mulf %90, %94 : vector<2x32xf32>
    %97 = arith.addf %95, %96 : vector<2x32xf32>
    %98 = math.tanh %97 : vector<2x32xf32>
    %99 = arith.mulf %92, %98 : vector<2x32xf32>
    %100 = vector.shape_cast %80 : vector<2x32xf32> to vector<2x1x32xf32>
    %c0_32 = arith.constant 0 : index
    %c1 = arith.constant 1 : index
    %c0_33 = arith.constant 0 : index
    %101 = vector.load %arg8[%c0_32, %c1, %c0_33] : memref<2x8x32xf32, #tpu.memory_space<vmem>>, vector<2x1x32xf32>
    tpu.vector_store %arg8[%c0_32, %c1, %c0_33], %100 {strides = array<i32>} : memref<2x8x32xf32, #tpu.memory_space<vmem>>, vector<2x1x32xf32>,
    %102 = vector.shape_cast %99 : vector<2x32xf32> to vector<2x1x32xf32>
    %c0_34 = arith.constant 0 : index
    %c6 = arith.constant 6 : index
    %c0_35 = arith.constant 0 : index
    %103 = vector.load %arg9[%c0_34, %c6, %c0_35] : memref<2x8x32xf32, #tpu.memory_space<vmem>>, vector<2x1x32xf32>
    tpu.vector_store %arg9[%c0_34, %c6, %c0_35], %102 {strides = array<i32>} : memref<2x8x32xf32, #tpu.memory_space<vmem>>, vector<2x1x32xf32>,
    %104 = vector.extract_strided_slice %9 {offsets = [0, 2, 0], sizes = [2, 1, 128], strides = [1, 1, 1]} : vector<2x8x128xf32> to vector<2x1x128xf32>
    %105 = vector.shape_cast %104 : vector<2x1x128xf32> to vector<2x128xf32>
    %cst_36 = arith.constant dense<0.000000e+00> : vector<2x128xf32>
    %106 = tpu.matmul %80, %0, %cst_36 {dimension_numbers = #tpu.dot_dimension_numbers<[1], [0], [0], [1], [0, 0, 1, 1], [], []>} : vector<2x32xf32>, vector<32x128xf32>, vector<2x128xf32> -> vector<2x128xf32>
    %107 = arith.addf %105, %106 : vector<2x128xf32>
    %108 = arith.negf %107 : vector<2x128xf32>
    %109 = math.exp %108 : vector<2x128xf32>
    %cst_37 = arith.constant 1.000000e+00 : f32
    %110 = vector.broadcast %cst_37 : f32 to vector<2x128xf32>
    %111 = arith.addf %110, %109 : vector<2x128xf32>
    %112 = arith.divf %110, %111 : vector<2x128xf32>
    %113 = vector.extract_strided_slice %112 {offsets = [0, 0], sizes = [2, 32], strides = [1, 1]} : vector<2x128xf32> to vector<2x32xf32>
    %114 = vector.extract_strided_slice %112 {offsets = [0, 32], sizes = [2, 32], strides = [1, 1]} : vector<2x128xf32> to vector<2x32xf32>
    %115 = vector.extract_strided_slice %112 {offsets = [0, 96], sizes = [2, 32], strides = [1, 1]} : vector<2x128xf32> to vector<2x32xf32>
    %116 = vector.extract_strided_slice %107 {offsets = [0, 64], sizes = [2, 32], strides = [1, 1]} : vector<2x128xf32> to vector<2x32xf32>
    %117 = math.tanh %116 : vector<2x32xf32>
    %118 = arith.mulf %114, %78 : vector<2x32xf32>
    %119 = arith.mulf %113, %117 : vector<2x32xf32>
    %120 = arith.addf %118, %119 : vector<2x32xf32>
    %121 = math.tanh %120 : vector<2x32xf32>
    %122 = arith.mulf %115, %121 : vector<2x32xf32>
    %123 = vector.extract_strided_slice %15 {offsets = [0, 5, 0], sizes = [2, 1, 128], strides = [1, 1, 1]} : vector<2x8x128xf32> to vector<2x1x128xf32>
    %124 = vector.shape_cast %123 : vector<2x1x128xf32> to vector<2x128xf32>
    %cst_38 = arith.constant dense<0.000000e+00> : vector<2x128xf32>
    %125 = tpu.matmul %99, %1, %cst_38 {dimension_numbers = #tpu.dot_dimension_numbers<[1], [0], [0], [1], [0, 0, 1, 1], [], []>} : vector<2x32xf32>, vector<32x128xf32>, vector<2x128xf32> -> vector<2x128xf32>
    %126 = arith.addf %124, %125 : vector<2x128xf32>
    %127 = arith.negf %126 : vector<2x128xf32>
    %128 = math.exp %127 : vector<2x128xf32>
    %cst_39 = arith.constant 1.000000e+00 : f32
    %129 = vector.broadcast %cst_39 : f32 to vector<2x128xf32>
    %130 = arith.addf %129, %128 : vector<2x128xf32>
    %131 = arith.divf %129, %130 : vector<2x128xf32>
    %132 = vector.extract_strided_slice %131 {offsets = [0, 0], sizes = [2, 32], strides = [1, 1]} : vector<2x128xf32> to vector<2x32xf32>
    %133 = vector.extract_strided_slice %131 {offsets = [0, 32], sizes = [2, 32], strides = [1, 1]} : vector<2x128xf32> to vector<2x32xf32>
    %134 = vector.extract_strided_slice %131 {offsets = [0, 96], sizes = [2, 32], strides = [1, 1]} : vector<2x128xf32> to vector<2x32xf32>
    %135 = vector.extract_strided_slice %126 {offsets = [0, 64], sizes = [2, 32], strides = [1, 1]} : vector<2x128xf32> to vector<2x32xf32>
    %136 = math.tanh %135 : vector<2x32xf32>
    %137 = arith.mulf %133, %97 : vector<2x32xf32>
    %138 = arith.mulf %132, %136 : vector<2x32xf32>
    %139 = arith.addf %137, %138 : vector<2x32xf32>
    %140 = math.tanh %139 : vector<2x32xf32>
    %141 = arith.mulf %134, %140 : vector<2x32xf32>
    %142 = vector.shape_cast %122 : vector<2x32xf32> to vector<2x1x32xf32>
    %c0_40 = arith.constant 0 : index
    %c2 = arith.constant 2 : index
    %c0_41 = arith.constant 0 : index
    %143 = vector.load %arg8[%c0_40, %c2, %c0_41] : memref<2x8x32xf32, #tpu.memory_space<vmem>>, vector<2x1x32xf32>
    tpu.vector_store %arg8[%c0_40, %c2, %c0_41], %142 {strides = array<i32>} : memref<2x8x32xf32, #tpu.memory_space<vmem>>, vector<2x1x32xf32>,
    %144 = vector.shape_cast %141 : vector<2x32xf32> to vector<2x1x32xf32>
    %c0_42 = arith.constant 0 : index
    %c5 = arith.constant 5 : index
    %c0_43 = arith.constant 0 : index
    %145 = vector.load %arg9[%c0_42, %c5, %c0_43] : memref<2x8x32xf32, #tpu.memory_space<vmem>>, vector<2x1x32xf32>
    tpu.vector_store %arg9[%c0_42, %c5, %c0_43], %144 {strides = array<i32>} : memref<2x8x32xf32, #tpu.memory_space<vmem>>, vector<2x1x32xf32>,
    %146 = vector.extract_strided_slice %9 {offsets = [0, 3, 0], sizes = [2, 1, 128], strides = [1, 1, 1]} : vector<2x8x128xf32> to vector<2x1x128xf32>
    %147 = vector.shape_cast %146 : vector<2x1x128xf32> to vector<2x128xf32>
    %cst_44 = arith.constant dense<0.000000e+00> : vector<2x128xf32>
    %148 = tpu.matmul %122, %0, %cst_44 {dimension_numbers = #tpu.dot_dimension_numbers<[1], [0], [0], [1], [0, 0, 1, 1], [], []>} : vector<2x32xf32>, vector<32x128xf32>, vector<2x128xf32> -> vector<2x128xf32>
    %149 = arith.addf %147, %148 : vector<2x128xf32>
    %150 = arith.negf %149 : vector<2x128xf32>
    %151 = math.exp %150 : vector<2x128xf32>
    %cst_45 = arith.constant 1.000000e+00 : f32
    %152 = vector.broadcast %cst_45 : f32 to vector<2x128xf32>
    %153 = arith.addf %152, %151 : vector<2x128xf32>
    %154 = arith.divf %152, %153 : vector<2x128xf32>
    %155 = vector.extract_strided_slice %154 {offsets = [0, 0], sizes = [2, 32], strides = [1, 1]} : vector<2x128xf32> to vector<2x32xf32>
    %156 = vector.extract_strided_slice %154 {offsets = [0, 32], sizes = [2, 32], strides = [1, 1]} : vector<2x128xf32> to vector<2x32xf32>
    %157 = vector.extract_strided_slice %154 {offsets = [0, 96], sizes = [2, 32], strides = [1, 1]} : vector<2x128xf32> to vector<2x32xf32>
    %158 = vector.extract_strided_slice %149 {offsets = [0, 64], sizes = [2, 32], strides = [1, 1]} : vector<2x128xf32> to vector<2x32xf32>
    %159 = math.tanh %158 : vector<2x32xf32>
    %160 = arith.mulf %156, %120 : vector<2x32xf32>
    %161 = arith.mulf %155, %159 : vector<2x32xf32>
    %162 = arith.addf %160, %161 : vector<2x32xf32>
    %163 = math.tanh %162 : vector<2x32xf32>
    %164 = arith.mulf %157, %163 : vector<2x32xf32>
    %165 = vector.extract_strided_slice %15 {offsets = [0, 4, 0], sizes = [2, 1, 128], strides = [1, 1, 1]} : vector<2x8x128xf32> to vector<2x1x128xf32>
    %166 = vector.shape_cast %165 : vector<2x1x128xf32> to vector<2x128xf32>
    %cst_46 = arith.constant dense<0.000000e+00> : vector<2x128xf32>
    %167 = tpu.matmul %141, %1, %cst_46 {dimension_numbers = #tpu.dot_dimension_numbers<[1], [0], [0], [1], [0, 0, 1, 1], [], []>} : vector<2x32xf32>, vector<32x128xf32>, vector<2x128xf32> -> vector<2x128xf32>
    %168 = arith.addf %166, %167 : vector<2x128xf32>
    %169 = arith.negf %168 : vector<2x128xf32>
    %170 = math.exp %169 : vector<2x128xf32>
    %cst_47 = arith.constant 1.000000e+00 : f32
    %171 = vector.broadcast %cst_47 : f32 to vector<2x128xf32>
    %172 = arith.addf %171, %170 : vector<2x128xf32>
    %173 = arith.divf %171, %172 : vector<2x128xf32>
    %174 = vector.extract_strided_slice %173 {offsets = [0, 0], sizes = [2, 32], strides = [1, 1]} : vector<2x128xf32> to vector<2x32xf32>
    %175 = vector.extract_strided_slice %173 {offsets = [0, 32], sizes = [2, 32], strides = [1, 1]} : vector<2x128xf32> to vector<2x32xf32>
    %176 = vector.extract_strided_slice %173 {offsets = [0, 96], sizes = [2, 32], strides = [1, 1]} : vector<2x128xf32> to vector<2x32xf32>
    %177 = vector.extract_strided_slice %168 {offsets = [0, 64], sizes = [2, 32], strides = [1, 1]} : vector<2x128xf32> to vector<2x32xf32>
    %178 = math.tanh %177 : vector<2x32xf32>
    %179 = arith.mulf %175, %139 : vector<2x32xf32>
    %180 = arith.mulf %174, %178 : vector<2x32xf32>
    %181 = arith.addf %179, %180 : vector<2x32xf32>
    %182 = math.tanh %181 : vector<2x32xf32>
    %183 = arith.mulf %176, %182 : vector<2x32xf32>
    %184 = vector.shape_cast %164 : vector<2x32xf32> to vector<2x1x32xf32>
    %c0_48 = arith.constant 0 : index
    %c3 = arith.constant 3 : index
    %c0_49 = arith.constant 0 : index
    %185 = vector.load %arg8[%c0_48, %c3, %c0_49] : memref<2x8x32xf32, #tpu.memory_space<vmem>>, vector<2x1x32xf32>
    tpu.vector_store %arg8[%c0_48, %c3, %c0_49], %184 {strides = array<i32>} : memref<2x8x32xf32, #tpu.memory_space<vmem>>, vector<2x1x32xf32>,
    %186 = vector.shape_cast %183 : vector<2x32xf32> to vector<2x1x32xf32>
    %c0_50 = arith.constant 0 : index
    %c4 = arith.constant 4 : index
    %c0_51 = arith.constant 0 : index
    %187 = vector.load %arg9[%c0_50, %c4, %c0_51] : memref<2x8x32xf32, #tpu.memory_space<vmem>>, vector<2x1x32xf32>
    tpu.vector_store %arg9[%c0_50, %c4, %c0_51], %186 {strides = array<i32>} : memref<2x8x32xf32, #tpu.memory_space<vmem>>, vector<2x1x32xf32>,
    %188 = vector.extract_strided_slice %9 {offsets = [0, 4, 0], sizes = [2, 1, 128], strides = [1, 1, 1]} : vector<2x8x128xf32> to vector<2x1x128xf32>
    %189 = vector.shape_cast %188 : vector<2x1x128xf32> to vector<2x128xf32>
    %cst_52 = arith.constant dense<0.000000e+00> : vector<2x128xf32>
    %190 = tpu.matmul %164, %0, %cst_52 {dimension_numbers = #tpu.dot_dimension_numbers<[1], [0], [0], [1], [0, 0, 1, 1], [], []>} : vector<2x32xf32>, vector<32x128xf32>, vector<2x128xf32> -> vector<2x128xf32>
    %191 = arith.addf %189, %190 : vector<2x128xf32>
    %192 = arith.negf %191 : vector<2x128xf32>
    %193 = math.exp %192 : vector<2x128xf32>
    %cst_53 = arith.constant 1.000000e+00 : f32
    %194 = vector.broadcast %cst_53 : f32 to vector<2x128xf32>
    %195 = arith.addf %194, %193 : vector<2x128xf32>
    %196 = arith.divf %194, %195 : vector<2x128xf32>
    %197 = vector.extract_strided_slice %196 {offsets = [0, 0], sizes = [2, 32], strides = [1, 1]} : vector<2x128xf32> to vector<2x32xf32>
    %198 = vector.extract_strided_slice %196 {offsets = [0, 32], sizes = [2, 32], strides = [1, 1]} : vector<2x128xf32> to vector<2x32xf32>
    %199 = vector.extract_strided_slice %196 {offsets = [0, 96], sizes = [2, 32], strides = [1, 1]} : vector<2x128xf32> to vector<2x32xf32>
    %200 = vector.extract_strided_slice %191 {offsets = [0, 64], sizes = [2, 32], strides = [1, 1]} : vector<2x128xf32> to vector<2x32xf32>
    %201 = math.tanh %200 : vector<2x32xf32>
    %202 = arith.mulf %198, %162 : vector<2x32xf32>
    %203 = arith.mulf %197, %201 : vector<2x32xf32>
    %204 = arith.addf %202, %203 : vector<2x32xf32>
    %205 = math.tanh %204 : vector<2x32xf32>
    %206 = arith.mulf %199, %205 : vector<2x32xf32>
    %207 = vector.extract_strided_slice %15 {offsets = [0, 3, 0], sizes = [2, 1, 128], strides = [1, 1, 1]} : vector<2x8x128xf32> to vector<2x1x128xf32>
    %208 = vector.shape_cast %207 : vector<2x1x128xf32> to vector<2x128xf32>
    %cst_54 = arith.constant dense<0.000000e+00> : vector<2x128xf32>
    %209 = tpu.matmul %183, %1, %cst_54 {dimension_numbers = #tpu.dot_dimension_numbers<[1], [0], [0], [1], [0, 0, 1, 1], [], []>} : vector<2x32xf32>, vector<32x128xf32>, vector<2x128xf32> -> vector<2x128xf32>
    %210 = arith.addf %208, %209 : vector<2x128xf32>
    %211 = arith.negf %210 : vector<2x128xf32>
    %212 = math.exp %211 : vector<2x128xf32>
    %cst_55 = arith.constant 1.000000e+00 : f32
    %213 = vector.broadcast %cst_55 : f32 to vector<2x128xf32>
    %214 = arith.addf %213, %212 : vector<2x128xf32>
    %215 = arith.divf %213, %214 : vector<2x128xf32>
    %216 = vector.extract_strided_slice %215 {offsets = [0, 0], sizes = [2, 32], strides = [1, 1]} : vector<2x128xf32> to vector<2x32xf32>
    %217 = vector.extract_strided_slice %215 {offsets = [0, 32], sizes = [2, 32], strides = [1, 1]} : vector<2x128xf32> to vector<2x32xf32>
    %218 = vector.extract_strided_slice %215 {offsets = [0, 96], sizes = [2, 32], strides = [1, 1]} : vector<2x128xf32> to vector<2x32xf32>
    %219 = vector.extract_strided_slice %210 {offsets = [0, 64], sizes = [2, 32], strides = [1, 1]} : vector<2x128xf32> to vector<2x32xf32>
    %220 = math.tanh %219 : vector<2x32xf32>
    %221 = arith.mulf %217, %181 : vector<2x32xf32>
    %222 = arith.mulf %216, %220 : vector<2x32xf32>
    %223 = arith.addf %221, %222 : vector<2x32xf32>
    %224 = math.tanh %223 : vector<2x32xf32>
    %225 = arith.mulf %218, %224 : vector<2x32xf32>
    %226 = vector.shape_cast %206 : vector<2x32xf32> to vector<2x1x32xf32>
    %c0_56 = arith.constant 0 : index
    %c4_57 = arith.constant 4 : index
    %c0_58 = arith.constant 0 : index
    %227 = vector.load %arg8[%c0_56, %c4_57, %c0_58] : memref<2x8x32xf32, #tpu.memory_space<vmem>>, vector<2x1x32xf32>
    tpu.vector_store %arg8[%c0_56, %c4_57, %c0_58], %226 {strides = array<i32>} : memref<2x8x32xf32, #tpu.memory_space<vmem>>, vector<2x1x32xf32>,
    %228 = vector.shape_cast %225 : vector<2x32xf32> to vector<2x1x32xf32>
    %c0_59 = arith.constant 0 : index
    %c3_60 = arith.constant 3 : index
    %c0_61 = arith.constant 0 : index
    %229 = vector.load %arg9[%c0_59, %c3_60, %c0_61] : memref<2x8x32xf32, #tpu.memory_space<vmem>>, vector<2x1x32xf32>
    tpu.vector_store %arg9[%c0_59, %c3_60, %c0_61], %228 {strides = array<i32>} : memref<2x8x32xf32, #tpu.memory_space<vmem>>, vector<2x1x32xf32>,
    %230 = vector.extract_strided_slice %9 {offsets = [0, 5, 0], sizes = [2, 1, 128], strides = [1, 1, 1]} : vector<2x8x128xf32> to vector<2x1x128xf32>
    %231 = vector.shape_cast %230 : vector<2x1x128xf32> to vector<2x128xf32>
    %cst_62 = arith.constant dense<0.000000e+00> : vector<2x128xf32>
    %232 = tpu.matmul %206, %0, %cst_62 {dimension_numbers = #tpu.dot_dimension_numbers<[1], [0], [0], [1], [0, 0, 1, 1], [], []>} : vector<2x32xf32>, vector<32x128xf32>, vector<2x128xf32> -> vector<2x128xf32>
    %233 = arith.addf %231, %232 : vector<2x128xf32>
    %234 = arith.negf %233 : vector<2x128xf32>
    %235 = math.exp %234 : vector<2x128xf32>
    %cst_63 = arith.constant 1.000000e+00 : f32
    %236 = vector.broadcast %cst_63 : f32 to vector<2x128xf32>
    %237 = arith.addf %236, %235 : vector<2x128xf32>
    %238 = arith.divf %236, %237 : vector<2x128xf32>
    %239 = vector.extract_strided_slice %238 {offsets = [0, 0], sizes = [2, 32], strides = [1, 1]} : vector<2x128xf32> to vector<2x32xf32>
    %240 = vector.extract_strided_slice %238 {offsets = [0, 32], sizes = [2, 32], strides = [1, 1]} : vector<2x128xf32> to vector<2x32xf32>
    %241 = vector.extract_strided_slice %238 {offsets = [0, 96], sizes = [2, 32], strides = [1, 1]} : vector<2x128xf32> to vector<2x32xf32>
    %242 = vector.extract_strided_slice %233 {offsets = [0, 64], sizes = [2, 32], strides = [1, 1]} : vector<2x128xf32> to vector<2x32xf32>
    %243 = math.tanh %242 : vector<2x32xf32>
    %244 = arith.mulf %240, %204 : vector<2x32xf32>
    %245 = arith.mulf %239, %243 : vector<2x32xf32>
    %246 = arith.addf %244, %245 : vector<2x32xf32>
    %247 = math.tanh %246 : vector<2x32xf32>
    %248 = arith.mulf %241, %247 : vector<2x32xf32>
    %249 = vector.extract_strided_slice %15 {offsets = [0, 2, 0], sizes = [2, 1, 128], strides = [1, 1, 1]} : vector<2x8x128xf32> to vector<2x1x128xf32>
    %250 = vector.shape_cast %249 : vector<2x1x128xf32> to vector<2x128xf32>
    %cst_64 = arith.constant dense<0.000000e+00> : vector<2x128xf32>
    %251 = tpu.matmul %225, %1, %cst_64 {dimension_numbers = #tpu.dot_dimension_numbers<[1], [0], [0], [1], [0, 0, 1, 1], [], []>} : vector<2x32xf32>, vector<32x128xf32>, vector<2x128xf32> -> vector<2x128xf32>
    %252 = arith.addf %250, %251 : vector<2x128xf32>
    %253 = arith.negf %252 : vector<2x128xf32>
    %254 = math.exp %253 : vector<2x128xf32>
    %cst_65 = arith.constant 1.000000e+00 : f32
    %255 = vector.broadcast %cst_65 : f32 to vector<2x128xf32>
    %256 = arith.addf %255, %254 : vector<2x128xf32>
    %257 = arith.divf %255, %256 : vector<2x128xf32>
    %258 = vector.extract_strided_slice %257 {offsets = [0, 0], sizes = [2, 32], strides = [1, 1]} : vector<2x128xf32> to vector<2x32xf32>
    %259 = vector.extract_strided_slice %257 {offsets = [0, 32], sizes = [2, 32], strides = [1, 1]} : vector<2x128xf32> to vector<2x32xf32>
    %260 = vector.extract_strided_slice %257 {offsets = [0, 96], sizes = [2, 32], strides = [1, 1]} : vector<2x128xf32> to vector<2x32xf32>
    %261 = vector.extract_strided_slice %252 {offsets = [0, 64], sizes = [2, 32], strides = [1, 1]} : vector<2x128xf32> to vector<2x32xf32>
    %262 = math.tanh %261 : vector<2x32xf32>
    %263 = arith.mulf %259, %223 : vector<2x32xf32>
    %264 = arith.mulf %258, %262 : vector<2x32xf32>
    %265 = arith.addf %263, %264 : vector<2x32xf32>
    %266 = math.tanh %265 : vector<2x32xf32>
    %267 = arith.mulf %260, %266 : vector<2x32xf32>
    %268 = vector.shape_cast %248 : vector<2x32xf32> to vector<2x1x32xf32>
    %c0_66 = arith.constant 0 : index
    %c5_67 = arith.constant 5 : index
    %c0_68 = arith.constant 0 : index
    %269 = vector.load %arg8[%c0_66, %c5_67, %c0_68] : memref<2x8x32xf32, #tpu.memory_space<vmem>>, vector<2x1x32xf32>
    tpu.vector_store %arg8[%c0_66, %c5_67, %c0_68], %268 {strides = array<i32>} : memref<2x8x32xf32, #tpu.memory_space<vmem>>, vector<2x1x32xf32>,
    %270 = vector.shape_cast %267 : vector<2x32xf32> to vector<2x1x32xf32>
    %c0_69 = arith.constant 0 : index
    %c2_70 = arith.constant 2 : index
    %c0_71 = arith.constant 0 : index
    %271 = vector.load %arg9[%c0_69, %c2_70, %c0_71] : memref<2x8x32xf32, #tpu.memory_space<vmem>>, vector<2x1x32xf32>
    tpu.vector_store %arg9[%c0_69, %c2_70, %c0_71], %270 {strides = array<i32>} : memref<2x8x32xf32, #tpu.memory_space<vmem>>, vector<2x1x32xf32>,
    %272 = vector.extract_strided_slice %9 {offsets = [0, 6, 0], sizes = [2, 1, 128], strides = [1, 1, 1]} : vector<2x8x128xf32> to vector<2x1x128xf32>
    %273 = vector.shape_cast %272 : vector<2x1x128xf32> to vector<2x128xf32>
    %cst_72 = arith.constant dense<0.000000e+00> : vector<2x128xf32>
    %274 = tpu.matmul %248, %0, %cst_72 {dimension_numbers = #tpu.dot_dimension_numbers<[1], [0], [0], [1], [0, 0, 1, 1], [], []>} : vector<2x32xf32>, vector<32x128xf32>, vector<2x128xf32> -> vector<2x128xf32>
    %275 = arith.addf %273, %274 : vector<2x128xf32>
    %276 = arith.negf %275 : vector<2x128xf32>
    %277 = math.exp %276 : vector<2x128xf32>
    %cst_73 = arith.constant 1.000000e+00 : f32
    %278 = vector.broadcast %cst_73 : f32 to vector<2x128xf32>
    %279 = arith.addf %278, %277 : vector<2x128xf32>
    %280 = arith.divf %278, %279 : vector<2x128xf32>
    %281 = vector.extract_strided_slice %280 {offsets = [0, 0], sizes = [2, 32], strides = [1, 1]} : vector<2x128xf32> to vector<2x32xf32>
    %282 = vector.extract_strided_slice %280 {offsets = [0, 32], sizes = [2, 32], strides = [1, 1]} : vector<2x128xf32> to vector<2x32xf32>
    %283 = vector.extract_strided_slice %280 {offsets = [0, 96], sizes = [2, 32], strides = [1, 1]} : vector<2x128xf32> to vector<2x32xf32>
    %284 = vector.extract_strided_slice %275 {offsets = [0, 64], sizes = [2, 32], strides = [1, 1]} : vector<2x128xf32> to vector<2x32xf32>
    %285 = math.tanh %284 : vector<2x32xf32>
    %286 = arith.mulf %282, %246 : vector<2x32xf32>
    %287 = arith.mulf %281, %285 : vector<2x32xf32>
    %288 = arith.addf %286, %287 : vector<2x32xf32>
    %289 = math.tanh %288 : vector<2x32xf32>
    %290 = arith.mulf %283, %289 : vector<2x32xf32>
    %291 = vector.extract_strided_slice %15 {offsets = [0, 1, 0], sizes = [2, 1, 128], strides = [1, 1, 1]} : vector<2x8x128xf32> to vector<2x1x128xf32>
    %292 = vector.shape_cast %291 : vector<2x1x128xf32> to vector<2x128xf32>
    %cst_74 = arith.constant dense<0.000000e+00> : vector<2x128xf32>
    %293 = tpu.matmul %267, %1, %cst_74 {dimension_numbers = #tpu.dot_dimension_numbers<[1], [0], [0], [1], [0, 0, 1, 1], [], []>} : vector<2x32xf32>, vector<32x128xf32>, vector<2x128xf32> -> vector<2x128xf32>
    %294 = arith.addf %292, %293 : vector<2x128xf32>
    %295 = arith.negf %294 : vector<2x128xf32>
    %296 = math.exp %295 : vector<2x128xf32>
    %cst_75 = arith.constant 1.000000e+00 : f32
    %297 = vector.broadcast %cst_75 : f32 to vector<2x128xf32>
    %298 = arith.addf %297, %296 : vector<2x128xf32>
    %299 = arith.divf %297, %298 : vector<2x128xf32>
    %300 = vector.extract_strided_slice %299 {offsets = [0, 0], sizes = [2, 32], strides = [1, 1]} : vector<2x128xf32> to vector<2x32xf32>
    %301 = vector.extract_strided_slice %299 {offsets = [0, 32], sizes = [2, 32], strides = [1, 1]} : vector<2x128xf32> to vector<2x32xf32>
    %302 = vector.extract_strided_slice %299 {offsets = [0, 96], sizes = [2, 32], strides = [1, 1]} : vector<2x128xf32> to vector<2x32xf32>
    %303 = vector.extract_strided_slice %294 {offsets = [0, 64], sizes = [2, 32], strides = [1, 1]} : vector<2x128xf32> to vector<2x32xf32>
    %304 = math.tanh %303 : vector<2x32xf32>
    %305 = arith.mulf %301, %265 : vector<2x32xf32>
    %306 = arith.mulf %300, %304 : vector<2x32xf32>
    %307 = arith.addf %305, %306 : vector<2x32xf32>
    %308 = math.tanh %307 : vector<2x32xf32>
    %309 = arith.mulf %302, %308 : vector<2x32xf32>
    %310 = vector.shape_cast %290 : vector<2x32xf32> to vector<2x1x32xf32>
    %c0_76 = arith.constant 0 : index
    %c6_77 = arith.constant 6 : index
    %c0_78 = arith.constant 0 : index
    %311 = vector.load %arg8[%c0_76, %c6_77, %c0_78] : memref<2x8x32xf32, #tpu.memory_space<vmem>>, vector<2x1x32xf32>
    tpu.vector_store %arg8[%c0_76, %c6_77, %c0_78], %310 {strides = array<i32>} : memref<2x8x32xf32, #tpu.memory_space<vmem>>, vector<2x1x32xf32>,
    %312 = vector.shape_cast %309 : vector<2x32xf32> to vector<2x1x32xf32>
    %c0_79 = arith.constant 0 : index
    %c1_80 = arith.constant 1 : index
    %c0_81 = arith.constant 0 : index
    %313 = vector.load %arg9[%c0_79, %c1_80, %c0_81] : memref<2x8x32xf32, #tpu.memory_space<vmem>>, vector<2x1x32xf32>
    tpu.vector_store %arg9[%c0_79, %c1_80, %c0_81], %312 {strides = array<i32>} : memref<2x8x32xf32, #tpu.memory_space<vmem>>, vector<2x1x32xf32>,
    %314 = vector.extract_strided_slice %9 {offsets = [0, 7, 0], sizes = [2, 1, 128], strides = [1, 1, 1]} : vector<2x8x128xf32> to vector<2x1x128xf32>
    %315 = vector.shape_cast %314 : vector<2x1x128xf32> to vector<2x128xf32>
    %cst_82 = arith.constant dense<0.000000e+00> : vector<2x128xf32>
    %316 = tpu.matmul %290, %0, %cst_82 {dimension_numbers = #tpu.dot_dimension_numbers<[1], [0], [0], [1], [0, 0, 1, 1], [], []>} : vector<2x32xf32>, vector<32x128xf32>, vector<2x128xf32> -> vector<2x128xf32>
    %317 = arith.addf %315, %316 : vector<2x128xf32>
    %318 = arith.negf %317 : vector<2x128xf32>
    %319 = math.exp %318 : vector<2x128xf32>
    %cst_83 = arith.constant 1.000000e+00 : f32
    %320 = vector.broadcast %cst_83 : f32 to vector<2x128xf32>
    %321 = arith.addf %320, %319 : vector<2x128xf32>
    %322 = arith.divf %320, %321 : vector<2x128xf32>
    %323 = vector.extract_strided_slice %322 {offsets = [0, 0], sizes = [2, 32], strides = [1, 1]} : vector<2x128xf32> to vector<2x32xf32>
    %324 = vector.extract_strided_slice %322 {offsets = [0, 32], sizes = [2, 32], strides = [1, 1]} : vector<2x128xf32> to vector<2x32xf32>
    %325 = vector.extract_strided_slice %322 {offsets = [0, 96], sizes = [2, 32], strides = [1, 1]} : vector<2x128xf32> to vector<2x32xf32>
    %326 = vector.extract_strided_slice %317 {offsets = [0, 64], sizes = [2, 32], strides = [1, 1]} : vector<2x128xf32> to vector<2x32xf32>
    %327 = math.tanh %326 : vector<2x32xf32>
    %328 = arith.mulf %324, %288 : vector<2x32xf32>
    %329 = arith.mulf %323, %327 : vector<2x32xf32>
    %330 = arith.addf %328, %329 : vector<2x32xf32>
    %331 = math.tanh %330 : vector<2x32xf32>
    %332 = arith.mulf %325, %331 : vector<2x32xf32>
    %333 = vector.extract_strided_slice %15 {offsets = [0, 0, 0], sizes = [2, 1, 128], strides = [1, 1, 1]} : vector<2x8x128xf32> to vector<2x1x128xf32>
    %334 = vector.shape_cast %333 : vector<2x1x128xf32> to vector<2x128xf32>
    %cst_84 = arith.constant dense<0.000000e+00> : vector<2x128xf32>
    %335 = tpu.matmul %309, %1, %cst_84 {dimension_numbers = #tpu.dot_dimension_numbers<[1], [0], [0], [1], [0, 0, 1, 1], [], []>} : vector<2x32xf32>, vector<32x128xf32>, vector<2x128xf32> -> vector<2x128xf32>
    %336 = arith.addf %334, %335 : vector<2x128xf32>
    %337 = arith.negf %336 : vector<2x128xf32>
    %338 = math.exp %337 : vector<2x128xf32>
    %cst_85 = arith.constant 1.000000e+00 : f32
    %339 = vector.broadcast %cst_85 : f32 to vector<2x128xf32>
    %340 = arith.addf %339, %338 : vector<2x128xf32>
    %341 = arith.divf %339, %340 : vector<2x128xf32>
    %342 = vector.extract_strided_slice %341 {offsets = [0, 0], sizes = [2, 32], strides = [1, 1]} : vector<2x128xf32> to vector<2x32xf32>
    %343 = vector.extract_strided_slice %341 {offsets = [0, 32], sizes = [2, 32], strides = [1, 1]} : vector<2x128xf32> to vector<2x32xf32>
    %344 = vector.extract_strided_slice %341 {offsets = [0, 96], sizes = [2, 32], strides = [1, 1]} : vector<2x128xf32> to vector<2x32xf32>
    %345 = vector.extract_strided_slice %336 {offsets = [0, 64], sizes = [2, 32], strides = [1, 1]} : vector<2x128xf32> to vector<2x32xf32>
    %346 = math.tanh %345 : vector<2x32xf32>
    %347 = arith.mulf %343, %307 : vector<2x32xf32>
    %348 = arith.mulf %342, %346 : vector<2x32xf32>
    %349 = arith.addf %347, %348 : vector<2x32xf32>
    %350 = math.tanh %349 : vector<2x32xf32>
    %351 = arith.mulf %344, %350 : vector<2x32xf32>
    %352 = vector.shape_cast %332 : vector<2x32xf32> to vector<2x1x32xf32>
    %c0_86 = arith.constant 0 : index
    %c7_87 = arith.constant 7 : index
    %c0_88 = arith.constant 0 : index
    %353 = vector.load %arg8[%c0_86, %c7_87, %c0_88] : memref<2x8x32xf32, #tpu.memory_space<vmem>>, vector<2x1x32xf32>
    tpu.vector_store %arg8[%c0_86, %c7_87, %c0_88], %352 {strides = array<i32>} : memref<2x8x32xf32, #tpu.memory_space<vmem>>, vector<2x1x32xf32>,
    %354 = vector.shape_cast %351 : vector<2x32xf32> to vector<2x1x32xf32>
    %c0_89 = arith.constant 0 : index
    %c0_90 = arith.constant 0 : index
    %c0_91 = arith.constant 0 : index
    %355 = vector.load %arg9[%c0_89, %c0_90, %c0_91] : memref<2x8x32xf32, #tpu.memory_space<vmem>>, vector<2x1x32xf32>
    tpu.vector_store %arg9[%c0_89, %c0_90, %c0_91], %354 {strides = array<i32>} : memref<2x8x32xf32, #tpu.memory_space<vmem>>, vector<2x1x32xf32>,
    return
  }
  func.func @transform_0(%arg0: i32) -> (i32, i32, i32) {
    %c0_i32 = arith.constant 0 : i32
    %c0_i32_0 = arith.constant 0 : i32
    %c0_i32_1 = arith.constant 0 : i32
    return %arg0, %c0_i32, %c0_i32_0 : i32, i32, i32
  }
  func.func @transform_1(%arg0: i32) -> (i32, i32) {
    %c0_i32 = arith.constant 0 : i32
    %c0_i32_0 = arith.constant 0 : i32
    %c0_i32_1 = arith.constant 0 : i32
    return %c0_i32, %c0_i32_0 : i32, i32
  }
  func.func @transform_2(%arg0: i32) -> (i32, i32) {
    %c0_i32 = arith.constant 0 : i32
    %c0_i32_0 = arith.constant 0 : i32
    %c0_i32_1 = arith.constant 0 : i32
    return %c0_i32, %c0_i32_0 : i32, i32
  }
  func.func @transform_3(%arg0: i32) -> (i32, i32) {
    %c0_i32 = arith.constant 0 : i32
    %c0_i32_0 = arith.constant 0 : i32
    %c0_i32_1 = arith.constant 0 : i32
    return %c0_i32, %c0_i32_0 : i32, i32
  }
  func.func @transform_4(%arg0: i32) -> (i32, i32) {
    %c0_i32 = arith.constant 0 : i32
    %c0_i32_0 = arith.constant 0 : i32
    %c0_i32_1 = arith.constant 0 : i32
    return %c0_i32, %c0_i32_0 : i32, i32
  }
  func.func @transform_5(%arg0: i32) -> (i32, i32) {
    %c0_i32 = arith.constant 0 : i32
    %c0_i32_0 = arith.constant 0 : i32
    %c0_i32_1 = arith.constant 0 : i32
    return %c0_i32, %c0_i32_0 : i32, i32
  }
  func.func @transform_6(%arg0: i32) -> (i32, i32) {
    %c0_i32 = arith.constant 0 : i32
    %c0_i32_0 = arith.constant 0 : i32
    %c0_i32_1 = arith.constant 0 : i32
    return %c0_i32, %c0_i32_0 : i32, i32
  }
  func.func @transform_7(%arg0: i32) -> (i32, i32, i32) {
    %c0_i32 = arith.constant 0 : i32
    %c0_i32_0 = arith.constant 0 : i32
    %c0_i32_1 = arith.constant 0 : i32
    return %arg0, %c0_i32, %c0_i32_0 : i32, i32, i32
  }
  func.func @transform_8(%arg0: i32) -> (i32, i32, i32) {
    %c0_i32 = arith.constant 0 : i32
    %c0_i32_0 = arith.constant 0 : i32
    %c0_i32_1 = arith.constant 0 : i32
    return %arg0, %c0_i32, %c0_i32_0 : i32, i32, i32
  }
}

module attributes {stable_mosaic.version = 11 : i64} {
  func.func @_matching_kernel(%arg0: i32, %arg1: memref<1x8x32xf32, #tpu.memory_space<vmem>>, %arg2: memref<1x8x32xf32, #tpu.memory_space<vmem>>, %arg3: memref<1x8x32xf32, #tpu.memory_space<vmem>>, %arg4: memref<1x8x32xf32, #tpu.memory_space<vmem>>, %arg5: memref<32x4xf32, #tpu.memory_space<vmem>>, %arg6: memref<32x4xf32, #tpu.memory_space<vmem>>, %arg7: memref<4x32xf32, #tpu.memory_space<vmem>>, %arg8: memref<4x32xf32, #tpu.memory_space<vmem>>, %arg9: memref<32x4xf32, #tpu.memory_space<vmem>>, %arg10: memref<32x4xf32, #tpu.memory_space<vmem>>, %arg11: memref<1x8x32xf32, #tpu.memory_space<vmem>>, %arg12: memref<1x8x32xf32, #tpu.memory_space<vmem>>) attributes {dimension_semantics = [#tpu.dimension_semantics<parallel>], iteration_bounds = array<i64: 2>, scalar_prefetch = 0 : i64, scratch_operands = 0 : i64, tpu.core_type = #tpu.core_type<tc>, window_params = [{transform_indices = @transform_0, window_bounds = array<i64: 1, 8, 32>}, {transform_indices = @transform_1, window_bounds = array<i64: 1, 8, 32>}, {transform_indices = @transform_2, window_bounds = array<i64: 1, 8, 32>}, {transform_indices = @transform_3, window_bounds = array<i64: 1, 8, 32>}, {pipeline_mode = #tpu.pipeline_mode<synchronous>, transform_indices = @transform_4, window_bounds = array<i64: 32, 4>}, {pipeline_mode = #tpu.pipeline_mode<synchronous>, transform_indices = @transform_5, window_bounds = array<i64: 32, 4>}, {pipeline_mode = #tpu.pipeline_mode<synchronous>, transform_indices = @transform_6, window_bounds = array<i64: 4, 32>}, {pipeline_mode = #tpu.pipeline_mode<synchronous>, transform_indices = @transform_7, window_bounds = array<i64: 4, 32>}, {pipeline_mode = #tpu.pipeline_mode<synchronous>, transform_indices = @transform_8, window_bounds = array<i64: 32, 4>}, {pipeline_mode = #tpu.pipeline_mode<synchronous>, transform_indices = @transform_9, window_bounds = array<i64: 32, 4>}, {transform_indices = @transform_10, window_bounds = array<i64: 1, 8, 32>}, {transform_indices = @transform_11, window_bounds = array<i64: 1, 8, 32>}]} {
    %c0 = arith.constant 0 : index
    %c0_0 = arith.constant 0 : index
    %c0_1 = arith.constant 0 : index
    %0 = vector.load %arg1[%c0, %c0_0, %c0_1] : memref<1x8x32xf32, #tpu.memory_space<vmem>>, vector<1x8x32xf32>
    %1 = vector.shape_cast %0 : vector<1x8x32xf32> to vector<8x32xf32>
    %c0_2 = arith.constant 0 : index
    %c0_3 = arith.constant 0 : index
    %c0_4 = arith.constant 0 : index
    %2 = vector.load %arg2[%c0_2, %c0_3, %c0_4] : memref<1x8x32xf32, #tpu.memory_space<vmem>>, vector<1x8x32xf32>
    %3 = vector.shape_cast %2 : vector<1x8x32xf32> to vector<8x32xf32>
    %c0_5 = arith.constant 0 : index
    %c0_6 = arith.constant 0 : index
    %c0_7 = arith.constant 0 : index
    %4 = vector.load %arg3[%c0_5, %c0_6, %c0_7] : memref<1x8x32xf32, #tpu.memory_space<vmem>>, vector<1x8x32xf32>
    %5 = vector.shape_cast %4 : vector<1x8x32xf32> to vector<8x32xf32>
    %c0_8 = arith.constant 0 : index
    %c0_9 = arith.constant 0 : index
    %c0_10 = arith.constant 0 : index
    %6 = vector.load %arg4[%c0_8, %c0_9, %c0_10] : memref<1x8x32xf32, #tpu.memory_space<vmem>>, vector<1x8x32xf32>
    %7 = vector.shape_cast %6 : vector<1x8x32xf32> to vector<8x32xf32>
    %c0_11 = arith.constant 0 : index
    %c0_12 = arith.constant 0 : index
    %8 = vector.load %arg5[%c0_11, %c0_12] : memref<32x4xf32, #tpu.memory_space<vmem>>, vector<32x4xf32>
    %c0_13 = arith.constant 0 : index
    %c0_14 = arith.constant 0 : index
    %9 = vector.load %arg6[%c0_13, %c0_14] : memref<32x4xf32, #tpu.memory_space<vmem>>, vector<32x4xf32>
    %c0_15 = arith.constant 0 : index
    %c0_16 = arith.constant 0 : index
    %10 = vector.load %arg7[%c0_15, %c0_16] : memref<4x32xf32, #tpu.memory_space<vmem>>, vector<4x32xf32>
    %c0_17 = arith.constant 0 : index
    %c0_18 = arith.constant 0 : index
    %11 = vector.load %arg8[%c0_17, %c0_18] : memref<4x32xf32, #tpu.memory_space<vmem>>, vector<4x32xf32>
    %c0_19 = arith.constant 0 : index
    %c0_20 = arith.constant 0 : index
    %12 = vector.load %arg9[%c0_19, %c0_20] : memref<32x4xf32, #tpu.memory_space<vmem>>, vector<32x4xf32>
    %c0_21 = arith.constant 0 : index
    %c0_22 = arith.constant 0 : index
    %13 = vector.load %arg10[%c0_21, %c0_22] : memref<32x4xf32, #tpu.memory_space<vmem>>, vector<32x4xf32>
    %14 = arith.mulf %1, %1 : vector<8x32xf32>
    %cst = arith.constant dense<0.000000e+00> : vector<8xf32>
    %15 = vector.multi_reduction <add>, %14, %cst [1] : vector<8x32xf32> to vector<8xf32>
    %16 = math.sqrt %15 : vector<8xf32>
    %17 = arith.mulf %3, %3 : vector<8x32xf32>
    %cst_23 = arith.constant dense<0.000000e+00> : vector<8xf32>
    %18 = vector.multi_reduction <add>, %17, %cst_23 [1] : vector<8x32xf32> to vector<8xf32>
    %19 = math.sqrt %18 : vector<8xf32>
    %20 = arith.mulf %5, %5 : vector<8x32xf32>
    %cst_24 = arith.constant dense<0.000000e+00> : vector<8xf32>
    %21 = vector.multi_reduction <add>, %20, %cst_24 [1] : vector<8x32xf32> to vector<8xf32>
    %22 = math.sqrt %21 : vector<8xf32>
    %23 = arith.mulf %7, %7 : vector<8x32xf32>
    %cst_25 = arith.constant dense<0.000000e+00> : vector<8xf32>
    %24 = vector.multi_reduction <add>, %23, %cst_25 [1] : vector<8x32xf32> to vector<8xf32>
    %25 = math.sqrt %24 : vector<8xf32>
    %26 = vector.extract_strided_slice %5 {offsets = [7, 0], sizes = [1, 32], strides = [1, 1]} : vector<8x32xf32> to vector<1x32xf32>
    %27 = vector.broadcast %26 : vector<1x32xf32> to vector<8x32xf32>
    %28 = arith.mulf %1, %27 : vector<8x32xf32>
    %cst_26 = arith.constant dense<0.000000e+00> : vector<8x4xf32>
    %29 = tpu.matmul %28, %8, %cst_26 {dimension_numbers = #tpu.dot_dimension_numbers<[1], [0], [0], [1], [0, 0, 1, 1], [], []>} : vector<8x32xf32>, vector<32x4xf32>, vector<8x4xf32> -> vector<8x4xf32>
    %30 = arith.mulf %1, %1 : vector<8x32xf32>
    %cst_27 = arith.constant dense<0.000000e+00> : vector<8x4xf32>
    %31 = tpu.matmul %30, %8, %cst_27 {dimension_numbers = #tpu.dot_dimension_numbers<[1], [0], [0], [1], [0, 0, 1, 1], [], []>} : vector<8x32xf32>, vector<32x4xf32>, vector<8x4xf32> -> vector<8x4xf32>
    %32 = arith.mulf %26, %26 : vector<1x32xf32>
    %cst_28 = arith.constant dense<0.000000e+00> : vector<1x4xf32>
    %33 = tpu.matmul %32, %8, %cst_28 {dimension_numbers = #tpu.dot_dimension_numbers<[1], [0], [0], [1], [0, 0, 1, 1], [], []>} : vector<1x32xf32>, vector<32x4xf32>, vector<1x4xf32> -> vector<1x4xf32>
    %34 = math.sqrt %31 : vector<8x4xf32>
    %cst_29 = arith.constant 9.99999993E-9 : f32
    %35 = vector.broadcast %cst_29 : f32 to vector<8x4xf32>
    %36 = arith.maximumf %34, %35 : vector<8x4xf32>
    %37 = math.sqrt %33 : vector<1x4xf32>
    %cst_30 = arith.constant 9.99999993E-9 : f32
    %38 = vector.broadcast %cst_30 : f32 to vector<1x4xf32>
    %39 = arith.maximumf %37, %38 : vector<1x4xf32>
    %40 = vector.broadcast %39 : vector<1x4xf32> to vector<8x4xf32>
    %41 = arith.mulf %36, %40 : vector<8x4xf32>
    %42 = arith.divf %29, %41 : vector<8x4xf32>
    %43 = vector.extract_strided_slice %7 {offsets = [0, 0], sizes = [1, 32], strides = [1, 1]} : vector<8x32xf32> to vector<1x32xf32>
    %44 = vector.broadcast %43 : vector<1x32xf32> to vector<8x32xf32>
    %45 = arith.mulf %3, %44 : vector<8x32xf32>
    %cst_31 = arith.constant dense<0.000000e+00> : vector<8x4xf32>
    %46 = tpu.matmul %45, %9, %cst_31 {dimension_numbers = #tpu.dot_dimension_numbers<[1], [0], [0], [1], [0, 0, 1, 1], [], []>} : vector<8x32xf32>, vector<32x4xf32>, vector<8x4xf32> -> vector<8x4xf32>
    %47 = arith.mulf %3, %3 : vector<8x32xf32>
    %cst_32 = arith.constant dense<0.000000e+00> : vector<8x4xf32>
    %48 = tpu.matmul %47, %9, %cst_32 {dimension_numbers = #tpu.dot_dimension_numbers<[1], [0], [0], [1], [0, 0, 1, 1], [], []>} : vector<8x32xf32>, vector<32x4xf32>, vector<8x4xf32> -> vector<8x4xf32>
    %49 = arith.mulf %43, %43 : vector<1x32xf32>
    %cst_33 = arith.constant dense<0.000000e+00> : vector<1x4xf32>
    %50 = tpu.matmul %49, %9, %cst_33 {dimension_numbers = #tpu.dot_dimension_numbers<[1], [0], [0], [1], [0, 0, 1, 1], [], []>} : vector<1x32xf32>, vector<32x4xf32>, vector<1x4xf32> -> vector<1x4xf32>
    %51 = math.sqrt %48 : vector<8x4xf32>
    %cst_34 = arith.constant 9.99999993E-9 : f32
    %52 = vector.broadcast %cst_34 : f32 to vector<8x4xf32>
    %53 = arith.maximumf %51, %52 : vector<8x4xf32>
    %54 = math.sqrt %50 : vector<1x4xf32>
    %cst_35 = arith.constant 9.99999993E-9 : f32
    %55 = vector.broadcast %cst_35 : f32 to vector<1x4xf32>
    %56 = arith.maximumf %54, %55 : vector<1x4xf32>
    %57 = vector.broadcast %56 : vector<1x4xf32> to vector<8x4xf32>
    %58 = arith.mulf %53, %57 : vector<8x4xf32>
    %59 = arith.divf %46, %58 : vector<8x4xf32>
    %60 = vector.extract_strided_slice %1 {offsets = [7, 0], sizes = [1, 32], strides = [1, 1]} : vector<8x32xf32> to vector<1x32xf32>
    %61 = vector.broadcast %60 : vector<1x32xf32> to vector<8x32xf32>
    %62 = arith.mulf %5, %61 : vector<8x32xf32>
    %cst_36 = arith.constant dense<0.000000e+00> : vector<8x4xf32>
    %63 = tpu.matmul %62, %8, %cst_36 {dimension_numbers = #tpu.dot_dimension_numbers<[1], [0], [0], [1], [0, 0, 1, 1], [], []>} : vector<8x32xf32>, vector<32x4xf32>, vector<8x4xf32> -> vector<8x4xf32>
    %64 = arith.mulf %5, %5 : vector<8x32xf32>
    %cst_37 = arith.constant dense<0.000000e+00> : vector<8x4xf32>
    %65 = tpu.matmul %64, %8, %cst_37 {dimension_numbers = #tpu.dot_dimension_numbers<[1], [0], [0], [1], [0, 0, 1, 1], [], []>} : vector<8x32xf32>, vector<32x4xf32>, vector<8x4xf32> -> vector<8x4xf32>
    %66 = arith.mulf %60, %60 : vector<1x32xf32>
    %cst_38 = arith.constant dense<0.000000e+00> : vector<1x4xf32>
    %67 = tpu.matmul %66, %8, %cst_38 {dimension_numbers = #tpu.dot_dimension_numbers<[1], [0], [0], [1], [0, 0, 1, 1], [], []>} : vector<1x32xf32>, vector<32x4xf32>, vector<1x4xf32> -> vector<1x4xf32>
    %68 = math.sqrt %65 : vector<8x4xf32>
    %cst_39 = arith.constant 9.99999993E-9 : f32
    %69 = vector.broadcast %cst_39 : f32 to vector<8x4xf32>
    %70 = arith.maximumf %68, %69 : vector<8x4xf32>
    %71 = math.sqrt %67 : vector<1x4xf32>
    %cst_40 = arith.constant 9.99999993E-9 : f32
    %72 = vector.broadcast %cst_40 : f32 to vector<1x4xf32>
    %73 = arith.maximumf %71, %72 : vector<1x4xf32>
    %74 = vector.broadcast %73 : vector<1x4xf32> to vector<8x4xf32>
    %75 = arith.mulf %70, %74 : vector<8x4xf32>
    %76 = arith.divf %63, %75 : vector<8x4xf32>
    %77 = vector.extract_strided_slice %3 {offsets = [0, 0], sizes = [1, 32], strides = [1, 1]} : vector<8x32xf32> to vector<1x32xf32>
    %78 = vector.broadcast %77 : vector<1x32xf32> to vector<8x32xf32>
    %79 = arith.mulf %7, %78 : vector<8x32xf32>
    %cst_41 = arith.constant dense<0.000000e+00> : vector<8x4xf32>
    %80 = tpu.matmul %79, %9, %cst_41 {dimension_numbers = #tpu.dot_dimension_numbers<[1], [0], [0], [1], [0, 0, 1, 1], [], []>} : vector<8x32xf32>, vector<32x4xf32>, vector<8x4xf32> -> vector<8x4xf32>
    %81 = arith.mulf %7, %7 : vector<8x32xf32>
    %cst_42 = arith.constant dense<0.000000e+00> : vector<8x4xf32>
    %82 = tpu.matmul %81, %9, %cst_42 {dimension_numbers = #tpu.dot_dimension_numbers<[1], [0], [0], [1], [0, 0, 1, 1], [], []>} : vector<8x32xf32>, vector<32x4xf32>, vector<8x4xf32> -> vector<8x4xf32>
    %83 = arith.mulf %77, %77 : vector<1x32xf32>
    %cst_43 = arith.constant dense<0.000000e+00> : vector<1x4xf32>
    %84 = tpu.matmul %83, %9, %cst_43 {dimension_numbers = #tpu.dot_dimension_numbers<[1], [0], [0], [1], [0, 0, 1, 1], [], []>} : vector<1x32xf32>, vector<32x4xf32>, vector<1x4xf32> -> vector<1x4xf32>
    %85 = math.sqrt %82 : vector<8x4xf32>
    %cst_44 = arith.constant 9.99999993E-9 : f32
    %86 = vector.broadcast %cst_44 : f32 to vector<8x4xf32>
    %87 = arith.maximumf %85, %86 : vector<8x4xf32>
    %88 = math.sqrt %84 : vector<1x4xf32>
    %cst_45 = arith.constant 9.99999993E-9 : f32
    %89 = vector.broadcast %cst_45 : f32 to vector<1x4xf32>
    %90 = arith.maximumf %88, %89 : vector<1x4xf32>
    %91 = vector.broadcast %90 : vector<1x4xf32> to vector<8x4xf32>
    %92 = arith.mulf %87, %91 : vector<8x4xf32>
    %93 = arith.divf %80, %92 : vector<8x4xf32>
    %94 = vector.shape_cast %16 : vector<8xf32> to vector<8x1xf32>
    %95 = vector.shape_cast %25 : vector<8xf32> to vector<1x8xf32>
    %96 = vector.broadcast %94 : vector<8x1xf32> to vector<8x8xf32>
    %97 = vector.broadcast %95 : vector<1x8xf32> to vector<8x8xf32>
    %98 = arith.mulf %96, %97 : vector<8x8xf32>
    %cst_46 = arith.constant 1.000000e+00 : f32
    %99 = vector.broadcast %cst_46 : f32 to vector<8x8xf32>
    %100 = arith.divf %99, %98 : vector<8x8xf32>
    %101 = vector.extract_strided_slice %10 {offsets = [0, 0], sizes = [1, 32], strides = [1, 1]} : vector<4x32xf32> to vector<1x32xf32>
    %102 = vector.broadcast %101 : vector<1x32xf32> to vector<8x32xf32>
    %103 = arith.mulf %1, %102 : vector<8x32xf32>
    %cst_47 = arith.constant dense<0.000000e+00> : vector<8x8xf32>
    %104 = tpu.matmul %103, %7, %cst_47 {dimension_numbers = #tpu.dot_dimension_numbers<[1], [1], [0], [0], [0, 0, 1, 0], [], []>} : vector<8x32xf32>, vector<8x32xf32>, vector<8x8xf32> -> vector<8x8xf32>
    %105 = arith.mulf %104, %100 : vector<8x8xf32>
    %cst_48 = arith.constant dense<0xFF800000> : vector<8xf32>
    %106 = vector.multi_reduction <maximumf>, %105, %cst_48 [1] : vector<8x8xf32> to vector<8xf32>
    %107 = vector.shape_cast %106 : vector<8xf32> to vector<8x1xf32>
    %cst_49 = arith.constant dense<0xFF800000> : vector<8xf32>
    %108 = vector.multi_reduction <maximumf>, %105, %cst_49 [0] : vector<8x8xf32> to vector<8xf32>
    %109 = vector.shape_cast %108 : vector<8xf32> to vector<1x8xf32>
    %110 = vector.extract_strided_slice %10 {offsets = [1, 0], sizes = [1, 32], strides = [1, 1]} : vector<4x32xf32> to vector<1x32xf32>
    %111 = vector.broadcast %110 : vector<1x32xf32> to vector<8x32xf32>
    %112 = arith.mulf %1, %111 : vector<8x32xf32>
    %cst_50 = arith.constant dense<0.000000e+00> : vector<8x8xf32>
    %113 = tpu.matmul %112, %7, %cst_50 {dimension_numbers = #tpu.dot_dimension_numbers<[1], [1], [0], [0], [0, 0, 1, 0], [], []>} : vector<8x32xf32>, vector<8x32xf32>, vector<8x8xf32> -> vector<8x8xf32>
    %114 = arith.mulf %113, %100 : vector<8x8xf32>
    %cst_51 = arith.constant dense<0xFF800000> : vector<8xf32>
    %115 = vector.multi_reduction <maximumf>, %114, %cst_51 [1] : vector<8x8xf32> to vector<8xf32>
    %116 = vector.shape_cast %115 : vector<8xf32> to vector<8x1xf32>
    %cst_52 = arith.constant dense<0xFF800000> : vector<8xf32>
    %117 = vector.multi_reduction <maximumf>, %114, %cst_52 [0] : vector<8x8xf32> to vector<8xf32>
    %118 = vector.shape_cast %117 : vector<8xf32> to vector<1x8xf32>
    %119 = vector.extract_strided_slice %10 {offsets = [2, 0], sizes = [1, 32], strides = [1, 1]} : vector<4x32xf32> to vector<1x32xf32>
    %120 = vector.broadcast %119 : vector<1x32xf32> to vector<8x32xf32>
    %121 = arith.mulf %1, %120 : vector<8x32xf32>
    %cst_53 = arith.constant dense<0.000000e+00> : vector<8x8xf32>
    %122 = tpu.matmul %121, %7, %cst_53 {dimension_numbers = #tpu.dot_dimension_numbers<[1], [1], [0], [0], [0, 0, 1, 0], [], []>} : vector<8x32xf32>, vector<8x32xf32>, vector<8x8xf32> -> vector<8x8xf32>
    %123 = arith.mulf %122, %100 : vector<8x8xf32>
    %cst_54 = arith.constant dense<0xFF800000> : vector<8xf32>
    %124 = vector.multi_reduction <maximumf>, %123, %cst_54 [1] : vector<8x8xf32> to vector<8xf32>
    %125 = vector.shape_cast %124 : vector<8xf32> to vector<8x1xf32>
    %cst_55 = arith.constant dense<0xFF800000> : vector<8xf32>
    %126 = vector.multi_reduction <maximumf>, %123, %cst_55 [0] : vector<8x8xf32> to vector<8xf32>
    %127 = vector.shape_cast %126 : vector<8xf32> to vector<1x8xf32>
    %128 = vector.extract_strided_slice %10 {offsets = [3, 0], sizes = [1, 32], strides = [1, 1]} : vector<4x32xf32> to vector<1x32xf32>
    %129 = vector.broadcast %128 : vector<1x32xf32> to vector<8x32xf32>
    %130 = arith.mulf %1, %129 : vector<8x32xf32>
    %cst_56 = arith.constant dense<0.000000e+00> : vector<8x8xf32>
    %131 = tpu.matmul %130, %7, %cst_56 {dimension_numbers = #tpu.dot_dimension_numbers<[1], [1], [0], [0], [0, 0, 1, 0], [], []>} : vector<8x32xf32>, vector<8x32xf32>, vector<8x8xf32> -> vector<8x8xf32>
    %132 = arith.mulf %131, %100 : vector<8x8xf32>
    %cst_57 = arith.constant dense<0xFF800000> : vector<8xf32>
    %133 = vector.multi_reduction <maximumf>, %132, %cst_57 [1] : vector<8x8xf32> to vector<8xf32>
    %134 = vector.shape_cast %133 : vector<8xf32> to vector<8x1xf32>
    %cst_58 = arith.constant dense<0xFF800000> : vector<8xf32>
    %135 = vector.multi_reduction <maximumf>, %132, %cst_58 [0] : vector<8x8xf32> to vector<8xf32>
    %136 = vector.shape_cast %135 : vector<8xf32> to vector<1x8xf32>
    %137 = tpu.concatenate %107, %116, %125, %134 in 1 : vector<8x1xf32>, vector<8x1xf32>, vector<8x1xf32>, vector<8x1xf32> -> vector<8x4xf32>
    %138 = tpu.concatenate %109, %118, %127, %136 in 0 : vector<1x8xf32>, vector<1x8xf32>, vector<1x8xf32>, vector<1x8xf32> -> vector<4x8xf32>
    %139 = tpu.transpose %138, [1, 0] : vector<4x8xf32> -> vector<8x4xf32>
    %140 = vector.shape_cast %19 : vector<8xf32> to vector<8x1xf32>
    %141 = vector.shape_cast %25 : vector<8xf32> to vector<1x8xf32>
    %142 = vector.broadcast %140 : vector<8x1xf32> to vector<8x8xf32>
    %143 = vector.broadcast %141 : vector<1x8xf32> to vector<8x8xf32>
    %144 = arith.mulf %142, %143 : vector<8x8xf32>
    %cst_59 = arith.constant 1.000000e+00 : f32
    %145 = vector.broadcast %cst_59 : f32 to vector<8x8xf32>
    %146 = arith.divf %145, %144 : vector<8x8xf32>
    %147 = vector.extract_strided_slice %11 {offsets = [0, 0], sizes = [1, 32], strides = [1, 1]} : vector<4x32xf32> to vector<1x32xf32>
    %148 = vector.broadcast %147 : vector<1x32xf32> to vector<8x32xf32>
    %149 = arith.mulf %3, %148 : vector<8x32xf32>
    %cst_60 = arith.constant dense<0.000000e+00> : vector<8x8xf32>
    %150 = tpu.matmul %149, %7, %cst_60 {dimension_numbers = #tpu.dot_dimension_numbers<[1], [1], [0], [0], [0, 0, 1, 0], [], []>} : vector<8x32xf32>, vector<8x32xf32>, vector<8x8xf32> -> vector<8x8xf32>
    %151 = arith.mulf %150, %146 : vector<8x8xf32>
    %cst_61 = arith.constant dense<0xFF800000> : vector<8xf32>
    %152 = vector.multi_reduction <maximumf>, %151, %cst_61 [1] : vector<8x8xf32> to vector<8xf32>
    %153 = vector.shape_cast %152 : vector<8xf32> to vector<8x1xf32>
    %cst_62 = arith.constant dense<0xFF800000> : vector<8xf32>
    %154 = vector.multi_reduction <maximumf>, %151, %cst_62 [0] : vector<8x8xf32> to vector<8xf32>
    %155 = vector.shape_cast %154 : vector<8xf32> to vector<1x8xf32>
    %156 = vector.extract_strided_slice %11 {offsets = [1, 0], sizes = [1, 32], strides = [1, 1]} : vector<4x32xf32> to vector<1x32xf32>
    %157 = vector.broadcast %156 : vector<1x32xf32> to vector<8x32xf32>
    %158 = arith.mulf %3, %157 : vector<8x32xf32>
    %cst_63 = arith.constant dense<0.000000e+00> : vector<8x8xf32>
    %159 = tpu.matmul %158, %7, %cst_63 {dimension_numbers = #tpu.dot_dimension_numbers<[1], [1], [0], [0], [0, 0, 1, 0], [], []>} : vector<8x32xf32>, vector<8x32xf32>, vector<8x8xf32> -> vector<8x8xf32>
    %160 = arith.mulf %159, %146 : vector<8x8xf32>
    %cst_64 = arith.constant dense<0xFF800000> : vector<8xf32>
    %161 = vector.multi_reduction <maximumf>, %160, %cst_64 [1] : vector<8x8xf32> to vector<8xf32>
    %162 = vector.shape_cast %161 : vector<8xf32> to vector<8x1xf32>
    %cst_65 = arith.constant dense<0xFF800000> : vector<8xf32>
    %163 = vector.multi_reduction <maximumf>, %160, %cst_65 [0] : vector<8x8xf32> to vector<8xf32>
    %164 = vector.shape_cast %163 : vector<8xf32> to vector<1x8xf32>
    %165 = vector.extract_strided_slice %11 {offsets = [2, 0], sizes = [1, 32], strides = [1, 1]} : vector<4x32xf32> to vector<1x32xf32>
    %166 = vector.broadcast %165 : vector<1x32xf32> to vector<8x32xf32>
    %167 = arith.mulf %3, %166 : vector<8x32xf32>
    %cst_66 = arith.constant dense<0.000000e+00> : vector<8x8xf32>
    %168 = tpu.matmul %167, %7, %cst_66 {dimension_numbers = #tpu.dot_dimension_numbers<[1], [1], [0], [0], [0, 0, 1, 0], [], []>} : vector<8x32xf32>, vector<8x32xf32>, vector<8x8xf32> -> vector<8x8xf32>
    %169 = arith.mulf %168, %146 : vector<8x8xf32>
    %cst_67 = arith.constant dense<0xFF800000> : vector<8xf32>
    %170 = vector.multi_reduction <maximumf>, %169, %cst_67 [1] : vector<8x8xf32> to vector<8xf32>
    %171 = vector.shape_cast %170 : vector<8xf32> to vector<8x1xf32>
    %cst_68 = arith.constant dense<0xFF800000> : vector<8xf32>
    %172 = vector.multi_reduction <maximumf>, %169, %cst_68 [0] : vector<8x8xf32> to vector<8xf32>
    %173 = vector.shape_cast %172 : vector<8xf32> to vector<1x8xf32>
    %174 = vector.extract_strided_slice %11 {offsets = [3, 0], sizes = [1, 32], strides = [1, 1]} : vector<4x32xf32> to vector<1x32xf32>
    %175 = vector.broadcast %174 : vector<1x32xf32> to vector<8x32xf32>
    %176 = arith.mulf %3, %175 : vector<8x32xf32>
    %cst_69 = arith.constant dense<0.000000e+00> : vector<8x8xf32>
    %177 = tpu.matmul %176, %7, %cst_69 {dimension_numbers = #tpu.dot_dimension_numbers<[1], [1], [0], [0], [0, 0, 1, 0], [], []>} : vector<8x32xf32>, vector<8x32xf32>, vector<8x8xf32> -> vector<8x8xf32>
    %178 = arith.mulf %177, %146 : vector<8x8xf32>
    %cst_70 = arith.constant dense<0xFF800000> : vector<8xf32>
    %179 = vector.multi_reduction <maximumf>, %178, %cst_70 [1] : vector<8x8xf32> to vector<8xf32>
    %180 = vector.shape_cast %179 : vector<8xf32> to vector<8x1xf32>
    %cst_71 = arith.constant dense<0xFF800000> : vector<8xf32>
    %181 = vector.multi_reduction <maximumf>, %178, %cst_71 [0] : vector<8x8xf32> to vector<8xf32>
    %182 = vector.shape_cast %181 : vector<8xf32> to vector<1x8xf32>
    %183 = tpu.concatenate %153, %162, %171, %180 in 1 : vector<8x1xf32>, vector<8x1xf32>, vector<8x1xf32>, vector<8x1xf32> -> vector<8x4xf32>
    %184 = tpu.concatenate %155, %164, %173, %182 in 0 : vector<1x8xf32>, vector<1x8xf32>, vector<1x8xf32>, vector<1x8xf32> -> vector<4x8xf32>
    %185 = tpu.transpose %184, [1, 0] : vector<4x8xf32> -> vector<8x4xf32>
    %cst_72 = arith.constant dense<0.000000e+00> : vector<8x8xf32>
    %186 = tpu.matmul %1, %5, %cst_72 {dimension_numbers = #tpu.dot_dimension_numbers<[1], [1], [0], [0], [0, 0, 1, 0], [], []>} : vector<8x32xf32>, vector<8x32xf32>, vector<8x8xf32> -> vector<8x8xf32>
    %187 = vector.shape_cast %16 : vector<8xf32> to vector<8x1xf32>
    %188 = vector.shape_cast %22 : vector<8xf32> to vector<1x8xf32>
    %189 = vector.broadcast %187 : vector<8x1xf32> to vector<8x8xf32>
    %190 = vector.broadcast %188 : vector<1x8xf32> to vector<8x8xf32>
    %191 = arith.mulf %189, %190 : vector<8x8xf32>
    %192 = arith.divf %186, %191 : vector<8x8xf32>
    %cst_73 = arith.constant dense<0.000000e+00> : vector<8x8xf32>
    %193 = tpu.matmul %3, %7, %cst_73 {dimension_numbers = #tpu.dot_dimension_numbers<[1], [1], [0], [0], [0, 0, 1, 0], [], []>} : vector<8x32xf32>, vector<8x32xf32>, vector<8x8xf32> -> vector<8x8xf32>
    %194 = vector.shape_cast %19 : vector<8xf32> to vector<8x1xf32>
    %195 = vector.shape_cast %25 : vector<8xf32> to vector<1x8xf32>
    %196 = vector.broadcast %194 : vector<8x1xf32> to vector<8x8xf32>
    %197 = vector.broadcast %195 : vector<1x8xf32> to vector<8x8xf32>
    %198 = arith.mulf %196, %197 : vector<8x8xf32>
    %199 = arith.divf %193, %198 : vector<8x8xf32>
    %cst_74 = arith.constant dense<0.000000e+00> : vector<8x32xf32>
    %200 = tpu.matmul %192, %1, %cst_74 {dimension_numbers = #tpu.dot_dimension_numbers<[0], [0], [1], [1], [0, 1, 1, 1], [], []>} : vector<8x8xf32>, vector<8x32xf32>, vector<8x32xf32> -> vector<8x32xf32>
    %cst_75 = arith.constant dense<0.000000e+00> : vector<8xf32>
    %201 = vector.multi_reduction <add>, %192, %cst_75 [0] : vector<8x8xf32> to vector<8xf32>
    %202 = vector.shape_cast %201 : vector<8xf32> to vector<8x1xf32>
    %203 = vector.broadcast %202 : vector<8x1xf32> to vector<8x32xf32>
    %204 = arith.divf %200, %203 : vector<8x32xf32>
    %cst_76 = arith.constant dense<0.000000e+00> : vector<8x32xf32>
    %205 = tpu.matmul %199, %1, %cst_76 {dimension_numbers = #tpu.dot_dimension_numbers<[0], [0], [1], [1], [0, 1, 1, 1], [], []>} : vector<8x8xf32>, vector<8x32xf32>, vector<8x32xf32> -> vector<8x32xf32>
    %cst_77 = arith.constant dense<0.000000e+00> : vector<8xf32>
    %206 = vector.multi_reduction <add>, %199, %cst_77 [0] : vector<8x8xf32> to vector<8xf32>
    %207 = vector.shape_cast %206 : vector<8xf32> to vector<8x1xf32>
    %208 = vector.broadcast %207 : vector<8x1xf32> to vector<8x32xf32>
    %209 = arith.divf %205, %208 : vector<8x32xf32>
    %cst_78 = arith.constant dense<0.000000e+00> : vector<8x32xf32>
    %210 = tpu.matmul %192, %5, %cst_78 {dimension_numbers = #tpu.dot_dimension_numbers<[1], [0], [0], [1], [0, 0, 1, 1], [], []>} : vector<8x8xf32>, vector<8x32xf32>, vector<8x32xf32> -> vector<8x32xf32>
    %cst_79 = arith.constant dense<0.000000e+00> : vector<8xf32>
    %211 = vector.multi_reduction <add>, %192, %cst_79 [1] : vector<8x8xf32> to vector<8xf32>
    %212 = vector.shape_cast %211 : vector<8xf32> to vector<8x1xf32>
    %213 = vector.broadcast %212 : vector<8x1xf32> to vector<8x32xf32>
    %214 = arith.divf %210, %213 : vector<8x32xf32>
    %cst_80 = arith.constant dense<0.000000e+00> : vector<8x32xf32>
    %215 = tpu.matmul %199, %5, %cst_80 {dimension_numbers = #tpu.dot_dimension_numbers<[1], [0], [0], [1], [0, 0, 1, 1], [], []>} : vector<8x8xf32>, vector<8x32xf32>, vector<8x32xf32> -> vector<8x32xf32>
    %cst_81 = arith.constant dense<0.000000e+00> : vector<8xf32>
    %216 = vector.multi_reduction <add>, %199, %cst_81 [1] : vector<8x8xf32> to vector<8xf32>
    %217 = vector.shape_cast %216 : vector<8xf32> to vector<8x1xf32>
    %218 = vector.broadcast %217 : vector<8x1xf32> to vector<8x32xf32>
    %219 = arith.divf %215, %218 : vector<8x32xf32>
    %220 = arith.mulf %1, %214 : vector<8x32xf32>
    %cst_82 = arith.constant dense<0.000000e+00> : vector<8x4xf32>
    %221 = tpu.matmul %220, %12, %cst_82 {dimension_numbers = #tpu.dot_dimension_numbers<[1], [0], [0], [1], [0, 0, 1, 1], [], []>} : vector<8x32xf32>, vector<32x4xf32>, vector<8x4xf32> -> vector<8x4xf32>
    %222 = arith.mulf %1, %1 : vector<8x32xf32>
    %cst_83 = arith.constant dense<0.000000e+00> : vector<8x4xf32>
    %223 = tpu.matmul %222, %12, %cst_83 {dimension_numbers = #tpu.dot_dimension_numbers<[1], [0], [0], [1], [0, 0, 1, 1], [], []>} : vector<8x32xf32>, vector<32x4xf32>, vector<8x4xf32> -> vector<8x4xf32>
    %224 = arith.mulf %214, %214 : vector<8x32xf32>
    %cst_84 = arith.constant dense<0.000000e+00> : vector<8x4xf32>
    %225 = tpu.matmul %224, %12, %cst_84 {dimension_numbers = #tpu.dot_dimension_numbers<[1], [0], [0], [1], [0, 0, 1, 1], [], []>} : vector<8x32xf32>, vector<32x4xf32>, vector<8x4xf32> -> vector<8x4xf32>
    %226 = math.sqrt %223 : vector<8x4xf32>
    %cst_85 = arith.constant 9.99999993E-9 : f32
    %227 = vector.broadcast %cst_85 : f32 to vector<8x4xf32>
    %228 = arith.maximumf %226, %227 : vector<8x4xf32>
    %229 = math.sqrt %225 : vector<8x4xf32>
    %cst_86 = arith.constant 9.99999993E-9 : f32
    %230 = vector.broadcast %cst_86 : f32 to vector<8x4xf32>
    %231 = arith.maximumf %229, %230 : vector<8x4xf32>
    %232 = arith.mulf %228, %231 : vector<8x4xf32>
    %233 = arith.divf %221, %232 : vector<8x4xf32>
    %234 = arith.mulf %3, %219 : vector<8x32xf32>
    %cst_87 = arith.constant dense<0.000000e+00> : vector<8x4xf32>
    %235 = tpu.matmul %234, %12, %cst_87 {dimension_numbers = #tpu.dot_dimension_numbers<[1], [0], [0], [1], [0, 0, 1, 1], [], []>} : vector<8x32xf32>, vector<32x4xf32>, vector<8x4xf32> -> vector<8x4xf32>
    %236 = arith.mulf %3, %3 : vector<8x32xf32>
    %cst_88 = arith.constant dense<0.000000e+00> : vector<8x4xf32>
    %237 = tpu.matmul %236, %12, %cst_88 {dimension_numbers = #tpu.dot_dimension_numbers<[1], [0], [0], [1], [0, 0, 1, 1], [], []>} : vector<8x32xf32>, vector<32x4xf32>, vector<8x4xf32> -> vector<8x4xf32>
    %238 = arith.mulf %219, %219 : vector<8x32xf32>
    %cst_89 = arith.constant dense<0.000000e+00> : vector<8x4xf32>
    %239 = tpu.matmul %238, %12, %cst_89 {dimension_numbers = #tpu.dot_dimension_numbers<[1], [0], [0], [1], [0, 0, 1, 1], [], []>} : vector<8x32xf32>, vector<32x4xf32>, vector<8x4xf32> -> vector<8x4xf32>
    %240 = math.sqrt %237 : vector<8x4xf32>
    %cst_90 = arith.constant 9.99999993E-9 : f32
    %241 = vector.broadcast %cst_90 : f32 to vector<8x4xf32>
    %242 = arith.maximumf %240, %241 : vector<8x4xf32>
    %243 = math.sqrt %239 : vector<8x4xf32>
    %cst_91 = arith.constant 9.99999993E-9 : f32
    %244 = vector.broadcast %cst_91 : f32 to vector<8x4xf32>
    %245 = arith.maximumf %243, %244 : vector<8x4xf32>
    %246 = arith.mulf %242, %245 : vector<8x4xf32>
    %247 = arith.divf %235, %246 : vector<8x4xf32>
    %248 = arith.mulf %5, %204 : vector<8x32xf32>
    %cst_92 = arith.constant dense<0.000000e+00> : vector<8x4xf32>
    %249 = tpu.matmul %248, %12, %cst_92 {dimension_numbers = #tpu.dot_dimension_numbers<[1], [0], [0], [1], [0, 0, 1, 1], [], []>} : vector<8x32xf32>, vector<32x4xf32>, vector<8x4xf32> -> vector<8x4xf32>
    %250 = arith.mulf %5, %5 : vector<8x32xf32>
    %cst_93 = arith.constant dense<0.000000e+00> : vector<8x4xf32>
    %251 = tpu.matmul %250, %12, %cst_93 {dimension_numbers = #tpu.dot_dimension_numbers<[1], [0], [0], [1], [0, 0, 1, 1], [], []>} : vector<8x32xf32>, vector<32x4xf32>, vector<8x4xf32> -> vector<8x4xf32>
    %252 = arith.mulf %204, %204 : vector<8x32xf32>
    %cst_94 = arith.constant dense<0.000000e+00> : vector<8x4xf32>
    %253 = tpu.matmul %252, %12, %cst_94 {dimension_numbers = #tpu.dot_dimension_numbers<[1], [0], [0], [1], [0, 0, 1, 1], [], []>} : vector<8x32xf32>, vector<32x4xf32>, vector<8x4xf32> -> vector<8x4xf32>
    %254 = math.sqrt %251 : vector<8x4xf32>
    %cst_95 = arith.constant 9.99999993E-9 : f32
    %255 = vector.broadcast %cst_95 : f32 to vector<8x4xf32>
    %256 = arith.maximumf %254, %255 : vector<8x4xf32>
    %257 = math.sqrt %253 : vector<8x4xf32>
    %cst_96 = arith.constant 9.99999993E-9 : f32
    %258 = vector.broadcast %cst_96 : f32 to vector<8x4xf32>
    %259 = arith.maximumf %257, %258 : vector<8x4xf32>
    %260 = arith.mulf %256, %259 : vector<8x4xf32>
    %261 = arith.divf %249, %260 : vector<8x4xf32>
    %262 = arith.mulf %7, %209 : vector<8x32xf32>
    %cst_97 = arith.constant dense<0.000000e+00> : vector<8x4xf32>
    %263 = tpu.matmul %262, %12, %cst_97 {dimension_numbers = #tpu.dot_dimension_numbers<[1], [0], [0], [1], [0, 0, 1, 1], [], []>} : vector<8x32xf32>, vector<32x4xf32>, vector<8x4xf32> -> vector<8x4xf32>
    %264 = arith.mulf %7, %7 : vector<8x32xf32>
    %cst_98 = arith.constant dense<0.000000e+00> : vector<8x4xf32>
    %265 = tpu.matmul %264, %12, %cst_98 {dimension_numbers = #tpu.dot_dimension_numbers<[1], [0], [0], [1], [0, 0, 1, 1], [], []>} : vector<8x32xf32>, vector<32x4xf32>, vector<8x4xf32> -> vector<8x4xf32>
    %266 = arith.mulf %209, %209 : vector<8x32xf32>
    %cst_99 = arith.constant dense<0.000000e+00> : vector<8x4xf32>
    %267 = tpu.matmul %266, %12, %cst_99 {dimension_numbers = #tpu.dot_dimension_numbers<[1], [0], [0], [1], [0, 0, 1, 1], [], []>} : vector<8x32xf32>, vector<32x4xf32>, vector<8x4xf32> -> vector<8x4xf32>
    %268 = math.sqrt %265 : vector<8x4xf32>
    %cst_100 = arith.constant 9.99999993E-9 : f32
    %269 = vector.broadcast %cst_100 : f32 to vector<8x4xf32>
    %270 = arith.maximumf %268, %269 : vector<8x4xf32>
    %271 = math.sqrt %267 : vector<8x4xf32>
    %cst_101 = arith.constant 9.99999993E-9 : f32
    %272 = vector.broadcast %cst_101 : f32 to vector<8x4xf32>
    %273 = arith.maximumf %271, %272 : vector<8x4xf32>
    %274 = arith.mulf %270, %273 : vector<8x4xf32>
    %275 = arith.divf %263, %274 : vector<8x4xf32>
    %276 = vector.shape_cast %1 : vector<8x32xf32> to vector<8x1x32xf32>
    %277 = vector.shape_cast %192 : vector<8x8xf32> to vector<8x8x1xf32>
    %278 = vector.broadcast %276 : vector<8x1x32xf32> to vector<8x8x32xf32>
    %279 = vector.broadcast %277 : vector<8x8x1xf32> to vector<8x8x32xf32>
    %280 = arith.mulf %278, %279 : vector<8x8x32xf32>
    %281 = vector.shape_cast %1 : vector<8x32xf32> to vector<8x1x32xf32>
    %282 = vector.shape_cast %199 : vector<8x8xf32> to vector<8x8x1xf32>
    %283 = vector.broadcast %281 : vector<8x1x32xf32> to vector<8x8x32xf32>
    %284 = vector.broadcast %282 : vector<8x8x1xf32> to vector<8x8x32xf32>
    %285 = arith.mulf %283, %284 : vector<8x8x32xf32>
    %286 = vector.shape_cast %5 : vector<8x32xf32> to vector<1x8x32xf32>
    %287 = vector.shape_cast %192 : vector<8x8xf32> to vector<8x8x1xf32>
    %288 = vector.broadcast %286 : vector<1x8x32xf32> to vector<8x8x32xf32>
    %289 = vector.broadcast %287 : vector<8x8x1xf32> to vector<8x8x32xf32>
    %290 = arith.mulf %288, %289 : vector<8x8x32xf32>
    %291 = vector.shape_cast %5 : vector<8x32xf32> to vector<1x8x32xf32>
    %292 = vector.shape_cast %199 : vector<8x8xf32> to vector<8x8x1xf32>
    %293 = vector.broadcast %291 : vector<1x8x32xf32> to vector<8x8x32xf32>
    %294 = vector.broadcast %292 : vector<8x8x1xf32> to vector<8x8x32xf32>
    %295 = arith.mulf %293, %294 : vector<8x8x32xf32>
    %cst_102 = arith.constant dense<0xFF800000> : vector<8x32xf32>
    %296 = vector.multi_reduction <maximumf>, %280, %cst_102 [0] : vector<8x8x32xf32> to vector<8x32xf32>
    %cst_103 = arith.constant dense<0xFF800000> : vector<8x32xf32>
    %297 = vector.multi_reduction <maximumf>, %285, %cst_103 [0] : vector<8x8x32xf32> to vector<8x32xf32>
    %cst_104 = arith.constant dense<0xFF800000> : vector<8x32xf32>
    %298 = vector.multi_reduction <maximumf>, %290, %cst_104 [1] : vector<8x8x32xf32> to vector<8x32xf32>
    %cst_105 = arith.constant dense<0xFF800000> : vector<8x32xf32>
    %299 = vector.multi_reduction <maximumf>, %295, %cst_105 [1] : vector<8x8x32xf32> to vector<8x32xf32>
    %300 = arith.mulf %1, %298 : vector<8x32xf32>
    %cst_106 = arith.constant dense<0.000000e+00> : vector<8x4xf32>
    %301 = tpu.matmul %300, %13, %cst_106 {dimension_numbers = #tpu.dot_dimension_numbers<[1], [0], [0], [1], [0, 0, 1, 1], [], []>} : vector<8x32xf32>, vector<32x4xf32>, vector<8x4xf32> -> vector<8x4xf32>
    %302 = arith.mulf %1, %1 : vector<8x32xf32>
    %cst_107 = arith.constant dense<0.000000e+00> : vector<8x4xf32>
    %303 = tpu.matmul %302, %13, %cst_107 {dimension_numbers = #tpu.dot_dimension_numbers<[1], [0], [0], [1], [0, 0, 1, 1], [], []>} : vector<8x32xf32>, vector<32x4xf32>, vector<8x4xf32> -> vector<8x4xf32>
    %304 = arith.mulf %298, %298 : vector<8x32xf32>
    %cst_108 = arith.constant dense<0.000000e+00> : vector<8x4xf32>
    %305 = tpu.matmul %304, %13, %cst_108 {dimension_numbers = #tpu.dot_dimension_numbers<[1], [0], [0], [1], [0, 0, 1, 1], [], []>} : vector<8x32xf32>, vector<32x4xf32>, vector<8x4xf32> -> vector<8x4xf32>
    %306 = math.sqrt %303 : vector<8x4xf32>
    %cst_109 = arith.constant 9.99999993E-9 : f32
    %307 = vector.broadcast %cst_109 : f32 to vector<8x4xf32>
    %308 = arith.maximumf %306, %307 : vector<8x4xf32>
    %309 = math.sqrt %305 : vector<8x4xf32>
    %cst_110 = arith.constant 9.99999993E-9 : f32
    %310 = vector.broadcast %cst_110 : f32 to vector<8x4xf32>
    %311 = arith.maximumf %309, %310 : vector<8x4xf32>
    %312 = arith.mulf %308, %311 : vector<8x4xf32>
    %313 = arith.divf %301, %312 : vector<8x4xf32>
    %314 = arith.mulf %3, %299 : vector<8x32xf32>
    %cst_111 = arith.constant dense<0.000000e+00> : vector<8x4xf32>
    %315 = tpu.matmul %314, %13, %cst_111 {dimension_numbers = #tpu.dot_dimension_numbers<[1], [0], [0], [1], [0, 0, 1, 1], [], []>} : vector<8x32xf32>, vector<32x4xf32>, vector<8x4xf32> -> vector<8x4xf32>
    %316 = arith.mulf %3, %3 : vector<8x32xf32>
    %cst_112 = arith.constant dense<0.000000e+00> : vector<8x4xf32>
    %317 = tpu.matmul %316, %13, %cst_112 {dimension_numbers = #tpu.dot_dimension_numbers<[1], [0], [0], [1], [0, 0, 1, 1], [], []>} : vector<8x32xf32>, vector<32x4xf32>, vector<8x4xf32> -> vector<8x4xf32>
    %318 = arith.mulf %299, %299 : vector<8x32xf32>
    %cst_113 = arith.constant dense<0.000000e+00> : vector<8x4xf32>
    %319 = tpu.matmul %318, %13, %cst_113 {dimension_numbers = #tpu.dot_dimension_numbers<[1], [0], [0], [1], [0, 0, 1, 1], [], []>} : vector<8x32xf32>, vector<32x4xf32>, vector<8x4xf32> -> vector<8x4xf32>
    %320 = math.sqrt %317 : vector<8x4xf32>
    %cst_114 = arith.constant 9.99999993E-9 : f32
    %321 = vector.broadcast %cst_114 : f32 to vector<8x4xf32>
    %322 = arith.maximumf %320, %321 : vector<8x4xf32>
    %323 = math.sqrt %319 : vector<8x4xf32>
    %cst_115 = arith.constant 9.99999993E-9 : f32
    %324 = vector.broadcast %cst_115 : f32 to vector<8x4xf32>
    %325 = arith.maximumf %323, %324 : vector<8x4xf32>
    %326 = arith.mulf %322, %325 : vector<8x4xf32>
    %327 = arith.divf %315, %326 : vector<8x4xf32>
    %328 = arith.mulf %5, %296 : vector<8x32xf32>
    %cst_116 = arith.constant dense<0.000000e+00> : vector<8x4xf32>
    %329 = tpu.matmul %328, %13, %cst_116 {dimension_numbers = #tpu.dot_dimension_numbers<[1], [0], [0], [1], [0, 0, 1, 1], [], []>} : vector<8x32xf32>, vector<32x4xf32>, vector<8x4xf32> -> vector<8x4xf32>
    %330 = arith.mulf %5, %5 : vector<8x32xf32>
    %cst_117 = arith.constant dense<0.000000e+00> : vector<8x4xf32>
    %331 = tpu.matmul %330, %13, %cst_117 {dimension_numbers = #tpu.dot_dimension_numbers<[1], [0], [0], [1], [0, 0, 1, 1], [], []>} : vector<8x32xf32>, vector<32x4xf32>, vector<8x4xf32> -> vector<8x4xf32>
    %332 = arith.mulf %296, %296 : vector<8x32xf32>
    %cst_118 = arith.constant dense<0.000000e+00> : vector<8x4xf32>
    %333 = tpu.matmul %332, %13, %cst_118 {dimension_numbers = #tpu.dot_dimension_numbers<[1], [0], [0], [1], [0, 0, 1, 1], [], []>} : vector<8x32xf32>, vector<32x4xf32>, vector<8x4xf32> -> vector<8x4xf32>
    %334 = math.sqrt %331 : vector<8x4xf32>
    %cst_119 = arith.constant 9.99999993E-9 : f32
    %335 = vector.broadcast %cst_119 : f32 to vector<8x4xf32>
    %336 = arith.maximumf %334, %335 : vector<8x4xf32>
    %337 = math.sqrt %333 : vector<8x4xf32>
    %cst_120 = arith.constant 9.99999993E-9 : f32
    %338 = vector.broadcast %cst_120 : f32 to vector<8x4xf32>
    %339 = arith.maximumf %337, %338 : vector<8x4xf32>
    %340 = arith.mulf %336, %339 : vector<8x4xf32>
    %341 = arith.divf %329, %340 : vector<8x4xf32>
    %342 = arith.mulf %7, %297 : vector<8x32xf32>
    %cst_121 = arith.constant dense<0.000000e+00> : vector<8x4xf32>
    %343 = tpu.matmul %342, %13, %cst_121 {dimension_numbers = #tpu.dot_dimension_numbers<[1], [0], [0], [1], [0, 0, 1, 1], [], []>} : vector<8x32xf32>, vector<32x4xf32>, vector<8x4xf32> -> vector<8x4xf32>
    %344 = arith.mulf %7, %7 : vector<8x32xf32>
    %cst_122 = arith.constant dense<0.000000e+00> : vector<8x4xf32>
    %345 = tpu.matmul %344, %13, %cst_122 {dimension_numbers = #tpu.dot_dimension_numbers<[1], [0], [0], [1], [0, 0, 1, 1], [], []>} : vector<8x32xf32>, vector<32x4xf32>, vector<8x4xf32> -> vector<8x4xf32>
    %346 = arith.mulf %297, %297 : vector<8x32xf32>
    %cst_123 = arith.constant dense<0.000000e+00> : vector<8x4xf32>
    %347 = tpu.matmul %346, %13, %cst_123 {dimension_numbers = #tpu.dot_dimension_numbers<[1], [0], [0], [1], [0, 0, 1, 1], [], []>} : vector<8x32xf32>, vector<32x4xf32>, vector<8x4xf32> -> vector<8x4xf32>
    %348 = math.sqrt %345 : vector<8x4xf32>
    %cst_124 = arith.constant 9.99999993E-9 : f32
    %349 = vector.broadcast %cst_124 : f32 to vector<8x4xf32>
    %350 = arith.maximumf %348, %349 : vector<8x4xf32>
    %351 = math.sqrt %347 : vector<8x4xf32>
    %cst_125 = arith.constant 9.99999993E-9 : f32
    %352 = vector.broadcast %cst_125 : f32 to vector<8x4xf32>
    %353 = arith.maximumf %351, %352 : vector<8x4xf32>
    %354 = arith.mulf %350, %353 : vector<8x4xf32>
    %355 = arith.divf %343, %354 : vector<8x4xf32>
    %356 = tpu.concatenate %42, %137, %233, %313, %59, %183, %247, %327 in 1 : vector<8x4xf32>, vector<8x4xf32>, vector<8x4xf32>, vector<8x4xf32>, vector<8x4xf32>, vector<8x4xf32>, vector<8x4xf32>, vector<8x4xf32> -> vector<8x32xf32>
    %c0_126 = arith.constant 0 : index
    %c0_127 = arith.constant 0 : index
    %c0_128 = arith.constant 0 : index
    %357 = vector.load %arg11[%c0_126, %c0_127, %c0_128] : memref<1x8x32xf32, #tpu.memory_space<vmem>>, vector<1x8x32xf32>
    %358 = vector.shape_cast %357 : vector<1x8x32xf32> to vector<8x32xf32>
    %359 = vector.shape_cast %356 : vector<8x32xf32> to vector<1x8x32xf32>
    tpu.vector_store %arg11[%c0_126, %c0_127, %c0_128], %359 {strides = array<i32>} : memref<1x8x32xf32, #tpu.memory_space<vmem>>, vector<1x8x32xf32>,
    %360 = tpu.concatenate %76, %139, %261, %341, %93, %185, %275, %355 in 1 : vector<8x4xf32>, vector<8x4xf32>, vector<8x4xf32>, vector<8x4xf32>, vector<8x4xf32>, vector<8x4xf32>, vector<8x4xf32>, vector<8x4xf32> -> vector<8x32xf32>
    %c0_129 = arith.constant 0 : index
    %c0_130 = arith.constant 0 : index
    %c0_131 = arith.constant 0 : index
    %361 = vector.load %arg12[%c0_129, %c0_130, %c0_131] : memref<1x8x32xf32, #tpu.memory_space<vmem>>, vector<1x8x32xf32>
    %362 = vector.shape_cast %361 : vector<1x8x32xf32> to vector<8x32xf32>
    %363 = vector.shape_cast %360 : vector<8x32xf32> to vector<1x8x32xf32>
    tpu.vector_store %arg12[%c0_129, %c0_130, %c0_131], %363 {strides = array<i32>} : memref<1x8x32xf32, #tpu.memory_space<vmem>>, vector<1x8x32xf32>,
    return
  }
  func.func @transform_0(%arg0: i32) -> (i32, i32, i32) {
    %c0_i32 = arith.constant 0 : i32
    %c0_i32_0 = arith.constant 0 : i32
    %c0_i32_1 = arith.constant 0 : i32
    return %arg0, %c0_i32, %c0_i32_0 : i32, i32, i32
  }
  func.func @transform_1(%arg0: i32) -> (i32, i32, i32) {
    %c0_i32 = arith.constant 0 : i32
    %c0_i32_0 = arith.constant 0 : i32
    %c0_i32_1 = arith.constant 0 : i32
    return %arg0, %c0_i32, %c0_i32_0 : i32, i32, i32
  }
  func.func @transform_2(%arg0: i32) -> (i32, i32, i32) {
    %c0_i32 = arith.constant 0 : i32
    %c0_i32_0 = arith.constant 0 : i32
    %c0_i32_1 = arith.constant 0 : i32
    return %arg0, %c0_i32, %c0_i32_0 : i32, i32, i32
  }
  func.func @transform_3(%arg0: i32) -> (i32, i32, i32) {
    %c0_i32 = arith.constant 0 : i32
    %c0_i32_0 = arith.constant 0 : i32
    %c0_i32_1 = arith.constant 0 : i32
    return %arg0, %c0_i32, %c0_i32_0 : i32, i32, i32
  }
  func.func @transform_4(%arg0: i32) -> (i32, i32) {
    %c0_i32 = arith.constant 0 : i32
    %c0_i32_0 = arith.constant 0 : i32
    %c0_i32_1 = arith.constant 0 : i32
    return %c0_i32, %c0_i32_0 : i32, i32
  }
  func.func @transform_5(%arg0: i32) -> (i32, i32) {
    %c0_i32 = arith.constant 0 : i32
    %c0_i32_0 = arith.constant 0 : i32
    %c0_i32_1 = arith.constant 0 : i32
    return %c0_i32, %c0_i32_0 : i32, i32
  }
  func.func @transform_6(%arg0: i32) -> (i32, i32) {
    %c0_i32 = arith.constant 0 : i32
    %c0_i32_0 = arith.constant 0 : i32
    %c0_i32_1 = arith.constant 0 : i32
    return %c0_i32, %c0_i32_0 : i32, i32
  }
  func.func @transform_7(%arg0: i32) -> (i32, i32) {
    %c0_i32 = arith.constant 0 : i32
    %c0_i32_0 = arith.constant 0 : i32
    %c0_i32_1 = arith.constant 0 : i32
    return %c0_i32, %c0_i32_0 : i32, i32
  }
  func.func @transform_8(%arg0: i32) -> (i32, i32) {
    %c0_i32 = arith.constant 0 : i32
    %c0_i32_0 = arith.constant 0 : i32
    %c0_i32_1 = arith.constant 0 : i32
    return %c0_i32, %c0_i32_0 : i32, i32
  }
  func.func @transform_9(%arg0: i32) -> (i32, i32) {
    %c0_i32 = arith.constant 0 : i32
    %c0_i32_0 = arith.constant 0 : i32
    %c0_i32_1 = arith.constant 0 : i32
    return %c0_i32, %c0_i32_0 : i32, i32
  }
  func.func @transform_10(%arg0: i32) -> (i32, i32, i32) {
    %c0_i32 = arith.constant 0 : i32
    %c0_i32_0 = arith.constant 0 : i32
    %c0_i32_1 = arith.constant 0 : i32
    return %arg0, %c0_i32, %c0_i32_0 : i32, i32, i32
  }
  func.func @transform_11(%arg0: i32) -> (i32, i32, i32) {
    %c0_i32 = arith.constant 0 : i32
    %c0_i32_0 = arith.constant 0 : i32
    %c0_i32_1 = arith.constant 0 : i32
    return %arg0, %c0_i32, %c0_i32_0 : i32, i32, i32
  }
}

</mosaic_0001>

<llo_original>
// kernel: mul.10
$region0: #{mul.10}
  #allocation0 [shape = 's32[1]{0}', space=sflag, size = 0x4, scoped, tag = 'scoped memory for mul.10']
  %s0 = inlined_call_operand.vmem [shape: f32[4,32], index: 0, kind: input, shape index: {}, may-alias: {0,1}]
  %s1 = inlined_call_operand.vmem [shape: f32[4,32], index: 1, kind: input, shape index: {}, may-alias: {0,1}]
  %s2 = inlined_call_operand.vmem [shape: f32[4,32], index: 2, kind: output, shape index: {}]
  %v3 = vld [vmem:[%s0] sm:$0xf]
  %v4 = vld [vmem:[%s1] sm:$0xf]
  %5 = xla_tuple %v3, %v4
  %6 = xla_tuple %5
  %v7 = vmul.f32 %v3, %v4
  %8 = xla_tuple %v7
  %9 = vst [vmem:[%s2] sm:$0xf] %v7

// kernel: bimpm_forward.7
$region0: #{bimpm_forward.7}
  #allocation0 [shape = 'u32[]', space=smem, size = 0x4, offset = 0x4, fixed_abs, tag = 'smem constant byte address 0x4 - core index']
  #allocation1 [shape = 'u32[144,128]{1,0:T(1,128)}', space=vmem, size = 0x12000, scoped, tag = 'internal scratch']
  %s0 = inlined_call_operand.vmem [shape: f32[2,128], index: 0, kind: input, shape index: {}]
  %s1 = inlined_call_operand.vmem [shape: f32[128,64], index: 1, kind: input, shape index: {}]
  %s2 = inlined_call_operand.vmem [shape: f32[1,64], index: 2, kind: input, shape index: {}]
  %s3 = inlined_call_operand.vmem [shape: f32[64,3], index: 3, kind: input, shape index: {}]
  %s4 = inlined_call_operand.vmem [shape: f32[1,3], index: 4, kind: input, shape index: {}]
  %s5 = inlined_call_operand.hbm [shape: f32[2,3], index: 5, kind: output, shape index: {}]
  %s6 = sld [smem:[#allocation0]]
  $region30: #{bimpm_forward.7} parent=0
    _
  %s8 = ssub.s32 1, %s6
  %s9 = scalar_select 0, %s8, %s6
  $region1: #{bimpm_forward.7} parent=0
    #allocation2 [shape = 'u8[1024]{0}', space=vmem, size = 0x400, scoped, tag = 'output window, operand 0, single buffered']
    #allocation3 [shape = 's32[1]{0}', space=sflag, size = 0x4, scoped, tag = 'scoped memory for bimpm_forward.7']
    %10 = vsyncpa [#allocation3], 0
    // Predicated region
    $region2: #{bimpm_forward.7} parent=1 // pred_check
      _
    $region3: #{bimpm_forward.7} parent=1 // pred_check_branch
      %12 = sbr.rel (0) target = $region5
    $region4: #{bimpm_forward.7} parent=1 // pred_region
      _
    $region5: #{bimpm_forward.7} parent=1 // pred_fallthru
      _
    // Predicated region
    $region6: #{bimpm_forward.7} parent=1 // pred_check
      _
    $region7: #{bimpm_forward.7} parent=1 // pred_check_branch
      %14 = sbr.rel (0) target = $region9
    $region8: #{bimpm_forward.7} parent=1 // pred_region
      _
    $region9: #{bimpm_forward.7} parent=1 // pred_fallthru
      _
    // Predicated region
    $region10: #{bimpm_forward.7} parent=1 // pred_check
      _
    $region11: #{bimpm_forward.7} parent=1 // pred_check_branch
      %16 = sbr.rel (0) target = $region13
    $region12: #{bimpm_forward.7} parent=1 // pred_region
      _
    $region13: #{bimpm_forward.7} parent=1 // pred_fallthru
      _
    // Predicated region
    $region14: #{bimpm_forward.7} parent=1 // pred_check
      _
    $region15: #{bimpm_forward.7} parent=1 // pred_check_branch
      %18 = sbr.rel (0) target = $region17
    $region16: #{bimpm_forward.7} parent=1 // pred_region
      _
    $region17: #{bimpm_forward.7} parent=1 // pred_fallthru
      _
    // Predicated region
    $region18: #{bimpm_forward.7} parent=1 // pred_check
      _
    $region19: #{bimpm_forward.7} parent=1 // pred_check_branch
      %20 = sbr.rel (0) target = $region21
    $region20: #{bimpm_forward.7} parent=1 // pred_region
      _
    $region21: #{bimpm_forward.7} parent=1 // pred_fallthru
      _
    %v21 = vld [vmem:[%s0] sm:$0x3]
    %v22 = vld [vmem:[%s1] sm:$0xff]
    %v23 = vld [vmem:[%s1 + $0x8] sm:$0xff]
    %v24 = vld [vmem:[%s1 + $0x10] sm:$0xff]
    %v25 = vld [vmem:[%s1 + $0x18] sm:$0xff]
    %v26 = vld [vmem:[%s1 + $0x20] sm:$0xff]
    %v27 = vld [vmem:[%s1 + $0x28] sm:$0xff]
    %v28 = vld [vmem:[%s1 + $0x30] sm:$0xff]
    %v29 = vld [vmem:[%s1 + $0x38] sm:$0xff]
    %v30 = vld [vmem:[%s1 + $0x40] sm:$0xff]
    %v31 = vld [vmem:[%s1 + $0x48] sm:$0xff]
    %v32 = vld [vmem:[%s1 + $0x50] sm:$0xff]
    %v33 = vld [vmem:[%s1 + $0x58] sm:$0xff]
    %v34 = vld [vmem:[%s1 + $0x60] sm:$0xff]
    %v35 = vld [vmem:[%s1 + $0x68] sm:$0xff]
    %v36 = vld [vmem:[%s1 + $0x70] sm:$0xff]
    %v37 = vld [vmem:[%s1 + $0x78] sm:$0xff]
    %v38 = vld [vmem:[%s2] sm:$0x1]
    %v40 = vlaneseq
    %v41 = vshrl.u32 %v40, 7
    %v42 = vsub.s32 0, %v41
    %v43 = vrot.slane %v38, %v42
    %45 = vmatprep.subr.mxu0 0.0
    %46 = vmatpush1.msra.mxu0 %v22
    %47 = vmatprep.subr.mxu0 0.0
    %48 = vmatpush1.msra.mxu0 %v23
    %49 = vmatprep.subr.mxu0 0.0
    %50 = vmatpush1.msra.mxu0 %v24
    %51 = vmatprep.subr.mxu0 0.0
    %52 = vmatpush1.msra.mxu0 %v25
    %53 = vmatprep.subr.mxu0 0.0
    %54 = vmatpush1.msra.mxu0 %v26
    %55 = vmatprep.subr.mxu0 0.0
    %56 = vmatpush1.msra.mxu0 %v27
    %57 = vmatprep.subr.mxu0 0.0
    %58 = vmatpush1.msra.mxu0 %v28
    %59 = vmatprep.subr.mxu0 0.0
    %60 = vmatpush1.msra.mxu0 %v29
    %61 = vmatprep.subr.mxu0 0.0
    %62 = vmatpush1.msra.mxu0 %v30
    %63 = vmatprep.subr.mxu0 0.0
    %64 = vmatpush1.msra.mxu0 %v31
    %65 = vmatprep.subr.mxu0 0.0
    %66 = vmatpush1.msra.mxu0 %v32
    %67 = vmatprep.subr.mxu0 0.0
    %68 = vmatpush1.msra.mxu0 %v33
    %69 = vmatprep.subr.mxu0 0.0
    %70 = vmatpush1.msra.mxu0 %v34
    %71 = vmatprep.subr.mxu0 0.0
    %72 = vmatpush1.msra.mxu0 %v35
    %73 = vmatprep.subr.mxu0 0.0
    %74 = vmatpush1.msra.mxu0 %v36
    %75 = vmatprep.subr.mxu0 0.0
    %76 = vmatpush1.msra.mxu0 %v37
    %77 = vmatprep.subr.mxu0 0.0
    %78 = vmatpush1.msra.mxu0 0.0
    %79 = vmatprep.subr.mxu0 0.0
    %80 = vmatpush1.msra.mxu0 0.0
    %81 = vmatprep.subr.mxu0 0.0
    %82 = vmatpush1.msra.mxu0 0.0
    %83 = vmatprep.subr.mxu0 0.0
    %84 = vmatpush1.msra.mxu0 0.0
    %85 = vmatprep.subr.mxu0 0.0
    %86 = vmatpush1.msra.mxu0 0.0
    %87 = vmatprep.subr.mxu0 0.0
    %88 = vmatpush1.msra.mxu0 0.0
    %89 = vmatprep.subr.mxu0 0.0
    %90 = vmatpush1.msra.mxu0 0.0
    %91 = vmatprep.subr.mxu0 0.0
    %92 = vmatpush1.msra.mxu0 0.0
    %93 = vmatprep.subr.mxu0 0.0
    %94 = vmatpush1.msra.mxu0 0.0
    %95 = vmatprep.subr.mxu0 0.0
    %96 = vmatpush1.msra.mxu0 0.0
    %97 = vmatprep.subr.mxu0 0.0
    %98 = vmatpush1.msra.mxu0 0.0
    %99 = vmatprep.subr.mxu0 0.0
    %100 = vmatpush1.msra.mxu0 0.0
    %101 = vmatprep.subr.mxu0 0.0
    %102 = vmatpush1.msra.mxu0 0.0
    %103 = vmatprep.subr.mxu0 0.0
    %104 = vmatpush1.msra.mxu0 0.0
    %105 = vmatprep.subr.mxu0 0.0
    %106 = vmatpush1.msra.mxu0 0.0
    %107 = vmatprep.subr.mxu0 0.0
    %108 = vmatpush1.msra.mxu0 0.0
    %109 = vmatprep.mubr.f32.mxu0 0.0
    %110 = vmatmul.mubr.f32.gmra.mrb[0].mxu0 %v21
    %v111 = vpop.f32.mrb[0].mxu0
    %v112 = vadd.f32 %v43, %v111
    %v113 = vpop.f32.mrb[0].mxu0
    %114 = vdwg.mxu0
    %v115 = vmax.f32 %v112, 0.0
    %v116 = vld [vmem:[%s3] sm:$0xff]
    %v117 = vld [vmem:[%s3 + $0x8] sm:$0xff]
    %v118 = vld [vmem:[%s3 + $0x10] sm:$0xff]
    %v119 = vld [vmem:[%s3 + $0x18] sm:$0xff]
    %v120 = vld [vmem:[%s3 + $0x20] sm:$0xff]
    %v121 = vld [vmem:[%s3 + $0x28] sm:$0xff]
    %v122 = vld [vmem:[%s3 + $0x30] sm:$0xff]
    %v123 = vld [vmem:[%s3 + $0x38] sm:$0xff]
    %v124 = vld [vmem:[%s4] sm:$0x1]
    %v126 = vlaneseq
    %v127 = vshrl.u32 %v126, 7
    %v128 = vsub.s32 0, %v127
    %v129 = vrot.slane %v124, %v128
    %vm131 = vcmask 523264
    %v133 = vsel %vm131, %v115, 0
    %135 = vmatprep.subr.mxu0 0.0
    %136 = vmatpush1.msra.mxu0 %v116
    %137 = vmatprep.subr.mxu0 0.0
    %138 = vmatpush1.msra.mxu0 %v117
    %139 = vmatprep.subr.mxu0 0.0
    %140 = vmatpush1.msra.mxu0 %v118
    %141 = vmatprep.subr.mxu0 0.0
    %142 = vmatpush1.msra.mxu0 %v119
    %143 = vmatprep.subr.mxu0 0.0
    %144 = vmatpush1.msra.mxu0 %v120
    %145 = vmatprep.subr.mxu0 0.0
    %146 = vmatpush1.msra.mxu0 %v121
    %147 = vmatprep.subr.mxu0 0.0
    %148 = vmatpush1.msra.mxu0 %v122
    %149 = vmatprep.subr.mxu0 0.0
    %150 = vmatpush1.msra.mxu0 %v123
    %151 = vmatprep.subr.mxu0 0.0
    %152 = vmatpush1.msra.mxu0 0.0
    %153 = vmatprep.subr.mxu0 0.0
    %154 = vmatpush1.msra.mxu0 0.0
    %155 = vmatprep.subr.mxu0 0.0
    %156 = vmatpush1.msra.mxu0 0.0
    %157 = vmatprep.subr.mxu0 0.0
    %158 = vmatpush1.msra.mxu0 0.0
    %159 = vmatprep.subr.mxu0 0.0
    %160 = vmatpush1.msra.mxu0 0.0
    %161 = vmatprep.subr.mxu0 0.0
    %162 = vmatpush1.msra.mxu0 0.0
    %163 = vmatprep.subr.mxu0 0.0
    %164 = vmatpush1.msra.mxu0 0.0
    %165 = vmatprep.subr.mxu0 0.0
    %166 = vmatpush1.msra.mxu0 0.0
    %167 = vmatprep.subr.mxu0 0.0
    %168 = vmatpush1.msra.mxu0 0.0
    %169 = vmatprep.subr.mxu0 0.0
    %170 = vmatpush1.msra.mxu0 0.0
    %171 = vmatprep.subr.mxu0 0.0
    %172 = vmatpush1.msra.mxu0 0.0
    %173 = vmatprep.subr.mxu0 0.0
    %174 = vmatpush1.msra.mxu0 0.0
    %175 = vmatprep.subr.mxu0 0.0
    %176 = vmatpush1.msra.mxu0 0.0
    %177 = vmatprep.subr.mxu0 0.0
    %178 = vmatpush1.msra.mxu0 0.0
    %179 = vmatprep.subr.mxu0 0.0
    %180 = vmatpush1.msra.mxu0 0.0
    %181 = vmatprep.subr.mxu0 0.0
    %182 = vmatpush1.msra.mxu0 0.0
    %183 = vmatprep.subr.mxu0 0.0
    %184 = vmatpush1.msra.mxu0 0.0
    %185 = vmatprep.subr.mxu0 0.0
    %186 = vmatpush1.msra.mxu0 0.0
    %187 = vmatprep.subr.mxu0 0.0
    %188 = vmatpush1.msra.mxu0 0.0
    %189 = vmatprep.subr.mxu0 0.0
    %190 = vmatpush1.msra.mxu0 0.0
    %191 = vmatprep.subr.mxu0 0.0
    %192 = vmatpush1.msra.mxu0 0.0
    %193 = vmatprep.subr.mxu0 0.0
    %194 = vmatpush1.msra.mxu0 0.0
    %195 = vmatprep.subr.mxu0 0.0
    %196 = vmatpush1.msra.mxu0 0.0
    %197 = vmatprep.subr.mxu0 0.0
    %198 = vmatpush1.msra.mxu0 0.0
    %199 = vmatprep.mubr.f32.mxu0 0.0
    %200 = vmatmul.mubr.f32.gmra.mrb[0].mxu0 %v133
    %v201 = vpop.f32.mrb[0].mxu0
    %v202 = vadd.f32 %v129, %v201
    %v203 = vpop.f32.mrb[0].mxu0
    %204 = vdwg.mxu0
    %vm205 = vcmask 17408
    %v206 = vsel %vm205, %v202, -inf
    %207 = vmax.xlane.f32.xlu0 %v206
    %v208 = vpop.xlane.xlu0 %207
    %v209 = vsub.f32 %v202, %v208
    %v210 = vmul.f32 %v209, 1.442695
    %v211 = vpow.pop %v210
    %v212 = vsel %vm205, %v211, 0.0
    %213 = vadd.xlane.f32.xlu0 %v212
    %v214 = vpop.xlane.xlu0 %213
    %v215 = vlog2.pop %v214
    %v216 = vmul.f32 %v215, 0.6931472
    %v217 = vsub.f32 %v209, %v216
    %218 = vst.msk [vmem:[#allocation2] sm:$0x3] %vm205, %v217
    // Predicated region
    $region22: #{bimpm_forward.7} parent=1 // pred_check
      _
    $region23: #{bimpm_forward.7} parent=1 // pred_check_branch
      %220 = sbr.rel (0) target = $region25
    $region24: #{bimpm_forward.7} parent=1 // pred_region
      %s222 = ssub.s32 32, 32
      %223 = vsyncadd [#allocation3], %s222
      %s225 = sshll.u32 [#allocation2], 4
      %s226 = int_to_ptr.vmem [resolvable:$true] %s225
      %228 = dma.vmem_to_hbm [thread:$0]  %s226, 32, %s5, [#allocation3]
    $region25: #{bimpm_forward.7} parent=1 // pred_fallthru
      _
    // Predicated region
    $region26: #{bimpm_forward.7} parent=1 // pred_check
      _
    $region27: #{bimpm_forward.7} parent=1 // pred_check_branch
      %230 = sbr.rel (0) target = $region29
    $region28: #{bimpm_forward.7} parent=1 // pred_region
      %231 = dma.done [#allocation3], 32
    $region29: #{bimpm_forward.7} parent=1 // pred_fallthru
      _
    %232 = vsyncpa [#allocation3], 1

// kernel: bimpm_forward.4
$region0: #{bimpm_forward.4}
  #allocation0 [shape = 'u32[]', space=smem, size = 0x4, offset = 0x4, fixed_abs, tag = 'smem constant byte address 0x4 - core index']
  #allocation1 [shape = 'u32[144,128]{1,0:T(1,128)}', space=vmem, size = 0x12000, scoped, tag = 'internal scratch']
  %s0 = inlined_call_operand.vmem [shape: f32[4,8,32], index: 0, kind: input, shape index: {}]
  %s1 = inlined_call_operand.vmem [shape: f32[32,128], index: 1, kind: input, shape index: {}]
  %s2 = inlined_call_operand.vmem [shape: f32[32,128], index: 2, kind: input, shape index: {}]
  %s3 = inlined_call_operand.vmem [shape: f32[1,128], index: 3, kind: input, shape index: {}]
  %s4 = inlined_call_operand.vmem [shape: f32[32,128], index: 4, kind: input, shape index: {}]
  %s5 = inlined_call_operand.vmem [shape: f32[32,128], index: 5, kind: input, shape index: {}]
  %s6 = inlined_call_operand.vmem [shape: f32[1,128], index: 6, kind: input, shape index: {}]
  %s7 = inlined_call_operand.vmem [shape: f32[4,8,32], index: 7, kind: output, shape index: {0}]
  %s8 = inlined_call_operand.vmem [shape: f32[4,8,32], index: 8, kind: output, shape index: {1}]
  %9 = xla_tuple %s7, %s8
  %s10 = sld [smem:[#allocation0]]
  $region69: #{bimpm_forward.4} parent=0
    _
  %s12 = ssub.s32 1, %s10
  %s13 = scalar_select 0, %s12, %s10
  loop: start=0, step=1, limit=4
  $region2: #{bimpm_forward.4} parent=0 // loop_pre_header
    _
  $region3: #{bimpm_forward.4} parent=0 // loop_header
    %s15 = sphi 0, %s19
    %p16 = scmp.ge.s32.totalorder %s15, 4
    %s25 = sphi 0, %s27
    %s28 = sphi 0, %s25
    %s29 = sphi 0, %s28
    %s45 = sphi 0, %s29
    %s49 = sphi 0, %s49
    %s51 = sphi 0, %s49
    %s52 = sphi 0, %s51
    %s66 = sphi 0, %s52
    %s70 = sphi 0, %s70
    %s72 = sphi 0, %s70
    %s73 = sphi 0, %s72
    %s87 = sphi 0, %s73
    %s91 = sphi 0, %s91
    %s93 = sphi 0, %s91
    %s94 = sphi 0, %s93
    %s108 = sphi 0, %s94
    %s112 = sphi 0, %s112
    %s114 = sphi 0, %s112
    %s115 = sphi 0, %s114
    %s129 = sphi 0, %s115
    %s133 = sphi 0, %s133
    %s135 = sphi 0, %s133
    %s136 = sphi 0, %s135
    %s150 = sphi 0, %s136
    %s154 = sphi 0, %s154
    %s156 = sphi 0, %s154
    %s157 = sphi 0, %s156
    %s171 = sphi 0, %s157
    %s177 = sphi 0, %s179
    %s180 = sphi 0, %s177
    %s181 = sphi 0, %s180
    %s197 = sphi 0, %s181
    %s203 = sphi 0, %s205
    %s206 = sphi 0, %s203
    %s207 = sphi 0, %s206
    %s223 = sphi 0, %s207
  $region4: #{bimpm_forward.4} parent=0 // loop_header_branch
    %18 = sbr.rel (%p16) target = $region8
  $region5: #{bimpm_forward.4} parent=0 // loop_body
    %s20 = ssub.s32 %s15, 1
    %s21 = ssub.s32 %s15, 2
    %s22 = sadd.s32 %s15, 1
    %s23 = ssub.s32 %s15, %s22
    %p24 = scmp.eq.s32.totalorder %s23, 0
    %s26 = sadd.s32 %s25, 1
    %s27 = scalar_select %p24, %s25, %s26
    %p30 = pneg %p24
    %p31 = scmp.eq.s32.totalorder %s15, 1
    %p32 = por %p30, %p31
    %p33 = scmp.ne.s32.totalorder %s25, %s28
    %p34 = scmp.eq.s32.totalorder %s15, 0
    %p35 = por %p33, %p34
    %p36 = scmp.ne.s32.totalorder %s25, %s28
    %p37 = scmp.eq.s32.totalorder %s20, 1
    %p38 = por %p36, %p37
    %p39 = scmp.ne.s32.totalorder %s28, %s29
    %p40 = scmp.eq.s32.totalorder %s20, 0
    %p41 = por %p39, %p40
    %p42 = scmp.ne.s32.totalorder %s28, %s29
    %p43 = scmp.eq.s32.totalorder %s21, 1
    %p44 = por %p42, %p43
    %p46 = scmp.ne.s32.totalorder %s29, %s45
    %p47 = scmp.eq.s32.totalorder %s21, 0
    %p48 = por %p46, %p47
    %s50 = sadd.s32 %s49, 1
    %p53 = scmp.eq.s32.totalorder %s15, 1
    %p54 = scmp.ne.s32.totalorder %s49, %s51
    %p55 = scmp.eq.s32.totalorder %s15, 0
    %p56 = por %p54, %p55
    %p57 = scmp.ne.s32.totalorder %s49, %s51
    %p58 = scmp.eq.s32.totalorder %s20, 1
    %p59 = por %p57, %p58
    %p60 = scmp.ne.s32.totalorder %s51, %s52
    %p61 = scmp.eq.s32.totalorder %s20, 0
    %p62 = por %p60, %p61
    %p63 = scmp.ne.s32.totalorder %s51, %s52
    %p64 = scmp.eq.s32.totalorder %s21, 1
    %p65 = por %p63, %p64
    %p67 = scmp.ne.s32.totalorder %s52, %s66
    %p68 = scmp.eq.s32.totalorder %s21, 0
    %p69 = por %p67, %p68
    %s71 = sadd.s32 %s70, 1
    %p74 = scmp.eq.s32.totalorder %s15, 1
    %p75 = scmp.ne.s32.totalorder %s70, %s72
    %p76 = scmp.eq.s32.totalorder %s15, 0
    %p77 = por %p75, %p76
    %p78 = scmp.ne.s32.totalorder %s70, %s72
    %p79 = scmp.eq.s32.totalorder %s20, 1
    %p80 = por %p78, %p79
    %p81 = scmp.ne.s32.totalorder %s72, %s73
    %p82 = scmp.eq.s32.totalorder %s20, 0
    %p83 = por %p81, %p82
    %p84 = scmp.ne.s32.totalorder %s72, %s73
    %p85 = scmp.eq.s32.totalorder %s21, 1
    %p86 = por %p84, %p85
    %p88 = scmp.ne.s32.totalorder %s73, %s87
    %p89 = scmp.eq.s32.totalorder %s21, 0
    %p90 = por %p88, %p89
    %s92 = sadd.s32 %s91, 1
    %p95 = scmp.eq.s32.totalorder %s15, 1
    %p96 = scmp.ne.s32.totalorder %s91, %s93
    %p97 = scmp.eq.s32.totalorder %s15, 0
    %p98 = por %p96, %p97
    %p99 = scmp.ne.s32.totalorder %s91, %s93
    %p100 = scmp.eq.s32.totalorder %s20, 1
    %p101 = por %p99, %p100
    %p102 = scmp.ne.s32.totalorder %s93, %s94
    %p103 = scmp.eq.s32.totalorder %s20, 0
    %p104 = por %p102, %p103
    %p105 = scmp.ne.s32.totalorder %s93, %s94
    %p106 = scmp.eq.s32.totalorder %s21, 1
    %p107 = por %p105, %p106
    %p109 = scmp.ne.s32.totalorder %s94, %s108
    %p110 = scmp.eq.s32.totalorder %s21, 0
    %p111 = por %p109, %p110
    %s113 = sadd.s32 %s112, 1
    %p116 = scmp.eq.s32.totalorder %s15, 1
    %p117 = scmp.ne.s32.totalorder %s112, %s114
    %p118 = scmp.eq.s32.totalorder %s15, 0
    %p119 = por %p117, %p118
    %p120 = scmp.ne.s32.totalorder %s112, %s114
    %p121 = scmp.eq.s32.totalorder %s20, 1
    %p122 = por %p120, %p121
    %p123 = scmp.ne.s32.totalorder %s114, %s115
    %p124 = scmp.eq.s32.totalorder %s20, 0
    %p125 = por %p123, %p124
    %p126 = scmp.ne.s32.totalorder %s114, %s115
    %p127 = scmp.eq.s32.totalorder %s21, 1
    %p128 = por %p126, %p127
    %p130 = scmp.ne.s32.totalorder %s115, %s129
    %p131 = scmp.eq.s32.totalorder %s21, 0
    %p132 = por %p130, %p131
    %s134 = sadd.s32 %s133, 1
    %p137 = scmp.eq.s32.totalorder %s15, 1
    %p138 = scmp.ne.s32.totalorder %s133, %s135
    %p139 = scmp.eq.s32.totalorder %s15, 0
    %p140 = por %p138, %p139
    %p141 = scmp.ne.s32.totalorder %s133, %s135
    %p142 = scmp.eq.s32.totalorder %s20, 1
    %p143 = por %p141, %p142
    %p144 = scmp.ne.s32.totalorder %s135, %s136
    %p145 = scmp.eq.s32.totalorder %s20, 0
    %p146 = por %p144, %p145
    %p147 = scmp.ne.s32.totalorder %s135, %s136
    %p148 = scmp.eq.s32.totalorder %s21, 1
    %p149 = por %p147, %p148
    %p151 = scmp.ne.s32.totalorder %s136, %s150
    %p152 = scmp.eq.s32.totalorder %s21, 0
    %p153 = por %p151, %p152
    %s155 = sadd.s32 %s154, 1
    %p158 = scmp.eq.s32.totalorder %s15, 1
    %p159 = scmp.ne.s32.totalorder %s154, %s156
    %p160 = scmp.eq.s32.totalorder %s15, 0
    %p161 = por %p159, %p160
    %p162 = scmp.ne.s32.totalorder %s154, %s156
    %p163 = scmp.eq.s32.totalorder %s20, 1
    %p164 = por %p162, %p163
    %p165 = scmp.ne.s32.totalorder %s156, %s157
    %p166 = scmp.eq.s32.totalorder %s20, 0
    %p167 = por %p165, %p166
    %p168 = scmp.ne.s32.totalorder %s156, %s157
    %p169 = scmp.eq.s32.totalorder %s21, 1
    %p170 = por %p168, %p169
    %p172 = scmp.ne.s32.totalorder %s157, %s171
    %p173 = scmp.eq.s32.totalorder %s21, 0
    %p174 = por %p172, %p173
    %s175 = ssub.s32 %s15, %s22
    %p176 = scmp.eq.s32.totalorder %s175, 0
    %s178 = sadd.s32 %s177, 1
    %s179 = scalar_select %p176, %s177, %s178
    %p182 = pneg %p176
    %p183 = scmp.eq.s32.totalorder %s15, 1
    %p184 = por %p182, %p183
    %p185 = scmp.ne.s32.totalorder %s177, %s180
    %p186 = scmp.eq.s32.totalorder %s15, 0
    %p187 = por %p185, %p186
    %p188 = scmp.ne.s32.totalorder %s177, %s180
    %p189 = scmp.eq.s32.totalorder %s20, 1
    %p190 = por %p188, %p189
    %p191 = scmp.ne.s32.totalorder %s180, %s181
    %p192 = scmp.eq.s32.totalorder %s20, 0
    %p193 = por %p191, %p192
    %p194 = scmp.ne.s32.totalorder %s180, %s181
    %p195 = scmp.eq.s32.totalorder %s21, 1
    %p196 = por %p194, %p195
    %p198 = scmp.ne.s32.totalorder %s181, %s197
    %p199 = scmp.eq.s32.totalorder %s21, 0
    %p200 = por %p198, %p199
    %s201 = ssub.s32 %s15, %s22
    %p202 = scmp.eq.s32.totalorder %s201, 0
    %s204 = sadd.s32 %s203, 1
    %s205 = scalar_select %p202, %s203, %s204
    %p208 = pneg %p202
    %p209 = scmp.eq.s32.totalorder %s15, 1
    %p210 = por %p208, %p209
    %p211 = scmp.ne.s32.totalorder %s203, %s206
    %p212 = scmp.eq.s32.totalorder %s15, 0
    %p213 = por %p211, %p212
    %p214 = scmp.ne.s32.totalorder %s203, %s206
    %p215 = scmp.eq.s32.totalorder %s20, 1
    %p216 = por %p214, %p215
    %p217 = scmp.ne.s32.totalorder %s206, %s207
    %p218 = scmp.eq.s32.totalorder %s20, 0
    %p219 = por %p217, %p218
    %p220 = scmp.ne.s32.totalorder %s206, %s207
    %p221 = scmp.eq.s32.totalorder %s21, 1
    %p222 = por %p220, %p221
    %p224 = scmp.ne.s32.totalorder %s207, %s223
    %p225 = scmp.eq.s32.totalorder %s21, 0
    %p226 = por %p224, %p225
    %p227 = scmp.le.s32.totalorder 1, %s15
    %p228 = scmp.lt.s32.totalorder %s15, 3
    %p229 = pnand %p227, %p228
    %p230 = pneg %p229
    // Predicated region
    $region9: #{bimpm_forward.4} parent=5 // pred_check
      _
    $region10: #{bimpm_forward.4} parent=5 // pred_check_branch
      %232 = sbr.rel (%p229) target = $region12
    $region11: #{bimpm_forward.4} parent=5 // pred_region
      %s233 = ssub.s32 %s15, 1
      // Predicated region
      $region13: #{bimpm_forward.4} parent=11 // pred_check
        %p234 = pneg %p62
      $region14: #{bimpm_forward.4} parent=11 // pred_check_branch
        %236 = sbr.rel (%p234) target = $region16
      $region15: #{bimpm_forward.4} parent=11 // pred_region
        _
      $region16: #{bimpm_forward.4} parent=11 // pred_fallthru
        _
      // Predicated region
      $region17: #{bimpm_forward.4} parent=11 // pred_check
        %p237 = pneg %p83
      $region18: #{bimpm_forward.4} parent=11 // pred_check_branch
        %239 = sbr.rel (%p237) target = $region20
      $region19: #{bimpm_forward.4} parent=11 // pred_region
        _
      $region20: #{bimpm_forward.4} parent=11 // pred_fallthru
        _
      // Predicated region
      $region21: #{bimpm_forward.4} parent=11 // pred_check
        %p240 = pneg %p104
      $region22: #{bimpm_forward.4} parent=11 // pred_check_branch
        %242 = sbr.rel (%p240) target = $region24
      $region23: #{bimpm_forward.4} parent=11 // pred_region
        _
      $region24: #{bimpm_forward.4} parent=11 // pred_fallthru
        _
      // Predicated region
      $region25: #{bimpm_forward.4} parent=11 // pred_check
        %p243 = pneg %p125
      $region26: #{bimpm_forward.4} parent=11 // pred_check_branch
        %245 = sbr.rel (%p243) target = $region28
      $region27: #{bimpm_forward.4} parent=11 // pred_region
        _
      $region28: #{bimpm_forward.4} parent=11 // pred_fallthru
        _
      // Predicated region
      $region29: #{bimpm_forward.4} parent=11 // pred_check
        %p246 = pneg %p146
      $region30: #{bimpm_forward.4} parent=11 // pred_check_branch
        %248 = sbr.rel (%p246) target = $region32
      $region31: #{bimpm_forward.4} parent=11 // pred_region
        _
      $region32: #{bimpm_forward.4} parent=11 // pred_fallthru
        _
      // Predicated region
      $region33: #{bimpm_forward.4} parent=11 // pred_check
        %p249 = pneg %p167
      $region34: #{bimpm_forward.4} parent=11 // pred_check_branch
        %251 = sbr.rel (%p249) target = $region36
      $region35: #{bimpm_forward.4} parent=11 // pred_region
        _
      $region36: #{bimpm_forward.4} parent=11 // pred_fallthru
        _
    $region12: #{bimpm_forward.4} parent=5 // pred_fallthru
      _
    %p252 = scmp.lt.s32.totalorder %s15, 2
    // Predicated region
    $region37: #{bimpm_forward.4} parent=5 // pred_check
      %p253 = pneg %p252
    $region38: #{bimpm_forward.4} parent=5 // pred_check_branch
      %255 = sbr.rel (%p253) target = $region40
    $region39: #{bimpm_forward.4} parent=5 // pred_region
      // Predicated region
      $region41: #{bimpm_forward.4} parent=39 // pred_check
        %p256 = pneg %p35
      $region42: #{bimpm_forward.4} parent=39 // pred_check_branch
        %258 = sbr.rel (%p256) target = $region44
      $region43: #{bimpm_forward.4} parent=39 // pred_region
        %s259 = smul.u32 2, %s15
        %p260 = scmp.lt.s32.totalorder %s259, 3
        %s261 = scalar_select %p260, %s259, 3
        %s262 = smul.addr %s261, 8
        %s263 = scalar_lea.vmem %s0, %s262
        %s264 = smul.u32 2, %s15
      $region44: #{bimpm_forward.4} parent=39 // pred_fallthru
        _
    $region40: #{bimpm_forward.4} parent=5 // pred_fallthru
      _
    %p265 = scmp.le.s32.totalorder 1, %s15
    %p266 = scmp.lt.s32.totalorder %s15, 3
    %p267 = pnand %p265, %p266
    %p268 = pneg %p267
    // Predicated region
    $region45: #{bimpm_forward.4} parent=5 // pred_check
      _
    $region46: #{bimpm_forward.4} parent=5 // pred_check_branch
      %270 = sbr.rel (%p267) target = $region48
    $region47: #{bimpm_forward.4} parent=5 // pred_region
      %s271 = ssub.s32 %s15, 1
      %s272 = smul.u32 2, %s20
      %p273 = scmp.lt.s32.totalorder %s272, 3
      %s274 = scalar_select %p273, %s272, 3
      %s275 = smul.addr %s274, 8
      %s276 = scalar_lea.vmem %s0, %s275
      %p277 = pneg %p41
      %p278 = pneg %p38
      %p279 = pneg %p62
      %p280 = pneg %p59
      %p281 = pneg %p83
      %p282 = pneg %p80
      %p283 = pneg %p104
      %p284 = pneg %p101
      %p285 = pneg %p125
      %p286 = pneg %p122
      %p287 = pneg %p146
      %p288 = pneg %p143
      %p289 = pneg %p167
      %p290 = pneg %p164
      %p291 = pneg %p193
      %p292 = pneg %p190
      %s293 = smul.u32 2, %s20
      %p294 = scmp.lt.s32.totalorder %s293, 3
      %s295 = scalar_select %p294, %s293, 3
      %s296 = smul.addr %s295, 8
      %s297 = scalar_lea.vmem %s7, %s296
      %p298 = pneg %p219
      %p299 = pneg %p216
      %s300 = smul.u32 2, %s20
      %p301 = scmp.lt.s32.totalorder %s300, 3
      %s302 = scalar_select %p301, %s300, 3
      %s303 = smul.addr %s302, 8
      %s304 = scalar_lea.vmem %s8, %s303
      %s305 = smul.u32 2, %s20
      %p306 = scmp.lt.s32.totalorder %s305, 3
      %s307 = scalar_select %p306, %s305, 3
      %s308 = smul.addr %s307, 8
      %s309 = scalar_lea.vmem %s0, %s308
      %s310 = smul.u32 2, %s20
      %s311 = smul.u32 2, %s20
      %p312 = scmp.lt.s32.totalorder %s311, 3
      %s313 = scalar_select %p312, %s311, 3
      %s314 = smul.addr %s313, 8
      %s315 = scalar_lea.vmem %s7, %s314
      %s316 = smul.u32 2, %s20
      %s317 = smul.u32 2, %s20
      %p318 = scmp.lt.s32.totalorder %s317, 3
      %s319 = scalar_select %p318, %s317, 3
      %s320 = smul.addr %s319, 8
      %s321 = scalar_lea.vmem %s8, %s320
      %s322 = smul.u32 2, %s20
      %v323 = vld [vmem:[%s2] sm:$0xff]
      %v324 = vld [vmem:[%s2 + $0x8] sm:$0xff]
      %v325 = vld [vmem:[%s2 + $0x10] sm:$0xff]
      %v326 = vld [vmem:[%s2 + $0x18] sm:$0xff]
      %v327 = vld [vmem:[%s5] sm:$0xff]
      %v328 = vld [vmem:[%s5 + $0x8] sm:$0xff]
      %v329 = vld [vmem:[%s5 + $0x10] sm:$0xff]
      %v330 = vld [vmem:[%s5 + $0x18] sm:$0xff]
      %v331 = vld [vmem:[%s309] sm:$0xff]
      %v332 = vld [vmem:[%s309 + $0x8] sm:$0xff]
      %v333 = vld [vmem:[%s1] sm:$0xff]
      %v334 = vld [vmem:[%s1 + $0x8] sm:$0xff]
      %v335 = vld [vmem:[%s1 + $0x10] sm:$0xff]
      %v336 = vld [vmem:[%s1 + $0x18] sm:$0xff]
      %v337 = vld [vmem:[%s3] sm:$0x1]
      %v339 = vlaneseq
      %v340 = vshrl.u32 %v339, 7
      %v341 = vsub.s32 0, %v340
      %v342 = vrot.slane %v337, %v341
      %vm344 = vcmask 261120
      %v346 = vsel %vm344, %v331, 0
      %v349 = vsel %vm344, %v332, 0
      %351 = vmatprep.subr.mxu0 0.0
      %352 = vmatpush1.msra.mxu0 %v333
      %353 = vmatprep.subr.mxu0 0.0
      %354 = vmatpush1.msra.mxu0 %v334
      %355 = vmatprep.subr.mxu0 0.0
      %356 = vmatpush1.msra.mxu0 %v335
      %357 = vmatprep.subr.mxu0 0.0
      %358 = vmatpush1.msra.mxu0 %v336
      %359 = vmatprep.subr.mxu0 0.0
      %360 = vmatpush1.msra.mxu0 0.0
      %361 = vmatprep.subr.mxu0 0.0
      %362 = vmatpush1.msra.mxu0 0.0
      %363 = vmatprep.subr.mxu0 0.0
      %364 = vmatpush1.msra.mxu0 0.0
      %365 = vmatprep.subr.mxu0 0.0
      %366 = vmatpush1.msra.mxu0 0.0
      %367 = vmatprep.subr.mxu0 0.0
      %368 = vmatpush1.msra.mxu0 0.0
      %369 = vmatprep.subr.mxu0 0.0
      %370 = vmatpush1.msra.mxu0 0.0
      %371 = vmatprep.subr.mxu0 0.0
      %372 = vmatpush1.msra.mxu0 0.0
      %373 = vmatprep.subr.mxu0 0.0
      %374 = vmatpush1.msra.mxu0 0.0
      %375 = vmatprep.subr.mxu0 0.0
      %376 = vmatpush1.msra.mxu0 0.0
      %377 = vmatprep.subr.mxu0 0.0
      %378 = vmatpush1.msra.mxu0 0.0
      %379 = vmatprep.subr.mxu0 0.0
      %380 = vmatpush1.msra.mxu0 0.0
      %381 = vmatprep.subr.mxu0 0.0
      %382 = vmatpush1.msra.mxu0 0.0
      %383 = vmatprep.subr.mxu0 0.0
      %384 = vmatpush1.msra.mxu0 0.0
      %385 = vmatprep.subr.mxu0 0.0
      %386 = vmatpush1.msra.mxu0 0.0
      %387 = vmatprep.subr.mxu0 0.0
      %388 = vmatpush1.msra.mxu0 0.0
      %389 = vmatprep.subr.mxu0 0.0
      %390 = vmatpush1.msra.mxu0 0.0
      %391 = vmatprep.subr.mxu0 0.0
      %392 = vmatpush1.msra.mxu0 0.0
      %393 = vmatprep.subr.mxu0 0.0
      %394 = vmatpush1.msra.mxu0 0.0
      %395 = vmatprep.subr.mxu0 0.0
      %396 = vmatpush1.msra.mxu0 0.0
      %397 = vmatprep.subr.mxu0 0.0
      %398 = vmatpush1.msra.mxu0 0.0
      %399 = vmatprep.subr.mxu0 0.0
      %400 = vmatpush1.msra.mxu0 0.0
      %401 = vmatprep.subr.mxu0 0.0
      %402 = vmatpush1.msra.mxu0 0.0
      %403 = vmatprep.subr.mxu0 0.0
      %404 = vmatpush1.msra.mxu0 0.0
      %405 = vmatprep.subr.mxu0 0.0
      %406 = vmatpush1.msra.mxu0 0.0
      %407 = vmatprep.subr.mxu0 0.0
      %408 = vmatpush1.msra.mxu0 0.0
      %409 = vmatprep.subr.mxu0 0.0
      %410 = vmatpush1.msra.mxu0 0.0
      %411 = vmatprep.subr.mxu0 0.0
      %412 = vmatpush1.msra.mxu0 0.0
      %413 = vmatprep.subr.mxu0 0.0
      %414 = vmatpush1.msra.mxu0 0.0
      %415 = vmatprep.mubr.f32.mxu0 0.0
      %416 = vmatmul.mubr.f32.gmra.mrb[0].mxu0 %v346
      %v417 = vpop.f32.mrb[0].mxu0
      %v418 = vadd.f32 %v342, %v417
      %v419 = vpop.f32.mrb[0].mxu0
      %420 = vmatprep.mubr.f32.mxu0 0.0
      %421 = vmatmul.mubr.f32.gmra.mrb[0].mxu0 %v349
      %v422 = vpop.f32.mrb[0].mxu0
      %v423 = vadd.f32 %v342, %v422
      %v424 = vpop.f32.mrb[0].mxu0
      %425 = vdwg.mxu0
      %v426 = vld [vmem:[%s4] sm:$0xff]
      %v427 = vld [vmem:[%s4 + $0x8] sm:$0xff]
      %v428 = vld [vmem:[%s4 + $0x10] sm:$0xff]
      %v429 = vld [vmem:[%s4 + $0x18] sm:$0xff]
      %v430 = vld [vmem:[%s6] sm:$0x1]
      %v432 = vlaneseq
      %v433 = vshrl.u32 %v432, 7
      %v434 = vsub.s32 0, %v433
      %v435 = vrot.slane %v430, %v434
      %437 = vmatprep.subr.mxu0 0.0
      %438 = vmatpush1.msra.mxu0 %v426
      %439 = vmatprep.subr.mxu0 0.0
      %440 = vmatpush1.msra.mxu0 %v427
      %441 = vmatprep.subr.mxu0 0.0
      %442 = vmatpush1.msra.mxu0 %v428
      %443 = vmatprep.subr.mxu0 0.0
      %444 = vmatpush1.msra.mxu0 %v429
      %445 = vmatprep.subr.mxu0 0.0
      %446 = vmatpush1.msra.mxu0 0.0
      %447 = vmatprep.subr.mxu0 0.0
      %448 = vmatpush1.msra.mxu0 0.0
      %449 = vmatprep.subr.mxu0 0.0
      %450 = vmatpush1.msra.mxu0 0.0
      %451 = vmatprep.subr.mxu0 0.0
      %452 = vmatpush1.msra.mxu0 0.0
      %453 = vmatprep.subr.mxu0 0.0
      %454 = vmatpush1.msra.mxu0 0.0
      %455 = vmatprep.subr.mxu0 0.0
      %456 = vmatpush1.msra.mxu0 0.0
      %457 = vmatprep.subr.mxu0 0.0
      %458 = vmatpush1.msra.mxu0 0.0
      %459 = vmatprep.subr.mxu0 0.0
      %460 = vmatpush1.msra.mxu0 0.0
      %461 = vmatprep.subr.mxu0 0.0
      %462 = vmatpush1.msra.mxu0 0.0
      %463 = vmatprep.subr.mxu0 0.0
      %464 = vmatpush1.msra.mxu0 0.0
      %465 = vmatprep.subr.mxu0 0.0
      %466 = vmatpush1.msra.mxu0 0.0
      %467 = vmatprep.subr.mxu0 0.0
      %468 = vmatpush1.msra.mxu0 0.0
      %469 = vmatprep.subr.mxu0 0.0
      %470 = vmatpush1.msra.mxu0 0.0
      %471 = vmatprep.subr.mxu0 0.0
      %472 = vmatpush1.msra.mxu0 0.0
      %473 = vmatprep.subr.mxu0 0.0
      %474 = vmatpush1.msra.mxu0 0.0
      %475 = vmatprep.subr.mxu0 0.0
      %476 = vmatpush1.msra.mxu0 0.0
      %477 = vmatprep.subr.mxu0 0.0
      %478 = vmatpush1.msra.mxu0 0.0
      %479 = vmatprep.subr.mxu0 0.0
      %480 = vmatpush1.msra.mxu0 0.0
      %481 = vmatprep.subr.mxu0 0.0
      %482 = vmatpush1.msra.mxu0 0.0
      %483 = vmatprep.subr.mxu0 0.0
      %484 = vmatpush1.msra.mxu0 0.0
      %485 = vmatprep.subr.mxu0 0.0
      %486 = vmatpush1.msra.mxu0 0.0
      %487 = vmatprep.subr.mxu0 0.0
      %488 = vmatpush1.msra.mxu0 0.0
      %489 = vmatprep.subr.mxu0 0.0
      %490 = vmatpush1.msra.mxu0 0.0
      %491 = vmatprep.subr.mxu0 0.0
      %492 = vmatpush1.msra.mxu0 0.0
      %493 = vmatprep.subr.mxu0 0.0
      %494 = vmatpush1.msra.mxu0 0.0
      %495 = vmatprep.subr.mxu0 0.0
      %496 = vmatpush1.msra.mxu0 0.0
      %497 = vmatprep.subr.mxu0 0.0
      %498 = vmatpush1.msra.mxu0 0.0
      %499 = vmatprep.subr.mxu0 0.0
      %500 = vmatpush1.msra.mxu0 0.0
      %501 = vmatprep.mubr.f32.mxu0 0.0
      %502 = vmatmul.mubr.f32.gmra.mrb[0].mxu0 %v346
      %v503 = vpop.f32.mrb[0].mxu0
      %v504 = vadd.f32 %v435, %v503
      %v505 = vpop.f32.mrb[0].mxu0
      %506 = vmatprep.mubr.f32.mxu0 0.0
      %507 = vmatmul.mubr.f32.gmra.mrb[0].mxu0 %v349
      %v508 = vpop.f32.mrb[0].mxu0
      %v509 = vadd.f32 %v435, %v508
      %v510 = vpop.f32.mrb[0].mxu0
      %511 = vdwg.mxu0
      %v513 = vsel %vm344, 0.0, 0
      %515 = vmatprep.subr.mxu0 0.0
      %516 = vmatpush1.msra.mxu0 %v323
      %517 = vmatprep.subr.mxu0 0.0
      %518 = vmatpush1.msra.mxu0 %v324
      %519 = vmatprep.subr.mxu0 0.0
      %520 = vmatpush1.msra.mxu0 %v325
      %521 = vmatprep.subr.mxu0 0.0
      %522 = vmatpush1.msra.mxu0 %v326
      %523 = vmatprep.subr.mxu0 0.0
      %524 = vmatpush1.msra.mxu0 0.0
      %525 = vmatprep.subr.mxu0 0.0
      %526 = vmatpush1.msra.mxu0 0.0
      %527 = vmatprep.subr.mxu0 0.0
      %528 = vmatpush1.msra.mxu0 0.0
      %529 = vmatprep.subr.mxu0 0.0
      %530 = vmatpush1.msra.mxu0 0.0
      %531 = vmatprep.subr.mxu0 0.0
      %532 = vmatpush1.msra.mxu0 0.0
      %533 = vmatprep.subr.mxu0 0.0
      %534 = vmatpush1.msra.mxu0 0.0
      %535 = vmatprep.subr.mxu0 0.0
      %536 = vmatpush1.msra.mxu0 0.0
      %537 = vmatprep.subr.mxu0 0.0
      %538 = vmatpush1.msra.mxu0 0.0
      %539 = vmatprep.subr.mxu0 0.0
      %540 = vmatpush1.msra.mxu0 0.0
      %541 = vmatprep.subr.mxu0 0.0
      %542 = vmatpush1.msra.mxu0 0.0
      %543 = vmatprep.subr.mxu0 0.0
      %544 = vmatpush1.msra.mxu0 0.0
      %545 = vmatprep.subr.mxu0 0.0
      %546 = vmatpush1.msra.mxu0 0.0
      %547 = vmatprep.subr.mxu0 0.0
      %548 = vmatpush1.msra.mxu0 0.0
      %549 = vmatprep.subr.mxu0 0.0
      %550 = vmatpush1.msra.mxu0 0.0
      %551 = vmatprep.subr.mxu0 0.0
      %552 = vmatpush1.msra.mxu0 0.0
      %553 = vmatprep.subr.mxu0 0.0
      %554 = vmatpush1.msra.mxu0 0.0
      %555 = vmatprep.subr.mxu0 0.0
      %556 = vmatpush1.msra.mxu0 0.0
      %557 = vmatprep.subr.mxu0 0.0
      %558 = vmatpush1.msra.mxu0 0.0
      %559 = vmatprep.subr.mxu0 0.0
      %560 = vmatpush1.msra.mxu0 0.0
      %561 = vmatprep.subr.mxu0 0.0
      %562 = vmatpush1.msra.mxu0 0.0
      %563 = vmatprep.subr.mxu0 0.0
      %564 = vmatpush1.msra.mxu0 0.0
      %565 = vmatprep.subr.mxu0 0.0
      %566 = vmatpush1.msra.mxu0 0.0
      %567 = vmatprep.subr.mxu0 0.0
      %568 = vmatpush1.msra.mxu0 0.0
      %569 = vmatprep.subr.mxu0 0.0
      %570 = vmatpush1.msra.mxu0 0.0
      %571 = vmatprep.subr.mxu0 0.0
      %572 = vmatpush1.msra.mxu0 0.0
      %573 = vmatprep.subr.mxu0 0.0
      %574 = vmatpush1.msra.mxu0 0.0
      %575 = vmatprep.subr.mxu0 0.0
      %576 = vmatpush1.msra.mxu0 0.0
      %577 = vmatprep.subr.mxu0 0.0
      %578 = vmatpush1.msra.mxu0 0.0
      %579 = vmatprep.mubr.f32.mxu0 0.0
      %580 = vmatmul.mubr.f32.gmra.mrb[0].mxu0 %v513
      %v581 = vpop.f32.mrb[0].mxu0
      %v582 = vadd.f32 0.0, %v581
      %v583 = vpop.f32.mrb[0].mxu0
      %584 = vdwg.mxu0
      %v586 = vrot.slane %v582, 1
      %v589 = vadd.f32 %v418, %v582
      %v590 = vadd.f32 %v423, %v586
      %v591 = vxor.u32 %v589, 2147483648
      %v592 = vxor.u32 %v590, 2147483648
      %v593 = vmul.f32 %v591, 1.442695
      %v594 = vpow.pop %v593
      %v595 = vmul.f32 %v592, 1.442695
      %v596 = vpow.pop %v595
      %v597 = vadd.f32 %v594, 1.0
      %v598 = vadd.f32 %v596, 1.0
      %v599 = vrcp.pop %v597
      %v600 = vmul.f32 1.0, %v599
      %v601 = vrcp.pop %v598
      %v602 = vmul.f32 1.0, %v601
      %v603 = vtanh.pop %v589
      %v604 = vtanh.pop %v590
      %v605 = vmul.f32 %v600, 0.0
      %v606 = vmul.f32 %v602, 0.0
      %609 = vrot.lane.b32.xlu0 %v603, 64
      %v610 = vpop.permute.xlu0 %609
      %611 = vrot.lane.b32.xlu0 %v604, 64
      %v612 = vpop.permute.xlu0 %611
      %v615 = vmul.f32 %v600, %v610
      %v616 = vmul.f32 %v602, %v612
      %619 = vrot.lane.b32.xlu0 %v615, 32
      %v620 = vpop.permute.xlu0 %619
      %621 = vrot.lane.b32.xlu0 %v616, 32
      %v622 = vpop.permute.xlu0 %621
      %v625 = vadd.f32 %v605, %v620
      %v626 = vadd.f32 %v606, %v622
      %v627 = vtanh.pop %v625
      %v628 = vtanh.pop %v626
      %631 = vrot.lane.b32.xlu0 %v627, 64
      %v632 = vpop.permute.xlu0 %631
      %633 = vrot.lane.b32.xlu0 %v628, 64
      %v634 = vpop.permute.xlu0 %633
      %v637 = vmul.f32 %v600, %v632
      %v638 = vmul.f32 %v602, %v634
      %639 = vmatprep.subr.mxu0 0.0
      %640 = vmatpush1.msra.mxu0 %v327
      %641 = vmatprep.subr.mxu0 0.0
      %642 = vmatpush1.msra.mxu0 %v328
      %643 = vmatprep.subr.mxu0 0.0
      %644 = vmatpush1.msra.mxu0 %v329
      %645 = vmatprep.subr.mxu0 0.0
      %646 = vmatpush1.msra.mxu0 %v330
      %647 = vmatprep.subr.mxu0 0.0
      %648 = vmatpush1.msra.mxu0 0.0
      %649 = vmatprep.subr.mxu0 0.0
      %650 = vmatpush1.msra.mxu0 0.0
      %651 = vmatprep.subr.mxu0 0.0
      %652 = vmatpush1.msra.mxu0 0.0
      %653 = vmatprep.subr.mxu0 0.0
      %654 = vmatpush1.msra.mxu0 0.0
      %655 = vmatprep.subr.mxu0 0.0
      %656 = vmatpush1.msra.mxu0 0.0
      %657 = vmatprep.subr.mxu0 0.0
      %658 = vmatpush1.msra.mxu0 0.0
      %659 = vmatprep.subr.mxu0 0.0
      %660 = vmatpush1.msra.mxu0 0.0
      %661 = vmatprep.subr.mxu0 0.0
      %662 = vmatpush1.msra.mxu0 0.0
      %663 = vmatprep.subr.mxu0 0.0
      %664 = vmatpush1.msra.mxu0 0.0
      %665 = vmatprep.subr.mxu0 0.0
      %666 = vmatpush1.msra.mxu0 0.0
      %667 = vmatprep.subr.mxu0 0.0
      %668 = vmatpush1.msra.mxu0 0.0
      %669 = vmatprep.subr.mxu0 0.0
      %670 = vmatpush1.msra.mxu0 0.0
      %671 = vmatprep.subr.mxu0 0.0
      %672 = vmatpush1.msra.mxu0 0.0
      %673 = vmatprep.subr.mxu0 0.0
      %674 = vmatpush1.msra.mxu0 0.0
      %675 = vmatprep.subr.mxu0 0.0
      %676 = vmatpush1.msra.mxu0 0.0
      %677 = vmatprep.subr.mxu0 0.0
      %678 = vmatpush1.msra.mxu0 0.0
      %679 = vmatprep.subr.mxu0 0.0
      %680 = vmatpush1.msra.mxu0 0.0
      %681 = vmatprep.subr.mxu0 0.0
      %682 = vmatpush1.msra.mxu0 0.0
      %683 = vmatprep.subr.mxu0 0.0
      %684 = vmatpush1.msra.mxu0 0.0
      %685 = vmatprep.subr.mxu0 0.0
      %686 = vmatpush1.msra.mxu0 0.0
      %687 = vmatprep.subr.mxu0 0.0
      %688 = vmatpush1.msra.mxu0 0.0
      %689 = vmatprep.subr.mxu0 0.0
      %690 = vmatpush1.msra.mxu0 0.0
      %691 = vmatprep.subr.mxu0 0.0
      %692 = vmatpush1.msra.mxu0 0.0
      %693 = vmatprep.subr.mxu0 0.0
      %694 = vmatpush1.msra.mxu0 0.0
      %695 = vmatprep.subr.mxu0 0.0
      %696 = vmatpush1.msra.mxu0 0.0
      %697 = vmatprep.subr.mxu0 0.0
      %698 = vmatpush1.msra.mxu0 0.0
      %699 = vmatprep.subr.mxu0 0.0
      %700 = vmatpush1.msra.mxu0 0.0
      %701 = vmatprep.subr.mxu0 0.0
      %702 = vmatpush1.msra.mxu0 0.0
      %703 = vmatprep.mubr.f32.mxu0 0.0
      %704 = vmatmul.mubr.f32.gmra.mrb[0].mxu0 %v513
      %v705 = vpop.f32.mrb[0].mxu0
      %v706 = vadd.f32 0.0, %v705
      %v707 = vpop.f32.mrb[0].mxu0
      %708 = vdwg.mxu0
      %v710 = vrot.slane %v706, 1
      %v711 = vrot.slane %v706, 2
      %v714 = vadd.f32 %v504, %v710
      %v715 = vadd.f32 %v509, %v711
      %v716 = vxor.u32 %v714, 2147483648
      %v717 = vxor.u32 %v715, 2147483648
      %v718 = vmul.f32 %v716, 1.442695
      %v719 = vpow.pop %v718
      %v720 = vmul.f32 %v717, 1.442695
      %v721 = vpow.pop %v720
      %v722 = vadd.f32 %v719, 1.0
      %v723 = vadd.f32 %v721, 1.0
      %v724 = vrcp.pop %v722
      %v725 = vmul.f32 1.0, %v724
      %v726 = vrcp.pop %v723
      %v727 = vmul.f32 1.0, %v726
      %v728 = vtanh.pop %v714
      %v729 = vtanh.pop %v715
      %v730 = vmul.f32 %v725, 0.0
      %v731 = vmul.f32 %v727, 0.0
      %734 = vrot.lane.b32.xlu0 %v728, 64
      %v735 = vpop.permute.xlu0 %734
      %736 = vrot.lane.b32.xlu0 %v729, 64
      %v737 = vpop.permute.xlu0 %736
      %v740 = vmul.f32 %v725, %v735
      %v741 = vmul.f32 %v727, %v737
      %744 = vrot.lane.b32.xlu0 %v740, 32
      %v745 = vpop.permute.xlu0 %744
      %746 = vrot.lane.b32.xlu0 %v741, 32
      %v747 = vpop.permute.xlu0 %746
      %v750 = vadd.f32 %v730, %v745
      %v751 = vadd.f32 %v731, %v747
      %v752 = vtanh.pop %v750
      %v753 = vtanh.pop %v751
      %756 = vrot.lane.b32.xlu0 %v752, 64
      %v757 = vpop.permute.xlu0 %756
      %758 = vrot.lane.b32.xlu0 %v753, 64
      %v759 = vpop.permute.xlu0 %758
      %v762 = vmul.f32 %v725, %v757
      %v763 = vmul.f32 %v727, %v759
      %766 = vrot.lane.b32.xlu0 %v637, 32
      %v767 = vpop.permute.xlu0 %766
      %768 = vrot.lane.b32.xlu0 %v638, 32
      %v769 = vpop.permute.xlu0 %768
      %vm772 = vcmask 253952
      %773 = vst.msk [vmem:[%s315] sm:$0x1] %vm772, %v767
      %774 = vst.msk [vmem:[%s315 + $0x8] sm:$0x1] %vm772, %v769
      %777 = vrot.lane.b32.xlu0 %v762, 32
      %v778 = vpop.permute.xlu0 %777
      %779 = vrot.lane.b32.xlu0 %v763, 32
      %v780 = vpop.permute.xlu0 %779
      %vm783 = vcmask 261127
      %784 = vst.msk [vmem:[%s321] sm:$0x80] %vm783, %v778
      %785 = vst.msk [vmem:[%s321 + $0x8] sm:$0x80] %vm783, %v780
      %v786 = vrot.slane %v638, 7
      %vm787 = vcmask 1041409
      %v788 = vsel %vm787, %v786, %v637
      %789 = vrot.lane.b32.xlu0 %v788, 32
      %v790 = vpop.permute.xlu0 %789
      %v791 = vsel %vm344, %v790, 0
      %793 = vmatprep.subr.mxu0 0.0
      %794 = vmatpush1.msra.mxu0 %v323
      %795 = vmatprep.subr.mxu0 0.0
      %796 = vmatpush1.msra.mxu0 %v324
      %797 = vmatprep.subr.mxu0 0.0
      %798 = vmatpush1.msra.mxu0 %v325
      %799 = vmatprep.subr.mxu0 0.0
      %800 = vmatpush1.msra.mxu0 %v326
      %801 = vmatprep.subr.mxu0 0.0
      %802 = vmatpush1.msra.mxu0 0.0
      %803 = vmatprep.subr.mxu0 0.0
      %804 = vmatpush1.msra.mxu0 0.0
      %805 = vmatprep.subr.mxu0 0.0
      %806 = vmatpush1.msra.mxu0 0.0
      %807 = vmatprep.subr.mxu0 0.0
      %808 = vmatpush1.msra.mxu0 0.0
      %809 = vmatprep.subr.mxu0 0.0
      %810 = vmatpush1.msra.mxu0 0.0
      %811 = vmatprep.subr.mxu0 0.0
      %812 = vmatpush1.msra.mxu0 0.0
      %813 = vmatprep.subr.mxu0 0.0
      %814 = vmatpush1.msra.mxu0 0.0
      %815 = vmatprep.subr.mxu0 0.0
      %816 = vmatpush1.msra.mxu0 0.0
      %817 = vmatprep.subr.mxu0 0.0
      %818 = vmatpush1.msra.mxu0 0.0
      %819 = vmatprep.subr.mxu0 0.0
      %820 = vmatpush1.msra.mxu0 0.0
      %821 = vmatprep.subr.mxu0 0.0
      %822 = vmatpush1.msra.mxu0 0.0
      %823 = vmatprep.subr.mxu0 0.0
      %824 = vmatpush1.msra.mxu0 0.0
      %825 = vmatprep.subr.mxu0 0.0
      %826 = vmatpush1.msra.mxu0 0.0
      %827 = vmatprep.subr.mxu0 0.0
      %828 = vmatpush1.msra.mxu0 0.0
      %829 = vmatprep.subr.mxu0 0.0
      %830 = vmatpush1.msra.mxu0 0.0
      %831 = vmatprep.subr.mxu0 0.0
      %832 = vmatpush1.msra.mxu0 0.0
      %833 = vmatprep.subr.mxu0 0.0
      %834 = vmatpush1.msra.mxu0 0.0
      %835 = vmatprep.subr.mxu0 0.0
      %836 = vmatpush1.msra.mxu0 0.0
      %837 = vmatprep.subr.mxu0 0.0
      %838 = vmatpush1.msra.mxu0 0.0
      %839 = vmatprep.subr.mxu0 0.0
      %840 = vmatpush1.msra.mxu0 0.0
      %841 = vmatprep.subr.mxu0 0.0
      %842 = vmatpush1.msra.mxu0 0.0
      %843 = vmatprep.subr.mxu0 0.0
      %844 = vmatpush1.msra.mxu0 0.0
      %845 = vmatprep.subr.mxu0 0.0
      %846 = vmatpush1.msra.mxu0 0.0
      %847 = vmatprep.subr.mxu0 0.0
      %848 = vmatpush1.msra.mxu0 0.0
      %849 = vmatprep.subr.mxu0 0.0
      %850 = vmatpush1.msra.mxu0 0.0
      %851 = vmatprep.subr.mxu0 0.0
      %852 = vmatpush1.msra.mxu0 0.0
      %853 = vmatprep.subr.mxu0 0.0
      %854 = vmatpush1.msra.mxu0 0.0
      %855 = vmatprep.subr.mxu0 0.0
      %856 = vmatpush1.msra.mxu0 0.0
      %857 = vmatprep.mubr.f32.mxu0 0.0
      %858 = vmatmul.mubr.f32.gmra.mrb[0].mxu0 %v791
      %v859 = vpop.f32.mrb[0].mxu0
      %v860 = vadd.f32 0.0, %v859
      %v861 = vpop.f32.mrb[0].mxu0
      %862 = vdwg.mxu0
      %v864 = vrot.slane %v860, 7
      %v867 = vadd.f32 %v418, %v864
      %v868 = vadd.f32 %v423, %v860
      %v869 = vxor.u32 %v867, 2147483648
      %v870 = vxor.u32 %v868, 2147483648
      %v871 = vmul.f32 %v869, 1.442695
      %v872 = vpow.pop %v871
      %v873 = vmul.f32 %v870, 1.442695
      %v874 = vpow.pop %v873
      %v875 = vadd.f32 %v872, 1.0
      %v876 = vadd.f32 %v874, 1.0
      %v877 = vrcp.pop %v875
      %v878 = vmul.f32 1.0, %v877
      %v879 = vrcp.pop %v876
      %v880 = vmul.f32 1.0, %v879
      %v881 = vtanh.pop %v867
      %v882 = vtanh.pop %v868
      %v885 = vrot.slane %v625, 7
      %v886 = vrot.slane %v626, 7
      %v889 = vmul.f32 %v878, %v885
      %v890 = vmul.f32 %v880, %v886
      %893 = vrot.lane.b32.xlu0 %v881, 64
      %v894 = vpop.permute.xlu0 %893
      %895 = vrot.lane.b32.xlu0 %v882, 64
      %v896 = vpop.permute.xlu0 %895
      %v899 = vmul.f32 %v878, %v894
      %v900 = vmul.f32 %v880, %v896
      %903 = vrot.lane.b32.xlu0 %v899, 32
      %v904 = vpop.permute.xlu0 %903
      %905 = vrot.lane.b32.xlu0 %v900, 32
      %v906 = vpop.permute.xlu0 %905
      %v909 = vadd.f32 %v889, %v904
      %v910 = vadd.f32 %v890, %v906
      %v911 = vtanh.pop %v909
      %v912 = vtanh.pop %v910
      %915 = vrot.lane.b32.xlu0 %v911, 64
      %v916 = vpop.permute.xlu0 %915
      %917 = vrot.lane.b32.xlu0 %v912, 64
      %v918 = vpop.permute.xlu0 %917
      %v921 = vmul.f32 %v878, %v916
      %v922 = vmul.f32 %v880, %v918
      %v923 = vrot.slane %v762, 7
      %v924 = vrot.slane %v763, 6
      %v925 = vsel %vm787, %v924, %v923
      %926 = vrot.lane.b32.xlu0 %v925, 32
      %v927 = vpop.permute.xlu0 %926
      %v928 = vsel %vm344, %v927, 0
      %930 = vmatprep.subr.mxu0 0.0
      %931 = vmatpush1.msra.mxu0 %v327
      %932 = vmatprep.subr.mxu0 0.0
      %933 = vmatpush1.msra.mxu0 %v328
      %934 = vmatprep.subr.mxu0 0.0
      %935 = vmatpush1.msra.mxu0 %v329
      %936 = vmatprep.subr.mxu0 0.0
      %937 = vmatpush1.msra.mxu0 %v330
      %938 = vmatprep.subr.mxu0 0.0
      %939 = vmatpush1.msra.mxu0 0.0
      %940 = vmatprep.subr.mxu0 0.0
      %941 = vmatpush1.msra.mxu0 0.0
      %942 = vmatprep.subr.mxu0 0.0
      %943 = vmatpush1.msra.mxu0 0.0
      %944 = vmatprep.subr.mxu0 0.0
      %945 = vmatpush1.msra.mxu0 0.0
      %946 = vmatprep.subr.mxu0 0.0
      %947 = vmatpush1.msra.mxu0 0.0
      %948 = vmatprep.subr.mxu0 0.0
      %949 = vmatpush1.msra.mxu0 0.0
      %950 = vmatprep.subr.mxu0 0.0
      %951 = vmatpush1.msra.mxu0 0.0
      %952 = vmatprep.subr.mxu0 0.0
      %953 = vmatpush1.msra.mxu0 0.0
      %954 = vmatprep.subr.mxu0 0.0
      %955 = vmatpush1.msra.mxu0 0.0
      %956 = vmatprep.subr.mxu0 0.0
      %957 = vmatpush1.msra.mxu0 0.0
      %958 = vmatprep.subr.mxu0 0.0
      %959 = vmatpush1.msra.mxu0 0.0
      %960 = vmatprep.subr.mxu0 0.0
      %961 = vmatpush1.msra.mxu0 0.0
      %962 = vmatprep.subr.mxu0 0.0
      %963 = vmatpush1.msra.mxu0 0.0
      %964 = vmatprep.subr.mxu0 0.0
      %965 = vmatpush1.msra.mxu0 0.0
      %966 = vmatprep.subr.mxu0 0.0
      %967 = vmatpush1.msra.mxu0 0.0
      %968 = vmatprep.subr.mxu0 0.0
      %969 = vmatpush1.msra.mxu0 0.0
      %970 = vmatprep.subr.mxu0 0.0
      %971 = vmatpush1.msra.mxu0 0.0
      %972 = vmatprep.subr.mxu0 0.0
      %973 = vmatpush1.msra.mxu0 0.0
      %974 = vmatprep.subr.mxu0 0.0
      %975 = vmatpush1.msra.mxu0 0.0
      %976 = vmatprep.subr.mxu0 0.0
      %977 = vmatpush1.msra.mxu0 0.0
      %978 = vmatprep.subr.mxu0 0.0
      %979 = vmatpush1.msra.mxu0 0.0
      %980 = vmatprep.subr.mxu0 0.0
      %981 = vmatpush1.msra.mxu0 0.0
      %982 = vmatprep.subr.mxu0 0.0
      %983 = vmatpush1.msra.mxu0 0.0
      %984 = vmatprep.subr.mxu0 0.0
      %985 = vmatpush1.msra.mxu0 0.0
      %986 = vmatprep.subr.mxu0 0.0
      %987 = vmatpush1.msra.mxu0 0.0
      %988 = vmatprep.subr.mxu0 0.0
      %989 = vmatpush1.msra.mxu0 0.0
      %990 = vmatprep.subr.mxu0 0.0
      %991 = vmatpush1.msra.mxu0 0.0
      %992 = vmatprep.subr.mxu0 0.0
      %993 = vmatpush1.msra.mxu0 0.0
      %994 = vmatprep.mubr.f32.mxu0 0.0
      %995 = vmatmul.mubr.f32.gmra.mrb[0].mxu0 %v928
      %v996 = vpop.f32.mrb[0].mxu0
      %v997 = vadd.f32 0.0, %v996
      %v998 = vpop.f32.mrb[0].mxu0
      %999 = vdwg.mxu0
      %v1001 = vrot.slane %v997, 2
      %v1002 = vrot.slane %v997, 3
      %v1005 = vadd.f32 %v504, %v1001
      %v1006 = vadd.f32 %v509, %v1002
      %v1007 = vxor.u32 %v1005, 2147483648
      %v1008 = vxor.u32 %v1006, 2147483648
      %v1009 = vmul.f32 %v1007, 1.442695
      %v1010 = vpow.pop %v1009
      %v1011 = vmul.f32 %v1008, 1.442695
      %v1012 = vpow.pop %v1011
      %v1013 = vadd.f32 %v1010, 1.0
      %v1014 = vadd.f32 %v1012, 1.0
      %v1015 = vrcp.pop %v1013
      %v1016 = vmul.f32 1.0, %v1015
      %v1017 = vrcp.pop %v1014
      %v1018 = vmul.f32 1.0, %v1017
      %v1019 = vtanh.pop %v1005
      %v1020 = vtanh.pop %v1006
      %v1023 = vrot.slane %v750, 1
      %v1024 = vrot.slane %v751, 1
      %v1027 = vmul.f32 %v1016, %v1023
      %v1028 = vmul.f32 %v1018, %v1024
      %1031 = vrot.lane.b32.xlu0 %v1019, 64
      %v1032 = vpop.permute.xlu0 %1031
      %1033 = vrot.lane.b32.xlu0 %v1020, 64
      %v1034 = vpop.permute.xlu0 %1033
      %v1037 = vmul.f32 %v1016, %v1032
      %v1038 = vmul.f32 %v1018, %v1034
      %1041 = vrot.lane.b32.xlu0 %v1037, 32
      %v1042 = vpop.permute.xlu0 %1041
      %1043 = vrot.lane.b32.xlu0 %v1038, 32
      %v1044 = vpop.permute.xlu0 %1043
      %v1047 = vadd.f32 %v1027, %v1042
      %v1048 = vadd.f32 %v1028, %v1044
      %v1049 = vtanh.pop %v1047
      %v1050 = vtanh.pop %v1048
      %1053 = vrot.lane.b32.xlu0 %v1049, 64
      %v1054 = vpop.permute.xlu0 %1053
      %1055 = vrot.lane.b32.xlu0 %v1050, 64
      %v1056 = vpop.permute.xlu0 %1055
      %v1059 = vmul.f32 %v1016, %v1054
      %v1060 = vmul.f32 %v1018, %v1056
      %1063 = vrot.lane.b32.xlu0 %v921, 32
      %v1064 = vpop.permute.xlu0 %1063
      %1065 = vrot.lane.b32.xlu0 %v922, 32
      %v1066 = vpop.permute.xlu0 %1065
      %vm1069 = vcmask 254977
      %1070 = vst.msk [vmem:[%s315] sm:$0x2] %vm1069, %v1064
      %1071 = vst.msk [vmem:[%s315 + $0x8] sm:$0x2] %vm1069, %v1066
      %1074 = vrot.lane.b32.xlu0 %v1059, 32
      %v1075 = vpop.permute.xlu0 %1074
      %1076 = vrot.lane.b32.xlu0 %v1060, 32
      %v1077 = vpop.permute.xlu0 %1076
      %vm1080 = vcmask 260102
      %1081 = vst.msk [vmem:[%s321] sm:$0x40] %vm1080, %v1075
      %1082 = vst.msk [vmem:[%s321 + $0x8] sm:$0x40] %vm1080, %v1077
      %v1083 = vrot.slane %v921, 1
      %v1084 = vsel %vm787, %v922, %v1083
      %1085 = vrot.lane.b32.xlu0 %v1084, 32
      %v1086 = vpop.permute.xlu0 %1085
      %v1087 = vsel %vm344, %v1086, 0
      %1089 = vmatprep.subr.mxu0 0.0
      %1090 = vmatpush1.msra.mxu0 %v323
      %1091 = vmatprep.subr.mxu0 0.0
      %1092 = vmatpush1.msra.mxu0 %v324
      %1093 = vmatprep.subr.mxu0 0.0
      %1094 = vmatpush1.msra.mxu0 %v325
      %1095 = vmatprep.subr.mxu0 0.0
      %1096 = vmatpush1.msra.mxu0 %v326
      %1097 = vmatprep.subr.mxu0 0.0
      %1098 = vmatpush1.msra.mxu0 0.0
      %1099 = vmatprep.subr.mxu0 0.0
      %1100 = vmatpush1.msra.mxu0 0.0
      %1101 = vmatprep.subr.mxu0 0.0
      %1102 = vmatpush1.msra.mxu0 0.0
      %1103 = vmatprep.subr.mxu0 0.0
      %1104 = vmatpush1.msra.mxu0 0.0
      %1105 = vmatprep.subr.mxu0 0.0
      %1106 = vmatpush1.msra.mxu0 0.0
      %1107 = vmatprep.subr.mxu0 0.0
      %1108 = vmatpush1.msra.mxu0 0.0
      %1109 = vmatprep.subr.mxu0 0.0
      %1110 = vmatpush1.msra.mxu0 0.0
      %1111 = vmatprep.subr.mxu0 0.0
      %1112 = vmatpush1.msra.mxu0 0.0
      %1113 = vmatprep.subr.mxu0 0.0
      %1114 = vmatpush1.msra.mxu0 0.0
      %1115 = vmatprep.subr.mxu0 0.0
      %1116 = vmatpush1.msra.mxu0 0.0
      %1117 = vmatprep.subr.mxu0 0.0
      %1118 = vmatpush1.msra.mxu0 0.0
      %1119 = vmatprep.subr.mxu0 0.0
      %1120 = vmatpush1.msra.mxu0 0.0
      %1121 = vmatprep.subr.mxu0 0.0
      %1122 = vmatpush1.msra.mxu0 0.0
      %1123 = vmatprep.subr.mxu0 0.0
      %1124 = vmatpush1.msra.mxu0 0.0
      %1125 = vmatprep.subr.mxu0 0.0
      %1126 = vmatpush1.msra.mxu0 0.0
      %1127 = vmatprep.subr.mxu0 0.0
      %1128 = vmatpush1.msra.mxu0 0.0
      %1129 = vmatprep.subr.mxu0 0.0
      %1130 = vmatpush1.msra.mxu0 0.0
      %1131 = vmatprep.subr.mxu0 0.0
      %1132 = vmatpush1.msra.mxu0 0.0
      %1133 = vmatprep.subr.mxu0 0.0
      %1134 = vmatpush1.msra.mxu0 0.0
      %1135 = vmatprep.subr.mxu0 0.0
      %1136 = vmatpush1.msra.mxu0 0.0
      %1137 = vmatprep.subr.mxu0 0.0
      %1138 = vmatpush1.msra.mxu0 0.0
      %1139 = vmatprep.subr.mxu0 0.0
      %1140 = vmatpush1.msra.mxu0 0.0
      %1141 = vmatprep.subr.mxu0 0.0
      %1142 = vmatpush1.msra.mxu0 0.0
      %1143 = vmatprep.subr.mxu0 0.0
      %1144 = vmatpush1.msra.mxu0 0.0
      %1145 = vmatprep.subr.mxu0 0.0
      %1146 = vmatpush1.msra.mxu0 0.0
      %1147 = vmatprep.subr.mxu0 0.0
      %1148 = vmatpush1.msra.mxu0 0.0
      %1149 = vmatprep.subr.mxu0 0.0
      %1150 = vmatpush1.msra.mxu0 0.0
      %1151 = vmatprep.subr.mxu0 0.0
      %1152 = vmatpush1.msra.mxu0 0.0
      %1153 = vmatprep.mubr.f32.mxu0 0.0
      %1154 = vmatmul.mubr.f32.gmra.mrb[0].mxu0 %v1087
      %v1155 = vpop.f32.mrb[0].mxu0
      %v1156 = vadd.f32 0.0, %v1155
      %v1157 = vpop.f32.mrb[0].mxu0
      %1158 = vdwg.mxu0
      %v1160 = vrot.slane %v1156, 6
      %v1161 = vrot.slane %v1156, 7
      %v1164 = vadd.f32 %v418, %v1160
      %v1165 = vadd.f32 %v423, %v1161
      %v1166 = vxor.u32 %v1164, 2147483648
      %v1167 = vxor.u32 %v1165, 2147483648
      %v1168 = vmul.f32 %v1166, 1.442695
      %v1169 = vpow.pop %v1168
      %v1170 = vmul.f32 %v1167, 1.442695
      %v1171 = vpow.pop %v1170
      %v1172 = vadd.f32 %v1169, 1.0
      %v1173 = vadd.f32 %v1171, 1.0
      %v1174 = vrcp.pop %v1172
      %v1175 = vmul.f32 1.0, %v1174
      %v1176 = vrcp.pop %v1173
      %v1177 = vmul.f32 1.0, %v1176
      %v1178 = vtanh.pop %v1164
      %v1179 = vtanh.pop %v1165
      %v1182 = vrot.slane %v909, 7
      %v1183 = vrot.slane %v910, 7
      %v1186 = vmul.f32 %v1175, %v1182
      %v1187 = vmul.f32 %v1177, %v1183
      %1190 = vrot.lane.b32.xlu0 %v1178, 64
      %v1191 = vpop.permute.xlu0 %1190
      %1192 = vrot.lane.b32.xlu0 %v1179, 64
      %v1193 = vpop.permute.xlu0 %1192
      %v1196 = vmul.f32 %v1175, %v1191
      %v1197 = vmul.f32 %v1177, %v1193
      %1200 = vrot.lane.b32.xlu0 %v1196, 32
      %v1201 = vpop.permute.xlu0 %1200
      %1202 = vrot.lane.b32.xlu0 %v1197, 32
      %v1203 = vpop.permute.xlu0 %1202
      %v1206 = vadd.f32 %v1186, %v1201
      %v1207 = vadd.f32 %v1187, %v1203
      %v1208 = vtanh.pop %v1206
      %v1209 = vtanh.pop %v1207
      %1212 = vrot.lane.b32.xlu0 %v1208, 64
      %v1213 = vpop.permute.xlu0 %1212
      %1214 = vrot.lane.b32.xlu0 %v1209, 64
      %v1215 = vpop.permute.xlu0 %1214
      %v1218 = vmul.f32 %v1175, %v1213
      %v1219 = vmul.f32 %v1177, %v1215
      %v1220 = vrot.slane %v1059, 6
      %v1221 = vrot.slane %v1060, 5
      %v1222 = vsel %vm787, %v1221, %v1220
      %1223 = vrot.lane.b32.xlu0 %v1222, 32
      %v1224 = vpop.permute.xlu0 %1223
      %v1225 = vsel %vm344, %v1224, 0
      %1227 = vmatprep.subr.mxu0 0.0
      %1228 = vmatpush1.msra.mxu0 %v327
      %1229 = vmatprep.subr.mxu0 0.0
      %1230 = vmatpush1.msra.mxu0 %v328
      %1231 = vmatprep.subr.mxu0 0.0
      %1232 = vmatpush1.msra.mxu0 %v329
      %1233 = vmatprep.subr.mxu0 0.0
      %1234 = vmatpush1.msra.mxu0 %v330
      %1235 = vmatprep.subr.mxu0 0.0
      %1236 = vmatpush1.msra.mxu0 0.0
      %1237 = vmatprep.subr.mxu0 0.0
      %1238 = vmatpush1.msra.mxu0 0.0
      %1239 = vmatprep.subr.mxu0 0.0
      %1240 = vmatpush1.msra.mxu0 0.0
      %1241 = vmatprep.subr.mxu0 0.0
      %1242 = vmatpush1.msra.mxu0 0.0
      %1243 = vmatprep.subr.mxu0 0.0
      %1244 = vmatpush1.msra.mxu0 0.0
      %1245 = vmatprep.subr.mxu0 0.0
      %1246 = vmatpush1.msra.mxu0 0.0
      %1247 = vmatprep.subr.mxu0 0.0
      %1248 = vmatpush1.msra.mxu0 0.0
      %1249 = vmatprep.subr.mxu0 0.0
      %1250 = vmatpush1.msra.mxu0 0.0
      %1251 = vmatprep.subr.mxu0 0.0
      %1252 = vmatpush1.msra.mxu0 0.0
      %1253 = vmatprep.subr.mxu0 0.0
      %1254 = vmatpush1.msra.mxu0 0.0
      %1255 = vmatprep.subr.mxu0 0.0
      %1256 = vmatpush1.msra.mxu0 0.0
      %1257 = vmatprep.subr.mxu0 0.0
      %1258 = vmatpush1.msra.mxu0 0.0
      %1259 = vmatprep.subr.mxu0 0.0
      %1260 = vmatpush1.msra.mxu0 0.0
      %1261 = vmatprep.subr.mxu0 0.0
      %1262 = vmatpush1.msra.mxu0 0.0
      %1263 = vmatprep.subr.mxu0 0.0
      %1264 = vmatpush1.msra.mxu0 0.0
      %1265 = vmatprep.subr.mxu0 0.0
      %1266 = vmatpush1.msra.mxu0 0.0
      %1267 = vmatprep.subr.mxu0 0.0
      %1268 = vmatpush1.msra.mxu0 0.0
      %1269 = vmatprep.subr.mxu0 0.0
      %1270 = vmatpush1.msra.mxu0 0.0
      %1271 = vmatprep.subr.mxu0 0.0
      %1272 = vmatpush1.msra.mxu0 0.0
      %1273 = vmatprep.subr.mxu0 0.0
      %1274 = vmatpush1.msra.mxu0 0.0
      %1275 = vmatprep.subr.mxu0 0.0
      %1276 = vmatpush1.msra.mxu0 0.0
      %1277 = vmatprep.subr.mxu0 0.0
      %1278 = vmatpush1.msra.mxu0 0.0
      %1279 = vmatprep.subr.mxu0 0.0
      %1280 = vmatpush1.msra.mxu0 0.0
      %1281 = vmatprep.subr.mxu0 0.0
      %1282 = vmatpush1.msra.mxu0 0.0
      %1283 = vmatprep.subr.mxu0 0.0
      %1284 = vmatpush1.msra.mxu0 0.0
      %1285 = vmatprep.subr.mxu0 0.0
      %1286 = vmatpush1.msra.mxu0 0.0
      %1287 = vmatprep.subr.mxu0 0.0
      %1288 = vmatpush1.msra.mxu0 0.0
      %1289 = vmatprep.subr.mxu0 0.0
      %1290 = vmatpush1.msra.mxu0 0.0
      %1291 = vmatprep.mubr.f32.mxu0 0.0
      %1292 = vmatmul.mubr.f32.gmra.mrb[0].mxu0 %v1225
      %v1293 = vpop.f32.mrb[0].mxu0
      %v1294 = vadd.f32 0.0, %v1293
      %v1295 = vpop.f32.mrb[0].mxu0
      %1296 = vdwg.mxu0
      %v1298 = vrot.slane %v1294, 3
      %v1299 = vrot.slane %v1294, 4
      %v1302 = vadd.f32 %v504, %v1298
      %v1303 = vadd.f32 %v509, %v1299
      %v1304 = vxor.u32 %v1302, 2147483648
      %v1305 = vxor.u32 %v1303, 2147483648
      %v1306 = vmul.f32 %v1304, 1.442695
      %v1307 = vpow.pop %v1306
      %v1308 = vmul.f32 %v1305, 1.442695
      %v1309 = vpow.pop %v1308
      %v1310 = vadd.f32 %v1307, 1.0
      %v1311 = vadd.f32 %v1309, 1.0
      %v1312 = vrcp.pop %v1310
      %v1313 = vmul.f32 1.0, %v1312
      %v1314 = vrcp.pop %v1311
      %v1315 = vmul.f32 1.0, %v1314
      %v1316 = vtanh.pop %v1302
      %v1317 = vtanh.pop %v1303
      %v1320 = vrot.slane %v1047, 1
      %v1321 = vrot.slane %v1048, 1
      %v1324 = vmul.f32 %v1313, %v1320
      %v1325 = vmul.f32 %v1315, %v1321
      %1328 = vrot.lane.b32.xlu0 %v1316, 64
      %v1329 = vpop.permute.xlu0 %1328
      %1330 = vrot.lane.b32.xlu0 %v1317, 64
      %v1331 = vpop.permute.xlu0 %1330
      %v1334 = vmul.f32 %v1313, %v1329
      %v1335 = vmul.f32 %v1315, %v1331
      %1338 = vrot.lane.b32.xlu0 %v1334, 32
      %v1339 = vpop.permute.xlu0 %1338
      %1340 = vrot.lane.b32.xlu0 %v1335, 32
      %v1341 = vpop.permute.xlu0 %1340
      %v1344 = vadd.f32 %v1324, %v1339
      %v1345 = vadd.f32 %v1325, %v1341
      %v1346 = vtanh.pop %v1344
      %v1347 = vtanh.pop %v1345
      %1350 = vrot.lane.b32.xlu0 %v1346, 64
      %v1351 = vpop.permute.xlu0 %1350
      %1352 = vrot.lane.b32.xlu0 %v1347, 64
      %v1353 = vpop.permute.xlu0 %1352
      %v1356 = vmul.f32 %v1313, %v1351
      %v1357 = vmul.f32 %v1315, %v1353
      %1360 = vrot.lane.b32.xlu0 %v1218, 32
      %v1361 = vpop.permute.xlu0 %1360
      %1362 = vrot.lane.b32.xlu0 %v1219, 32
      %v1363 = vpop.permute.xlu0 %1362
      %vm1366 = vcmask 256002
      %1367 = vst.msk [vmem:[%s315] sm:$0x4] %vm1366, %v1361
      %1368 = vst.msk [vmem:[%s315 + $0x8] sm:$0x4] %vm1366, %v1363
      %1371 = vrot.lane.b32.xlu0 %v1356, 32
      %v1372 = vpop.permute.xlu0 %1371
      %1373 = vrot.lane.b32.xlu0 %v1357, 32
      %v1374 = vpop.permute.xlu0 %1373
      %vm1377 = vcmask 259077
      %1378 = vst.msk [vmem:[%s321] sm:$0x20] %vm1377, %v1372
      %1379 = vst.msk [vmem:[%s321 + $0x8] sm:$0x20] %vm1377, %v1374
      %v1380 = vrot.slane %v1218, 2
      %v1381 = vrot.slane %v1219, 1
      %v1382 = vsel %vm787, %v1381, %v1380
      %1383 = vrot.lane.b32.xlu0 %v1382, 32
      %v1384 = vpop.permute.xlu0 %1383
      %v1385 = vsel %vm344, %v1384, 0
      %1387 = vmatprep.subr.mxu0 0.0
      %1388 = vmatpush1.msra.mxu0 %v323
      %1389 = vmatprep.subr.mxu0 0.0
      %1390 = vmatpush1.msra.mxu0 %v324
      %1391 = vmatprep.subr.mxu0 0.0
      %1392 = vmatpush1.msra.mxu0 %v325
      %1393 = vmatprep.subr.mxu0 0.0
      %1394 = vmatpush1.msra.mxu0 %v326
      %1395 = vmatprep.subr.mxu0 0.0
      %1396 = vmatpush1.msra.mxu0 0.0
      %1397 = vmatprep.subr.mxu0 0.0
      %1398 = vmatpush1.msra.mxu0 0.0
      %1399 = vmatprep.subr.mxu0 0.0
      %1400 = vmatpush1.msra.mxu0 0.0
      %1401 = vmatprep.subr.mxu0 0.0
      %1402 = vmatpush1.msra.mxu0 0.0
      %1403 = vmatprep.subr.mxu0 0.0
      %1404 = vmatpush1.msra.mxu0 0.0
      %1405 = vmatprep.subr.mxu0 0.0
      %1406 = vmatpush1.msra.mxu0 0.0
      %1407 = vmatprep.subr.mxu0 0.0
      %1408 = vmatpush1.msra.mxu0 0.0
      %1409 = vmatprep.subr.mxu0 0.0
      %1410 = vmatpush1.msra.mxu0 0.0
      %1411 = vmatprep.subr.mxu0 0.0
      %1412 = vmatpush1.msra.mxu0 0.0
      %1413 = vmatprep.subr.mxu0 0.0
      %1414 = vmatpush1.msra.mxu0 0.0
      %1415 = vmatprep.subr.mxu0 0.0
      %1416 = vmatpush1.msra.mxu0 0.0
      %1417 = vmatprep.subr.mxu0 0.0
      %1418 = vmatpush1.msra.mxu0 0.0
      %1419 = vmatprep.subr.mxu0 0.0
      %1420 = vmatpush1.msra.mxu0 0.0
      %1421 = vmatprep.subr.mxu0 0.0
      %1422 = vmatpush1.msra.mxu0 0.0
      %1423 = vmatprep.subr.mxu0 0.0
      %1424 = vmatpush1.msra.mxu0 0.0
      %1425 = vmatprep.subr.mxu0 0.0
      %1426 = vmatpush1.msra.mxu0 0.0
      %1427 = vmatprep.subr.mxu0 0.0
      %1428 = vmatpush1.msra.mxu0 0.0
      %1429 = vmatprep.subr.mxu0 0.0
      %1430 = vmatpush1.msra.mxu0 0.0
      %1431 = vmatprep.subr.mxu0 0.0
      %1432 = vmatpush1.msra.mxu0 0.0
      %1433 = vmatprep.subr.mxu0 0.0
      %1434 = vmatpush1.msra.mxu0 0.0
      %1435 = vmatprep.subr.mxu0 0.0
      %1436 = vmatpush1.msra.mxu0 0.0
      %1437 = vmatprep.subr.mxu0 0.0
      %1438 = vmatpush1.msra.mxu0 0.0
      %1439 = vmatprep.subr.mxu0 0.0
      %1440 = vmatpush1.msra.mxu0 0.0
      %1441 = vmatprep.subr.mxu0 0.0
      %1442 = vmatpush1.msra.mxu0 0.0
      %1443 = vmatprep.subr.mxu0 0.0
      %1444 = vmatpush1.msra.mxu0 0.0
      %1445 = vmatprep.subr.mxu0 0.0
      %1446 = vmatpush1.msra.mxu0 0.0
      %1447 = vmatprep.subr.mxu0 0.0
      %1448 = vmatpush1.msra.mxu0 0.0
      %1449 = vmatprep.subr.mxu0 0.0
      %1450 = vmatpush1.msra.mxu0 0.0
      %1451 = vmatprep.mubr.f32.mxu0 0.0
      %1452 = vmatmul.mubr.f32.gmra.mrb[0].mxu0 %v1385
      %v1453 = vpop.f32.mrb[0].mxu0
      %v1454 = vadd.f32 0.0, %v1453
      %v1455 = vpop.f32.mrb[0].mxu0
      %1456 = vdwg.mxu0
      %v1458 = vrot.slane %v1454, 5
      %v1459 = vrot.slane %v1454, 6
      %v1462 = vadd.f32 %v418, %v1458
      %v1463 = vadd.f32 %v423, %v1459
      %v1464 = vxor.u32 %v1462, 2147483648
      %v1465 = vxor.u32 %v1463, 2147483648
      %v1466 = vmul.f32 %v1464, 1.442695
      %v1467 = vpow.pop %v1466
      %v1468 = vmul.f32 %v1465, 1.442695
      %v1469 = vpow.pop %v1468
      %v1470 = vadd.f32 %v1467, 1.0
      %v1471 = vadd.f32 %v1469, 1.0
      %v1472 = vrcp.pop %v1470
      %v1473 = vmul.f32 1.0, %v1472
      %v1474 = vrcp.pop %v1471
      %v1475 = vmul.f32 1.0, %v1474
      %v1476 = vtanh.pop %v1462
      %v1477 = vtanh.pop %v1463
      %v1480 = vrot.slane %v1206, 7
      %v1481 = vrot.slane %v1207, 7
      %v1484 = vmul.f32 %v1473, %v1480
      %v1485 = vmul.f32 %v1475, %v1481
      %1488 = vrot.lane.b32.xlu0 %v1476, 64
      %v1489 = vpop.permute.xlu0 %1488
      %1490 = vrot.lane.b32.xlu0 %v1477, 64
      %v1491 = vpop.permute.xlu0 %1490
      %v1494 = vmul.f32 %v1473, %v1489
      %v1495 = vmul.f32 %v1475, %v1491
      %1498 = vrot.lane.b32.xlu0 %v1494, 32
      %v1499 = vpop.permute.xlu0 %1498
      %1500 = vrot.lane.b32.xlu0 %v1495, 32
      %v1501 = vpop.permute.xlu0 %1500
      %v1504 = vadd.f32 %v1484, %v1499
      %v1505 = vadd.f32 %v1485, %v1501
      %v1506 = vtanh.pop %v1504
      %v1507 = vtanh.pop %v1505
      %1510 = vrot.lane.b32.xlu0 %v1506, 64
      %v1511 = vpop.permute.xlu0 %1510
      %1512 = vrot.lane.b32.xlu0 %v1507, 64
      %v1513 = vpop.permute.xlu0 %1512
      %v1516 = vmul.f32 %v1473, %v1511
      %v1517 = vmul.f32 %v1475, %v1513
      %v1518 = vrot.slane %v1356, 5
      %v1519 = vrot.slane %v1357, 4
      %v1520 = vsel %vm787, %v1519, %v1518
      %1521 = vrot.lane.b32.xlu0 %v1520, 32
      %v1522 = vpop.permute.xlu0 %1521
      %v1523 = vsel %vm344, %v1522, 0
      %1525 = vmatprep.subr.mxu0 0.0
      %1526 = vmatpush1.msra.mxu0 %v327
      %1527 = vmatprep.subr.mxu0 0.0
      %1528 = vmatpush1.msra.mxu0 %v328
      %1529 = vmatprep.subr.mxu0 0.0
      %1530 = vmatpush1.msra.mxu0 %v329
      %1531 = vmatprep.subr.mxu0 0.0
      %1532 = vmatpush1.msra.mxu0 %v330
      %1533 = vmatprep.subr.mxu0 0.0
      %1534 = vmatpush1.msra.mxu0 0.0
      %1535 = vmatprep.subr.mxu0 0.0
      %1536 = vmatpush1.msra.mxu0 0.0
      %1537 = vmatprep.subr.mxu0 0.0
      %1538 = vmatpush1.msra.mxu0 0.0
      %1539 = vmatprep.subr.mxu0 0.0
      %1540 = vmatpush1.msra.mxu0 0.0
      %1541 = vmatprep.subr.mxu0 0.0
      %1542 = vmatpush1.msra.mxu0 0.0
      %1543 = vmatprep.subr.mxu0 0.0
      %1544 = vmatpush1.msra.mxu0 0.0
      %1545 = vmatprep.subr.mxu0 0.0
      %1546 = vmatpush1.msra.mxu0 0.0
      %1547 = vmatprep.subr.mxu0 0.0
      %1548 = vmatpush1.msra.mxu0 0.0
      %1549 = vmatprep.subr.mxu0 0.0
      %1550 = vmatpush1.msra.mxu0 0.0
      %1551 = vmatprep.subr.mxu0 0.0
      %1552 = vmatpush1.msra.mxu0 0.0
      %1553 = vmatprep.subr.mxu0 0.0
      %1554 = vmatpush1.msra.mxu0 0.0
      %1555 = vmatprep.subr.mxu0 0.0
      %1556 = vmatpush1.msra.mxu0 0.0
      %1557 = vmatprep.subr.mxu0 0.0
      %1558 = vmatpush1.msra.mxu0 0.0
      %1559 = vmatprep.subr.mxu0 0.0
      %1560 = vmatpush1.msra.mxu0 0.0
      %1561 = vmatprep.subr.mxu0 0.0
      %1562 = vmatpush1.msra.mxu0 0.0
      %1563 = vmatprep.subr.mxu0 0.0
      %1564 = vmatpush1.msra.mxu0 0.0
      %1565 = vmatprep.subr.mxu0 0.0
      %1566 = vmatpush1.msra.mxu0 0.0
      %1567 = vmatprep.subr.mxu0 0.0
      %1568 = vmatpush1.msra.mxu0 0.0
      %1569 = vmatprep.subr.mxu0 0.0
      %1570 = vmatpush1.msra.mxu0 0.0
      %1571 = vmatprep.subr.mxu0 0.0
      %1572 = vmatpush1.msra.mxu0 0.0
      %1573 = vmatprep.subr.mxu0 0.0
      %1574 = vmatpush1.msra.mxu0 0.0
      %1575 = vmatprep.subr.mxu0 0.0
      %1576 = vmatpush1.msra.mxu0 0.0
      %1577 = vmatprep.subr.mxu0 0.0
      %1578 = vmatpush1.msra.mxu0 0.0
      %1579 = vmatprep.subr.mxu0 0.0
      %1580 = vmatpush1.msra.mxu0 0.0
      %1581 = vmatprep.subr.mxu0 0.0
      %1582 = vmatpush1.msra.mxu0 0.0
      %1583 = vmatprep.subr.mxu0 0.0
      %1584 = vmatpush1.msra.mxu0 0.0
      %1585 = vmatprep.subr.mxu0 0.0
      %1586 = vmatpush1.msra.mxu0 0.0
      %1587 = vmatprep.subr.mxu0 0.0
      %1588 = vmatpush1.msra.mxu0 0.0
      %1589 = vmatprep.mubr.f32.mxu0 0.0
      %1590 = vmatmul.mubr.f32.gmra.mrb[0].mxu0 %v1523
      %v1591 = vpop.f32.mrb[0].mxu0
      %v1592 = vadd.f32 0.0, %v1591
      %v1593 = vpop.f32.mrb[0].mxu0
      %1594 = vdwg.mxu0
      %v1596 = vrot.slane %v1592, 4
      %v1597 = vrot.slane %v1592, 5
      %v1600 = vadd.f32 %v504, %v1596
      %v1601 = vadd.f32 %v509, %v1597
      %v1602 = vxor.u32 %v1600, 2147483648
      %v1603 = vxor.u32 %v1601, 2147483648
      %v1604 = vmul.f32 %v1602, 1.442695
      %v1605 = vpow.pop %v1604
      %v1606 = vmul.f32 %v1603, 1.442695
      %v1607 = vpow.pop %v1606
      %v1608 = vadd.f32 %v1605, 1.0
      %v1609 = vadd.f32 %v1607, 1.0
      %v1610 = vrcp.pop %v1608
      %v1611 = vmul.f32 1.0, %v1610
      %v1612 = vrcp.pop %v1609
      %v1613 = vmul.f32 1.0, %v1612
      %v1614 = vtanh.pop %v1600
      %v1615 = vtanh.pop %v1601
      %v1618 = vrot.slane %v1344, 1
      %v1619 = vrot.slane %v1345, 1
      %v1622 = vmul.f32 %v1611, %v1618
      %v1623 = vmul.f32 %v1613, %v1619
      %1626 = vrot.lane.b32.xlu0 %v1614, 64
      %v1627 = vpop.permute.xlu0 %1626
      %1628 = vrot.lane.b32.xlu0 %v1615, 64
      %v1629 = vpop.permute.xlu0 %1628
      %v1632 = vmul.f32 %v1611, %v1627
      %v1633 = vmul.f32 %v1613, %v1629
      %1636 = vrot.lane.b32.xlu0 %v1632, 32
      %v1637 = vpop.permute.xlu0 %1636
      %1638 = vrot.lane.b32.xlu0 %v1633, 32
      %v1639 = vpop.permute.xlu0 %1638
      %v1642 = vadd.f32 %v1622, %v1637
      %v1643 = vadd.f32 %v1623, %v1639
      %v1644 = vtanh.pop %v1642
      %v1645 = vtanh.pop %v1643
      %1648 = vrot.lane.b32.xlu0 %v1644, 64
      %v1649 = vpop.permute.xlu0 %1648
      %1650 = vrot.lane.b32.xlu0 %v1645, 64
      %v1651 = vpop.permute.xlu0 %1650
      %v1654 = vmul.f32 %v1611, %v1649
      %v1655 = vmul.f32 %v1613, %v1651
      %1658 = vrot.lane.b32.xlu0 %v1516, 32
      %v1659 = vpop.permute.xlu0 %1658
      %1660 = vrot.lane.b32.xlu0 %v1517, 32
      %v1661 = vpop.permute.xlu0 %1660
      %vm1664 = vcmask 257027
      %1665 = vst.msk [vmem:[%s315] sm:$0x8] %vm1664, %v1659
      %1666 = vst.msk [vmem:[%s315 + $0x8] sm:$0x8] %vm1664, %v1661
      %1669 = vrot.lane.b32.xlu0 %v1654, 32
      %v1670 = vpop.permute.xlu0 %1669
      %1671 = vrot.lane.b32.xlu0 %v1655, 32
      %v1672 = vpop.permute.xlu0 %1671
      %vm1675 = vcmask 258052
      %1676 = vst.msk [vmem:[%s321] sm:$0x10] %vm1675, %v1670
      %1677 = vst.msk [vmem:[%s321 + $0x8] sm:$0x10] %vm1675, %v1672
      %v1678 = vrot.slane %v1516, 3
      %v1679 = vrot.slane %v1517, 2
      %v1680 = vsel %vm787, %v1679, %v1678
      %1681 = vrot.lane.b32.xlu0 %v1680, 32
      %v1682 = vpop.permute.xlu0 %1681
      %v1683 = vsel %vm344, %v1682, 0
      %1685 = vmatprep.subr.mxu0 0.0
      %1686 = vmatpush1.msra.mxu0 %v323
      %1687 = vmatprep.subr.mxu0 0.0
      %1688 = vmatpush1.msra.mxu0 %v324
      %1689 = vmatprep.subr.mxu0 0.0
      %1690 = vmatpush1.msra.mxu0 %v325
      %1691 = vmatprep.subr.mxu0 0.0
      %1692 = vmatpush1.msra.mxu0 %v326
      %1693 = vmatprep.subr.mxu0 0.0
      %1694 = vmatpush1.msra.mxu0 0.0
      %1695 = vmatprep.subr.mxu0 0.0
      %1696 = vmatpush1.msra.mxu0 0.0
      %1697 = vmatprep.subr.mxu0 0.0
      %1698 = vmatpush1.msra.mxu0 0.0
      %1699 = vmatprep.subr.mxu0 0.0
      %1700 = vmatpush1.msra.mxu0 0.0
      %1701 = vmatprep.subr.mxu0 0.0
      %1702 = vmatpush1.msra.mxu0 0.0
      %1703 = vmatprep.subr.mxu0 0.0
      %1704 = vmatpush1.msra.mxu0 0.0
      %1705 = vmatprep.subr.mxu0 0.0
      %1706 = vmatpush1.msra.mxu0 0.0
      %1707 = vmatprep.subr.mxu0 0.0
      %1708 = vmatpush1.msra.mxu0 0.0
      %1709 = vmatprep.subr.mxu0 0.0
      %1710 = vmatpush1.msra.mxu0 0.0
      %1711 = vmatprep.subr.mxu0 0.0
      %1712 = vmatpush1.msra.mxu0 0.0
      %1713 = vmatprep.subr.mxu0 0.0
      %1714 = vmatpush1.msra.mxu0 0.0
      %1715 = vmatprep.subr.mxu0 0.0
      %1716 = vmatpush1.msra.mxu0 0.0
      %1717 = vmatprep.subr.mxu0 0.0
      %1718 = vmatpush1.msra.mxu0 0.0
      %1719 = vmatprep.subr.mxu0 0.0
      %1720 = vmatpush1.msra.mxu0 0.0
      %1721 = vmatprep.subr.mxu0 0.0
      %1722 = vmatpush1.msra.mxu0 0.0
      %1723 = vmatprep.subr.mxu0 0.0
      %1724 = vmatpush1.msra.mxu0 0.0
      %1725 = vmatprep.subr.mxu0 0.0
      %1726 = vmatpush1.msra.mxu0 0.0
      %1727 = vmatprep.subr.mxu0 0.0
      %1728 = vmatpush1.msra.mxu0 0.0
      %1729 = vmatprep.subr.mxu0 0.0
      %1730 = vmatpush1.msra.mxu0 0.0
      %1731 = vmatprep.subr.mxu0 0.0
      %1732 = vmatpush1.msra.mxu0 0.0
      %1733 = vmatprep.subr.mxu0 0.0
      %1734 = vmatpush1.msra.mxu0 0.0
      %1735 = vmatprep.subr.mxu0 0.0
      %1736 = vmatpush1.msra.mxu0 0.0
      %1737 = vmatprep.subr.mxu0 0.0
      %1738 = vmatpush1.msra.mxu0 0.0
      %1739 = vmatprep.subr.mxu0 0.0
      %1740 = vmatpush1.msra.mxu0 0.0
      %1741 = vmatprep.subr.mxu0 0.0
      %1742 = vmatpush1.msra.mxu0 0.0
      %1743 = vmatprep.subr.mxu0 0.0
      %1744 = vmatpush1.msra.mxu0 0.0
      %1745 = vmatprep.subr.mxu0 0.0
      %1746 = vmatpush1.msra.mxu0 0.0
      %1747 = vmatprep.subr.mxu0 0.0
      %1748 = vmatpush1.msra.mxu0 0.0
      %1749 = vmatprep.mubr.f32.mxu0 0.0
      %1750 = vmatmul.mubr.f32.gmra.mrb[0].mxu0 %v1683
      %v1751 = vpop.f32.mrb[0].mxu0
      %v1752 = vadd.f32 0.0, %v1751
      %v1753 = vpop.f32.mrb[0].mxu0
      %1754 = vdwg.mxu0
      %v1756 = vrot.slane %v1752, 4
      %v1757 = vrot.slane %v1752, 5
      %v1760 = vadd.f32 %v418, %v1756
      %v1761 = vadd.f32 %v423, %v1757
      %v1762 = vxor.u32 %v1760, 2147483648
      %v1763 = vxor.u32 %v1761, 2147483648
      %v1764 = vmul.f32 %v1762, 1.442695
      %v1765 = vpow.pop %v1764
      %v1766 = vmul.f32 %v1763, 1.442695
      %v1767 = vpow.pop %v1766
      %v1768 = vadd.f32 %v1765, 1.0
      %v1769 = vadd.f32 %v1767, 1.0
      %v1770 = vrcp.pop %v1768
      %v1771 = vmul.f32 1.0, %v1770
      %v1772 = vrcp.pop %v1769
      %v1773 = vmul.f32 1.0, %v1772
      %v1774 = vtanh.pop %v1760
      %v1775 = vtanh.pop %v1761
      %v1778 = vrot.slane %v1504, 7
      %v1779 = vrot.slane %v1505, 7
      %v1782 = vmul.f32 %v1771, %v1778
      %v1783 = vmul.f32 %v1773, %v1779
      %1786 = vrot.lane.b32.xlu0 %v1774, 64
      %v1787 = vpop.permute.xlu0 %1786
      %1788 = vrot.lane.b32.xlu0 %v1775, 64
      %v1789 = vpop.permute.xlu0 %1788
      %v1792 = vmul.f32 %v1771, %v1787
      %v1793 = vmul.f32 %v1773, %v1789
      %1796 = vrot.lane.b32.xlu0 %v1792, 32
      %v1797 = vpop.permute.xlu0 %1796
      %1798 = vrot.lane.b32.xlu0 %v1793, 32
      %v1799 = vpop.permute.xlu0 %1798
      %v1802 = vadd.f32 %v1782, %v1797
      %v1803 = vadd.f32 %v1783, %v1799
      %v1804 = vtanh.pop %v1802
      %v1805 = vtanh.pop %v1803
      %1808 = vrot.lane.b32.xlu0 %v1804, 64
      %v1809 = vpop.permute.xlu0 %1808
      %1810 = vrot.lane.b32.xlu0 %v1805, 64
      %v1811 = vpop.permute.xlu0 %1810
      %v1814 = vmul.f32 %v1771, %v1809
      %v1815 = vmul.f32 %v1773, %v1811
      %v1816 = vrot.slane %v1654, 4
      %v1817 = vrot.slane %v1655, 3
      %v1818 = vsel %vm787, %v1817, %v1816
      %1819 = vrot.lane.b32.xlu0 %v1818, 32
      %v1820 = vpop.permute.xlu0 %1819
      %v1821 = vsel %vm344, %v1820, 0
      %1823 = vmatprep.subr.mxu0 0.0
      %1824 = vmatpush1.msra.mxu0 %v327
      %1825 = vmatprep.subr.mxu0 0.0
      %1826 = vmatpush1.msra.mxu0 %v328
      %1827 = vmatprep.subr.mxu0 0.0
      %1828 = vmatpush1.msra.mxu0 %v329
      %1829 = vmatprep.subr.mxu0 0.0
      %1830 = vmatpush1.msra.mxu0 %v330
      %1831 = vmatprep.subr.mxu0 0.0
      %1832 = vmatpush1.msra.mxu0 0.0
      %1833 = vmatprep.subr.mxu0 0.0
      %1834 = vmatpush1.msra.mxu0 0.0
      %1835 = vmatprep.subr.mxu0 0.0
      %1836 = vmatpush1.msra.mxu0 0.0
      %1837 = vmatprep.subr.mxu0 0.0
      %1838 = vmatpush1.msra.mxu0 0.0
      %1839 = vmatprep.subr.mxu0 0.0
      %1840 = vmatpush1.msra.mxu0 0.0
      %1841 = vmatprep.subr.mxu0 0.0
      %1842 = vmatpush1.msra.mxu0 0.0
      %1843 = vmatprep.subr.mxu0 0.0
      %1844 = vmatpush1.msra.mxu0 0.0
      %1845 = vmatprep.subr.mxu0 0.0
      %1846 = vmatpush1.msra.mxu0 0.0
      %1847 = vmatprep.subr.mxu0 0.0
      %1848 = vmatpush1.msra.mxu0 0.0
      %1849 = vmatprep.subr.mxu0 0.0
      %1850 = vmatpush1.msra.mxu0 0.0
      %1851 = vmatprep.subr.mxu0 0.0
      %1852 = vmatpush1.msra.mxu0 0.0
      %1853 = vmatprep.subr.mxu0 0.0
      %1854 = vmatpush1.msra.mxu0 0.0
      %1855 = vmatprep.subr.mxu0 0.0
      %1856 = vmatpush1.msra.mxu0 0.0
      %1857 = vmatprep.subr.mxu0 0.0
      %1858 = vmatpush1.msra.mxu0 0.0
      %1859 = vmatprep.subr.mxu0 0.0
      %1860 = vmatpush1.msra.mxu0 0.0
      %1861 = vmatprep.subr.mxu0 0.0
      %1862 = vmatpush1.msra.mxu0 0.0
      %1863 = vmatprep.subr.mxu0 0.0
      %1864 = vmatpush1.msra.mxu0 0.0
      %1865 = vmatprep.subr.mxu0 0.0
      %1866 = vmatpush1.msra.mxu0 0.0
      %1867 = vmatprep.subr.mxu0 0.0
      %1868 = vmatpush1.msra.mxu0 0.0
      %1869 = vmatprep.subr.mxu0 0.0
      %1870 = vmatpush1.msra.mxu0 0.0
      %1871 = vmatprep.subr.mxu0 0.0
      %1872 = vmatpush1.msra.mxu0 0.0
      %1873 = vmatprep.subr.mxu0 0.0
      %1874 = vmatpush1.msra.mxu0 0.0
      %1875 = vmatprep.subr.mxu0 0.0
      %1876 = vmatpush1.msra.mxu0 0.0
      %1877 = vmatprep.subr.mxu0 0.0
      %1878 = vmatpush1.msra.mxu0 0.0
      %1879 = vmatprep.subr.mxu0 0.0
      %1880 = vmatpush1.msra.mxu0 0.0
      %1881 = vmatprep.subr.mxu0 0.0
      %1882 = vmatpush1.msra.mxu0 0.0
      %1883 = vmatprep.subr.mxu0 0.0
      %1884 = vmatpush1.msra.mxu0 0.0
      %1885 = vmatprep.subr.mxu0 0.0
      %1886 = vmatpush1.msra.mxu0 0.0
      %1887 = vmatprep.mubr.f32.mxu0 0.0
      %1888 = vmatmul.mubr.f32.gmra.mrb[0].mxu0 %v1821
      %v1889 = vpop.f32.mrb[0].mxu0
      %v1890 = vadd.f32 0.0, %v1889
      %v1891 = vpop.f32.mrb[0].mxu0
      %1892 = vdwg.mxu0
      %v1894 = vrot.slane %v1890, 5
      %v1895 = vrot.slane %v1890, 6
      %v1898 = vadd.f32 %v504, %v1894
      %v1899 = vadd.f32 %v509, %v1895
      %v1900 = vxor.u32 %v1898, 2147483648
      %v1901 = vxor.u32 %v1899, 2147483648
      %v1902 = vmul.f32 %v1900, 1.442695
      %v1903 = vpow.pop %v1902
      %v1904 = vmul.f32 %v1901, 1.442695
      %v1905 = vpow.pop %v1904
      %v1906 = vadd.f32 %v1903, 1.0
      %v1907 = vadd.f32 %v1905, 1.0
      %v1908 = vrcp.pop %v1906
      %v1909 = vmul.f32 1.0, %v1908
      %v1910 = vrcp.pop %v1907
      %v1911 = vmul.f32 1.0, %v1910
      %v1912 = vtanh.pop %v1898
      %v1913 = vtanh.pop %v1899
      %v1916 = vrot.slane %v1642, 1
      %v1917 = vrot.slane %v1643, 1
      %v1920 = vmul.f32 %v1909, %v1916
      %v1921 = vmul.f32 %v1911, %v1917
      %1924 = vrot.lane.b32.xlu0 %v1912, 64
      %v1925 = vpop.permute.xlu0 %1924
      %1926 = vrot.lane.b32.xlu0 %v1913, 64
      %v1927 = vpop.permute.xlu0 %1926
      %v1930 = vmul.f32 %v1909, %v1925
      %v1931 = vmul.f32 %v1911, %v1927
      %1934 = vrot.lane.b32.xlu0 %v1930, 32
      %v1935 = vpop.permute.xlu0 %1934
      %1936 = vrot.lane.b32.xlu0 %v1931, 32
      %v1937 = vpop.permute.xlu0 %1936
      %v1940 = vadd.f32 %v1920, %v1935
      %v1941 = vadd.f32 %v1921, %v1937
      %v1942 = vtanh.pop %v1940
      %v1943 = vtanh.pop %v1941
      %1946 = vrot.lane.b32.xlu0 %v1942, 64
      %v1947 = vpop.permute.xlu0 %1946
      %1948 = vrot.lane.b32.xlu0 %v1943, 64
      %v1949 = vpop.permute.xlu0 %1948
      %v1952 = vmul.f32 %v1909, %v1947
      %v1953 = vmul.f32 %v1911, %v1949
      %1956 = vrot.lane.b32.xlu0 %v1814, 32
      %v1957 = vpop.permute.xlu0 %1956
      %1958 = vrot.lane.b32.xlu0 %v1815, 32
      %v1959 = vpop.permute.xlu0 %1958
      %1962 = vst.msk [vmem:[%s315] sm:$0x10] %vm1675, %v1957
      %1963 = vst.msk [vmem:[%s315 + $0x8] sm:$0x10] %vm1675, %v1959
      %1966 = vrot.lane.b32.xlu0 %v1952, 32
      %v1967 = vpop.permute.xlu0 %1966
      %1968 = vrot.lane.b32.xlu0 %v1953, 32
      %v1969 = vpop.permute.xlu0 %1968
      %1972 = vst.msk [vmem:[%s321] sm:$0x8] %vm1664, %v1967
      %1973 = vst.msk [vmem:[%s321 + $0x8] sm:$0x8] %vm1664, %v1969
      %v1974 = vrot.slane %v1814, 4
      %v1975 = vrot.slane %v1815, 3
      %v1976 = vsel %vm787, %v1975, %v1974
      %1977 = vrot.lane.b32.xlu0 %v1976, 32
      %v1978 = vpop.permute.xlu0 %1977
      %v1979 = vsel %vm344, %v1978, 0
      %1981 = vmatprep.subr.mxu0 0.0
      %1982 = vmatpush1.msra.mxu0 %v323
      %1983 = vmatprep.subr.mxu0 0.0
      %1984 = vmatpush1.msra.mxu0 %v324
      %1985 = vmatprep.subr.mxu0 0.0
      %1986 = vmatpush1.msra.mxu0 %v325
      %1987 = vmatprep.subr.mxu0 0.0
      %1988 = vmatpush1.msra.mxu0 %v326
      %1989 = vmatprep.subr.mxu0 0.0
      %1990 = vmatpush1.msra.mxu0 0.0
      %1991 = vmatprep.subr.mxu0 0.0
      %1992 = vmatpush1.msra.mxu0 0.0
      %1993 = vmatprep.subr.mxu0 0.0
      %1994 = vmatpush1.msra.mxu0 0.0
      %1995 = vmatprep.subr.mxu0 0.0
      %1996 = vmatpush1.msra.mxu0 0.0
      %1997 = vmatprep.subr.mxu0 0.0
      %1998 = vmatpush1.msra.mxu0 0.0
      %1999 = vmatprep.subr.mxu0 0.0
      %2000 = vmatpush1.msra.mxu0 0.0
      %2001 = vmatprep.subr.mxu0 0.0
      %2002 = vmatpush1.msra.mxu0 0.0
      %2003 = vmatprep.subr.mxu0 0.0
      %2004 = vmatpush1.msra.mxu0 0.0
      %2005 = vmatprep.subr.mxu0 0.0
      %2006 = vmatpush1.msra.mxu0 0.0
      %2007 = vmatprep.subr.mxu0 0.0
      %2008 = vmatpush1.msra.mxu0 0.0
      %2009 = vmatprep.subr.mxu0 0.0
      %2010 = vmatpush1.msra.mxu0 0.0
      %2011 = vmatprep.subr.mxu0 0.0
      %2012 = vmatpush1.msra.mxu0 0.0
      %2013 = vmatprep.subr.mxu0 0.0
      %2014 = vmatpush1.msra.mxu0 0.0
      %2015 = vmatprep.subr.mxu0 0.0
      %2016 = vmatpush1.msra.mxu0 0.0
      %2017 = vmatprep.subr.mxu0 0.0
      %2018 = vmatpush1.msra.mxu0 0.0
      %2019 = vmatprep.subr.mxu0 0.0
      %2020 = vmatpush1.msra.mxu0 0.0
      %2021 = vmatprep.subr.mxu0 0.0
      %2022 = vmatpush1.msra.mxu0 0.0
      %2023 = vmatprep.subr.mxu0 0.0
      %2024 = vmatpush1.msra.mxu0 0.0
      %2025 = vmatprep.subr.mxu0 0.0
      %2026 = vmatpush1.msra.mxu0 0.0
      %2027 = vmatprep.subr.mxu0 0.0
      %2028 = vmatpush1.msra.mxu0 0.0
      %2029 = vmatprep.subr.mxu0 0.0
      %2030 = vmatpush1.msra.mxu0 0.0
      %2031 = vmatprep.subr.mxu0 0.0
      %2032 = vmatpush1.msra.mxu0 0.0
      %2033 = vmatprep.subr.mxu0 0.0
      %2034 = vmatpush1.msra.mxu0 0.0
      %2035 = vmatprep.subr.mxu0 0.0
      %2036 = vmatpush1.msra.mxu0 0.0
      %2037 = vmatprep.subr.mxu0 0.0
      %2038 = vmatpush1.msra.mxu0 0.0
      %2039 = vmatprep.subr.mxu0 0.0
      %2040 = vmatpush1.msra.mxu0 0.0
      %2041 = vmatprep.subr.mxu0 0.0
      %2042 = vmatpush1.msra.mxu0 0.0
      %2043 = vmatprep.subr.mxu0 0.0
      %2044 = vmatpush1.msra.mxu0 0.0
      %2045 = vmatprep.mubr.f32.mxu0 0.0
      %2046 = vmatmul.mubr.f32.gmra.mrb[0].mxu0 %v1979
      %v2047 = vpop.f32.mrb[0].mxu0
      %v2048 = vadd.f32 0.0, %v2047
      %v2049 = vpop.f32.mrb[0].mxu0
      %2050 = vdwg.mxu0
      %v2052 = vrot.slane %v2048, 3
      %v2053 = vrot.slane %v2048, 4
      %v2056 = vadd.f32 %v418, %v2052
      %v2057 = vadd.f32 %v423, %v2053
      %v2058 = vxor.u32 %v2056, 2147483648
      %v2059 = vxor.u32 %v2057, 2147483648
      %v2060 = vmul.f32 %v2058, 1.442695
      %v2061 = vpow.pop %v2060
      %v2062 = vmul.f32 %v2059, 1.442695
      %v2063 = vpow.pop %v2062
      %v2064 = vadd.f32 %v2061, 1.0
      %v2065 = vadd.f32 %v2063, 1.0
      %v2066 = vrcp.pop %v2064
      %v2067 = vmul.f32 1.0, %v2066
      %v2068 = vrcp.pop %v2065
      %v2069 = vmul.f32 1.0, %v2068
      %v2070 = vtanh.pop %v2056
      %v2071 = vtanh.pop %v2057
      %v2074 = vrot.slane %v1802, 7
      %v2075 = vrot.slane %v1803, 7
      %v2078 = vmul.f32 %v2067, %v2074
      %v2079 = vmul.f32 %v2069, %v2075
      %2082 = vrot.lane.b32.xlu0 %v2070, 64
      %v2083 = vpop.permute.xlu0 %2082
      %2084 = vrot.lane.b32.xlu0 %v2071, 64
      %v2085 = vpop.permute.xlu0 %2084
      %v2088 = vmul.f32 %v2067, %v2083
      %v2089 = vmul.f32 %v2069, %v2085
      %2092 = vrot.lane.b32.xlu0 %v2088, 32
      %v2093 = vpop.permute.xlu0 %2092
      %2094 = vrot.lane.b32.xlu0 %v2089, 32
      %v2095 = vpop.permute.xlu0 %2094
      %v2098 = vadd.f32 %v2078, %v2093
      %v2099 = vadd.f32 %v2079, %v2095
      %v2100 = vtanh.pop %v2098
      %v2101 = vtanh.pop %v2099
      %2104 = vrot.lane.b32.xlu0 %v2100, 64
      %v2105 = vpop.permute.xlu0 %2104
      %2106 = vrot.lane.b32.xlu0 %v2101, 64
      %v2107 = vpop.permute.xlu0 %2106
      %v2110 = vmul.f32 %v2067, %v2105
      %v2111 = vmul.f32 %v2069, %v2107
      %v2112 = vrot.slane %v1952, 3
      %v2113 = vrot.slane %v1953, 2
      %v2114 = vsel %vm787, %v2113, %v2112
      %2115 = vrot.lane.b32.xlu0 %v2114, 32
      %v2116 = vpop.permute.xlu0 %2115
      %v2117 = vsel %vm344, %v2116, 0
      %2119 = vmatprep.subr.mxu0 0.0
      %2120 = vmatpush1.msra.mxu0 %v327
      %2121 = vmatprep.subr.mxu0 0.0
      %2122 = vmatpush1.msra.mxu0 %v328
      %2123 = vmatprep.subr.mxu0 0.0
      %2124 = vmatpush1.msra.mxu0 %v329
      %2125 = vmatprep.subr.mxu0 0.0
      %2126 = vmatpush1.msra.mxu0 %v330
      %2127 = vmatprep.subr.mxu0 0.0
      %2128 = vmatpush1.msra.mxu0 0.0
      %2129 = vmatprep.subr.mxu0 0.0
      %2130 = vmatpush1.msra.mxu0 0.0
      %2131 = vmatprep.subr.mxu0 0.0
      %2132 = vmatpush1.msra.mxu0 0.0
      %2133 = vmatprep.subr.mxu0 0.0
      %2134 = vmatpush1.msra.mxu0 0.0
      %2135 = vmatprep.subr.mxu0 0.0
      %2136 = vmatpush1.msra.mxu0 0.0
      %2137 = vmatprep.subr.mxu0 0.0
      %2138 = vmatpush1.msra.mxu0 0.0
      %2139 = vmatprep.subr.mxu0 0.0
      %2140 = vmatpush1.msra.mxu0 0.0
      %2141 = vmatprep.subr.mxu0 0.0
      %2142 = vmatpush1.msra.mxu0 0.0
      %2143 = vmatprep.subr.mxu0 0.0
      %2144 = vmatpush1.msra.mxu0 0.0
      %2145 = vmatprep.subr.mxu0 0.0
      %2146 = vmatpush1.msra.mxu0 0.0
      %2147 = vmatprep.subr.mxu0 0.0
      %2148 = vmatpush1.msra.mxu0 0.0
      %2149 = vmatprep.subr.mxu0 0.0
      %2150 = vmatpush1.msra.mxu0 0.0
      %2151 = vmatprep.subr.mxu0 0.0
      %2152 = vmatpush1.msra.mxu0 0.0
      %2153 = vmatprep.subr.mxu0 0.0
      %2154 = vmatpush1.msra.mxu0 0.0
      %2155 = vmatprep.subr.mxu0 0.0
      %2156 = vmatpush1.msra.mxu0 0.0
      %2157 = vmatprep.subr.mxu0 0.0
      %2158 = vmatpush1.msra.mxu0 0.0
      %2159 = vmatprep.subr.mxu0 0.0
      %2160 = vmatpush1.msra.mxu0 0.0
      %2161 = vmatprep.subr.mxu0 0.0
      %2162 = vmatpush1.msra.mxu0 0.0
      %2163 = vmatprep.subr.mxu0 0.0
      %2164 = vmatpush1.msra.mxu0 0.0
      %2165 = vmatprep.subr.mxu0 0.0
      %2166 = vmatpush1.msra.mxu0 0.0
      %2167 = vmatprep.subr.mxu0 0.0
      %2168 = vmatpush1.msra.mxu0 0.0
      %2169 = vmatprep.subr.mxu0 0.0
      %2170 = vmatpush1.msra.mxu0 0.0
      %2171 = vmatprep.subr.mxu0 0.0
      %2172 = vmatpush1.msra.mxu0 0.0
      %2173 = vmatprep.subr.mxu0 0.0
      %2174 = vmatpush1.msra.mxu0 0.0
      %2175 = vmatprep.subr.mxu0 0.0
      %2176 = vmatpush1.msra.mxu0 0.0
      %2177 = vmatprep.subr.mxu0 0.0
      %2178 = vmatpush1.msra.mxu0 0.0
      %2179 = vmatprep.subr.mxu0 0.0
      %2180 = vmatpush1.msra.mxu0 0.0
      %2181 = vmatprep.subr.mxu0 0.0
      %2182 = vmatpush1.msra.mxu0 0.0
      %2183 = vmatprep.mubr.f32.mxu0 0.0
      %2184 = vmatmul.mubr.f32.gmra.mrb[0].mxu0 %v2117
      %v2185 = vpop.f32.mrb[0].mxu0
      %v2186 = vadd.f32 0.0, %v2185
      %v2187 = vpop.f32.mrb[0].mxu0
      %2188 = vdwg.mxu0
      %v2190 = vrot.slane %v2186, 6
      %v2191 = vrot.slane %v2186, 7
      %v2194 = vadd.f32 %v504, %v2190
      %v2195 = vadd.f32 %v509, %v2191
      %v2196 = vxor.u32 %v2194, 2147483648
      %v2197 = vxor.u32 %v2195, 2147483648
      %v2198 = vmul.f32 %v2196, 1.442695
      %v2199 = vpow.pop %v2198
      %v2200 = vmul.f32 %v2197, 1.442695
      %v2201 = vpow.pop %v2200
      %v2202 = vadd.f32 %v2199, 1.0
      %v2203 = vadd.f32 %v2201, 1.0
      %v2204 = vrcp.pop %v2202
      %v2205 = vmul.f32 1.0, %v2204
      %v2206 = vrcp.pop %v2203
      %v2207 = vmul.f32 1.0, %v2206
      %v2208 = vtanh.pop %v2194
      %v2209 = vtanh.pop %v2195
      %v2212 = vrot.slane %v1940, 1
      %v2213 = vrot.slane %v1941, 1
      %v2216 = vmul.f32 %v2205, %v2212
      %v2217 = vmul.f32 %v2207, %v2213
      %2220 = vrot.lane.b32.xlu0 %v2208, 64
      %v2221 = vpop.permute.xlu0 %2220
      %2222 = vrot.lane.b32.xlu0 %v2209, 64
      %v2223 = vpop.permute.xlu0 %2222
      %v2226 = vmul.f32 %v2205, %v2221
      %v2227 = vmul.f32 %v2207, %v2223
      %2230 = vrot.lane.b32.xlu0 %v2226, 32
      %v2231 = vpop.permute.xlu0 %2230
      %2232 = vrot.lane.b32.xlu0 %v2227, 32
      %v2233 = vpop.permute.xlu0 %2232
      %v2236 = vadd.f32 %v2216, %v2231
      %v2237 = vadd.f32 %v2217, %v2233
      %v2238 = vtanh.pop %v2236
      %v2239 = vtanh.pop %v2237
      %2242 = vrot.lane.b32.xlu0 %v2238, 64
      %v2243 = vpop.permute.xlu0 %2242
      %2244 = vrot.lane.b32.xlu0 %v2239, 64
      %v2245 = vpop.permute.xlu0 %2244
      %v2248 = vmul.f32 %v2205, %v2243
      %v2249 = vmul.f32 %v2207, %v2245
      %2252 = vrot.lane.b32.xlu0 %v2110, 32
      %v2253 = vpop.permute.xlu0 %2252
      %2254 = vrot.lane.b32.xlu0 %v2111, 32
      %v2255 = vpop.permute.xlu0 %2254
      %2258 = vst.msk [vmem:[%s315] sm:$0x20] %vm1377, %v2253
      %2259 = vst.msk [vmem:[%s315 + $0x8] sm:$0x20] %vm1377, %v2255
      %2262 = vrot.lane.b32.xlu0 %v2248, 32
      %v2263 = vpop.permute.xlu0 %2262
      %2264 = vrot.lane.b32.xlu0 %v2249, 32
      %v2265 = vpop.permute.xlu0 %2264
      %2268 = vst.msk [vmem:[%s321] sm:$0x4] %vm1366, %v2263
      %2269 = vst.msk [vmem:[%s321 + $0x8] sm:$0x4] %vm1366, %v2265
      %v2270 = vrot.slane %v2110, 5
      %v2271 = vrot.slane %v2111, 4
      %v2272 = vsel %vm787, %v2271, %v2270
      %2273 = vrot.lane.b32.xlu0 %v2272, 32
      %v2274 = vpop.permute.xlu0 %2273
      %v2275 = vsel %vm344, %v2274, 0
      %2277 = vmatprep.subr.mxu0 0.0
      %2278 = vmatpush1.msra.mxu0 %v323
      %2279 = vmatprep.subr.mxu0 0.0
      %2280 = vmatpush1.msra.mxu0 %v324
      %2281 = vmatprep.subr.mxu0 0.0
      %2282 = vmatpush1.msra.mxu0 %v325
      %2283 = vmatprep.subr.mxu0 0.0
      %2284 = vmatpush1.msra.mxu0 %v326
      %2285 = vmatprep.subr.mxu0 0.0
      %2286 = vmatpush1.msra.mxu0 0.0
      %2287 = vmatprep.subr.mxu0 0.0
      %2288 = vmatpush1.msra.mxu0 0.0
      %2289 = vmatprep.subr.mxu0 0.0
      %2290 = vmatpush1.msra.mxu0 0.0
      %2291 = vmatprep.subr.mxu0 0.0
      %2292 = vmatpush1.msra.mxu0 0.0
      %2293 = vmatprep.subr.mxu0 0.0
      %2294 = vmatpush1.msra.mxu0 0.0
      %2295 = vmatprep.subr.mxu0 0.0
      %2296 = vmatpush1.msra.mxu0 0.0
      %2297 = vmatprep.subr.mxu0 0.0
      %2298 = vmatpush1.msra.mxu0 0.0
      %2299 = vmatprep.subr.mxu0 0.0
      %2300 = vmatpush1.msra.mxu0 0.0
      %2301 = vmatprep.subr.mxu0 0.0
      %2302 = vmatpush1.msra.mxu0 0.0
      %2303 = vmatprep.subr.mxu0 0.0
      %2304 = vmatpush1.msra.mxu0 0.0
      %2305 = vmatprep.subr.mxu0 0.0
      %2306 = vmatpush1.msra.mxu0 0.0
      %2307 = vmatprep.subr.mxu0 0.0
      %2308 = vmatpush1.msra.mxu0 0.0
      %2309 = vmatprep.subr.mxu0 0.0
      %2310 = vmatpush1.msra.mxu0 0.0
      %2311 = vmatprep.subr.mxu0 0.0
      %2312 = vmatpush1.msra.mxu0 0.0
      %2313 = vmatprep.subr.mxu0 0.0
      %2314 = vmatpush1.msra.mxu0 0.0
      %2315 = vmatprep.subr.mxu0 0.0
      %2316 = vmatpush1.msra.mxu0 0.0
      %2317 = vmatprep.subr.mxu0 0.0
      %2318 = vmatpush1.msra.mxu0 0.0
      %2319 = vmatprep.subr.mxu0 0.0
      %2320 = vmatpush1.msra.mxu0 0.0
      %2321 = vmatprep.subr.mxu0 0.0
      %2322 = vmatpush1.msra.mxu0 0.0
      %2323 = vmatprep.subr.mxu0 0.0
      %2324 = vmatpush1.msra.mxu0 0.0
      %2325 = vmatprep.subr.mxu0 0.0
      %2326 = vmatpush1.msra.mxu0 0.0
      %2327 = vmatprep.subr.mxu0 0.0
      %2328 = vmatpush1.msra.mxu0 0.0
      %2329 = vmatprep.subr.mxu0 0.0
      %2330 = vmatpush1.msra.mxu0 0.0
      %2331 = vmatprep.subr.mxu0 0.0
      %2332 = vmatpush1.msra.mxu0 0.0
      %2333 = vmatprep.subr.mxu0 0.0
      %2334 = vmatpush1.msra.mxu0 0.0
      %2335 = vmatprep.subr.mxu0 0.0
      %2336 = vmatpush1.msra.mxu0 0.0
      %2337 = vmatprep.subr.mxu0 0.0
      %2338 = vmatpush1.msra.mxu0 0.0
      %2339 = vmatprep.subr.mxu0 0.0
      %2340 = vmatpush1.msra.mxu0 0.0
      %2341 = vmatprep.mubr.f32.mxu0 0.0
      %2342 = vmatmul.mubr.f32.gmra.mrb[0].mxu0 %v2275
      %v2343 = vpop.f32.mrb[0].mxu0
      %v2344 = vadd.f32 0.0, %v2343
      %v2345 = vpop.f32.mrb[0].mxu0
      %2346 = vdwg.mxu0
      %v2348 = vrot.slane %v2344, 2
      %v2349 = vrot.slane %v2344, 3
      %v2352 = vadd.f32 %v418, %v2348
      %v2353 = vadd.f32 %v423, %v2349
      %v2354 = vxor.u32 %v2352, 2147483648
      %v2355 = vxor.u32 %v2353, 2147483648
      %v2356 = vmul.f32 %v2354, 1.442695
      %v2357 = vpow.pop %v2356
      %v2358 = vmul.f32 %v2355, 1.442695
      %v2359 = vpow.pop %v2358
      %v2360 = vadd.f32 %v2357, 1.0
      %v2361 = vadd.f32 %v2359, 1.0
      %v2362 = vrcp.pop %v2360
      %v2363 = vmul.f32 1.0, %v2362
      %v2364 = vrcp.pop %v2361
      %v2365 = vmul.f32 1.0, %v2364
      %v2366 = vtanh.pop %v2352
      %v2367 = vtanh.pop %v2353
      %v2370 = vrot.slane %v2098, 7
      %v2371 = vrot.slane %v2099, 7
      %v2374 = vmul.f32 %v2363, %v2370
      %v2375 = vmul.f32 %v2365, %v2371
      %2378 = vrot.lane.b32.xlu0 %v2366, 64
      %v2379 = vpop.permute.xlu0 %2378
      %2380 = vrot.lane.b32.xlu0 %v2367, 64
      %v2381 = vpop.permute.xlu0 %2380
      %v2384 = vmul.f32 %v2363, %v2379
      %v2385 = vmul.f32 %v2365, %v2381
      %2388 = vrot.lane.b32.xlu0 %v2384, 32
      %v2389 = vpop.permute.xlu0 %2388
      %2390 = vrot.lane.b32.xlu0 %v2385, 32
      %v2391 = vpop.permute.xlu0 %2390
      %v2394 = vadd.f32 %v2374, %v2389
      %v2395 = vadd.f32 %v2375, %v2391
      %v2396 = vtanh.pop %v2394
      %v2397 = vtanh.pop %v2395
      %2400 = vrot.lane.b32.xlu0 %v2396, 64
      %v2401 = vpop.permute.xlu0 %2400
      %2402 = vrot.lane.b32.xlu0 %v2397, 64
      %v2403 = vpop.permute.xlu0 %2402
      %v2406 = vmul.f32 %v2363, %v2401
      %v2407 = vmul.f32 %v2365, %v2403
      %v2408 = vrot.slane %v2248, 2
      %v2409 = vrot.slane %v2249, 1
      %v2410 = vsel %vm787, %v2409, %v2408
      %2411 = vrot.lane.b32.xlu0 %v2410, 32
      %v2412 = vpop.permute.xlu0 %2411
      %v2413 = vsel %vm344, %v2412, 0
      %2415 = vmatprep.subr.mxu0 0.0
      %2416 = vmatpush1.msra.mxu0 %v327
      %2417 = vmatprep.subr.mxu0 0.0
      %2418 = vmatpush1.msra.mxu0 %v328
      %2419 = vmatprep.subr.mxu0 0.0
      %2420 = vmatpush1.msra.mxu0 %v329
      %2421 = vmatprep.subr.mxu0 0.0
      %2422 = vmatpush1.msra.mxu0 %v330
      %2423 = vmatprep.subr.mxu0 0.0
      %2424 = vmatpush1.msra.mxu0 0.0
      %2425 = vmatprep.subr.mxu0 0.0
      %2426 = vmatpush1.msra.mxu0 0.0
      %2427 = vmatprep.subr.mxu0 0.0
      %2428 = vmatpush1.msra.mxu0 0.0
      %2429 = vmatprep.subr.mxu0 0.0
      %2430 = vmatpush1.msra.mxu0 0.0
      %2431 = vmatprep.subr.mxu0 0.0
      %2432 = vmatpush1.msra.mxu0 0.0
      %2433 = vmatprep.subr.mxu0 0.0
      %2434 = vmatpush1.msra.mxu0 0.0
      %2435 = vmatprep.subr.mxu0 0.0
      %2436 = vmatpush1.msra.mxu0 0.0
      %2437 = vmatprep.subr.mxu0 0.0
      %2438 = vmatpush1.msra.mxu0 0.0
      %2439 = vmatprep.subr.mxu0 0.0
      %2440 = vmatpush1.msra.mxu0 0.0
      %2441 = vmatprep.subr.mxu0 0.0
      %2442 = vmatpush1.msra.mxu0 0.0
      %2443 = vmatprep.subr.mxu0 0.0
      %2444 = vmatpush1.msra.mxu0 0.0
      %2445 = vmatprep.subr.mxu0 0.0
      %2446 = vmatpush1.msra.mxu0 0.0
      %2447 = vmatprep.subr.mxu0 0.0
      %2448 = vmatpush1.msra.mxu0 0.0
      %2449 = vmatprep.subr.mxu0 0.0
      %2450 = vmatpush1.msra.mxu0 0.0
      %2451 = vmatprep.subr.mxu0 0.0
      %2452 = vmatpush1.msra.mxu0 0.0
      %2453 = vmatprep.subr.mxu0 0.0
      %2454 = vmatpush1.msra.mxu0 0.0
      %2455 = vmatprep.subr.mxu0 0.0
      %2456 = vmatpush1.msra.mxu0 0.0
      %2457 = vmatprep.subr.mxu0 0.0
      %2458 = vmatpush1.msra.mxu0 0.0
      %2459 = vmatprep.subr.mxu0 0.0
      %2460 = vmatpush1.msra.mxu0 0.0
      %2461 = vmatprep.subr.mxu0 0.0
      %2462 = vmatpush1.msra.mxu0 0.0
      %2463 = vmatprep.subr.mxu0 0.0
      %2464 = vmatpush1.msra.mxu0 0.0
      %2465 = vmatprep.subr.mxu0 0.0
      %2466 = vmatpush1.msra.mxu0 0.0
      %2467 = vmatprep.subr.mxu0 0.0
      %2468 = vmatpush1.msra.mxu0 0.0
      %2469 = vmatprep.subr.mxu0 0.0
      %2470 = vmatpush1.msra.mxu0 0.0
      %2471 = vmatprep.subr.mxu0 0.0
      %2472 = vmatpush1.msra.mxu0 0.0
      %2473 = vmatprep.subr.mxu0 0.0
      %2474 = vmatpush1.msra.mxu0 0.0
      %2475 = vmatprep.subr.mxu0 0.0
      %2476 = vmatpush1.msra.mxu0 0.0
      %2477 = vmatprep.subr.mxu0 0.0
      %2478 = vmatpush1.msra.mxu0 0.0
      %2479 = vmatprep.mubr.f32.mxu0 0.0
      %2480 = vmatmul.mubr.f32.gmra.mrb[0].mxu0 %v2413
      %v2481 = vpop.f32.mrb[0].mxu0
      %v2482 = vadd.f32 0.0, %v2481
      %v2483 = vpop.f32.mrb[0].mxu0
      %2484 = vdwg.mxu0
      %v2486 = vrot.slane %v2482, 7
      %v2489 = vadd.f32 %v504, %v2486
      %v2490 = vadd.f32 %v509, %v2482
      %v2491 = vxor.u32 %v2489, 2147483648
      %v2492 = vxor.u32 %v2490, 2147483648
      %v2493 = vmul.f32 %v2491, 1.442695
      %v2494 = vpow.pop %v2493
      %v2495 = vmul.f32 %v2492, 1.442695
      %v2496 = vpow.pop %v2495
      %v2497 = vadd.f32 %v2494, 1.0
      %v2498 = vadd.f32 %v2496, 1.0
      %v2499 = vrcp.pop %v2497
      %v2500 = vmul.f32 1.0, %v2499
      %v2501 = vrcp.pop %v2498
      %v2502 = vmul.f32 1.0, %v2501
      %v2503 = vtanh.pop %v2489
      %v2504 = vtanh.pop %v2490
      %v2507 = vrot.slane %v2236, 1
      %v2508 = vrot.slane %v2237, 1
      %v2511 = vmul.f32 %v2500, %v2507
      %v2512 = vmul.f32 %v2502, %v2508
      %2515 = vrot.lane.b32.xlu0 %v2503, 64
      %v2516 = vpop.permute.xlu0 %2515
      %2517 = vrot.lane.b32.xlu0 %v2504, 64
      %v2518 = vpop.permute.xlu0 %2517
      %v2521 = vmul.f32 %v2500, %v2516
      %v2522 = vmul.f32 %v2502, %v2518
      %2525 = vrot.lane.b32.xlu0 %v2521, 32
      %v2526 = vpop.permute.xlu0 %2525
      %2527 = vrot.lane.b32.xlu0 %v2522, 32
      %v2528 = vpop.permute.xlu0 %2527
      %v2531 = vadd.f32 %v2511, %v2526
      %v2532 = vadd.f32 %v2512, %v2528
      %v2533 = vtanh.pop %v2531
      %v2534 = vtanh.pop %v2532
      %2537 = vrot.lane.b32.xlu0 %v2533, 64
      %v2538 = vpop.permute.xlu0 %2537
      %2539 = vrot.lane.b32.xlu0 %v2534, 64
      %v2540 = vpop.permute.xlu0 %2539
      %v2543 = vmul.f32 %v2500, %v2538
      %v2544 = vmul.f32 %v2502, %v2540
      %2547 = vrot.lane.b32.xlu0 %v2406, 32
      %v2548 = vpop.permute.xlu0 %2547
      %2549 = vrot.lane.b32.xlu0 %v2407, 32
      %v2550 = vpop.permute.xlu0 %2549
      %2553 = vst.msk [vmem:[%s315] sm:$0x40] %vm1080, %v2548
      %2554 = vst.msk [vmem:[%s315 + $0x8] sm:$0x40] %vm1080, %v2550
      %2557 = vrot.lane.b32.xlu0 %v2543, 32
      %v2558 = vpop.permute.xlu0 %2557
      %2559 = vrot.lane.b32.xlu0 %v2544, 32
      %v2560 = vpop.permute.xlu0 %2559
      %2563 = vst.msk [vmem:[%s321] sm:$0x2] %vm1069, %v2558
      %2564 = vst.msk [vmem:[%s321 + $0x8] sm:$0x2] %vm1069, %v2560
      %v2565 = vrot.slane %v2406, 6
      %v2566 = vrot.slane %v2407, 5
      %v2567 = vsel %vm787, %v2566, %v2565
      %2568 = vrot.lane.b32.xlu0 %v2567, 32
      %v2569 = vpop.permute.xlu0 %2568
      %v2570 = vsel %vm344, %v2569, 0
      %2572 = vmatprep.subr.mxu0 0.0
      %2573 = vmatpush1.msra.mxu0 %v323
      %2574 = vmatprep.subr.mxu0 0.0
      %2575 = vmatpush1.msra.mxu0 %v324
      %2576 = vmatprep.subr.mxu0 0.0
      %2577 = vmatpush1.msra.mxu0 %v325
      %2578 = vmatprep.subr.mxu0 0.0
      %2579 = vmatpush1.msra.mxu0 %v326
      %2580 = vmatprep.subr.mxu0 0.0
      %2581 = vmatpush1.msra.mxu0 0.0
      %2582 = vmatprep.subr.mxu0 0.0
      %2583 = vmatpush1.msra.mxu0 0.0
      %2584 = vmatprep.subr.mxu0 0.0
      %2585 = vmatpush1.msra.mxu0 0.0
      %2586 = vmatprep.subr.mxu0 0.0
      %2587 = vmatpush1.msra.mxu0 0.0
      %2588 = vmatprep.subr.mxu0 0.0
      %2589 = vmatpush1.msra.mxu0 0.0
      %2590 = vmatprep.subr.mxu0 0.0
      %2591 = vmatpush1.msra.mxu0 0.0
      %2592 = vmatprep.subr.mxu0 0.0
      %2593 = vmatpush1.msra.mxu0 0.0
      %2594 = vmatprep.subr.mxu0 0.0
      %2595 = vmatpush1.msra.mxu0 0.0
      %2596 = vmatprep.subr.mxu0 0.0
      %2597 = vmatpush1.msra.mxu0 0.0
      %2598 = vmatprep.subr.mxu0 0.0
      %2599 = vmatpush1.msra.mxu0 0.0
      %2600 = vmatprep.subr.mxu0 0.0
      %2601 = vmatpush1.msra.mxu0 0.0
      %2602 = vmatprep.subr.mxu0 0.0
      %2603 = vmatpush1.msra.mxu0 0.0
      %2604 = vmatprep.subr.mxu0 0.0
      %2605 = vmatpush1.msra.mxu0 0.0
      %2606 = vmatprep.subr.mxu0 0.0
      %2607 = vmatpush1.msra.mxu0 0.0
      %2608 = vmatprep.subr.mxu0 0.0
      %2609 = vmatpush1.msra.mxu0 0.0
      %2610 = vmatprep.subr.mxu0 0.0
      %2611 = vmatpush1.msra.mxu0 0.0
      %2612 = vmatprep.subr.mxu0 0.0
      %2613 = vmatpush1.msra.mxu0 0.0
      %2614 = vmatprep.subr.mxu0 0.0
      %2615 = vmatpush1.msra.mxu0 0.0
      %2616 = vmatprep.subr.mxu0 0.0
      %2617 = vmatpush1.msra.mxu0 0.0
      %2618 = vmatprep.subr.mxu0 0.0
      %2619 = vmatpush1.msra.mxu0 0.0
      %2620 = vmatprep.subr.mxu0 0.0
      %2621 = vmatpush1.msra.mxu0 0.0
      %2622 = vmatprep.subr.mxu0 0.0
      %2623 = vmatpush1.msra.mxu0 0.0
      %2624 = vmatprep.subr.mxu0 0.0
      %2625 = vmatpush1.msra.mxu0 0.0
      %2626 = vmatprep.subr.mxu0 0.0
      %2627 = vmatpush1.msra.mxu0 0.0
      %2628 = vmatprep.subr.mxu0 0.0
      %2629 = vmatpush1.msra.mxu0 0.0
      %2630 = vmatprep.subr.mxu0 0.0
      %2631 = vmatpush1.msra.mxu0 0.0
      %2632 = vmatprep.subr.mxu0 0.0
      %2633 = vmatpush1.msra.mxu0 0.0
      %2634 = vmatprep.subr.mxu0 0.0
      %2635 = vmatpush1.msra.mxu0 0.0
      %2636 = vmatprep.mubr.f32.mxu0 0.0
      %2637 = vmatmul.mubr.f32.gmra.mrb[0].mxu0 %v2570
      %v2638 = vpop.f32.mrb[0].mxu0
      %v2639 = vadd.f32 0.0, %v2638
      %v2640 = vpop.f32.mrb[0].mxu0
      %2641 = vdwg.mxu0
      %v2643 = vrot.slane %v2639, 1
      %v2644 = vrot.slane %v2639, 2
      %v2647 = vadd.f32 %v418, %v2643
      %v2648 = vadd.f32 %v423, %v2644
      %v2649 = vxor.u32 %v2647, 2147483648
      %v2650 = vxor.u32 %v2648, 2147483648
      %v2651 = vmul.f32 %v2649, 1.442695
      %v2652 = vpow.pop %v2651
      %v2653 = vmul.f32 %v2650, 1.442695
      %v2654 = vpow.pop %v2653
      %v2655 = vadd.f32 %v2652, 1.0
      %v2656 = vadd.f32 %v2654, 1.0
      %v2657 = vrcp.pop %v2655
      %v2658 = vmul.f32 1.0, %v2657
      %v2659 = vrcp.pop %v2656
      %v2660 = vmul.f32 1.0, %v2659
      %v2661 = vtanh.pop %v2647
      %v2662 = vtanh.pop %v2648
      %v2665 = vrot.slane %v2394, 7
      %v2666 = vrot.slane %v2395, 7
      %v2669 = vmul.f32 %v2658, %v2665
      %v2670 = vmul.f32 %v2660, %v2666
      %2673 = vrot.lane.b32.xlu0 %v2661, 64
      %v2674 = vpop.permute.xlu0 %2673
      %2675 = vrot.lane.b32.xlu0 %v2662, 64
      %v2676 = vpop.permute.xlu0 %2675
      %v2679 = vmul.f32 %v2658, %v2674
      %v2680 = vmul.f32 %v2660, %v2676
      %2683 = vrot.lane.b32.xlu0 %v2679, 32
      %v2684 = vpop.permute.xlu0 %2683
      %2685 = vrot.lane.b32.xlu0 %v2680, 32
      %v2686 = vpop.permute.xlu0 %2685
      %v2689 = vadd.f32 %v2669, %v2684
      %v2690 = vadd.f32 %v2670, %v2686
      %v2691 = vtanh.pop %v2689
      %v2692 = vtanh.pop %v2690
      %2695 = vrot.lane.b32.xlu0 %v2691, 64
      %v2696 = vpop.permute.xlu0 %2695
      %2697 = vrot.lane.b32.xlu0 %v2692, 64
      %v2698 = vpop.permute.xlu0 %2697
      %v2701 = vmul.f32 %v2658, %v2696
      %v2702 = vmul.f32 %v2660, %v2698
      %v2703 = vrot.slane %v2543, 1
      %v2704 = vsel %vm787, %v2544, %v2703
      %2705 = vrot.lane.b32.xlu0 %v2704, 32
      %v2706 = vpop.permute.xlu0 %2705
      %v2707 = vsel %vm344, %v2706, 0
      %2709 = vmatprep.subr.mxu0 0.0
      %2710 = vmatpush1.msra.mxu0 %v327
      %2711 = vmatprep.subr.mxu0 0.0
      %2712 = vmatpush1.msra.mxu0 %v328
      %2713 = vmatprep.subr.mxu0 0.0
      %2714 = vmatpush1.msra.mxu0 %v329
      %2715 = vmatprep.subr.mxu0 0.0
      %2716 = vmatpush1.msra.mxu0 %v330
      %2717 = vmatprep.subr.mxu0 0.0
      %2718 = vmatpush1.msra.mxu0 0.0
      %2719 = vmatprep.subr.mxu0 0.0
      %2720 = vmatpush1.msra.mxu0 0.0
      %2721 = vmatprep.subr.mxu0 0.0
      %2722 = vmatpush1.msra.mxu0 0.0
      %2723 = vmatprep.subr.mxu0 0.0
      %2724 = vmatpush1.msra.mxu0 0.0
      %2725 = vmatprep.subr.mxu0 0.0
      %2726 = vmatpush1.msra.mxu0 0.0
      %2727 = vmatprep.subr.mxu0 0.0
      %2728 = vmatpush1.msra.mxu0 0.0
      %2729 = vmatprep.subr.mxu0 0.0
      %2730 = vmatpush1.msra.mxu0 0.0
      %2731 = vmatprep.subr.mxu0 0.0
      %2732 = vmatpush1.msra.mxu0 0.0
      %2733 = vmatprep.subr.mxu0 0.0
      %2734 = vmatpush1.msra.mxu0 0.0
      %2735 = vmatprep.subr.mxu0 0.0
      %2736 = vmatpush1.msra.mxu0 0.0
      %2737 = vmatprep.subr.mxu0 0.0
      %2738 = vmatpush1.msra.mxu0 0.0
      %2739 = vmatprep.subr.mxu0 0.0
      %2740 = vmatpush1.msra.mxu0 0.0
      %2741 = vmatprep.subr.mxu0 0.0
      %2742 = vmatpush1.msra.mxu0 0.0
      %2743 = vmatprep.subr.mxu0 0.0
      %2744 = vmatpush1.msra.mxu0 0.0
      %2745 = vmatprep.subr.mxu0 0.0
      %2746 = vmatpush1.msra.mxu0 0.0
      %2747 = vmatprep.subr.mxu0 0.0
      %2748 = vmatpush1.msra.mxu0 0.0
      %2749 = vmatprep.subr.mxu0 0.0
      %2750 = vmatpush1.msra.mxu0 0.0
      %2751 = vmatprep.subr.mxu0 0.0
      %2752 = vmatpush1.msra.mxu0 0.0
      %2753 = vmatprep.subr.mxu0 0.0
      %2754 = vmatpush1.msra.mxu0 0.0
      %2755 = vmatprep.subr.mxu0 0.0
      %2756 = vmatpush1.msra.mxu0 0.0
      %2757 = vmatprep.subr.mxu0 0.0
      %2758 = vmatpush1.msra.mxu0 0.0
      %2759 = vmatprep.subr.mxu0 0.0
      %2760 = vmatpush1.msra.mxu0 0.0
      %2761 = vmatprep.subr.mxu0 0.0
      %2762 = vmatpush1.msra.mxu0 0.0
      %2763 = vmatprep.subr.mxu0 0.0
      %2764 = vmatpush1.msra.mxu0 0.0
      %2765 = vmatprep.subr.mxu0 0.0
      %2766 = vmatpush1.msra.mxu0 0.0
      %2767 = vmatprep.subr.mxu0 0.0
      %2768 = vmatpush1.msra.mxu0 0.0
      %2769 = vmatprep.subr.mxu0 0.0
      %2770 = vmatpush1.msra.mxu0 0.0
      %2771 = vmatprep.subr.mxu0 0.0
      %2772 = vmatpush1.msra.mxu0 0.0
      %2773 = vmatprep.mubr.f32.mxu0 0.0
      %2774 = vmatmul.mubr.f32.gmra.mrb[0].mxu0 %v2707
      %v2775 = vpop.f32.mrb[0].mxu0
      %v2776 = vadd.f32 0.0, %v2775
      %v2777 = vpop.f32.mrb[0].mxu0
      %2778 = vdwg.mxu0
      %v2780 = vrot.slane %v2776, 1
      %v2783 = vadd.f32 %v504, %v2776
      %v2784 = vadd.f32 %v509, %v2780
      %v2785 = vxor.u32 %v2783, 2147483648
      %v2786 = vxor.u32 %v2784, 2147483648
      %v2787 = vmul.f32 %v2785, 1.442695
      %v2788 = vpow.pop %v2787
      %v2789 = vmul.f32 %v2786, 1.442695
      %v2790 = vpow.pop %v2789
      %v2791 = vadd.f32 %v2788, 1.0
      %v2792 = vadd.f32 %v2790, 1.0
      %v2793 = vrcp.pop %v2791
      %v2794 = vmul.f32 1.0, %v2793
      %v2795 = vrcp.pop %v2792
      %v2796 = vmul.f32 1.0, %v2795
      %v2797 = vtanh.pop %v2783
      %v2798 = vtanh.pop %v2784
      %v2801 = vrot.slane %v2531, 1
      %v2802 = vrot.slane %v2532, 1
      %v2805 = vmul.f32 %v2794, %v2801
      %v2806 = vmul.f32 %v2796, %v2802
      %2809 = vrot.lane.b32.xlu0 %v2797, 64
      %v2810 = vpop.permute.xlu0 %2809
      %2811 = vrot.lane.b32.xlu0 %v2798, 64
      %v2812 = vpop.permute.xlu0 %2811
      %v2815 = vmul.f32 %v2794, %v2810
      %v2816 = vmul.f32 %v2796, %v2812
      %2819 = vrot.lane.b32.xlu0 %v2815, 32
      %v2820 = vpop.permute.xlu0 %2819
      %2821 = vrot.lane.b32.xlu0 %v2816, 32
      %v2822 = vpop.permute.xlu0 %2821
      %v2825 = vadd.f32 %v2805, %v2820
      %v2826 = vadd.f32 %v2806, %v2822
      %v2827 = vtanh.pop %v2825
      %v2828 = vtanh.pop %v2826
      %2831 = vrot.lane.b32.xlu0 %v2827, 64
      %v2832 = vpop.permute.xlu0 %2831
      %2833 = vrot.lane.b32.xlu0 %v2828, 64
      %v2834 = vpop.permute.xlu0 %2833
      %v2837 = vmul.f32 %v2794, %v2832
      %v2838 = vmul.f32 %v2796, %v2834
      %2841 = vrot.lane.b32.xlu0 %v2701, 32
      %v2842 = vpop.permute.xlu0 %2841
      %2843 = vrot.lane.b32.xlu0 %v2702, 32
      %v2844 = vpop.permute.xlu0 %2843
      %2847 = vst.msk [vmem:[%s315] sm:$0x80] %vm783, %v2842
      %2848 = vst.msk [vmem:[%s315 + $0x8] sm:$0x80] %vm783, %v2844
      %2851 = vrot.lane.b32.xlu0 %v2837, 32
      %v2852 = vpop.permute.xlu0 %2851
      %2853 = vrot.lane.b32.xlu0 %v2838, 32
      %v2854 = vpop.permute.xlu0 %2853
      %2857 = vst.msk [vmem:[%s321] sm:$0x1] %vm772, %v2852
      %2858 = vst.msk [vmem:[%s321 + $0x8] sm:$0x1] %vm772, %v2854
      %s2859 = smul.u32 2, %s20
      %p2860 = scmp.lt.s32.totalorder %s2859, 3
      %s2861 = scalar_select %p2860, %s2859, 3
      %s2862 = smul.addr %s2861, 8
      %s2863 = scalar_lea.vmem %s7, %s2862
      %s2864 = smul.u32 2, %s20
      %p2865 = scmp.lt.s32.totalorder %s2864, 3
      %s2866 = scalar_select %p2865, %s2864, 3
      %s2867 = smul.addr %s2866, 8
      %s2868 = scalar_lea.vmem %s8, %s2867
      // Predicated region
      $region49: #{bimpm_forward.4} parent=47 // pred_check
        %p2869 = pneg %p190
      $region50: #{bimpm_forward.4} parent=47 // pred_check_branch
        %2871 = sbr.rel (%p2869) target = $region52
      $region51: #{bimpm_forward.4} parent=47 // pred_region
        %s2872 = smul.u32 2, %s20
      $region52: #{bimpm_forward.4} parent=47 // pred_fallthru
        _
      // Predicated region
      $region53: #{bimpm_forward.4} parent=47 // pred_check
        %p2873 = pneg %p216
      $region54: #{bimpm_forward.4} parent=47 // pred_check_branch
        %2875 = sbr.rel (%p2873) target = $region56
      $region55: #{bimpm_forward.4} parent=47 // pred_region
        %s2876 = smul.u32 2, %s20
      $region56: #{bimpm_forward.4} parent=47 // pred_fallthru
        _
    $region48: #{bimpm_forward.4} parent=5 // pred_fallthru
      _
    %p2877 = scmp.le.s32.totalorder 2, %s15
    // Predicated region
    $region57: #{bimpm_forward.4} parent=5 // pred_check
      %p2878 = pneg %p2877
    $region58: #{bimpm_forward.4} parent=5 // pred_check_branch
      %2880 = sbr.rel (%p2878) target = $region60
    $region59: #{bimpm_forward.4} parent=5 // pred_region
      %s2881 = ssub.s32 %s15, 2
      // Predicated region
      $region61: #{bimpm_forward.4} parent=59 // pred_check
        %p2882 = pneg %p196
      $region62: #{bimpm_forward.4} parent=59 // pred_check_branch
        %2884 = sbr.rel (%p2882) target = $region64
      $region63: #{bimpm_forward.4} parent=59 // pred_region
        %s2885 = smul.u32 2, %s21
        %p2886 = scmp.lt.s32.totalorder %s2885, 3
        %s2887 = scalar_select %p2886, %s2885, 3
        %s2888 = smul.addr %s2887, 8
        %s2889 = scalar_lea.vmem %s7, %s2888
      $region64: #{bimpm_forward.4} parent=59 // pred_fallthru
        _
      // Predicated region
      $region65: #{bimpm_forward.4} parent=59 // pred_check
        %p2890 = pneg %p222
      $region66: #{bimpm_forward.4} parent=59 // pred_check_branch
        %2892 = sbr.rel (%p2890) target = $region68
      $region67: #{bimpm_forward.4} parent=59 // pred_region
        %s2893 = smul.u32 2, %s21
        %p2894 = scmp.lt.s32.totalorder %s2893, 3
        %s2895 = scalar_select %p2894, %s2893, 3
        %s2896 = smul.addr %s2895, 8
        %s2897 = scalar_lea.vmem %s8, %s2896
      $region68: #{bimpm_forward.4} parent=59 // pred_fallthru
        _
    $region60: #{bimpm_forward.4} parent=5 // pred_fallthru
      _
  $region6: #{bimpm_forward.4} parent=0 // loop_footer
    %s19 = sadd.s32 1, %s15
  $region7: #{bimpm_forward.4} parent=0 // loop_footer_branch
    %14 = sbr.rel target = $region3
  $region8: #{bimpm_forward.4} parent=0 // loop_exit
    _

// kernel: bimpm_forward.5
$region0: #{bimpm_forward.5}
  #allocation0 [shape = 'u32[]', space=smem, size = 0x4, offset = 0x4, fixed_abs, tag = 'smem constant byte address 0x4 - core index']
  #allocation1 [shape = 'u32[144,128]{1,0:T(1,128)}', space=vmem, size = 0x12000, scoped, tag = 'internal scratch']
  %s0 = inlined_call_operand.vmem [shape: f32[2,8,32], index: 0, kind: input, shape index: {}]
  %s1 = inlined_call_operand.vmem [shape: f32[2,8,32], index: 1, kind: input, shape index: {}]
  %s2 = inlined_call_operand.vmem [shape: f32[2,8,32], index: 2, kind: input, shape index: {}]
  %s3 = inlined_call_operand.vmem [shape: f32[2,8,32], index: 3, kind: input, shape index: {}]
  %s4 = inlined_call_operand.vmem [shape: f32[32,4], index: 4, kind: input, shape index: {}]
  %s5 = inlined_call_operand.vmem [shape: f32[32,4], index: 5, kind: input, shape index: {}]
  %s6 = inlined_call_operand.vmem [shape: f32[4,32], index: 6, kind: input, shape index: {}]
  %s7 = inlined_call_operand.vmem [shape: f32[4,32], index: 7, kind: input, shape index: {}]
  %s8 = inlined_call_operand.vmem [shape: f32[32,4], index: 8, kind: input, shape index: {}]
  %s9 = inlined_call_operand.vmem [shape: f32[32,4], index: 9, kind: input, shape index: {}]
  %s10 = inlined_call_operand.vmem [shape: f32[2,8,32], index: 10, kind: output, shape index: {0}]
  %s11 = inlined_call_operand.vmem [shape: f32[2,8,32], index: 11, kind: output, shape index: {1}]
  %12 = xla_tuple %s10, %s11
  %s13 = sld [smem:[#allocation0]]
  $region81: #{bimpm_forward.5} parent=0
    _
  %s15 = ssub.s32 1, %s13
  %s16 = scalar_select 0, %s15, %s13
  loop: start=0, step=1, limit=4
  $region2: #{bimpm_forward.5} parent=0 // loop_pre_header
    _
  $region3: #{bimpm_forward.5} parent=0 // loop_header
    %s18 = sphi 0, %s22
    %p19 = scmp.ge.s32.totalorder %s18, 4
    %s28 = sphi 0, %s30
    %s31 = sphi 0, %s28
    %s32 = sphi 0, %s31
    %s48 = sphi 0, %s32
    %s54 = sphi 0, %s56
    %s57 = sphi 0, %s54
    %s58 = sphi 0, %s57
    %s74 = sphi 0, %s58
    %s80 = sphi 0, %s82
    %s83 = sphi 0, %s80
    %s84 = sphi 0, %s83
    %s100 = sphi 0, %s84
    %s106 = sphi 0, %s108
    %s109 = sphi 0, %s106
    %s110 = sphi 0, %s109
    %s126 = sphi 0, %s110
    %s130 = sphi 0, %s130
    %s132 = sphi 0, %s130
    %s133 = sphi 0, %s132
    %s147 = sphi 0, %s133
    %s151 = sphi 0, %s151
    %s153 = sphi 0, %s151
    %s154 = sphi 0, %s153
    %s168 = sphi 0, %s154
    %s172 = sphi 0, %s172
    %s174 = sphi 0, %s172
    %s175 = sphi 0, %s174
    %s189 = sphi 0, %s175
    %s193 = sphi 0, %s193
    %s195 = sphi 0, %s193
    %s196 = sphi 0, %s195
    %s210 = sphi 0, %s196
    %s214 = sphi 0, %s214
    %s216 = sphi 0, %s214
    %s217 = sphi 0, %s216
    %s231 = sphi 0, %s217
    %s235 = sphi 0, %s235
    %s237 = sphi 0, %s235
    %s238 = sphi 0, %s237
    %s252 = sphi 0, %s238
    %s258 = sphi 0, %s260
    %s261 = sphi 0, %s258
    %s262 = sphi 0, %s261
    %s278 = sphi 0, %s262
    %s284 = sphi 0, %s286
    %s287 = sphi 0, %s284
    %s288 = sphi 0, %s287
    %s304 = sphi 0, %s288
  $region4: #{bimpm_forward.5} parent=0 // loop_header_branch
    %21 = sbr.rel (%p19) target = $region8
  $region5: #{bimpm_forward.5} parent=0 // loop_body
    %s23 = ssub.s32 %s18, 1
    %s24 = ssub.s32 %s18, 2
    %s25 = sadd.s32 %s18, 1
    %s26 = ssub.s32 %s18, %s25
    %p27 = scmp.eq.s32.totalorder %s26, 0
    %s29 = sadd.s32 %s28, 1
    %s30 = scalar_select %p27, %s28, %s29
    %p33 = pneg %p27
    %p34 = scmp.eq.s32.totalorder %s18, 1
    %p35 = por %p33, %p34
    %p36 = scmp.ne.s32.totalorder %s28, %s31
    %p37 = scmp.eq.s32.totalorder %s18, 0
    %p38 = por %p36, %p37
    %p39 = scmp.ne.s32.totalorder %s28, %s31
    %p40 = scmp.eq.s32.totalorder %s23, 1
    %p41 = por %p39, %p40
    %p42 = scmp.ne.s32.totalorder %s31, %s32
    %p43 = scmp.eq.s32.totalorder %s23, 0
    %p44 = por %p42, %p43
    %p45 = scmp.ne.s32.totalorder %s31, %s32
    %p46 = scmp.eq.s32.totalorder %s24, 1
    %p47 = por %p45, %p46
    %p49 = scmp.ne.s32.totalorder %s32, %s48
    %p50 = scmp.eq.s32.totalorder %s24, 0
    %p51 = por %p49, %p50
    %s52 = ssub.s32 %s18, %s25
    %p53 = scmp.eq.s32.totalorder %s52, 0
    %s55 = sadd.s32 %s54, 1
    %s56 = scalar_select %p53, %s54, %s55
    %p59 = pneg %p53
    %p60 = scmp.eq.s32.totalorder %s18, 1
    %p61 = por %p59, %p60
    %p62 = scmp.ne.s32.totalorder %s54, %s57
    %p63 = scmp.eq.s32.totalorder %s18, 0
    %p64 = por %p62, %p63
    %p65 = scmp.ne.s32.totalorder %s54, %s57
    %p66 = scmp.eq.s32.totalorder %s23, 1
    %p67 = por %p65, %p66
    %p68 = scmp.ne.s32.totalorder %s57, %s58
    %p69 = scmp.eq.s32.totalorder %s23, 0
    %p70 = por %p68, %p69
    %p71 = scmp.ne.s32.totalorder %s57, %s58
    %p72 = scmp.eq.s32.totalorder %s24, 1
    %p73 = por %p71, %p72
    %p75 = scmp.ne.s32.totalorder %s58, %s74
    %p76 = scmp.eq.s32.totalorder %s24, 0
    %p77 = por %p75, %p76
    %s78 = ssub.s32 %s18, %s25
    %p79 = scmp.eq.s32.totalorder %s78, 0
    %s81 = sadd.s32 %s80, 1
    %s82 = scalar_select %p79, %s80, %s81
    %p85 = pneg %p79
    %p86 = scmp.eq.s32.totalorder %s18, 1
    %p87 = por %p85, %p86
    %p88 = scmp.ne.s32.totalorder %s80, %s83
    %p89 = scmp.eq.s32.totalorder %s18, 0
    %p90 = por %p88, %p89
    %p91 = scmp.ne.s32.totalorder %s80, %s83
    %p92 = scmp.eq.s32.totalorder %s23, 1
    %p93 = por %p91, %p92
    %p94 = scmp.ne.s32.totalorder %s83, %s84
    %p95 = scmp.eq.s32.totalorder %s23, 0
    %p96 = por %p94, %p95
    %p97 = scmp.ne.s32.totalorder %s83, %s84
    %p98 = scmp.eq.s32.totalorder %s24, 1
    %p99 = por %p97, %p98
    %p101 = scmp.ne.s32.totalorder %s84, %s100
    %p102 = scmp.eq.s32.totalorder %s24, 0
    %p103 = por %p101, %p102
    %s104 = ssub.s32 %s18, %s25
    %p105 = scmp.eq.s32.totalorder %s104, 0
    %s107 = sadd.s32 %s106, 1
    %s108 = scalar_select %p105, %s106, %s107
    %p111 = pneg %p105
    %p112 = scmp.eq.s32.totalorder %s18, 1
    %p113 = por %p111, %p112
    %p114 = scmp.ne.s32.totalorder %s106, %s109
    %p115 = scmp.eq.s32.totalorder %s18, 0
    %p116 = por %p114, %p115
    %p117 = scmp.ne.s32.totalorder %s106, %s109
    %p118 = scmp.eq.s32.totalorder %s23, 1
    %p119 = por %p117, %p118
    %p120 = scmp.ne.s32.totalorder %s109, %s110
    %p121 = scmp.eq.s32.totalorder %s23, 0
    %p122 = por %p120, %p121
    %p123 = scmp.ne.s32.totalorder %s109, %s110
    %p124 = scmp.eq.s32.totalorder %s24, 1
    %p125 = por %p123, %p124
    %p127 = scmp.ne.s32.totalorder %s110, %s126
    %p128 = scmp.eq.s32.totalorder %s24, 0
    %p129 = por %p127, %p128
    %s131 = sadd.s32 %s130, 1
    %p134 = scmp.eq.s32.totalorder %s18, 1
    %p135 = scmp.ne.s32.totalorder %s130, %s132
    %p136 = scmp.eq.s32.totalorder %s18, 0
    %p137 = por %p135, %p136
    %p138 = scmp.ne.s32.totalorder %s130, %s132
    %p139 = scmp.eq.s32.totalorder %s23, 1
    %p140 = por %p138, %p139
    %p141 = scmp.ne.s32.totalorder %s132, %s133
    %p142 = scmp.eq.s32.totalorder %s23, 0
    %p143 = por %p141, %p142
    %p144 = scmp.ne.s32.totalorder %s132, %s133
    %p145 = scmp.eq.s32.totalorder %s24, 1
    %p146 = por %p144, %p145
    %p148 = scmp.ne.s32.totalorder %s133, %s147
    %p149 = scmp.eq.s32.totalorder %s24, 0
    %p150 = por %p148, %p149
    %s152 = sadd.s32 %s151, 1
    %p155 = scmp.eq.s32.totalorder %s18, 1
    %p156 = scmp.ne.s32.totalorder %s151, %s153
    %p157 = scmp.eq.s32.totalorder %s18, 0
    %p158 = por %p156, %p157
    %p159 = scmp.ne.s32.totalorder %s151, %s153
    %p160 = scmp.eq.s32.totalorder %s23, 1
    %p161 = por %p159, %p160
    %p162 = scmp.ne.s32.totalorder %s153, %s154
    %p163 = scmp.eq.s32.totalorder %s23, 0
    %p164 = por %p162, %p163
    %p165 = scmp.ne.s32.totalorder %s153, %s154
    %p166 = scmp.eq.s32.totalorder %s24, 1
    %p167 = por %p165, %p166
    %p169 = scmp.ne.s32.totalorder %s154, %s168
    %p170 = scmp.eq.s32.totalorder %s24, 0
    %p171 = por %p169, %p170
    %s173 = sadd.s32 %s172, 1
    %p176 = scmp.eq.s32.totalorder %s18, 1
    %p177 = scmp.ne.s32.totalorder %s172, %s174
    %p178 = scmp.eq.s32.totalorder %s18, 0
    %p179 = por %p177, %p178
    %p180 = scmp.ne.s32.totalorder %s172, %s174
    %p181 = scmp.eq.s32.totalorder %s23, 1
    %p182 = por %p180, %p181
    %p183 = scmp.ne.s32.totalorder %s174, %s175
    %p184 = scmp.eq.s32.totalorder %s23, 0
    %p185 = por %p183, %p184
    %p186 = scmp.ne.s32.totalorder %s174, %s175
    %p187 = scmp.eq.s32.totalorder %s24, 1
    %p188 = por %p186, %p187
    %p190 = scmp.ne.s32.totalorder %s175, %s189
    %p191 = scmp.eq.s32.totalorder %s24, 0
    %p192 = por %p190, %p191
    %s194 = sadd.s32 %s193, 1
    %p197 = scmp.eq.s32.totalorder %s18, 1
    %p198 = scmp.ne.s32.totalorder %s193, %s195
    %p199 = scmp.eq.s32.totalorder %s18, 0
    %p200 = por %p198, %p199
    %p201 = scmp.ne.s32.totalorder %s193, %s195
    %p202 = scmp.eq.s32.totalorder %s23, 1
    %p203 = por %p201, %p202
    %p204 = scmp.ne.s32.totalorder %s195, %s196
    %p205 = scmp.eq.s32.totalorder %s23, 0
    %p206 = por %p204, %p205
    %p207 = scmp.ne.s32.totalorder %s195, %s196
    %p208 = scmp.eq.s32.totalorder %s24, 1
    %p209 = por %p207, %p208
    %p211 = scmp.ne.s32.totalorder %s196, %s210
    %p212 = scmp.eq.s32.totalorder %s24, 0
    %p213 = por %p211, %p212
    %s215 = sadd.s32 %s214, 1
    %p218 = scmp.eq.s32.totalorder %s18, 1
    %p219 = scmp.ne.s32.totalorder %s214, %s216
    %p220 = scmp.eq.s32.totalorder %s18, 0
    %p221 = por %p219, %p220
    %p222 = scmp.ne.s32.totalorder %s214, %s216
    %p223 = scmp.eq.s32.totalorder %s23, 1
    %p224 = por %p222, %p223
    %p225 = scmp.ne.s32.totalorder %s216, %s217
    %p226 = scmp.eq.s32.totalorder %s23, 0
    %p227 = por %p225, %p226
    %p228 = scmp.ne.s32.totalorder %s216, %s217
    %p229 = scmp.eq.s32.totalorder %s24, 1
    %p230 = por %p228, %p229
    %p232 = scmp.ne.s32.totalorder %s217, %s231
    %p233 = scmp.eq.s32.totalorder %s24, 0
    %p234 = por %p232, %p233
    %s236 = sadd.s32 %s235, 1
    %p239 = scmp.eq.s32.totalorder %s18, 1
    %p240 = scmp.ne.s32.totalorder %s235, %s237
    %p241 = scmp.eq.s32.totalorder %s18, 0
    %p242 = por %p240, %p241
    %p243 = scmp.ne.s32.totalorder %s235, %s237
    %p244 = scmp.eq.s32.totalorder %s23, 1
    %p245 = por %p243, %p244
    %p246 = scmp.ne.s32.totalorder %s237, %s238
    %p247 = scmp.eq.s32.totalorder %s23, 0
    %p248 = por %p246, %p247
    %p249 = scmp.ne.s32.totalorder %s237, %s238
    %p250 = scmp.eq.s32.totalorder %s24, 1
    %p251 = por %p249, %p250
    %p253 = scmp.ne.s32.totalorder %s238, %s252
    %p254 = scmp.eq.s32.totalorder %s24, 0
    %p255 = por %p253, %p254
    %s256 = ssub.s32 %s18, %s25
    %p257 = scmp.eq.s32.totalorder %s256, 0
    %s259 = sadd.s32 %s258, 1
    %s260 = scalar_select %p257, %s258, %s259
    %p263 = pneg %p257
    %p264 = scmp.eq.s32.totalorder %s18, 1
    %p265 = por %p263, %p264
    %p266 = scmp.ne.s32.totalorder %s258, %s261
    %p267 = scmp.eq.s32.totalorder %s18, 0
    %p268 = por %p266, %p267
    %p269 = scmp.ne.s32.totalorder %s258, %s261
    %p270 = scmp.eq.s32.totalorder %s23, 1
    %p271 = por %p269, %p270
    %p272 = scmp.ne.s32.totalorder %s261, %s262
    %p273 = scmp.eq.s32.totalorder %s23, 0
    %p274 = por %p272, %p273
    %p275 = scmp.ne.s32.totalorder %s261, %s262
    %p276 = scmp.eq.s32.totalorder %s24, 1
    %p277 = por %p275, %p276
    %p279 = scmp.ne.s32.totalorder %s262, %s278
    %p280 = scmp.eq.s32.totalorder %s24, 0
    %p281 = por %p279, %p280
    %s282 = ssub.s32 %s18, %s25
    %p283 = scmp.eq.s32.totalorder %s282, 0
    %s285 = sadd.s32 %s284, 1
    %s286 = scalar_select %p283, %s284, %s285
    %p289 = pneg %p283
    %p290 = scmp.eq.s32.totalorder %s18, 1
    %p291 = por %p289, %p290
    %p292 = scmp.ne.s32.totalorder %s284, %s287
    %p293 = scmp.eq.s32.totalorder %s18, 0
    %p294 = por %p292, %p293
    %p295 = scmp.ne.s32.totalorder %s284, %s287
    %p296 = scmp.eq.s32.totalorder %s23, 1
    %p297 = por %p295, %p296
    %p298 = scmp.ne.s32.totalorder %s287, %s288
    %p299 = scmp.eq.s32.totalorder %s23, 0
    %p300 = por %p298, %p299
    %p301 = scmp.ne.s32.totalorder %s287, %s288
    %p302 = scmp.eq.s32.totalorder %s24, 1
    %p303 = por %p301, %p302
    %p305 = scmp.ne.s32.totalorder %s288, %s304
    %p306 = scmp.eq.s32.totalorder %s24, 0
    %p307 = por %p305, %p306
    %p308 = scmp.le.s32.totalorder 1, %s18
    %p309 = scmp.lt.s32.totalorder %s18, 3
    %p310 = pnand %p308, %p309
    %p311 = pneg %p310
    // Predicated region
    $region9: #{bimpm_forward.5} parent=5 // pred_check
      _
    $region10: #{bimpm_forward.5} parent=5 // pred_check_branch
      %313 = sbr.rel (%p310) target = $region12
    $region11: #{bimpm_forward.5} parent=5 // pred_region
      %s314 = ssub.s32 %s18, 1
      // Predicated region
      $region13: #{bimpm_forward.5} parent=11 // pred_check
        %p315 = pneg %p143
      $region14: #{bimpm_forward.5} parent=11 // pred_check_branch
        %317 = sbr.rel (%p315) target = $region16
      $region15: #{bimpm_forward.5} parent=11 // pred_region
        _
      $region16: #{bimpm_forward.5} parent=11 // pred_fallthru
        _
      // Predicated region
      $region17: #{bimpm_forward.5} parent=11 // pred_check
        %p318 = pneg %p164
      $region18: #{bimpm_forward.5} parent=11 // pred_check_branch
        %320 = sbr.rel (%p318) target = $region20
      $region19: #{bimpm_forward.5} parent=11 // pred_region
        _
      $region20: #{bimpm_forward.5} parent=11 // pred_fallthru
        _
      // Predicated region
      $region21: #{bimpm_forward.5} parent=11 // pred_check
        %p321 = pneg %p185
      $region22: #{bimpm_forward.5} parent=11 // pred_check_branch
        %323 = sbr.rel (%p321) target = $region24
      $region23: #{bimpm_forward.5} parent=11 // pred_region
        _
      $region24: #{bimpm_forward.5} parent=11 // pred_fallthru
        _
      // Predicated region
      $region25: #{bimpm_forward.5} parent=11 // pred_check
        %p324 = pneg %p206
      $region26: #{bimpm_forward.5} parent=11 // pred_check_branch
        %326 = sbr.rel (%p324) target = $region28
      $region27: #{bimpm_forward.5} parent=11 // pred_region
        _
      $region28: #{bimpm_forward.5} parent=11 // pred_fallthru
        _
      // Predicated region
      $region29: #{bimpm_forward.5} parent=11 // pred_check
        %p327 = pneg %p227
      $region30: #{bimpm_forward.5} parent=11 // pred_check_branch
        %329 = sbr.rel (%p327) target = $region32
      $region31: #{bimpm_forward.5} parent=11 // pred_region
        _
      $region32: #{bimpm_forward.5} parent=11 // pred_fallthru
        _
      // Predicated region
      $region33: #{bimpm_forward.5} parent=11 // pred_check
        %p330 = pneg %p248
      $region34: #{bimpm_forward.5} parent=11 // pred_check_branch
        %332 = sbr.rel (%p330) target = $region36
      $region35: #{bimpm_forward.5} parent=11 // pred_region
        _
      $region36: #{bimpm_forward.5} parent=11 // pred_fallthru
        _
    $region12: #{bimpm_forward.5} parent=5 // pred_fallthru
      _
    %p333 = scmp.lt.s32.totalorder %s18, 2
    // Predicated region
    $region37: #{bimpm_forward.5} parent=5 // pred_check
      %p334 = pneg %p333
    $region38: #{bimpm_forward.5} parent=5 // pred_check_branch
      %336 = sbr.rel (%p334) target = $region40
    $region39: #{bimpm_forward.5} parent=5 // pred_region
      // Predicated region
      $region41: #{bimpm_forward.5} parent=39 // pred_check
        %p337 = pneg %p38
      $region42: #{bimpm_forward.5} parent=39 // pred_check_branch
        %339 = sbr.rel (%p337) target = $region44
      $region43: #{bimpm_forward.5} parent=39 // pred_region
        %p340 = scmp.lt.s32.totalorder %s18, 1
        %s341 = scalar_select %p340, %s18, 1
        %s342 = smul.addr %s341, 8
        %s343 = scalar_lea.vmem %s0, %s342
      $region44: #{bimpm_forward.5} parent=39 // pred_fallthru
        _
      // Predicated region
      $region45: #{bimpm_forward.5} parent=39 // pred_check
        %p344 = pneg %p64
      $region46: #{bimpm_forward.5} parent=39 // pred_check_branch
        %346 = sbr.rel (%p344) target = $region48
      $region47: #{bimpm_forward.5} parent=39 // pred_region
        %p347 = scmp.lt.s32.totalorder %s18, 1
        %s348 = scalar_select %p347, %s18, 1
        %s349 = smul.addr %s348, 8
        %s350 = scalar_lea.vmem %s1, %s349
      $region48: #{bimpm_forward.5} parent=39 // pred_fallthru
        _
      // Predicated region
      $region49: #{bimpm_forward.5} parent=39 // pred_check
        %p351 = pneg %p90
      $region50: #{bimpm_forward.5} parent=39 // pred_check_branch
        %353 = sbr.rel (%p351) target = $region52
      $region51: #{bimpm_forward.5} parent=39 // pred_region
        %p354 = scmp.lt.s32.totalorder %s18, 1
        %s355 = scalar_select %p354, %s18, 1
        %s356 = smul.addr %s355, 8
        %s357 = scalar_lea.vmem %s2, %s356
      $region52: #{bimpm_forward.5} parent=39 // pred_fallthru
        _
      // Predicated region
      $region53: #{bimpm_forward.5} parent=39 // pred_check
        %p358 = pneg %p116
      $region54: #{bimpm_forward.5} parent=39 // pred_check_branch
        %360 = sbr.rel (%p358) target = $region56
      $region55: #{bimpm_forward.5} parent=39 // pred_region
        %p361 = scmp.lt.s32.totalorder %s18, 1
        %s362 = scalar_select %p361, %s18, 1
        %s363 = smul.addr %s362, 8
        %s364 = scalar_lea.vmem %s3, %s363
      $region56: #{bimpm_forward.5} parent=39 // pred_fallthru
        _
    $region40: #{bimpm_forward.5} parent=5 // pred_fallthru
      _
    %p365 = scmp.le.s32.totalorder 1, %s18
    %p366 = scmp.lt.s32.totalorder %s18, 3
    %p367 = pnand %p365, %p366
    %p368 = pneg %p367
    // Predicated region
    $region57: #{bimpm_forward.5} parent=5 // pred_check
      _
    $region58: #{bimpm_forward.5} parent=5 // pred_check_branch
      %370 = sbr.rel (%p367) target = $region60
    $region59: #{bimpm_forward.5} parent=5 // pred_region
      %s371 = ssub.s32 %s18, 1
      %p372 = scmp.lt.s32.totalorder %s23, 1
      %s373 = scalar_select %p372, %s23, 1
      %s374 = smul.addr %s373, 8
      %s375 = scalar_lea.vmem %s0, %s374
      %p376 = pneg %p44
      %p377 = pneg %p41
      %p378 = scmp.lt.s32.totalorder %s23, 1
      %s379 = scalar_select %p378, %s23, 1
      %s380 = smul.addr %s379, 8
      %s381 = scalar_lea.vmem %s1, %s380
      %p382 = pneg %p70
      %p383 = pneg %p67
      %p384 = scmp.lt.s32.totalorder %s23, 1
      %s385 = scalar_select %p384, %s23, 1
      %s386 = smul.addr %s385, 8
      %s387 = scalar_lea.vmem %s2, %s386
      %p388 = pneg %p96
      %p389 = pneg %p93
      %p390 = scmp.lt.s32.totalorder %s23, 1
      %s391 = scalar_select %p390, %s23, 1
      %s392 = smul.addr %s391, 8
      %s393 = scalar_lea.vmem %s3, %s392
      %p394 = pneg %p122
      %p395 = pneg %p119
      %p396 = pneg %p143
      %p397 = pneg %p140
      %p398 = pneg %p164
      %p399 = pneg %p161
      %p400 = pneg %p185
      %p401 = pneg %p182
      %p402 = pneg %p206
      %p403 = pneg %p203
      %p404 = pneg %p227
      %p405 = pneg %p224
      %p406 = pneg %p248
      %p407 = pneg %p245
      %p408 = pneg %p274
      %p409 = pneg %p271
      %p410 = scmp.lt.s32.totalorder %s23, 1
      %s411 = scalar_select %p410, %s23, 1
      %s412 = smul.addr %s411, 8
      %s413 = scalar_lea.vmem %s10, %s412
      %p414 = pneg %p300
      %p415 = pneg %p297
      %p416 = scmp.lt.s32.totalorder %s23, 1
      %s417 = scalar_select %p416, %s23, 1
      %s418 = smul.addr %s417, 8
      %s419 = scalar_lea.vmem %s11, %s418
      %p420 = scmp.lt.s32.totalorder %s23, 1
      %s421 = scalar_select %p420, %s23, 1
      %s422 = smul.addr %s421, 8
      %s423 = scalar_lea.vmem %s0, %s422
      %p424 = scmp.lt.s32.totalorder %s23, 1
      %s425 = scalar_select %p424, %s23, 1
      %s426 = smul.addr %s425, 8
      %s427 = scalar_lea.vmem %s1, %s426
      %p428 = scmp.lt.s32.totalorder %s23, 1
      %s429 = scalar_select %p428, %s23, 1
      %s430 = smul.addr %s429, 8
      %s431 = scalar_lea.vmem %s2, %s430
      %p432 = scmp.lt.s32.totalorder %s23, 1
      %s433 = scalar_select %p432, %s23, 1
      %s434 = smul.addr %s433, 8
      %s435 = scalar_lea.vmem %s3, %s434
      %p436 = scmp.lt.s32.totalorder %s23, 1
      %s437 = scalar_select %p436, %s23, 1
      %s438 = smul.addr %s437, 8
      %s439 = scalar_lea.vmem %s10, %s438
      %p440 = scmp.lt.s32.totalorder %s23, 1
      %s441 = scalar_select %p440, %s23, 1
      %s442 = smul.addr %s441, 8
      %s443 = scalar_lea.vmem %s11, %s442
      %v444 = vld [vmem:[%s423] sm:$0xff]
      %v445 = vld [vmem:[%s427] sm:$0xff]
      %v446 = vld [vmem:[%s431] sm:$0xff]
      %v447 = vld [vmem:[%s435] sm:$0xff]
      %v448 = vld [vmem:[%s4] sm:$0xff]
      %v449 = vld [vmem:[%s4 + $0x8] sm:$0xff]
      %v450 = vld [vmem:[%s4 + $0x10] sm:$0xff]
      %v451 = vld [vmem:[%s4 + $0x18] sm:$0xff]
      %v452 = vld [vmem:[%s5] sm:$0xff]
      %v453 = vld [vmem:[%s5 + $0x8] sm:$0xff]
      %v454 = vld [vmem:[%s5 + $0x10] sm:$0xff]
      %v455 = vld [vmem:[%s5 + $0x18] sm:$0xff]
      %v456 = vld [vmem:[%s6] sm:$0xf]
      %v457 = vld [vmem:[%s7] sm:$0xf]
      %v458 = vld [vmem:[%s8] sm:$0xff]
      %v459 = vld [vmem:[%s8 + $0x8] sm:$0xff]
      %v460 = vld [vmem:[%s8 + $0x10] sm:$0xff]
      %v461 = vld [vmem:[%s8 + $0x18] sm:$0xff]
      %v462 = vld [vmem:[%s9] sm:$0xff]
      %v463 = vld [vmem:[%s9 + $0x8] sm:$0xff]
      %v464 = vld [vmem:[%s9 + $0x10] sm:$0xff]
      %v465 = vld [vmem:[%s9 + $0x18] sm:$0xff]
      %v466 = vmul.f32 %v444, %v444
      %vm467 = vcmask 261120
      %v468 = vsel %vm467, %v466, 0.0
      %469 = vadd.xlane.f32.xlu0 %v468
      %v470 = vpop.xlane.xlu0 %469
      %v471 = vrsqrt.pop %v470
      %v472 = vmul.f32 %v470, %v471
      %vm473 = vcmp.eq.f32.partialorder %v470, inf
      %v474 = vsel %vm473, %v470, %v472
      %vm475 = vcmp.eq.f32.partialorder %v470, 0.0
      %v476 = vand.u32 %v470, 2147483648
      %v477 = vsel %vm475, %v476, %v474
      %v478 = vmul.f32 %v445, %v445
      %v479 = vsel %vm467, %v478, 0.0
      %480 = vadd.xlane.f32.xlu0 %v479
      %v481 = vpop.xlane.xlu0 %480
      %v482 = vrsqrt.pop %v481
      %v483 = vmul.f32 %v481, %v482
      %vm484 = vcmp.eq.f32.partialorder %v481, inf
      %v485 = vsel %vm484, %v481, %v483
      %vm486 = vcmp.eq.f32.partialorder %v481, 0.0
      %v487 = vand.u32 %v481, 2147483648
      %v488 = vsel %vm486, %v487, %v485
      %v489 = vmul.f32 %v446, %v446
      %v490 = vsel %vm467, %v489, 0.0
      %491 = vadd.xlane.f32.xlu0 %v490
      %v492 = vpop.xlane.xlu0 %491
      %v493 = vrsqrt.pop %v492
      %v494 = vmul.f32 %v492, %v493
      %vm495 = vcmp.eq.f32.partialorder %v492, inf
      %v496 = vsel %vm495, %v492, %v494
      %vm497 = vcmp.eq.f32.partialorder %v492, 0.0
      %v498 = vand.u32 %v492, 2147483648
      %v499 = vsel %vm497, %v498, %v496
      %v500 = vmul.f32 %v447, %v447
      %v501 = vsel %vm467, %v500, 0.0
      %502 = vadd.xlane.f32.xlu0 %v501
      %v503 = vpop.xlane.xlu0 %502
      %v504 = vrsqrt.pop %v503
      %v505 = vmul.f32 %v503, %v504
      %vm506 = vcmp.eq.f32.partialorder %v503, inf
      %v507 = vsel %vm506, %v503, %v505
      %vm508 = vcmp.eq.f32.partialorder %v503, 0.0
      %v509 = vand.u32 %v503, 2147483648
      %v510 = vsel %vm508, %v509, %v507
      %v511 = vlaneseq
      %v512 = vshrl.u32 %v511, 7
      %v513 = vsub.s32 7, %v512
      %v514 = vrot.slane %v446, %v513
      %v515 = vmul.f32 %v444, %v514
      %v517 = vsel %vm467, %v515, 0
      %519 = vmatprep.subr.mxu0 0.0
      %520 = vmatpush1.msra.mxu0 %v448
      %521 = vmatprep.subr.mxu0 0.0
      %522 = vmatpush1.msra.mxu0 %v449
      %523 = vmatprep.subr.mxu0 0.0
      %524 = vmatpush1.msra.mxu0 %v450
      %525 = vmatprep.subr.mxu0 0.0
      %526 = vmatpush1.msra.mxu0 %v451
      %527 = vmatprep.subr.mxu0 0.0
      %528 = vmatpush1.msra.mxu0 0.0
      %529 = vmatprep.subr.mxu0 0.0
      %530 = vmatpush1.msra.mxu0 0.0
      %531 = vmatprep.subr.mxu0 0.0
      %532 = vmatpush1.msra.mxu0 0.0
      %533 = vmatprep.subr.mxu0 0.0
      %534 = vmatpush1.msra.mxu0 0.0
      %535 = vmatprep.subr.mxu0 0.0
      %536 = vmatpush1.msra.mxu0 0.0
      %537 = vmatprep.subr.mxu0 0.0
      %538 = vmatpush1.msra.mxu0 0.0
      %539 = vmatprep.subr.mxu0 0.0
      %540 = vmatpush1.msra.mxu0 0.0
      %541 = vmatprep.subr.mxu0 0.0
      %542 = vmatpush1.msra.mxu0 0.0
      %543 = vmatprep.subr.mxu0 0.0
      %544 = vmatpush1.msra.mxu0 0.0
      %545 = vmatprep.subr.mxu0 0.0
      %546 = vmatpush1.msra.mxu0 0.0
      %547 = vmatprep.subr.mxu0 0.0
      %548 = vmatpush1.msra.mxu0 0.0
      %549 = vmatprep.subr.mxu0 0.0
      %550 = vmatpush1.msra.mxu0 0.0
      %551 = vmatprep.subr.mxu0 0.0
      %552 = vmatpush1.msra.mxu0 0.0
      %553 = vmatprep.subr.mxu0 0.0
      %554 = vmatpush1.msra.mxu0 0.0
      %555 = vmatprep.subr.mxu0 0.0
      %556 = vmatpush1.msra.mxu0 0.0
      %557 = vmatprep.subr.mxu0 0.0
      %558 = vmatpush1.msra.mxu0 0.0
      %559 = vmatprep.subr.mxu0 0.0
      %560 = vmatpush1.msra.mxu0 0.0
      %561 = vmatprep.subr.mxu0 0.0
      %562 = vmatpush1.msra.mxu0 0.0
      %563 = vmatprep.subr.mxu0 0.0
      %564 = vmatpush1.msra.mxu0 0.0
      %565 = vmatprep.subr.mxu0 0.0
      %566 = vmatpush1.msra.mxu0 0.0
      %567 = vmatprep.subr.mxu0 0.0
      %568 = vmatpush1.msra.mxu0 0.0
      %569 = vmatprep.subr.mxu0 0.0
      %570 = vmatpush1.msra.mxu0 0.0
      %571 = vmatprep.subr.mxu0 0.0
      %572 = vmatpush1.msra.mxu0 0.0
      %573 = vmatprep.subr.mxu0 0.0
      %574 = vmatpush1.msra.mxu0 0.0
      %575 = vmatprep.subr.mxu0 0.0
      %576 = vmatpush1.msra.mxu0 0.0
      %577 = vmatprep.subr.mxu0 0.0
      %578 = vmatpush1.msra.mxu0 0.0
      %579 = vmatprep.subr.mxu0 0.0
      %580 = vmatpush1.msra.mxu0 0.0
      %581 = vmatprep.subr.mxu0 0.0
      %582 = vmatpush1.msra.mxu0 0.0
      %583 = vmatprep.mubr.f32.mxu0 0.0
      %584 = vmatmul.mubr.f32.gmra.mrb[0].mxu0 %v517
      %v585 = vpop.f32.mrb[0].mxu0
      %v586 = vadd.f32 0.0, %v585
      %v587 = vpop.f32.mrb[0].mxu0
      %588 = vdwg.mxu0
      %v590 = vsel %vm467, %v466, 0
      %592 = vmatprep.subr.mxu0 0.0
      %593 = vmatpush1.msra.mxu0 %v448
      %594 = vmatprep.subr.mxu0 0.0
      %595 = vmatpush1.msra.mxu0 %v449
      %596 = vmatprep.subr.mxu0 0.0
      %597 = vmatpush1.msra.mxu0 %v450
      %598 = vmatprep.subr.mxu0 0.0
      %599 = vmatpush1.msra.mxu0 %v451
      %600 = vmatprep.subr.mxu0 0.0
      %601 = vmatpush1.msra.mxu0 0.0
      %602 = vmatprep.subr.mxu0 0.0
      %603 = vmatpush1.msra.mxu0 0.0
      %604 = vmatprep.subr.mxu0 0.0
      %605 = vmatpush1.msra.mxu0 0.0
      %606 = vmatprep.subr.mxu0 0.0
      %607 = vmatpush1.msra.mxu0 0.0
      %608 = vmatprep.subr.mxu0 0.0
      %609 = vmatpush1.msra.mxu0 0.0
      %610 = vmatprep.subr.mxu0 0.0
      %611 = vmatpush1.msra.mxu0 0.0
      %612 = vmatprep.subr.mxu0 0.0
      %613 = vmatpush1.msra.mxu0 0.0
      %614 = vmatprep.subr.mxu0 0.0
      %615 = vmatpush1.msra.mxu0 0.0
      %616 = vmatprep.subr.mxu0 0.0
      %617 = vmatpush1.msra.mxu0 0.0
      %618 = vmatprep.subr.mxu0 0.0
      %619 = vmatpush1.msra.mxu0 0.0
      %620 = vmatprep.subr.mxu0 0.0
      %621 = vmatpush1.msra.mxu0 0.0
      %622 = vmatprep.subr.mxu0 0.0
      %623 = vmatpush1.msra.mxu0 0.0
      %624 = vmatprep.subr.mxu0 0.0
      %625 = vmatpush1.msra.mxu0 0.0
      %626 = vmatprep.subr.mxu0 0.0
      %627 = vmatpush1.msra.mxu0 0.0
      %628 = vmatprep.subr.mxu0 0.0
      %629 = vmatpush1.msra.mxu0 0.0
      %630 = vmatprep.subr.mxu0 0.0
      %631 = vmatpush1.msra.mxu0 0.0
      %632 = vmatprep.subr.mxu0 0.0
      %633 = vmatpush1.msra.mxu0 0.0
      %634 = vmatprep.subr.mxu0 0.0
      %635 = vmatpush1.msra.mxu0 0.0
      %636 = vmatprep.subr.mxu0 0.0
      %637 = vmatpush1.msra.mxu0 0.0
      %638 = vmatprep.subr.mxu0 0.0
      %639 = vmatpush1.msra.mxu0 0.0
      %640 = vmatprep.subr.mxu0 0.0
      %641 = vmatpush1.msra.mxu0 0.0
      %642 = vmatprep.subr.mxu0 0.0
      %643 = vmatpush1.msra.mxu0 0.0
      %644 = vmatprep.subr.mxu0 0.0
      %645 = vmatpush1.msra.mxu0 0.0
      %646 = vmatprep.subr.mxu0 0.0
      %647 = vmatpush1.msra.mxu0 0.0
      %648 = vmatprep.subr.mxu0 0.0
      %649 = vmatpush1.msra.mxu0 0.0
      %650 = vmatprep.subr.mxu0 0.0
      %651 = vmatpush1.msra.mxu0 0.0
      %652 = vmatprep.subr.mxu0 0.0
      %653 = vmatpush1.msra.mxu0 0.0
      %654 = vmatprep.subr.mxu0 0.0
      %655 = vmatpush1.msra.mxu0 0.0
      %656 = vmatprep.mubr.f32.mxu0 0.0
      %657 = vmatmul.mubr.f32.gmra.mrb[0].mxu0 %v590
      %v658 = vpop.f32.mrb[0].mxu0
      %v659 = vadd.f32 0.0, %v658
      %v660 = vpop.f32.mrb[0].mxu0
      %661 = vdwg.mxu0
      %v663 = vrot.slane %v489, 7
      %v664 = vsel %vm467, %v663, 0
      %666 = vmatprep.subr.mxu0 0.0
      %667 = vmatpush1.msra.mxu0 %v448
      %668 = vmatprep.subr.mxu0 0.0
      %669 = vmatpush1.msra.mxu0 %v449
      %670 = vmatprep.subr.mxu0 0.0
      %671 = vmatpush1.msra.mxu0 %v450
      %672 = vmatprep.subr.mxu0 0.0
      %673 = vmatpush1.msra.mxu0 %v451
      %674 = vmatprep.subr.mxu0 0.0
      %675 = vmatpush1.msra.mxu0 0.0
      %676 = vmatprep.subr.mxu0 0.0
      %677 = vmatpush1.msra.mxu0 0.0
      %678 = vmatprep.subr.mxu0 0.0
      %679 = vmatpush1.msra.mxu0 0.0
      %680 = vmatprep.subr.mxu0 0.0
      %681 = vmatpush1.msra.mxu0 0.0
      %682 = vmatprep.subr.mxu0 0.0
      %683 = vmatpush1.msra.mxu0 0.0
      %684 = vmatprep.subr.mxu0 0.0
      %685 = vmatpush1.msra.mxu0 0.0
      %686 = vmatprep.subr.mxu0 0.0
      %687 = vmatpush1.msra.mxu0 0.0
      %688 = vmatprep.subr.mxu0 0.0
      %689 = vmatpush1.msra.mxu0 0.0
      %690 = vmatprep.subr.mxu0 0.0
      %691 = vmatpush1.msra.mxu0 0.0
      %692 = vmatprep.subr.mxu0 0.0
      %693 = vmatpush1.msra.mxu0 0.0
      %694 = vmatprep.subr.mxu0 0.0
      %695 = vmatpush1.msra.mxu0 0.0
      %696 = vmatprep.subr.mxu0 0.0
      %697 = vmatpush1.msra.mxu0 0.0
      %698 = vmatprep.subr.mxu0 0.0
      %699 = vmatpush1.msra.mxu0 0.0
      %700 = vmatprep.subr.mxu0 0.0
      %701 = vmatpush1.msra.mxu0 0.0
      %702 = vmatprep.subr.mxu0 0.0
      %703 = vmatpush1.msra.mxu0 0.0
      %704 = vmatprep.subr.mxu0 0.0
      %705 = vmatpush1.msra.mxu0 0.0
      %706 = vmatprep.subr.mxu0 0.0
      %707 = vmatpush1.msra.mxu0 0.0
      %708 = vmatprep.subr.mxu0 0.0
      %709 = vmatpush1.msra.mxu0 0.0
      %710 = vmatprep.subr.mxu0 0.0
      %711 = vmatpush1.msra.mxu0 0.0
      %712 = vmatprep.subr.mxu0 0.0
      %713 = vmatpush1.msra.mxu0 0.0
      %714 = vmatprep.subr.mxu0 0.0
      %715 = vmatpush1.msra.mxu0 0.0
      %716 = vmatprep.subr.mxu0 0.0
      %717 = vmatpush1.msra.mxu0 0.0
      %718 = vmatprep.subr.mxu0 0.0
      %719 = vmatpush1.msra.mxu0 0.0
      %720 = vmatprep.subr.mxu0 0.0
      %721 = vmatpush1.msra.mxu0 0.0
      %722 = vmatprep.subr.mxu0 0.0
      %723 = vmatpush1.msra.mxu0 0.0
      %724 = vmatprep.subr.mxu0 0.0
      %725 = vmatpush1.msra.mxu0 0.0
      %726 = vmatprep.subr.mxu0 0.0
      %727 = vmatpush1.msra.mxu0 0.0
      %728 = vmatprep.subr.mxu0 0.0
      %729 = vmatpush1.msra.mxu0 0.0
      %730 = vmatprep.mubr.f32.mxu0 0.0
      %731 = vmatmul.mubr.f32.gmra.mrb[0].mxu0 %v664
      %v732 = vpop.f32.mrb[0].mxu0
      %v733 = vadd.f32 0.0, %v732
      %v734 = vpop.f32.mrb[0].mxu0
      %735 = vdwg.mxu0
      %v736 = vrsqrt.pop %v659
      %v737 = vmul.f32 %v659, %v736
      %vm738 = vcmp.eq.f32.partialorder %v659, inf
      %v739 = vsel %vm738, %v659, %v737
      %vm740 = vcmp.eq.f32.partialorder %v659, 0.0
      %v741 = vand.u32 %v659, 2147483648
      %v742 = vsel %vm740, %v741, %v739
      %v743 = vmax.f32 %v742, 1e-08
      %v744 = vrsqrt.pop %v733
      %v745 = vmul.f32 %v733, %v744
      %vm746 = vcmp.eq.f32.partialorder %v733, inf
      %v747 = vsel %vm746, %v733, %v745
      %vm748 = vcmp.eq.f32.partialorder %v733, 0.0
      %v749 = vand.u32 %v733, 2147483648
      %v750 = vsel %vm748, %v749, %v747
      %v751 = vmax.f32 %v750, 1e-08
      %v752 = vlaneseq
      %v753 = vshrl.u32 %v752, 7
      %v754 = vsub.s32 0, %v753
      %v755 = vrot.slane %v751, %v754
      %v756 = vmul.f32 %v743, %v755
      %v757 = vrcp.pop %v756
      %v758 = vmul.f32 %v586, %v757
      %v759 = vlaneseq
      %v760 = vshrl.u32 %v759, 7
      %v761 = vsub.s32 0, %v760
      %v762 = vrot.slane %v447, %v761
      %v763 = vmul.f32 %v445, %v762
      %v765 = vsel %vm467, %v763, 0
      %767 = vmatprep.subr.mxu0 0.0
      %768 = vmatpush1.msra.mxu0 %v452
      %769 = vmatprep.subr.mxu0 0.0
      %770 = vmatpush1.msra.mxu0 %v453
      %771 = vmatprep.subr.mxu0 0.0
      %772 = vmatpush1.msra.mxu0 %v454
      %773 = vmatprep.subr.mxu0 0.0
      %774 = vmatpush1.msra.mxu0 %v455
      %775 = vmatprep.subr.mxu0 0.0
      %776 = vmatpush1.msra.mxu0 0.0
      %777 = vmatprep.subr.mxu0 0.0
      %778 = vmatpush1.msra.mxu0 0.0
      %779 = vmatprep.subr.mxu0 0.0
      %780 = vmatpush1.msra.mxu0 0.0
      %781 = vmatprep.subr.mxu0 0.0
      %782 = vmatpush1.msra.mxu0 0.0
      %783 = vmatprep.subr.mxu0 0.0
      %784 = vmatpush1.msra.mxu0 0.0
      %785 = vmatprep.subr.mxu0 0.0
      %786 = vmatpush1.msra.mxu0 0.0
      %787 = vmatprep.subr.mxu0 0.0
      %788 = vmatpush1.msra.mxu0 0.0
      %789 = vmatprep.subr.mxu0 0.0
      %790 = vmatpush1.msra.mxu0 0.0
      %791 = vmatprep.subr.mxu0 0.0
      %792 = vmatpush1.msra.mxu0 0.0
      %793 = vmatprep.subr.mxu0 0.0
      %794 = vmatpush1.msra.mxu0 0.0
      %795 = vmatprep.subr.mxu0 0.0
      %796 = vmatpush1.msra.mxu0 0.0
      %797 = vmatprep.subr.mxu0 0.0
      %798 = vmatpush1.msra.mxu0 0.0
      %799 = vmatprep.subr.mxu0 0.0
      %800 = vmatpush1.msra.mxu0 0.0
      %801 = vmatprep.subr.mxu0 0.0
      %802 = vmatpush1.msra.mxu0 0.0
      %803 = vmatprep.subr.mxu0 0.0
      %804 = vmatpush1.msra.mxu0 0.0
      %805 = vmatprep.subr.mxu0 0.0
      %806 = vmatpush1.msra.mxu0 0.0
      %807 = vmatprep.subr.mxu0 0.0
      %808 = vmatpush1.msra.mxu0 0.0
      %809 = vmatprep.subr.mxu0 0.0
      %810 = vmatpush1.msra.mxu0 0.0
      %811 = vmatprep.subr.mxu0 0.0
      %812 = vmatpush1.msra.mxu0 0.0
      %813 = vmatprep.subr.mxu0 0.0
      %814 = vmatpush1.msra.mxu0 0.0
      %815 = vmatprep.subr.mxu0 0.0
      %816 = vmatpush1.msra.mxu0 0.0
      %817 = vmatprep.subr.mxu0 0.0
      %818 = vmatpush1.msra.mxu0 0.0
      %819 = vmatprep.subr.mxu0 0.0
      %820 = vmatpush1.msra.mxu0 0.0
      %821 = vmatprep.subr.mxu0 0.0
      %822 = vmatpush1.msra.mxu0 0.0
      %823 = vmatprep.subr.mxu0 0.0
      %824 = vmatpush1.msra.mxu0 0.0
      %825 = vmatprep.subr.mxu0 0.0
      %826 = vmatpush1.msra.mxu0 0.0
      %827 = vmatprep.subr.mxu0 0.0
      %828 = vmatpush1.msra.mxu0 0.0
      %829 = vmatprep.subr.mxu0 0.0
      %830 = vmatpush1.msra.mxu0 0.0
      %831 = vmatprep.mubr.f32.mxu0 0.0
      %832 = vmatmul.mubr.f32.gmra.mrb[0].mxu0 %v765
      %v833 = vpop.f32.mrb[0].mxu0
      %v834 = vadd.f32 0.0, %v833
      %v835 = vpop.f32.mrb[0].mxu0
      %836 = vdwg.mxu0
      %v838 = vsel %vm467, %v478, 0
      %840 = vmatprep.subr.mxu0 0.0
      %841 = vmatpush1.msra.mxu0 %v452
      %842 = vmatprep.subr.mxu0 0.0
      %843 = vmatpush1.msra.mxu0 %v453
      %844 = vmatprep.subr.mxu0 0.0
      %845 = vmatpush1.msra.mxu0 %v454
      %846 = vmatprep.subr.mxu0 0.0
      %847 = vmatpush1.msra.mxu0 %v455
      %848 = vmatprep.subr.mxu0 0.0
      %849 = vmatpush1.msra.mxu0 0.0
      %850 = vmatprep.subr.mxu0 0.0
      %851 = vmatpush1.msra.mxu0 0.0
      %852 = vmatprep.subr.mxu0 0.0
      %853 = vmatpush1.msra.mxu0 0.0
      %854 = vmatprep.subr.mxu0 0.0
      %855 = vmatpush1.msra.mxu0 0.0
      %856 = vmatprep.subr.mxu0 0.0
      %857 = vmatpush1.msra.mxu0 0.0
      %858 = vmatprep.subr.mxu0 0.0
      %859 = vmatpush1.msra.mxu0 0.0
      %860 = vmatprep.subr.mxu0 0.0
      %861 = vmatpush1.msra.mxu0 0.0
      %862 = vmatprep.subr.mxu0 0.0
      %863 = vmatpush1.msra.mxu0 0.0
      %864 = vmatprep.subr.mxu0 0.0
      %865 = vmatpush1.msra.mxu0 0.0
      %866 = vmatprep.subr.mxu0 0.0
      %867 = vmatpush1.msra.mxu0 0.0
      %868 = vmatprep.subr.mxu0 0.0
      %869 = vmatpush1.msra.mxu0 0.0
      %870 = vmatprep.subr.mxu0 0.0
      %871 = vmatpush1.msra.mxu0 0.0
      %872 = vmatprep.subr.mxu0 0.0
      %873 = vmatpush1.msra.mxu0 0.0
      %874 = vmatprep.subr.mxu0 0.0
      %875 = vmatpush1.msra.mxu0 0.0
      %876 = vmatprep.subr.mxu0 0.0
      %877 = vmatpush1.msra.mxu0 0.0
      %878 = vmatprep.subr.mxu0 0.0
      %879 = vmatpush1.msra.mxu0 0.0
      %880 = vmatprep.subr.mxu0 0.0
      %881 = vmatpush1.msra.mxu0 0.0
      %882 = vmatprep.subr.mxu0 0.0
      %883 = vmatpush1.msra.mxu0 0.0
      %884 = vmatprep.subr.mxu0 0.0
      %885 = vmatpush1.msra.mxu0 0.0
      %886 = vmatprep.subr.mxu0 0.0
      %887 = vmatpush1.msra.mxu0 0.0
      %888 = vmatprep.subr.mxu0 0.0
      %889 = vmatpush1.msra.mxu0 0.0
      %890 = vmatprep.subr.mxu0 0.0
      %891 = vmatpush1.msra.mxu0 0.0
      %892 = vmatprep.subr.mxu0 0.0
      %893 = vmatpush1.msra.mxu0 0.0
      %894 = vmatprep.subr.mxu0 0.0
      %895 = vmatpush1.msra.mxu0 0.0
      %896 = vmatprep.subr.mxu0 0.0
      %897 = vmatpush1.msra.mxu0 0.0
      %898 = vmatprep.subr.mxu0 0.0
      %899 = vmatpush1.msra.mxu0 0.0
      %900 = vmatprep.subr.mxu0 0.0
      %901 = vmatpush1.msra.mxu0 0.0
      %902 = vmatprep.subr.mxu0 0.0
      %903 = vmatpush1.msra.mxu0 0.0
      %904 = vmatprep.mubr.f32.mxu0 0.0
      %905 = vmatmul.mubr.f32.gmra.mrb[0].mxu0 %v838
      %v906 = vpop.f32.mrb[0].mxu0
      %v907 = vadd.f32 0.0, %v906
      %v908 = vpop.f32.mrb[0].mxu0
      %909 = vdwg.mxu0
      %v911 = vsel %vm467, %v500, 0
      %913 = vmatprep.subr.mxu0 0.0
      %914 = vmatpush1.msra.mxu0 %v452
      %915 = vmatprep.subr.mxu0 0.0
      %916 = vmatpush1.msra.mxu0 %v453
      %917 = vmatprep.subr.mxu0 0.0
      %918 = vmatpush1.msra.mxu0 %v454
      %919 = vmatprep.subr.mxu0 0.0
      %920 = vmatpush1.msra.mxu0 %v455
      %921 = vmatprep.subr.mxu0 0.0
      %922 = vmatpush1.msra.mxu0 0.0
      %923 = vmatprep.subr.mxu0 0.0
      %924 = vmatpush1.msra.mxu0 0.0
      %925 = vmatprep.subr.mxu0 0.0
      %926 = vmatpush1.msra.mxu0 0.0
      %927 = vmatprep.subr.mxu0 0.0
      %928 = vmatpush1.msra.mxu0 0.0
      %929 = vmatprep.subr.mxu0 0.0
      %930 = vmatpush1.msra.mxu0 0.0
      %931 = vmatprep.subr.mxu0 0.0
      %932 = vmatpush1.msra.mxu0 0.0
      %933 = vmatprep.subr.mxu0 0.0
      %934 = vmatpush1.msra.mxu0 0.0
      %935 = vmatprep.subr.mxu0 0.0
      %936 = vmatpush1.msra.mxu0 0.0
      %937 = vmatprep.subr.mxu0 0.0
      %938 = vmatpush1.msra.mxu0 0.0
      %939 = vmatprep.subr.mxu0 0.0
      %940 = vmatpush1.msra.mxu0 0.0
      %941 = vmatprep.subr.mxu0 0.0
      %942 = vmatpush1.msra.mxu0 0.0
      %943 = vmatprep.subr.mxu0 0.0
      %944 = vmatpush1.msra.mxu0 0.0
      %945 = vmatprep.subr.mxu0 0.0
      %946 = vmatpush1.msra.mxu0 0.0
      %947 = vmatprep.subr.mxu0 0.0
      %948 = vmatpush1.msra.mxu0 0.0
      %949 = vmatprep.subr.mxu0 0.0
      %950 = vmatpush1.msra.mxu0 0.0
      %951 = vmatprep.subr.mxu0 0.0
      %952 = vmatpush1.msra.mxu0 0.0
      %953 = vmatprep.subr.mxu0 0.0
      %954 = vmatpush1.msra.mxu0 0.0
      %955 = vmatprep.subr.mxu0 0.0
      %956 = vmatpush1.msra.mxu0 0.0
      %957 = vmatprep.subr.mxu0 0.0
      %958 = vmatpush1.msra.mxu0 0.0
      %959 = vmatprep.subr.mxu0 0.0
      %960 = vmatpush1.msra.mxu0 0.0
      %961 = vmatprep.subr.mxu0 0.0
      %962 = vmatpush1.msra.mxu0 0.0
      %963 = vmatprep.subr.mxu0 0.0
      %964 = vmatpush1.msra.mxu0 0.0
      %965 = vmatprep.subr.mxu0 0.0
      %966 = vmatpush1.msra.mxu0 0.0
      %967 = vmatprep.subr.mxu0 0.0
      %968 = vmatpush1.msra.mxu0 0.0
      %969 = vmatprep.subr.mxu0 0.0
      %970 = vmatpush1.msra.mxu0 0.0
      %971 = vmatprep.subr.mxu0 0.0
      %972 = vmatpush1.msra.mxu0 0.0
      %973 = vmatprep.subr.mxu0 0.0
      %974 = vmatpush1.msra.mxu0 0.0
      %975 = vmatprep.subr.mxu0 0.0
      %976 = vmatpush1.msra.mxu0 0.0
      %977 = vmatprep.mubr.f32.mxu0 0.0
      %978 = vmatmul.mubr.f32.gmra.mrb[0].mxu0 %v911
      %v979 = vpop.f32.mrb[0].mxu0
      %v980 = vadd.f32 0.0, %v979
      %v981 = vpop.f32.mrb[0].mxu0
      %982 = vdwg.mxu0
      %v983 = vrsqrt.pop %v907
      %v984 = vmul.f32 %v907, %v983
      %vm985 = vcmp.eq.f32.partialorder %v907, inf
      %v986 = vsel %vm985, %v907, %v984
      %vm987 = vcmp.eq.f32.partialorder %v907, 0.0
      %v988 = vand.u32 %v907, 2147483648
      %v989 = vsel %vm987, %v988, %v986
      %v990 = vmax.f32 %v989, 1e-08
      %v991 = vrsqrt.pop %v980
      %v992 = vmul.f32 %v980, %v991
      %vm993 = vcmp.eq.f32.partialorder %v980, inf
      %v994 = vsel %vm993, %v980, %v992
      %vm995 = vcmp.eq.f32.partialorder %v980, 0.0
      %v996 = vand.u32 %v980, 2147483648
      %v997 = vsel %vm995, %v996, %v994
      %v998 = vmax.f32 %v997, 1e-08
      %v999 = vlaneseq
      %v1000 = vshrl.u32 %v999, 7
      %v1001 = vsub.s32 0, %v1000
      %v1002 = vrot.slane %v998, %v1001
      %v1003 = vmul.f32 %v990, %v1002
      %v1004 = vrcp.pop %v1003
      %v1005 = vmul.f32 %v834, %v1004
      %v1006 = vlaneseq
      %v1007 = vshrl.u32 %v1006, 7
      %v1008 = vsub.s32 7, %v1007
      %v1009 = vrot.slane %v444, %v1008
      %v1010 = vmul.f32 %v446, %v1009
      %v1012 = vsel %vm467, %v1010, 0
      %1014 = vmatprep.subr.mxu0 0.0
      %1015 = vmatpush1.msra.mxu0 %v448
      %1016 = vmatprep.subr.mxu0 0.0
      %1017 = vmatpush1.msra.mxu0 %v449
      %1018 = vmatprep.subr.mxu0 0.0
      %1019 = vmatpush1.msra.mxu0 %v450
      %1020 = vmatprep.subr.mxu0 0.0
      %1021 = vmatpush1.msra.mxu0 %v451
      %1022 = vmatprep.subr.mxu0 0.0
      %1023 = vmatpush1.msra.mxu0 0.0
      %1024 = vmatprep.subr.mxu0 0.0
      %1025 = vmatpush1.msra.mxu0 0.0
      %1026 = vmatprep.subr.mxu0 0.0
      %1027 = vmatpush1.msra.mxu0 0.0
      %1028 = vmatprep.subr.mxu0 0.0
      %1029 = vmatpush1.msra.mxu0 0.0
      %1030 = vmatprep.subr.mxu0 0.0
      %1031 = vmatpush1.msra.mxu0 0.0
      %1032 = vmatprep.subr.mxu0 0.0
      %1033 = vmatpush1.msra.mxu0 0.0
      %1034 = vmatprep.subr.mxu0 0.0
      %1035 = vmatpush1.msra.mxu0 0.0
      %1036 = vmatprep.subr.mxu0 0.0
      %1037 = vmatpush1.msra.mxu0 0.0
      %1038 = vmatprep.subr.mxu0 0.0
      %1039 = vmatpush1.msra.mxu0 0.0
      %1040 = vmatprep.subr.mxu0 0.0
      %1041 = vmatpush1.msra.mxu0 0.0
      %1042 = vmatprep.subr.mxu0 0.0
      %1043 = vmatpush1.msra.mxu0 0.0
      %1044 = vmatprep.subr.mxu0 0.0
      %1045 = vmatpush1.msra.mxu0 0.0
      %1046 = vmatprep.subr.mxu0 0.0
      %1047 = vmatpush1.msra.mxu0 0.0
      %1048 = vmatprep.subr.mxu0 0.0
      %1049 = vmatpush1.msra.mxu0 0.0
      %1050 = vmatprep.subr.mxu0 0.0
      %1051 = vmatpush1.msra.mxu0 0.0
      %1052 = vmatprep.subr.mxu0 0.0
      %1053 = vmatpush1.msra.mxu0 0.0
      %1054 = vmatprep.subr.mxu0 0.0
      %1055 = vmatpush1.msra.mxu0 0.0
      %1056 = vmatprep.subr.mxu0 0.0
      %1057 = vmatpush1.msra.mxu0 0.0
      %1058 = vmatprep.subr.mxu0 0.0
      %1059 = vmatpush1.msra.mxu0 0.0
      %1060 = vmatprep.subr.mxu0 0.0
      %1061 = vmatpush1.msra.mxu0 0.0
      %1062 = vmatprep.subr.mxu0 0.0
      %1063 = vmatpush1.msra.mxu0 0.0
      %1064 = vmatprep.subr.mxu0 0.0
      %1065 = vmatpush1.msra.mxu0 0.0
      %1066 = vmatprep.subr.mxu0 0.0
      %1067 = vmatpush1.msra.mxu0 0.0
      %1068 = vmatprep.subr.mxu0 0.0
      %1069 = vmatpush1.msra.mxu0 0.0
      %1070 = vmatprep.subr.mxu0 0.0
      %1071 = vmatpush1.msra.mxu0 0.0
      %1072 = vmatprep.subr.mxu0 0.0
      %1073 = vmatpush1.msra.mxu0 0.0
      %1074 = vmatprep.subr.mxu0 0.0
      %1075 = vmatpush1.msra.mxu0 0.0
      %1076 = vmatprep.subr.mxu0 0.0
      %1077 = vmatpush1.msra.mxu0 0.0
      %1078 = vmatprep.mubr.f32.mxu0 0.0
      %1079 = vmatmul.mubr.f32.gmra.mrb[0].mxu0 %v1012
      %v1080 = vpop.f32.mrb[0].mxu0
      %v1081 = vadd.f32 0.0, %v1080
      %v1082 = vpop.f32.mrb[0].mxu0
      %1083 = vdwg.mxu0
      %v1084 = vsel %vm467, %v489, 0
      %1086 = vmatprep.subr.mxu0 0.0
      %1087 = vmatpush1.msra.mxu0 %v448
      %1088 = vmatprep.subr.mxu0 0.0
      %1089 = vmatpush1.msra.mxu0 %v449
      %1090 = vmatprep.subr.mxu0 0.0
      %1091 = vmatpush1.msra.mxu0 %v450
      %1092 = vmatprep.subr.mxu0 0.0
      %1093 = vmatpush1.msra.mxu0 %v451
      %1094 = vmatprep.subr.mxu0 0.0
      %1095 = vmatpush1.msra.mxu0 0.0
      %1096 = vmatprep.subr.mxu0 0.0
      %1097 = vmatpush1.msra.mxu0 0.0
      %1098 = vmatprep.subr.mxu0 0.0
      %1099 = vmatpush1.msra.mxu0 0.0
      %1100 = vmatprep.subr.mxu0 0.0
      %1101 = vmatpush1.msra.mxu0 0.0
      %1102 = vmatprep.subr.mxu0 0.0
      %1103 = vmatpush1.msra.mxu0 0.0
      %1104 = vmatprep.subr.mxu0 0.0
      %1105 = vmatpush1.msra.mxu0 0.0
      %1106 = vmatprep.subr.mxu0 0.0
      %1107 = vmatpush1.msra.mxu0 0.0
      %1108 = vmatprep.subr.mxu0 0.0
      %1109 = vmatpush1.msra.mxu0 0.0
      %1110 = vmatprep.subr.mxu0 0.0
      %1111 = vmatpush1.msra.mxu0 0.0
      %1112 = vmatprep.subr.mxu0 0.0
      %1113 = vmatpush1.msra.mxu0 0.0
      %1114 = vmatprep.subr.mxu0 0.0
      %1115 = vmatpush1.msra.mxu0 0.0
      %1116 = vmatprep.subr.mxu0 0.0
      %1117 = vmatpush1.msra.mxu0 0.0
      %1118 = vmatprep.subr.mxu0 0.0
      %1119 = vmatpush1.msra.mxu0 0.0
      %1120 = vmatprep.subr.mxu0 0.0
      %1121 = vmatpush1.msra.mxu0 0.0
      %1122 = vmatprep.subr.mxu0 0.0
      %1123 = vmatpush1.msra.mxu0 0.0
      %1124 = vmatprep.subr.mxu0 0.0
      %1125 = vmatpush1.msra.mxu0 0.0
      %1126 = vmatprep.subr.mxu0 0.0
      %1127 = vmatpush1.msra.mxu0 0.0
      %1128 = vmatprep.subr.mxu0 0.0
      %1129 = vmatpush1.msra.mxu0 0.0
      %1130 = vmatprep.subr.mxu0 0.0
      %1131 = vmatpush1.msra.mxu0 0.0
      %1132 = vmatprep.subr.mxu0 0.0
      %1133 = vmatpush1.msra.mxu0 0.0
      %1134 = vmatprep.subr.mxu0 0.0
      %1135 = vmatpush1.msra.mxu0 0.0
      %1136 = vmatprep.subr.mxu0 0.0
      %1137 = vmatpush1.msra.mxu0 0.0
      %1138 = vmatprep.subr.mxu0 0.0
      %1139 = vmatpush1.msra.mxu0 0.0
      %1140 = vmatprep.subr.mxu0 0.0
      %1141 = vmatpush1.msra.mxu0 0.0
      %1142 = vmatprep.subr.mxu0 0.0
      %1143 = vmatpush1.msra.mxu0 0.0
      %1144 = vmatprep.subr.mxu0 0.0
      %1145 = vmatpush1.msra.mxu0 0.0
      %1146 = vmatprep.subr.mxu0 0.0
      %1147 = vmatpush1.msra.mxu0 0.0
      %1148 = vmatprep.subr.mxu0 0.0
      %1149 = vmatpush1.msra.mxu0 0.0
      %1150 = vmatprep.mubr.f32.mxu0 0.0
      %1151 = vmatmul.mubr.f32.gmra.mrb[0].mxu0 %v1084
      %v1152 = vpop.f32.mrb[0].mxu0
      %v1153 = vadd.f32 0.0, %v1152
      %v1154 = vpop.f32.mrb[0].mxu0
      %1155 = vdwg.mxu0
      %v1156 = vrot.slane %v466, 7
      %v1157 = vsel %vm467, %v1156, 0
      %1159 = vmatprep.subr.mxu0 0.0
      %1160 = vmatpush1.msra.mxu0 %v448
      %1161 = vmatprep.subr.mxu0 0.0
      %1162 = vmatpush1.msra.mxu0 %v449
      %1163 = vmatprep.subr.mxu0 0.0
      %1164 = vmatpush1.msra.mxu0 %v450
      %1165 = vmatprep.subr.mxu0 0.0
      %1166 = vmatpush1.msra.mxu0 %v451
      %1167 = vmatprep.subr.mxu0 0.0
      %1168 = vmatpush1.msra.mxu0 0.0
      %1169 = vmatprep.subr.mxu0 0.0
      %1170 = vmatpush1.msra.mxu0 0.0
      %1171 = vmatprep.subr.mxu0 0.0
      %1172 = vmatpush1.msra.mxu0 0.0
      %1173 = vmatprep.subr.mxu0 0.0
      %1174 = vmatpush1.msra.mxu0 0.0
      %1175 = vmatprep.subr.mxu0 0.0
      %1176 = vmatpush1.msra.mxu0 0.0
      %1177 = vmatprep.subr.mxu0 0.0
      %1178 = vmatpush1.msra.mxu0 0.0
      %1179 = vmatprep.subr.mxu0 0.0
      %1180 = vmatpush1.msra.mxu0 0.0
      %1181 = vmatprep.subr.mxu0 0.0
      %1182 = vmatpush1.msra.mxu0 0.0
      %1183 = vmatprep.subr.mxu0 0.0
      %1184 = vmatpush1.msra.mxu0 0.0
      %1185 = vmatprep.subr.mxu0 0.0
      %1186 = vmatpush1.msra.mxu0 0.0
      %1187 = vmatprep.subr.mxu0 0.0
      %1188 = vmatpush1.msra.mxu0 0.0
      %1189 = vmatprep.subr.mxu0 0.0
      %1190 = vmatpush1.msra.mxu0 0.0
      %1191 = vmatprep.subr.mxu0 0.0
      %1192 = vmatpush1.msra.mxu0 0.0
      %1193 = vmatprep.subr.mxu0 0.0
      %1194 = vmatpush1.msra.mxu0 0.0
      %1195 = vmatprep.subr.mxu0 0.0
      %1196 = vmatpush1.msra.mxu0 0.0
      %1197 = vmatprep.subr.mxu0 0.0
      %1198 = vmatpush1.msra.mxu0 0.0
      %1199 = vmatprep.subr.mxu0 0.0
      %1200 = vmatpush1.msra.mxu0 0.0
      %1201 = vmatprep.subr.mxu0 0.0
      %1202 = vmatpush1.msra.mxu0 0.0
      %1203 = vmatprep.subr.mxu0 0.0
      %1204 = vmatpush1.msra.mxu0 0.0
      %1205 = vmatprep.subr.mxu0 0.0
      %1206 = vmatpush1.msra.mxu0 0.0
      %1207 = vmatprep.subr.mxu0 0.0
      %1208 = vmatpush1.msra.mxu0 0.0
      %1209 = vmatprep.subr.mxu0 0.0
      %1210 = vmatpush1.msra.mxu0 0.0
      %1211 = vmatprep.subr.mxu0 0.0
      %1212 = vmatpush1.msra.mxu0 0.0
      %1213 = vmatprep.subr.mxu0 0.0
      %1214 = vmatpush1.msra.mxu0 0.0
      %1215 = vmatprep.subr.mxu0 0.0
      %1216 = vmatpush1.msra.mxu0 0.0
      %1217 = vmatprep.subr.mxu0 0.0
      %1218 = vmatpush1.msra.mxu0 0.0
      %1219 = vmatprep.subr.mxu0 0.0
      %1220 = vmatpush1.msra.mxu0 0.0
      %1221 = vmatprep.subr.mxu0 0.0
      %1222 = vmatpush1.msra.mxu0 0.0
      %1223 = vmatprep.mubr.f32.mxu0 0.0
      %1224 = vmatmul.mubr.f32.gmra.mrb[0].mxu0 %v1157
      %v1225 = vpop.f32.mrb[0].mxu0
      %v1226 = vadd.f32 0.0, %v1225
      %v1227 = vpop.f32.mrb[0].mxu0
      %1228 = vdwg.mxu0
      %v1229 = vrsqrt.pop %v1153
      %v1230 = vmul.f32 %v1153, %v1229
      %vm1231 = vcmp.eq.f32.partialorder %v1153, inf
      %v1232 = vsel %vm1231, %v1153, %v1230
      %vm1233 = vcmp.eq.f32.partialorder %v1153, 0.0
      %v1234 = vand.u32 %v1153, 2147483648
      %v1235 = vsel %vm1233, %v1234, %v1232
      %v1236 = vmax.f32 %v1235, 1e-08
      %v1237 = vrsqrt.pop %v1226
      %v1238 = vmul.f32 %v1226, %v1237
      %vm1239 = vcmp.eq.f32.partialorder %v1226, inf
      %v1240 = vsel %vm1239, %v1226, %v1238
      %vm1241 = vcmp.eq.f32.partialorder %v1226, 0.0
      %v1242 = vand.u32 %v1226, 2147483648
      %v1243 = vsel %vm1241, %v1242, %v1240
      %v1244 = vmax.f32 %v1243, 1e-08
      %v1245 = vlaneseq
      %v1246 = vshrl.u32 %v1245, 7
      %v1247 = vsub.s32 0, %v1246
      %v1248 = vrot.slane %v1244, %v1247
      %v1249 = vmul.f32 %v1236, %v1248
      %v1250 = vrcp.pop %v1249
      %v1251 = vmul.f32 %v1081, %v1250
      %v1252 = vlaneseq
      %v1253 = vshrl.u32 %v1252, 7
      %v1254 = vsub.s32 0, %v1253
      %v1255 = vrot.slane %v445, %v1254
      %v1256 = vmul.f32 %v447, %v1255
      %v1258 = vsel %vm467, %v1256, 0
      %1260 = vmatprep.subr.mxu0 0.0
      %1261 = vmatpush1.msra.mxu0 %v452
      %1262 = vmatprep.subr.mxu0 0.0
      %1263 = vmatpush1.msra.mxu0 %v453
      %1264 = vmatprep.subr.mxu0 0.0
      %1265 = vmatpush1.msra.mxu0 %v454
      %1266 = vmatprep.subr.mxu0 0.0
      %1267 = vmatpush1.msra.mxu0 %v455
      %1268 = vmatprep.subr.mxu0 0.0
      %1269 = vmatpush1.msra.mxu0 0.0
      %1270 = vmatprep.subr.mxu0 0.0
      %1271 = vmatpush1.msra.mxu0 0.0
      %1272 = vmatprep.subr.mxu0 0.0
      %1273 = vmatpush1.msra.mxu0 0.0
      %1274 = vmatprep.subr.mxu0 0.0
      %1275 = vmatpush1.msra.mxu0 0.0
      %1276 = vmatprep.subr.mxu0 0.0
      %1277 = vmatpush1.msra.mxu0 0.0
      %1278 = vmatprep.subr.mxu0 0.0
      %1279 = vmatpush1.msra.mxu0 0.0
      %1280 = vmatprep.subr.mxu0 0.0
      %1281 = vmatpush1.msra.mxu0 0.0
      %1282 = vmatprep.subr.mxu0 0.0
      %1283 = vmatpush1.msra.mxu0 0.0
      %1284 = vmatprep.subr.mxu0 0.0
      %1285 = vmatpush1.msra.mxu0 0.0
      %1286 = vmatprep.subr.mxu0 0.0
      %1287 = vmatpush1.msra.mxu0 0.0
      %1288 = vmatprep.subr.mxu0 0.0
      %1289 = vmatpush1.msra.mxu0 0.0
      %1290 = vmatprep.subr.mxu0 0.0
      %1291 = vmatpush1.msra.mxu0 0.0
      %1292 = vmatprep.subr.mxu0 0.0
      %1293 = vmatpush1.msra.mxu0 0.0
      %1294 = vmatprep.subr.mxu0 0.0
      %1295 = vmatpush1.msra.mxu0 0.0
      %1296 = vmatprep.subr.mxu0 0.0
      %1297 = vmatpush1.msra.mxu0 0.0
      %1298 = vmatprep.subr.mxu0 0.0
      %1299 = vmatpush1.msra.mxu0 0.0
      %1300 = vmatprep.subr.mxu0 0.0
      %1301 = vmatpush1.msra.mxu0 0.0
      %1302 = vmatprep.subr.mxu0 0.0
      %1303 = vmatpush1.msra.mxu0 0.0
      %1304 = vmatprep.subr.mxu0 0.0
      %1305 = vmatpush1.msra.mxu0 0.0
      %1306 = vmatprep.subr.mxu0 0.0
      %1307 = vmatpush1.msra.mxu0 0.0
      %1308 = vmatprep.subr.mxu0 0.0
      %1309 = vmatpush1.msra.mxu0 0.0
      %1310 = vmatprep.subr.mxu0 0.0
      %1311 = vmatpush1.msra.mxu0 0.0
      %1312 = vmatprep.subr.mxu0 0.0
      %1313 = vmatpush1.msra.mxu0 0.0
      %1314 = vmatprep.subr.mxu0 0.0
      %1315 = vmatpush1.msra.mxu0 0.0
      %1316 = vmatprep.subr.mxu0 0.0
      %1317 = vmatpush1.msra.mxu0 0.0
      %1318 = vmatprep.subr.mxu0 0.0
      %1319 = vmatpush1.msra.mxu0 0.0
      %1320 = vmatprep.subr.mxu0 0.0
      %1321 = vmatpush1.msra.mxu0 0.0
      %1322 = vmatprep.subr.mxu0 0.0
      %1323 = vmatpush1.msra.mxu0 0.0
      %1324 = vmatprep.mubr.f32.mxu0 0.0
      %1325 = vmatmul.mubr.f32.gmra.mrb[0].mxu0 %v1258
      %v1326 = vpop.f32.mrb[0].mxu0
      %v1327 = vadd.f32 0.0, %v1326
      %v1328 = vpop.f32.mrb[0].mxu0
      %1329 = vdwg.mxu0
      %v1330 = vlaneseq
      %v1331 = vshrl.u32 %v1330, 7
      %v1332 = vsub.s32 0, %v1331
      %v1333 = vrot.slane %v990, %v1332
      %v1334 = vmul.f32 %v998, %v1333
      %v1335 = vrcp.pop %v1334
      %v1336 = vmul.f32 %v1327, %v1335
      %v1338 = vlaneseq
      %v1339 = vand.u32 %v1338, 127
      %v1340 = vlaneseq
      %v1341 = vshrl.u32 %v1340, 7
      %v1342 = vsub.s32 %v1339, %v1341
      %v1343 = vrot.slane %v510, %v1342
      %vm1344 = vcmask 1041409
      %vm1345 = vcmask 1042434
      %v1346 = vsel %vm1345, %v1343, %v1343
      %vm1347 = vcmask 1043459
      %v1348 = vsel %vm1347, %v1343, %v1346
      %vm1349 = vcmask 1044484
      %v1350 = vsel %vm1349, %v1343, %v1348
      %vm1351 = vcmask 1045509
      %v1352 = vsel %vm1351, %v1343, %v1350
      %vm1353 = vcmask 1046534
      %v1354 = vsel %vm1353, %v1343, %v1352
      %vm1355 = vcmask 1047559
      %v1356 = vsel %vm1355, %v1343, %v1354
      %v1358 = vmul.f32 %v477, %v1356
      %v1359 = vrcp.pop %v1358
      %v1360 = vmul.f32 1.0, %v1359
      %v1361 = vlaneseq
      %v1362 = vshrl.u32 %v1361, 7
      %v1363 = vsub.s32 0, %v1362
      %v1364 = vrot.slane %v456, %v1363
      %v1365 = vmul.f32 %v444, %v1364
      %v1367 = vsel %vm467, %v1365, 0
      %v1370 = vsel %vm467, %v447, 0
      %1372 = vmatprep.subr.mxu0 0.0
      %1373 = vmatpush1.xpose.msra.mxu0 %v1370
      %1374 = vmatprep.subr.mxu0 0.0
      %1375 = vmatpush1.xpose.msra.mxu0 0.0
      %1376 = vmatprep.subr.mxu0 0.0
      %1377 = vmatpush1.xpose.msra.mxu0 0.0
      %1378 = vmatprep.subr.mxu0 0.0
      %1379 = vmatpush1.xpose.msra.mxu0 0.0
      %1380 = vmatprep.subr.mxu0 0.0
      %1381 = vmatpush1.xpose.msra.mxu0 0.0
      %1382 = vmatprep.subr.mxu0 0.0
      %1383 = vmatpush1.xpose.msra.mxu0 0.0
      %1384 = vmatprep.subr.mxu0 0.0
      %1385 = vmatpush1.xpose.msra.mxu0 0.0
      %1386 = vmatprep.subr.mxu0 0.0
      %1387 = vmatpush1.xpose.msra.mxu0 0.0
      %1388 = vmatprep.subr.mxu0 0.0
      %1389 = vmatpush1.xpose.msra.mxu0 0.0
      %1390 = vmatprep.subr.mxu0 0.0
      %1391 = vmatpush1.xpose.msra.mxu0 0.0
      %1392 = vmatprep.subr.mxu0 0.0
      %1393 = vmatpush1.xpose.msra.mxu0 0.0
      %1394 = vmatprep.subr.mxu0 0.0
      %1395 = vmatpush1.xpose.msra.mxu0 0.0
      %1396 = vmatprep.subr.mxu0 0.0
      %1397 = vmatpush1.xpose.msra.mxu0 0.0
      %1398 = vmatprep.subr.mxu0 0.0
      %1399 = vmatpush1.xpose.msra.mxu0 0.0
      %1400 = vmatprep.subr.mxu0 0.0
      %1401 = vmatpush1.xpose.msra.mxu0 0.0
      %1402 = vmatprep.subr.mxu0 0.0
      %1403 = vmatpush1.xpose.msra.mxu0 0.0
      %1404 = vmatprep.subr.mxu0 0.0
      %1405 = vmatpush1.xpose.msra.mxu0 0.0
      %1406 = vmatprep.subr.mxu0 0.0
      %1407 = vmatpush1.xpose.msra.mxu0 0.0
      %1408 = vmatprep.subr.mxu0 0.0
      %1409 = vmatpush1.xpose.msra.mxu0 0.0
      %1410 = vmatprep.subr.mxu0 0.0
      %1411 = vmatpush1.xpose.msra.mxu0 0.0
      %1412 = vmatprep.subr.mxu0 0.0
      %1413 = vmatpush1.xpose.msra.mxu0 0.0
      %1414 = vmatprep.subr.mxu0 0.0
      %1415 = vmatpush1.xpose.msra.mxu0 0.0
      %1416 = vmatprep.subr.mxu0 0.0
      %1417 = vmatpush1.xpose.msra.mxu0 0.0
      %1418 = vmatprep.subr.mxu0 0.0
      %1419 = vmatpush1.xpose.msra.mxu0 0.0
      %1420 = vmatprep.subr.mxu0 0.0
      %1421 = vmatpush1.xpose.msra.mxu0 0.0
      %1422 = vmatprep.subr.mxu0 0.0
      %1423 = vmatpush1.xpose.msra.mxu0 0.0
      %1424 = vmatprep.subr.mxu0 0.0
      %1425 = vmatpush1.xpose.msra.mxu0 0.0
      %1426 = vmatprep.subr.mxu0 0.0
      %1427 = vmatpush1.xpose.msra.mxu0 0.0
      %1428 = vmatprep.subr.mxu0 0.0
      %1429 = vmatpush1.xpose.msra.mxu0 0.0
      %1430 = vmatprep.subr.mxu0 0.0
      %1431 = vmatpush1.xpose.msra.mxu0 0.0
      %1432 = vmatprep.subr.mxu0 0.0
      %1433 = vmatpush1.xpose.msra.mxu0 0.0
      %1434 = vmatprep.subr.mxu0 0.0
      %1435 = vmatpush1.xpose.msra.mxu0 0.0
      %1436 = vmatprep.mubr.f32.mxu0 0.0
      %1437 = vmatmul.mubr.f32.gmra.mrb[0].mxu0 %v1367
      %v1438 = vpop.f32.mrb[0].mxu0
      %v1439 = vadd.f32 0.0, %v1438
      %v1440 = vpop.f32.mrb[0].mxu0
      %1441 = vdwg.mxu0
      %v1442 = vmul.f32 %v1439, %v1360
      %vm1443 = vcmask 64512
      %v1444 = vsel %vm1443, %v1442, -inf
      %1445 = vmax.xlane.f32.xlu0 %v1444
      %v1446 = vpop.xlane.xlu0 %1445
      %v1447 = vrot.slane %v1444, 4
      %v1448 = vmax.f32 %v1444, %v1447
      %v1449 = vrot.slane %v1448, 2
      %v1450 = vmax.f32 %v1448, %v1449
      %v1451 = vrot.slane %v1450, 1
      %v1452 = vmax.f32 %v1450, %v1451
      %v1453 = vlaneseq
      %v1454 = vshrl.u32 %v1453, 7
      %v1455 = vsub.s32 1, %v1454
      %v1456 = vrot.slane %v456, %v1455
      %v1457 = vmul.f32 %v444, %v1456
      %v1459 = vsel %vm467, %v1457, 0
      %1461 = vmatprep.subr.mxu0 0.0
      %1462 = vmatpush1.xpose.msra.mxu0 %v1370
      %1463 = vmatprep.subr.mxu0 0.0
      %1464 = vmatpush1.xpose.msra.mxu0 0.0
      %1465 = vmatprep.subr.mxu0 0.0
      %1466 = vmatpush1.xpose.msra.mxu0 0.0
      %1467 = vmatprep.subr.mxu0 0.0
      %1468 = vmatpush1.xpose.msra.mxu0 0.0
      %1469 = vmatprep.subr.mxu0 0.0
      %1470 = vmatpush1.xpose.msra.mxu0 0.0
      %1471 = vmatprep.subr.mxu0 0.0
      %1472 = vmatpush1.xpose.msra.mxu0 0.0
      %1473 = vmatprep.subr.mxu0 0.0
      %1474 = vmatpush1.xpose.msra.mxu0 0.0
      %1475 = vmatprep.subr.mxu0 0.0
      %1476 = vmatpush1.xpose.msra.mxu0 0.0
      %1477 = vmatprep.subr.mxu0 0.0
      %1478 = vmatpush1.xpose.msra.mxu0 0.0
      %1479 = vmatprep.subr.mxu0 0.0
      %1480 = vmatpush1.xpose.msra.mxu0 0.0
      %1481 = vmatprep.subr.mxu0 0.0
      %1482 = vmatpush1.xpose.msra.mxu0 0.0
      %1483 = vmatprep.subr.mxu0 0.0
      %1484 = vmatpush1.xpose.msra.mxu0 0.0
      %1485 = vmatprep.subr.mxu0 0.0
      %1486 = vmatpush1.xpose.msra.mxu0 0.0
      %1487 = vmatprep.subr.mxu0 0.0
      %1488 = vmatpush1.xpose.msra.mxu0 0.0
      %1489 = vmatprep.subr.mxu0 0.0
      %1490 = vmatpush1.xpose.msra.mxu0 0.0
      %1491 = vmatprep.subr.mxu0 0.0
      %1492 = vmatpush1.xpose.msra.mxu0 0.0
      %1493 = vmatprep.subr.mxu0 0.0
      %1494 = vmatpush1.xpose.msra.mxu0 0.0
      %1495 = vmatprep.subr.mxu0 0.0
      %1496 = vmatpush1.xpose.msra.mxu0 0.0
      %1497 = vmatprep.subr.mxu0 0.0
      %1498 = vmatpush1.xpose.msra.mxu0 0.0
      %1499 = vmatprep.subr.mxu0 0.0
      %1500 = vmatpush1.xpose.msra.mxu0 0.0
      %1501 = vmatprep.subr.mxu0 0.0
      %1502 = vmatpush1.xpose.msra.mxu0 0.0
      %1503 = vmatprep.subr.mxu0 0.0
      %1504 = vmatpush1.xpose.msra.mxu0 0.0
      %1505 = vmatprep.subr.mxu0 0.0
      %1506 = vmatpush1.xpose.msra.mxu0 0.0
      %1507 = vmatprep.subr.mxu0 0.0
      %1508 = vmatpush1.xpose.msra.mxu0 0.0
      %1509 = vmatprep.subr.mxu0 0.0
      %1510 = vmatpush1.xpose.msra.mxu0 0.0
      %1511 = vmatprep.subr.mxu0 0.0
      %1512 = vmatpush1.xpose.msra.mxu0 0.0
      %1513 = vmatprep.subr.mxu0 0.0
      %1514 = vmatpush1.xpose.msra.mxu0 0.0
      %1515 = vmatprep.subr.mxu0 0.0
      %1516 = vmatpush1.xpose.msra.mxu0 0.0
      %1517 = vmatprep.subr.mxu0 0.0
      %1518 = vmatpush1.xpose.msra.mxu0 0.0
      %1519 = vmatprep.subr.mxu0 0.0
      %1520 = vmatpush1.xpose.msra.mxu0 0.0
      %1521 = vmatprep.subr.mxu0 0.0
      %1522 = vmatpush1.xpose.msra.mxu0 0.0
      %1523 = vmatprep.subr.mxu0 0.0
      %1524 = vmatpush1.xpose.msra.mxu0 0.0
      %1525 = vmatprep.mubr.f32.mxu0 0.0
      %1526 = vmatmul.mubr.f32.gmra.mrb[0].mxu0 %v1459
      %v1527 = vpop.f32.mrb[0].mxu0
      %v1528 = vadd.f32 0.0, %v1527
      %v1529 = vpop.f32.mrb[0].mxu0
      %1530 = vdwg.mxu0
      %v1531 = vmul.f32 %v1528, %v1360
      %v1532 = vsel %vm1443, %v1531, -inf
      %1533 = vmax.xlane.f32.xlu0 %v1532
      %v1534 = vpop.xlane.xlu0 %1533
      %v1535 = vrot.slane %v1532, 4
      %v1536 = vmax.f32 %v1532, %v1535
      %v1537 = vrot.slane %v1536, 2
      %v1538 = vmax.f32 %v1536, %v1537
      %v1539 = vrot.slane %v1538, 1
      %v1540 = vmax.f32 %v1538, %v1539
      %v1541 = vlaneseq
      %v1542 = vshrl.u32 %v1541, 7
      %v1543 = vsub.s32 2, %v1542
      %v1544 = vrot.slane %v456, %v1543
      %v1545 = vmul.f32 %v444, %v1544
      %v1547 = vsel %vm467, %v1545, 0
      %1549 = vmatprep.subr.mxu0 0.0
      %1550 = vmatpush1.xpose.msra.mxu0 %v1370
      %1551 = vmatprep.subr.mxu0 0.0
      %1552 = vmatpush1.xpose.msra.mxu0 0.0
      %1553 = vmatprep.subr.mxu0 0.0
      %1554 = vmatpush1.xpose.msra.mxu0 0.0
      %1555 = vmatprep.subr.mxu0 0.0
      %1556 = vmatpush1.xpose.msra.mxu0 0.0
      %1557 = vmatprep.subr.mxu0 0.0
      %1558 = vmatpush1.xpose.msra.mxu0 0.0
      %1559 = vmatprep.subr.mxu0 0.0
      %1560 = vmatpush1.xpose.msra.mxu0 0.0
      %1561 = vmatprep.subr.mxu0 0.0
      %1562 = vmatpush1.xpose.msra.mxu0 0.0
      %1563 = vmatprep.subr.mxu0 0.0
      %1564 = vmatpush1.xpose.msra.mxu0 0.0
      %1565 = vmatprep.subr.mxu0 0.0
      %1566 = vmatpush1.xpose.msra.mxu0 0.0
      %1567 = vmatprep.subr.mxu0 0.0
      %1568 = vmatpush1.xpose.msra.mxu0 0.0
      %1569 = vmatprep.subr.mxu0 0.0
      %1570 = vmatpush1.xpose.msra.mxu0 0.0
      %1571 = vmatprep.subr.mxu0 0.0
      %1572 = vmatpush1.xpose.msra.mxu0 0.0
      %1573 = vmatprep.subr.mxu0 0.0
      %1574 = vmatpush1.xpose.msra.mxu0 0.0
      %1575 = vmatprep.subr.mxu0 0.0
      %1576 = vmatpush1.xpose.msra.mxu0 0.0
      %1577 = vmatprep.subr.mxu0 0.0
      %1578 = vmatpush1.xpose.msra.mxu0 0.0
      %1579 = vmatprep.subr.mxu0 0.0
      %1580 = vmatpush1.xpose.msra.mxu0 0.0
      %1581 = vmatprep.subr.mxu0 0.0
      %1582 = vmatpush1.xpose.msra.mxu0 0.0
      %1583 = vmatprep.subr.mxu0 0.0
      %1584 = vmatpush1.xpose.msra.mxu0 0.0
      %1585 = vmatprep.subr.mxu0 0.0
      %1586 = vmatpush1.xpose.msra.mxu0 0.0
      %1587 = vmatprep.subr.mxu0 0.0
      %1588 = vmatpush1.xpose.msra.mxu0 0.0
      %1589 = vmatprep.subr.mxu0 0.0
      %1590 = vmatpush1.xpose.msra.mxu0 0.0
      %1591 = vmatprep.subr.mxu0 0.0
      %1592 = vmatpush1.xpose.msra.mxu0 0.0
      %1593 = vmatprep.subr.mxu0 0.0
      %1594 = vmatpush1.xpose.msra.mxu0 0.0
      %1595 = vmatprep.subr.mxu0 0.0
      %1596 = vmatpush1.xpose.msra.mxu0 0.0
      %1597 = vmatprep.subr.mxu0 0.0
      %1598 = vmatpush1.xpose.msra.mxu0 0.0
      %1599 = vmatprep.subr.mxu0 0.0
      %1600 = vmatpush1.xpose.msra.mxu0 0.0
      %1601 = vmatprep.subr.mxu0 0.0
      %1602 = vmatpush1.xpose.msra.mxu0 0.0
      %1603 = vmatprep.subr.mxu0 0.0
      %1604 = vmatpush1.xpose.msra.mxu0 0.0
      %1605 = vmatprep.subr.mxu0 0.0
      %1606 = vmatpush1.xpose.msra.mxu0 0.0
      %1607 = vmatprep.subr.mxu0 0.0
      %1608 = vmatpush1.xpose.msra.mxu0 0.0
      %1609 = vmatprep.subr.mxu0 0.0
      %1610 = vmatpush1.xpose.msra.mxu0 0.0
      %1611 = vmatprep.subr.mxu0 0.0
      %1612 = vmatpush1.xpose.msra.mxu0 0.0
      %1613 = vmatprep.mubr.f32.mxu0 0.0
      %1614 = vmatmul.mubr.f32.gmra.mrb[0].mxu0 %v1547
      %v1615 = vpop.f32.mrb[0].mxu0
      %v1616 = vadd.f32 0.0, %v1615
      %v1617 = vpop.f32.mrb[0].mxu0
      %1618 = vdwg.mxu0
      %v1619 = vmul.f32 %v1616, %v1360
      %v1620 = vsel %vm1443, %v1619, -inf
      %1621 = vmax.xlane.f32.xlu0 %v1620
      %v1622 = vpop.xlane.xlu0 %1621
      %v1623 = vrot.slane %v1620, 4
      %v1624 = vmax.f32 %v1620, %v1623
      %v1625 = vrot.slane %v1624, 2
      %v1626 = vmax.f32 %v1624, %v1625
      %v1627 = vrot.slane %v1626, 1
      %v1628 = vmax.f32 %v1626, %v1627
      %v1629 = vlaneseq
      %v1630 = vshrl.u32 %v1629, 7
      %v1631 = vsub.s32 3, %v1630
      %v1632 = vrot.slane %v456, %v1631
      %v1633 = vmul.f32 %v444, %v1632
      %v1635 = vsel %vm467, %v1633, 0
      %1637 = vmatprep.subr.mxu0 0.0
      %1638 = vmatpush1.xpose.msra.mxu0 %v1370
      %1639 = vmatprep.subr.mxu0 0.0
      %1640 = vmatpush1.xpose.msra.mxu0 0.0
      %1641 = vmatprep.subr.mxu0 0.0
      %1642 = vmatpush1.xpose.msra.mxu0 0.0
      %1643 = vmatprep.subr.mxu0 0.0
      %1644 = vmatpush1.xpose.msra.mxu0 0.0
      %1645 = vmatprep.subr.mxu0 0.0
      %1646 = vmatpush1.xpose.msra.mxu0 0.0
      %1647 = vmatprep.subr.mxu0 0.0
      %1648 = vmatpush1.xpose.msra.mxu0 0.0
      %1649 = vmatprep.subr.mxu0 0.0
      %1650 = vmatpush1.xpose.msra.mxu0 0.0
      %1651 = vmatprep.subr.mxu0 0.0
      %1652 = vmatpush1.xpose.msra.mxu0 0.0
      %1653 = vmatprep.subr.mxu0 0.0
      %1654 = vmatpush1.xpose.msra.mxu0 0.0
      %1655 = vmatprep.subr.mxu0 0.0
      %1656 = vmatpush1.xpose.msra.mxu0 0.0
      %1657 = vmatprep.subr.mxu0 0.0
      %1658 = vmatpush1.xpose.msra.mxu0 0.0
      %1659 = vmatprep.subr.mxu0 0.0
      %1660 = vmatpush1.xpose.msra.mxu0 0.0
      %1661 = vmatprep.subr.mxu0 0.0
      %1662 = vmatpush1.xpose.msra.mxu0 0.0
      %1663 = vmatprep.subr.mxu0 0.0
      %1664 = vmatpush1.xpose.msra.mxu0 0.0
      %1665 = vmatprep.subr.mxu0 0.0
      %1666 = vmatpush1.xpose.msra.mxu0 0.0
      %1667 = vmatprep.subr.mxu0 0.0
      %1668 = vmatpush1.xpose.msra.mxu0 0.0
      %1669 = vmatprep.subr.mxu0 0.0
      %1670 = vmatpush1.xpose.msra.mxu0 0.0
      %1671 = vmatprep.subr.mxu0 0.0
      %1672 = vmatpush1.xpose.msra.mxu0 0.0
      %1673 = vmatprep.subr.mxu0 0.0
      %1674 = vmatpush1.xpose.msra.mxu0 0.0
      %1675 = vmatprep.subr.mxu0 0.0
      %1676 = vmatpush1.xpose.msra.mxu0 0.0
      %1677 = vmatprep.subr.mxu0 0.0
      %1678 = vmatpush1.xpose.msra.mxu0 0.0
      %1679 = vmatprep.subr.mxu0 0.0
      %1680 = vmatpush1.xpose.msra.mxu0 0.0
      %1681 = vmatprep.subr.mxu0 0.0
      %1682 = vmatpush1.xpose.msra.mxu0 0.0
      %1683 = vmatprep.subr.mxu0 0.0
      %1684 = vmatpush1.xpose.msra.mxu0 0.0
      %1685 = vmatprep.subr.mxu0 0.0
      %1686 = vmatpush1.xpose.msra.mxu0 0.0
      %1687 = vmatprep.subr.mxu0 0.0
      %1688 = vmatpush1.xpose.msra.mxu0 0.0
      %1689 = vmatprep.subr.mxu0 0.0
      %1690 = vmatpush1.xpose.msra.mxu0 0.0
      %1691 = vmatprep.subr.mxu0 0.0
      %1692 = vmatpush1.xpose.msra.mxu0 0.0
      %1693 = vmatprep.subr.mxu0 0.0
      %1694 = vmatpush1.xpose.msra.mxu0 0.0
      %1695 = vmatprep.subr.mxu0 0.0
      %1696 = vmatpush1.xpose.msra.mxu0 0.0
      %1697 = vmatprep.subr.mxu0 0.0
      %1698 = vmatpush1.xpose.msra.mxu0 0.0
      %1699 = vmatprep.subr.mxu0 0.0
      %1700 = vmatpush1.xpose.msra.mxu0 0.0
      %1701 = vmatprep.mubr.f32.mxu0 0.0
      %1702 = vmatmul.mubr.f32.gmra.mrb[0].mxu0 %v1635
      %v1703 = vpop.f32.mrb[0].mxu0
      %v1704 = vadd.f32 0.0, %v1703
      %v1705 = vpop.f32.mrb[0].mxu0
      %1706 = vdwg.mxu0
      %v1707 = vmul.f32 %v1704, %v1360
      %v1708 = vsel %vm1443, %v1707, -inf
      %1709 = vmax.xlane.f32.xlu0 %v1708
      %v1710 = vpop.xlane.xlu0 %1709
      %v1711 = vrot.slane %v1708, 4
      %v1712 = vmax.f32 %v1708, %v1711
      %v1713 = vrot.slane %v1712, 2
      %v1714 = vmax.f32 %v1712, %v1713
      %v1715 = vrot.slane %v1714, 1
      %v1716 = vmax.f32 %v1714, %v1715
      %vm1717 = vcmask 7168
      %v1718 = vsel %vm1717, %v1446, %v1534
      %vm1719 = vcmask 15360
      %v1720 = vsel %vm1719, %v1718, %v1622
      %vm1721 = vcmask 23552
      %v1722 = vsel %vm1721, %v1720, %v1710
      %vm1723 = vcmask 1040384
      %v1724 = vsel %vm1723, %v1452, %v1540
      %vm1725 = vcmask 1041408
      %v1726 = vsel %vm1725, %v1724, %v1628
      %vm1727 = vcmask 1042432
      %v1728 = vsel %vm1727, %v1726, %v1716
      %1729 = vxpose.xlu0.b32.start [1/16] %v1728, 128
      %1730 = vxpose.xlu0.b32.cont [2/16] 0.0, 128
      %1731 = vxpose.xlu0.b32.cont [3/16] 0.0, 128
      %1732 = vxpose.xlu0.b32.cont [4/16] 0.0, 128
      %1733 = vxpose.xlu0.b32.cont [5/16] 0.0, 128
      %1734 = vxpose.xlu0.b32.cont [6/16] 0.0, 128
      %1735 = vxpose.xlu0.b32.cont [7/16] 0.0, 128
      %1736 = vxpose.xlu0.b32.cont [8/16] 0.0, 128
      %1737 = vxpose.xlu0.b32.cont [9/16] 0.0, 128
      %1738 = vxpose.xlu0.b32.cont [10/16] 0.0, 128
      %1739 = vxpose.xlu0.b32.cont [11/16] 0.0, 128
      %1740 = vxpose.xlu0.b32.cont [12/16] 0.0, 128
      %1741 = vxpose.xlu0.b32.cont [13/16] 0.0, 128
      %1742 = vxpose.xlu0.b32.cont [14/16] 0.0, 128
      %1743 = vxpose.xlu0.b32.cont [15/16] 0.0, 128
      %1744 = vxpose.xlu0.b32.end [16/16] 0.0, 128
      %v1745 = vpop.trf.xlu0
      %v1746 = vpop.trf.xlu0
      %v1747 = vpop.trf.xlu0
      %v1748 = vpop.trf.xlu0
      %v1749 = vpop.trf.xlu0
      %v1750 = vpop.trf.xlu0
      %v1751 = vpop.trf.xlu0
      %v1752 = vpop.trf.xlu0
      %v1753 = vpop.trf.xlu0
      %v1754 = vpop.trf.xlu0
      %v1755 = vpop.trf.xlu0
      %v1756 = vpop.trf.xlu0
      %v1757 = vpop.trf.xlu0
      %v1758 = vpop.trf.xlu0
      %v1759 = vpop.trf.xlu0
      %v1760 = vpop.trf.xlu0
      %v1761 = vmul.f32 %v488, %v1356
      %v1762 = vrcp.pop %v1761
      %v1763 = vmul.f32 1.0, %v1762
      %v1764 = vlaneseq
      %v1765 = vshrl.u32 %v1764, 7
      %v1766 = vsub.s32 0, %v1765
      %v1767 = vrot.slane %v457, %v1766
      %v1768 = vmul.f32 %v445, %v1767
      %v1770 = vsel %vm467, %v1768, 0
      %1772 = vmatprep.subr.mxu0 0.0
      %1773 = vmatpush1.xpose.msra.mxu0 %v1370
      %1774 = vmatprep.subr.mxu0 0.0
      %1775 = vmatpush1.xpose.msra.mxu0 0.0
      %1776 = vmatprep.subr.mxu0 0.0
      %1777 = vmatpush1.xpose.msra.mxu0 0.0
      %1778 = vmatprep.subr.mxu0 0.0
      %1779 = vmatpush1.xpose.msra.mxu0 0.0
      %1780 = vmatprep.subr.mxu0 0.0
      %1781 = vmatpush1.xpose.msra.mxu0 0.0
      %1782 = vmatprep.subr.mxu0 0.0
      %1783 = vmatpush1.xpose.msra.mxu0 0.0
      %1784 = vmatprep.subr.mxu0 0.0
      %1785 = vmatpush1.xpose.msra.mxu0 0.0
      %1786 = vmatprep.subr.mxu0 0.0
      %1787 = vmatpush1.xpose.msra.mxu0 0.0
      %1788 = vmatprep.subr.mxu0 0.0
      %1789 = vmatpush1.xpose.msra.mxu0 0.0
      %1790 = vmatprep.subr.mxu0 0.0
      %1791 = vmatpush1.xpose.msra.mxu0 0.0
      %1792 = vmatprep.subr.mxu0 0.0
      %1793 = vmatpush1.xpose.msra.mxu0 0.0
      %1794 = vmatprep.subr.mxu0 0.0
      %1795 = vmatpush1.xpose.msra.mxu0 0.0
      %1796 = vmatprep.subr.mxu0 0.0
      %1797 = vmatpush1.xpose.msra.mxu0 0.0
      %1798 = vmatprep.subr.mxu0 0.0
      %1799 = vmatpush1.xpose.msra.mxu0 0.0
      %1800 = vmatprep.subr.mxu0 0.0
      %1801 = vmatpush1.xpose.msra.mxu0 0.0
      %1802 = vmatprep.subr.mxu0 0.0
      %1803 = vmatpush1.xpose.msra.mxu0 0.0
      %1804 = vmatprep.subr.mxu0 0.0
      %1805 = vmatpush1.xpose.msra.mxu0 0.0
      %1806 = vmatprep.subr.mxu0 0.0
      %1807 = vmatpush1.xpose.msra.mxu0 0.0
      %1808 = vmatprep.subr.mxu0 0.0
      %1809 = vmatpush1.xpose.msra.mxu0 0.0
      %1810 = vmatprep.subr.mxu0 0.0
      %1811 = vmatpush1.xpose.msra.mxu0 0.0
      %1812 = vmatprep.subr.mxu0 0.0
      %1813 = vmatpush1.xpose.msra.mxu0 0.0
      %1814 = vmatprep.subr.mxu0 0.0
      %1815 = vmatpush1.xpose.msra.mxu0 0.0
      %1816 = vmatprep.subr.mxu0 0.0
      %1817 = vmatpush1.xpose.msra.mxu0 0.0
      %1818 = vmatprep.subr.mxu0 0.0
      %1819 = vmatpush1.xpose.msra.mxu0 0.0
      %1820 = vmatprep.subr.mxu0 0.0
      %1821 = vmatpush1.xpose.msra.mxu0 0.0
      %1822 = vmatprep.subr.mxu0 0.0
      %1823 = vmatpush1.xpose.msra.mxu0 0.0
      %1824 = vmatprep.subr.mxu0 0.0
      %1825 = vmatpush1.xpose.msra.mxu0 0.0
      %1826 = vmatprep.subr.mxu0 0.0
      %1827 = vmatpush1.xpose.msra.mxu0 0.0
      %1828 = vmatprep.subr.mxu0 0.0
      %1829 = vmatpush1.xpose.msra.mxu0 0.0
      %1830 = vmatprep.subr.mxu0 0.0
      %1831 = vmatpush1.xpose.msra.mxu0 0.0
      %1832 = vmatprep.subr.mxu0 0.0
      %1833 = vmatpush1.xpose.msra.mxu0 0.0
      %1834 = vmatprep.subr.mxu0 0.0
      %1835 = vmatpush1.xpose.msra.mxu0 0.0
      %1836 = vmatprep.mubr.f32.mxu0 0.0
      %1837 = vmatmul.mubr.f32.gmra.mrb[0].mxu0 %v1770
      %v1838 = vpop.f32.mrb[0].mxu0
      %v1839 = vadd.f32 0.0, %v1838
      %v1840 = vpop.f32.mrb[0].mxu0
      %1841 = vdwg.mxu0
      %v1842 = vmul.f32 %v1839, %v1763
      %v1843 = vsel %vm1443, %v1842, -inf
      %1844 = vmax.xlane.f32.xlu0 %v1843
      %v1845 = vpop.xlane.xlu0 %1844
      %v1846 = vrot.slane %v1843, 4
      %v1847 = vmax.f32 %v1843, %v1846
      %v1848 = vrot.slane %v1847, 2
      %v1849 = vmax.f32 %v1847, %v1848
      %v1850 = vrot.slane %v1849, 1
      %v1851 = vmax.f32 %v1849, %v1850
      %v1852 = vlaneseq
      %v1853 = vshrl.u32 %v1852, 7
      %v1854 = vsub.s32 1, %v1853
      %v1855 = vrot.slane %v457, %v1854
      %v1856 = vmul.f32 %v445, %v1855
      %v1858 = vsel %vm467, %v1856, 0
      %1860 = vmatprep.subr.mxu0 0.0
      %1861 = vmatpush1.xpose.msra.mxu0 %v1370
      %1862 = vmatprep.subr.mxu0 0.0
      %1863 = vmatpush1.xpose.msra.mxu0 0.0
      %1864 = vmatprep.subr.mxu0 0.0
      %1865 = vmatpush1.xpose.msra.mxu0 0.0
      %1866 = vmatprep.subr.mxu0 0.0
      %1867 = vmatpush1.xpose.msra.mxu0 0.0
      %1868 = vmatprep.subr.mxu0 0.0
      %1869 = vmatpush1.xpose.msra.mxu0 0.0
      %1870 = vmatprep.subr.mxu0 0.0
      %1871 = vmatpush1.xpose.msra.mxu0 0.0
      %1872 = vmatprep.subr.mxu0 0.0
      %1873 = vmatpush1.xpose.msra.mxu0 0.0
      %1874 = vmatprep.subr.mxu0 0.0
      %1875 = vmatpush1.xpose.msra.mxu0 0.0
      %1876 = vmatprep.subr.mxu0 0.0
      %1877 = vmatpush1.xpose.msra.mxu0 0.0
      %1878 = vmatprep.subr.mxu0 0.0
      %1879 = vmatpush1.xpose.msra.mxu0 0.0
      %1880 = vmatprep.subr.mxu0 0.0
      %1881 = vmatpush1.xpose.msra.mxu0 0.0
      %1882 = vmatprep.subr.mxu0 0.0
      %1883 = vmatpush1.xpose.msra.mxu0 0.0
      %1884 = vmatprep.subr.mxu0 0.0
      %1885 = vmatpush1.xpose.msra.mxu0 0.0
      %1886 = vmatprep.subr.mxu0 0.0
      %1887 = vmatpush1.xpose.msra.mxu0 0.0
      %1888 = vmatprep.subr.mxu0 0.0
      %1889 = vmatpush1.xpose.msra.mxu0 0.0
      %1890 = vmatprep.subr.mxu0 0.0
      %1891 = vmatpush1.xpose.msra.mxu0 0.0
      %1892 = vmatprep.subr.mxu0 0.0
      %1893 = vmatpush1.xpose.msra.mxu0 0.0
      %1894 = vmatprep.subr.mxu0 0.0
      %1895 = vmatpush1.xpose.msra.mxu0 0.0
      %1896 = vmatprep.subr.mxu0 0.0
      %1897 = vmatpush1.xpose.msra.mxu0 0.0
      %1898 = vmatprep.subr.mxu0 0.0
      %1899 = vmatpush1.xpose.msra.mxu0 0.0
      %1900 = vmatprep.subr.mxu0 0.0
      %1901 = vmatpush1.xpose.msra.mxu0 0.0
      %1902 = vmatprep.subr.mxu0 0.0
      %1903 = vmatpush1.xpose.msra.mxu0 0.0
      %1904 = vmatprep.subr.mxu0 0.0
      %1905 = vmatpush1.xpose.msra.mxu0 0.0
      %1906 = vmatprep.subr.mxu0 0.0
      %1907 = vmatpush1.xpose.msra.mxu0 0.0
      %1908 = vmatprep.subr.mxu0 0.0
      %1909 = vmatpush1.xpose.msra.mxu0 0.0
      %1910 = vmatprep.subr.mxu0 0.0
      %1911 = vmatpush1.xpose.msra.mxu0 0.0
      %1912 = vmatprep.subr.mxu0 0.0
      %1913 = vmatpush1.xpose.msra.mxu0 0.0
      %1914 = vmatprep.subr.mxu0 0.0
      %1915 = vmatpush1.xpose.msra.mxu0 0.0
      %1916 = vmatprep.subr.mxu0 0.0
      %1917 = vmatpush1.xpose.msra.mxu0 0.0
      %1918 = vmatprep.subr.mxu0 0.0
      %1919 = vmatpush1.xpose.msra.mxu0 0.0
      %1920 = vmatprep.subr.mxu0 0.0
      %1921 = vmatpush1.xpose.msra.mxu0 0.0
      %1922 = vmatprep.subr.mxu0 0.0
      %1923 = vmatpush1.xpose.msra.mxu0 0.0
      %1924 = vmatprep.mubr.f32.mxu0 0.0
      %1925 = vmatmul.mubr.f32.gmra.mrb[0].mxu0 %v1858
      %v1926 = vpop.f32.mrb[0].mxu0
      %v1927 = vadd.f32 0.0, %v1926
      %v1928 = vpop.f32.mrb[0].mxu0
      %1929 = vdwg.mxu0
      %v1930 = vmul.f32 %v1927, %v1763
      %v1931 = vsel %vm1443, %v1930, -inf
      %1932 = vmax.xlane.f32.xlu0 %v1931
      %v1933 = vpop.xlane.xlu0 %1932
      %v1934 = vrot.slane %v1931, 4
      %v1935 = vmax.f32 %v1931, %v1934
      %v1936 = vrot.slane %v1935, 2
      %v1937 = vmax.f32 %v1935, %v1936
      %v1938 = vrot.slane %v1937, 1
      %v1939 = vmax.f32 %v1937, %v1938
      %v1940 = vlaneseq
      %v1941 = vshrl.u32 %v1940, 7
      %v1942 = vsub.s32 2, %v1941
      %v1943 = vrot.slane %v457, %v1942
      %v1944 = vmul.f32 %v445, %v1943
      %v1946 = vsel %vm467, %v1944, 0
      %1948 = vmatprep.subr.mxu0 0.0
      %1949 = vmatpush1.xpose.msra.mxu0 %v1370
      %1950 = vmatprep.subr.mxu0 0.0
      %1951 = vmatpush1.xpose.msra.mxu0 0.0
      %1952 = vmatprep.subr.mxu0 0.0
      %1953 = vmatpush1.xpose.msra.mxu0 0.0
      %1954 = vmatprep.subr.mxu0 0.0
      %1955 = vmatpush1.xpose.msra.mxu0 0.0
      %1956 = vmatprep.subr.mxu0 0.0
      %1957 = vmatpush1.xpose.msra.mxu0 0.0
      %1958 = vmatprep.subr.mxu0 0.0
      %1959 = vmatpush1.xpose.msra.mxu0 0.0
      %1960 = vmatprep.subr.mxu0 0.0
      %1961 = vmatpush1.xpose.msra.mxu0 0.0
      %1962 = vmatprep.subr.mxu0 0.0
      %1963 = vmatpush1.xpose.msra.mxu0 0.0
      %1964 = vmatprep.subr.mxu0 0.0
      %1965 = vmatpush1.xpose.msra.mxu0 0.0
      %1966 = vmatprep.subr.mxu0 0.0
      %1967 = vmatpush1.xpose.msra.mxu0 0.0
      %1968 = vmatprep.subr.mxu0 0.0
      %1969 = vmatpush1.xpose.msra.mxu0 0.0
      %1970 = vmatprep.subr.mxu0 0.0
      %1971 = vmatpush1.xpose.msra.mxu0 0.0
      %1972 = vmatprep.subr.mxu0 0.0
      %1973 = vmatpush1.xpose.msra.mxu0 0.0
      %1974 = vmatprep.subr.mxu0 0.0
      %1975 = vmatpush1.xpose.msra.mxu0 0.0
      %1976 = vmatprep.subr.mxu0 0.0
      %1977 = vmatpush1.xpose.msra.mxu0 0.0
      %1978 = vmatprep.subr.mxu0 0.0
      %1979 = vmatpush1.xpose.msra.mxu0 0.0
      %1980 = vmatprep.subr.mxu0 0.0
      %1981 = vmatpush1.xpose.msra.mxu0 0.0
      %1982 = vmatprep.subr.mxu0 0.0
      %1983 = vmatpush1.xpose.msra.mxu0 0.0
      %1984 = vmatprep.subr.mxu0 0.0
      %1985 = vmatpush1.xpose.msra.mxu0 0.0
      %1986 = vmatprep.subr.mxu0 0.0
      %1987 = vmatpush1.xpose.msra.mxu0 0.0
      %1988 = vmatprep.subr.mxu0 0.0
      %1989 = vmatpush1.xpose.msra.mxu0 0.0
      %1990 = vmatprep.subr.mxu0 0.0
      %1991 = vmatpush1.xpose.msra.mxu0 0.0
      %1992 = vmatprep.subr.mxu0 0.0
      %1993 = vmatpush1.xpose.msra.mxu0 0.0
      %1994 = vmatprep.subr.mxu0 0.0
      %1995 = vmatpush1.xpose.msra.mxu0 0.0
      %1996 = vmatprep.subr.mxu0 0.0
      %1997 = vmatpush1.xpose.msra.mxu0 0.0
      %1998 = vmatprep.subr.mxu0 0.0
      %1999 = vmatpush1.xpose.msra.mxu0 0.0
      %2000 = vmatprep.subr.mxu0 0.0
      %2001 = vmatpush1.xpose.msra.mxu0 0.0
      %2002 = vmatprep.subr.mxu0 0.0
      %2003 = vmatpush1.xpose.msra.mxu0 0.0
      %2004 = vmatprep.subr.mxu0 0.0
      %2005 = vmatpush1.xpose.msra.mxu0 0.0
      %2006 = vmatprep.subr.mxu0 0.0
      %2007 = vmatpush1.xpose.msra.mxu0 0.0
      %2008 = vmatprep.subr.mxu0 0.0
      %2009 = vmatpush1.xpose.msra.mxu0 0.0
      %2010 = vmatprep.subr.mxu0 0.0
      %2011 = vmatpush1.xpose.msra.mxu0 0.0
      %2012 = vmatprep.mubr.f32.mxu0 0.0
      %2013 = vmatmul.mubr.f32.gmra.mrb[0].mxu0 %v1946
      %v2014 = vpop.f32.mrb[0].mxu0
      %v2015 = vadd.f32 0.0, %v2014
      %v2016 = vpop.f32.mrb[0].mxu0
      %2017 = vdwg.mxu0
      %v2018 = vmul.f32 %v2015, %v1763
      %v2019 = vsel %vm1443, %v2018, -inf
      %2020 = vmax.xlane.f32.xlu0 %v2019
      %v2021 = vpop.xlane.xlu0 %2020
      %v2022 = vrot.slane %v2019, 4
      %v2023 = vmax.f32 %v2019, %v2022
      %v2024 = vrot.slane %v2023, 2
      %v2025 = vmax.f32 %v2023, %v2024
      %v2026 = vrot.slane %v2025, 1
      %v2027 = vmax.f32 %v2025, %v2026
      %v2028 = vlaneseq
      %v2029 = vshrl.u32 %v2028, 7
      %v2030 = vsub.s32 3, %v2029
      %v2031 = vrot.slane %v457, %v2030
      %v2032 = vmul.f32 %v445, %v2031
      %v2034 = vsel %vm467, %v2032, 0
      %2036 = vmatprep.subr.mxu0 0.0
      %2037 = vmatpush1.xpose.msra.mxu0 %v1370
      %2038 = vmatprep.subr.mxu0 0.0
      %2039 = vmatpush1.xpose.msra.mxu0 0.0
      %2040 = vmatprep.subr.mxu0 0.0
      %2041 = vmatpush1.xpose.msra.mxu0 0.0
      %2042 = vmatprep.subr.mxu0 0.0
      %2043 = vmatpush1.xpose.msra.mxu0 0.0
      %2044 = vmatprep.subr.mxu0 0.0
      %2045 = vmatpush1.xpose.msra.mxu0 0.0
      %2046 = vmatprep.subr.mxu0 0.0
      %2047 = vmatpush1.xpose.msra.mxu0 0.0
      %2048 = vmatprep.subr.mxu0 0.0
      %2049 = vmatpush1.xpose.msra.mxu0 0.0
      %2050 = vmatprep.subr.mxu0 0.0
      %2051 = vmatpush1.xpose.msra.mxu0 0.0
      %2052 = vmatprep.subr.mxu0 0.0
      %2053 = vmatpush1.xpose.msra.mxu0 0.0
      %2054 = vmatprep.subr.mxu0 0.0
      %2055 = vmatpush1.xpose.msra.mxu0 0.0
      %2056 = vmatprep.subr.mxu0 0.0
      %2057 = vmatpush1.xpose.msra.mxu0 0.0
      %2058 = vmatprep.subr.mxu0 0.0
      %2059 = vmatpush1.xpose.msra.mxu0 0.0
      %2060 = vmatprep.subr.mxu0 0.0
      %2061 = vmatpush1.xpose.msra.mxu0 0.0
      %2062 = vmatprep.subr.mxu0 0.0
      %2063 = vmatpush1.xpose.msra.mxu0 0.0
      %2064 = vmatprep.subr.mxu0 0.0
      %2065 = vmatpush1.xpose.msra.mxu0 0.0
      %2066 = vmatprep.subr.mxu0 0.0
      %2067 = vmatpush1.xpose.msra.mxu0 0.0
      %2068 = vmatprep.subr.mxu0 0.0
      %2069 = vmatpush1.xpose.msra.mxu0 0.0
      %2070 = vmatprep.subr.mxu0 0.0
      %2071 = vmatpush1.xpose.msra.mxu0 0.0
      %2072 = vmatprep.subr.mxu0 0.0
      %2073 = vmatpush1.xpose.msra.mxu0 0.0
      %2074 = vmatprep.subr.mxu0 0.0
      %2075 = vmatpush1.xpose.msra.mxu0 0.0
      %2076 = vmatprep.subr.mxu0 0.0
      %2077 = vmatpush1.xpose.msra.mxu0 0.0
      %2078 = vmatprep.subr.mxu0 0.0
      %2079 = vmatpush1.xpose.msra.mxu0 0.0
      %2080 = vmatprep.subr.mxu0 0.0
      %2081 = vmatpush1.xpose.msra.mxu0 0.0
      %2082 = vmatprep.subr.mxu0 0.0
      %2083 = vmatpush1.xpose.msra.mxu0 0.0
      %2084 = vmatprep.subr.mxu0 0.0
      %2085 = vmatpush1.xpose.msra.mxu0 0.0
      %2086 = vmatprep.subr.mxu0 0.0
      %2087 = vmatpush1.xpose.msra.mxu0 0.0
      %2088 = vmatprep.subr.mxu0 0.0
      %2089 = vmatpush1.xpose.msra.mxu0 0.0
      %2090 = vmatprep.subr.mxu0 0.0
      %2091 = vmatpush1.xpose.msra.mxu0 0.0
      %2092 = vmatprep.subr.mxu0 0.0
      %2093 = vmatpush1.xpose.msra.mxu0 0.0
      %2094 = vmatprep.subr.mxu0 0.0
      %2095 = vmatpush1.xpose.msra.mxu0 0.0
      %2096 = vmatprep.subr.mxu0 0.0
      %2097 = vmatpush1.xpose.msra.mxu0 0.0
      %2098 = vmatprep.subr.mxu0 0.0
      %2099 = vmatpush1.xpose.msra.mxu0 0.0
      %2100 = vmatprep.mubr.f32.mxu0 0.0
      %2101 = vmatmul.mubr.f32.gmra.mrb[0].mxu0 %v2034
      %v2102 = vpop.f32.mrb[0].mxu0
      %v2103 = vadd.f32 0.0, %v2102
      %v2104 = vpop.f32.mrb[0].mxu0
      %2105 = vdwg.mxu0
      %v2106 = vmul.f32 %v2103, %v1763
      %v2107 = vsel %vm1443, %v2106, -inf
      %2108 = vmax.xlane.f32.xlu0 %v2107
      %v2109 = vpop.xlane.xlu0 %2108
      %v2110 = vrot.slane %v2107, 4
      %v2111 = vmax.f32 %v2107, %v2110
      %v2112 = vrot.slane %v2111, 2
      %v2113 = vmax.f32 %v2111, %v2112
      %v2114 = vrot.slane %v2113, 1
      %v2115 = vmax.f32 %v2113, %v2114
      %v2116 = vsel %vm1717, %v1845, %v1933
      %v2117 = vsel %vm1719, %v2116, %v2021
      %v2118 = vsel %vm1721, %v2117, %v2109
      %v2119 = vsel %vm1723, %v1851, %v1939
      %v2120 = vsel %vm1725, %v2119, %v2027
      %v2121 = vsel %vm1727, %v2120, %v2115
      %2122 = vxpose.xlu0.b32.start [1/16] %v2121, 128
      %2123 = vxpose.xlu0.b32.cont [2/16] 0.0, 128
      %2124 = vxpose.xlu0.b32.cont [3/16] 0.0, 128
      %2125 = vxpose.xlu0.b32.cont [4/16] 0.0, 128
      %2126 = vxpose.xlu0.b32.cont [5/16] 0.0, 128
      %2127 = vxpose.xlu0.b32.cont [6/16] 0.0, 128
      %2128 = vxpose.xlu0.b32.cont [7/16] 0.0, 128
      %2129 = vxpose.xlu0.b32.cont [8/16] 0.0, 128
      %2130 = vxpose.xlu0.b32.cont [9/16] 0.0, 128
      %2131 = vxpose.xlu0.b32.cont [10/16] 0.0, 128
      %2132 = vxpose.xlu0.b32.cont [11/16] 0.0, 128
      %2133 = vxpose.xlu0.b32.cont [12/16] 0.0, 128
      %2134 = vxpose.xlu0.b32.cont [13/16] 0.0, 128
      %2135 = vxpose.xlu0.b32.cont [14/16] 0.0, 128
      %2136 = vxpose.xlu0.b32.cont [15/16] 0.0, 128
      %2137 = vxpose.xlu0.b32.end [16/16] 0.0, 128
      %v2138 = vpop.trf.xlu0
      %v2139 = vpop.trf.xlu0
      %v2140 = vpop.trf.xlu0
      %v2141 = vpop.trf.xlu0
      %v2142 = vpop.trf.xlu0
      %v2143 = vpop.trf.xlu0
      %v2144 = vpop.trf.xlu0
      %v2145 = vpop.trf.xlu0
      %v2146 = vpop.trf.xlu0
      %v2147 = vpop.trf.xlu0
      %v2148 = vpop.trf.xlu0
      %v2149 = vpop.trf.xlu0
      %v2150 = vpop.trf.xlu0
      %v2151 = vpop.trf.xlu0
      %v2152 = vpop.trf.xlu0
      %v2153 = vpop.trf.xlu0
      %v2155 = vsel %vm467, %v444, 0
      %v2158 = vsel %vm467, %v446, 0
      %2160 = vmatprep.subr.mxu0 0.0
      %2161 = vmatpush1.xpose.msra.mxu0 %v2158
      %2162 = vmatprep.subr.mxu0 0.0
      %2163 = vmatpush1.xpose.msra.mxu0 0.0
      %2164 = vmatprep.subr.mxu0 0.0
      %2165 = vmatpush1.xpose.msra.mxu0 0.0
      %2166 = vmatprep.subr.mxu0 0.0
      %2167 = vmatpush1.xpose.msra.mxu0 0.0
      %2168 = vmatprep.subr.mxu0 0.0
      %2169 = vmatpush1.xpose.msra.mxu0 0.0
      %2170 = vmatprep.subr.mxu0 0.0
      %2171 = vmatpush1.xpose.msra.mxu0 0.0
      %2172 = vmatprep.subr.mxu0 0.0
      %2173 = vmatpush1.xpose.msra.mxu0 0.0
      %2174 = vmatprep.subr.mxu0 0.0
      %2175 = vmatpush1.xpose.msra.mxu0 0.0
      %2176 = vmatprep.subr.mxu0 0.0
      %2177 = vmatpush1.xpose.msra.mxu0 0.0
      %2178 = vmatprep.subr.mxu0 0.0
      %2179 = vmatpush1.xpose.msra.mxu0 0.0
      %2180 = vmatprep.subr.mxu0 0.0
      %2181 = vmatpush1.xpose.msra.mxu0 0.0
      %2182 = vmatprep.subr.mxu0 0.0
      %2183 = vmatpush1.xpose.msra.mxu0 0.0
      %2184 = vmatprep.subr.mxu0 0.0
      %2185 = vmatpush1.xpose.msra.mxu0 0.0
      %2186 = vmatprep.subr.mxu0 0.0
      %2187 = vmatpush1.xpose.msra.mxu0 0.0
      %2188 = vmatprep.subr.mxu0 0.0
      %2189 = vmatpush1.xpose.msra.mxu0 0.0
      %2190 = vmatprep.subr.mxu0 0.0
      %2191 = vmatpush1.xpose.msra.mxu0 0.0
      %2192 = vmatprep.subr.mxu0 0.0
      %2193 = vmatpush1.xpose.msra.mxu0 0.0
      %2194 = vmatprep.subr.mxu0 0.0
      %2195 = vmatpush1.xpose.msra.mxu0 0.0
      %2196 = vmatprep.subr.mxu0 0.0
      %2197 = vmatpush1.xpose.msra.mxu0 0.0
      %2198 = vmatprep.subr.mxu0 0.0
      %2199 = vmatpush1.xpose.msra.mxu0 0.0
      %2200 = vmatprep.subr.mxu0 0.0
      %2201 = vmatpush1.xpose.msra.mxu0 0.0
      %2202 = vmatprep.subr.mxu0 0.0
      %2203 = vmatpush1.xpose.msra.mxu0 0.0
      %2204 = vmatprep.subr.mxu0 0.0
      %2205 = vmatpush1.xpose.msra.mxu0 0.0
      %2206 = vmatprep.subr.mxu0 0.0
      %2207 = vmatpush1.xpose.msra.mxu0 0.0
      %2208 = vmatprep.subr.mxu0 0.0
      %2209 = vmatpush1.xpose.msra.mxu0 0.0
      %2210 = vmatprep.subr.mxu0 0.0
      %2211 = vmatpush1.xpose.msra.mxu0 0.0
      %2212 = vmatprep.subr.mxu0 0.0
      %2213 = vmatpush1.xpose.msra.mxu0 0.0
      %2214 = vmatprep.subr.mxu0 0.0
      %2215 = vmatpush1.xpose.msra.mxu0 0.0
      %2216 = vmatprep.subr.mxu0 0.0
      %2217 = vmatpush1.xpose.msra.mxu0 0.0
      %2218 = vmatprep.subr.mxu0 0.0
      %2219 = vmatpush1.xpose.msra.mxu0 0.0
      %2220 = vmatprep.subr.mxu0 0.0
      %2221 = vmatpush1.xpose.msra.mxu0 0.0
      %2222 = vmatprep.subr.mxu0 0.0
      %2223 = vmatpush1.xpose.msra.mxu0 0.0
      %2224 = vmatprep.mubr.f32.mxu0 0.0
      %2225 = vmatmul.mubr.f32.gmra.mrb[0].mxu0 %v2155
      %v2226 = vpop.f32.mrb[0].mxu0
      %v2227 = vadd.f32 0.0, %v2226
      %v2228 = vpop.f32.mrb[0].mxu0
      %2229 = vdwg.mxu0
      %v2231 = vlaneseq
      %v2232 = vshrl.u32 %v2231, 7
      %v2233 = vsub.s32 %v1339, %v2232
      %v2234 = vrot.slane %v499, %v2233
      %v2235 = vsel %vm1345, %v2234, %v2234
      %v2236 = vsel %vm1347, %v2234, %v2235
      %v2237 = vsel %vm1349, %v2234, %v2236
      %v2238 = vsel %vm1351, %v2234, %v2237
      %v2239 = vsel %vm1353, %v2234, %v2238
      %v2240 = vsel %vm1355, %v2234, %v2239
      %v2242 = vmul.f32 %v477, %v2240
      %v2243 = vrcp.pop %v2242
      %v2244 = vmul.f32 %v2227, %v2243
      %v2246 = vsel %vm467, %v445, 0
      %2248 = vmatprep.subr.mxu0 0.0
      %2249 = vmatpush1.xpose.msra.mxu0 %v1370
      %2250 = vmatprep.subr.mxu0 0.0
      %2251 = vmatpush1.xpose.msra.mxu0 0.0
      %2252 = vmatprep.subr.mxu0 0.0
      %2253 = vmatpush1.xpose.msra.mxu0 0.0
      %2254 = vmatprep.subr.mxu0 0.0
      %2255 = vmatpush1.xpose.msra.mxu0 0.0
      %2256 = vmatprep.subr.mxu0 0.0
      %2257 = vmatpush1.xpose.msra.mxu0 0.0
      %2258 = vmatprep.subr.mxu0 0.0
      %2259 = vmatpush1.xpose.msra.mxu0 0.0
      %2260 = vmatprep.subr.mxu0 0.0
      %2261 = vmatpush1.xpose.msra.mxu0 0.0
      %2262 = vmatprep.subr.mxu0 0.0
      %2263 = vmatpush1.xpose.msra.mxu0 0.0
      %2264 = vmatprep.subr.mxu0 0.0
      %2265 = vmatpush1.xpose.msra.mxu0 0.0
      %2266 = vmatprep.subr.mxu0 0.0
      %2267 = vmatpush1.xpose.msra.mxu0 0.0
      %2268 = vmatprep.subr.mxu0 0.0
      %2269 = vmatpush1.xpose.msra.mxu0 0.0
      %2270 = vmatprep.subr.mxu0 0.0
      %2271 = vmatpush1.xpose.msra.mxu0 0.0
      %2272 = vmatprep.subr.mxu0 0.0
      %2273 = vmatpush1.xpose.msra.mxu0 0.0
      %2274 = vmatprep.subr.mxu0 0.0
      %2275 = vmatpush1.xpose.msra.mxu0 0.0
      %2276 = vmatprep.subr.mxu0 0.0
      %2277 = vmatpush1.xpose.msra.mxu0 0.0
      %2278 = vmatprep.subr.mxu0 0.0
      %2279 = vmatpush1.xpose.msra.mxu0 0.0
      %2280 = vmatprep.subr.mxu0 0.0
      %2281 = vmatpush1.xpose.msra.mxu0 0.0
      %2282 = vmatprep.subr.mxu0 0.0
      %2283 = vmatpush1.xpose.msra.mxu0 0.0
      %2284 = vmatprep.subr.mxu0 0.0
      %2285 = vmatpush1.xpose.msra.mxu0 0.0
      %2286 = vmatprep.subr.mxu0 0.0
      %2287 = vmatpush1.xpose.msra.mxu0 0.0
      %2288 = vmatprep.subr.mxu0 0.0
      %2289 = vmatpush1.xpose.msra.mxu0 0.0
      %2290 = vmatprep.subr.mxu0 0.0
      %2291 = vmatpush1.xpose.msra.mxu0 0.0
      %2292 = vmatprep.subr.mxu0 0.0
      %2293 = vmatpush1.xpose.msra.mxu0 0.0
      %2294 = vmatprep.subr.mxu0 0.0
      %2295 = vmatpush1.xpose.msra.mxu0 0.0
      %2296 = vmatprep.subr.mxu0 0.0
      %2297 = vmatpush1.xpose.msra.mxu0 0.0
      %2298 = vmatprep.subr.mxu0 0.0
      %2299 = vmatpush1.xpose.msra.mxu0 0.0
      %2300 = vmatprep.subr.mxu0 0.0
      %2301 = vmatpush1.xpose.msra.mxu0 0.0
      %2302 = vmatprep.subr.mxu0 0.0
      %2303 = vmatpush1.xpose.msra.mxu0 0.0
      %2304 = vmatprep.subr.mxu0 0.0
      %2305 = vmatpush1.xpose.msra.mxu0 0.0
      %2306 = vmatprep.subr.mxu0 0.0
      %2307 = vmatpush1.xpose.msra.mxu0 0.0
      %2308 = vmatprep.subr.mxu0 0.0
      %2309 = vmatpush1.xpose.msra.mxu0 0.0
      %2310 = vmatprep.subr.mxu0 0.0
      %2311 = vmatpush1.xpose.msra.mxu0 0.0
      %2312 = vmatprep.mubr.f32.mxu0 0.0
      %2313 = vmatmul.mubr.f32.gmra.mrb[0].mxu0 %v2246
      %v2314 = vpop.f32.mrb[0].mxu0
      %v2315 = vadd.f32 0.0, %v2314
      %v2316 = vpop.f32.mrb[0].mxu0
      %2317 = vdwg.mxu0
      %v2318 = vmul.f32 %v2315, %v1762
      %2319 = vxpose.xlu0.b32.start [1/16] %v2244, 128
      %2320 = vxpose.xlu0.b32.cont [2/16] 0.0, 128
      %2321 = vxpose.xlu0.b32.cont [3/16] 0.0, 128
      %2322 = vxpose.xlu0.b32.cont [4/16] 0.0, 128
      %2323 = vxpose.xlu0.b32.cont [5/16] 0.0, 128
      %2324 = vxpose.xlu0.b32.cont [6/16] 0.0, 128
      %2325 = vxpose.xlu0.b32.cont [7/16] 0.0, 128
      %2326 = vxpose.xlu0.b32.cont [8/16] 0.0, 128
      %2327 = vxpose.xlu0.b32.cont [9/16] 0.0, 128
      %2328 = vxpose.xlu0.b32.cont [10/16] 0.0, 128
      %2329 = vxpose.xlu0.b32.cont [11/16] 0.0, 128
      %2330 = vxpose.xlu0.b32.cont [12/16] 0.0, 128
      %2331 = vxpose.xlu0.b32.cont [13/16] 0.0, 128
      %2332 = vxpose.xlu0.b32.cont [14/16] 0.0, 128
      %2333 = vxpose.xlu0.b32.cont [15/16] 0.0, 128
      %2334 = vxpose.xlu0.b32.end [16/16] 0.0, 128
      %v2335 = vpop.trf.xlu0
      %v2336 = vpop.trf.xlu0
      %v2337 = vpop.trf.xlu0
      %v2338 = vpop.trf.xlu0
      %v2339 = vpop.trf.xlu0
      %v2340 = vpop.trf.xlu0
      %v2341 = vpop.trf.xlu0
      %v2342 = vpop.trf.xlu0
      %v2343 = vpop.trf.xlu0
      %v2344 = vpop.trf.xlu0
      %v2345 = vpop.trf.xlu0
      %v2346 = vpop.trf.xlu0
      %v2347 = vpop.trf.xlu0
      %v2348 = vpop.trf.xlu0
      %v2349 = vpop.trf.xlu0
      %v2350 = vpop.trf.xlu0
      %v2352 = vsel %vm1443, %v2335, 0
      %2354 = vmatprep.subr.mxu0 0.0
      %2355 = vmatpush1.msra.mxu0 %v444
      %2356 = vmatprep.subr.mxu0 0.0
      %2357 = vmatpush1.msra.mxu0 0.0
      %2358 = vmatprep.subr.mxu0 0.0
      %2359 = vmatpush1.msra.mxu0 0.0
      %2360 = vmatprep.subr.mxu0 0.0
      %2361 = vmatpush1.msra.mxu0 0.0
      %2362 = vmatprep.subr.mxu0 0.0
      %2363 = vmatpush1.msra.mxu0 0.0
      %2364 = vmatprep.subr.mxu0 0.0
      %2365 = vmatpush1.msra.mxu0 0.0
      %2366 = vmatprep.subr.mxu0 0.0
      %2367 = vmatpush1.msra.mxu0 0.0
      %2368 = vmatprep.subr.mxu0 0.0
      %2369 = vmatpush1.msra.mxu0 0.0
      %2370 = vmatprep.subr.mxu0 0.0
      %2371 = vmatpush1.msra.mxu0 0.0
      %2372 = vmatprep.subr.mxu0 0.0
      %2373 = vmatpush1.msra.mxu0 0.0
      %2374 = vmatprep.subr.mxu0 0.0
      %2375 = vmatpush1.msra.mxu0 0.0
      %2376 = vmatprep.subr.mxu0 0.0
      %2377 = vmatpush1.msra.mxu0 0.0
      %2378 = vmatprep.subr.mxu0 0.0
      %2379 = vmatpush1.msra.mxu0 0.0
      %2380 = vmatprep.subr.mxu0 0.0
      %2381 = vmatpush1.msra.mxu0 0.0
      %2382 = vmatprep.subr.mxu0 0.0
      %2383 = vmatpush1.msra.mxu0 0.0
      %2384 = vmatprep.subr.mxu0 0.0
      %2385 = vmatpush1.msra.mxu0 0.0
      %2386 = vmatprep.subr.mxu0 0.0
      %2387 = vmatpush1.msra.mxu0 0.0
      %2388 = vmatprep.subr.mxu0 0.0
      %2389 = vmatpush1.msra.mxu0 0.0
      %2390 = vmatprep.subr.mxu0 0.0
      %2391 = vmatpush1.msra.mxu0 0.0
      %2392 = vmatprep.subr.mxu0 0.0
      %2393 = vmatpush1.msra.mxu0 0.0
      %2394 = vmatprep.subr.mxu0 0.0
      %2395 = vmatpush1.msra.mxu0 0.0
      %2396 = vmatprep.subr.mxu0 0.0
      %2397 = vmatpush1.msra.mxu0 0.0
      %2398 = vmatprep.subr.mxu0 0.0
      %2399 = vmatpush1.msra.mxu0 0.0
      %2400 = vmatprep.subr.mxu0 0.0
      %2401 = vmatpush1.msra.mxu0 0.0
      %2402 = vmatprep.subr.mxu0 0.0
      %2403 = vmatpush1.msra.mxu0 0.0
      %2404 = vmatprep.subr.mxu0 0.0
      %2405 = vmatpush1.msra.mxu0 0.0
      %2406 = vmatprep.subr.mxu0 0.0
      %2407 = vmatpush1.msra.mxu0 0.0
      %2408 = vmatprep.subr.mxu0 0.0
      %2409 = vmatpush1.msra.mxu0 0.0
      %2410 = vmatprep.subr.mxu0 0.0
      %2411 = vmatpush1.msra.mxu0 0.0
      %2412 = vmatprep.subr.mxu0 0.0
      %2413 = vmatpush1.msra.mxu0 0.0
      %2414 = vmatprep.subr.mxu0 0.0
      %2415 = vmatpush1.msra.mxu0 0.0
      %2416 = vmatprep.subr.mxu0 0.0
      %2417 = vmatpush1.msra.mxu0 0.0
      %2418 = vmatprep.mubr.f32.mxu0 0.0
      %2419 = vmatmul.mubr.f32.gmra.mrb[0].mxu0 %v2352
      %v2420 = vpop.f32.mrb[0].mxu0
      %v2421 = vadd.f32 0.0, %v2420
      %v2422 = vpop.f32.mrb[0].mxu0
      %2423 = vdwg.mxu0
      %v2424 = vsel %vm1443, %v2244, 0.0
      %v2425 = vrot.slane %v2424, 4
      %v2426 = vadd.f32 %v2424, %v2425
      %v2427 = vrot.slane %v2426, 2
      %v2428 = vadd.f32 %v2426, %v2427
      %v2429 = vrot.slane %v2428, 1
      %v2430 = vadd.f32 %v2428, %v2429
      %2432 = vbcast.lane.b32.xlu0 %v2430, 256
      %v2433 = vpop.permute.xlu0 %2432
      %v2434 = vrcp.pop %v2433
      %v2435 = vmul.f32 %v2421, %v2434
      %2436 = vxpose.xlu0.b32.start [1/16] %v2318, 128
      %2437 = vxpose.xlu0.b32.cont [2/16] 0.0, 128
      %2438 = vxpose.xlu0.b32.cont [3/16] 0.0, 128
      %2439 = vxpose.xlu0.b32.cont [4/16] 0.0, 128
      %2440 = vxpose.xlu0.b32.cont [5/16] 0.0, 128
      %2441 = vxpose.xlu0.b32.cont [6/16] 0.0, 128
      %2442 = vxpose.xlu0.b32.cont [7/16] 0.0, 128
      %2443 = vxpose.xlu0.b32.cont [8/16] 0.0, 128
      %2444 = vxpose.xlu0.b32.cont [9/16] 0.0, 128
      %2445 = vxpose.xlu0.b32.cont [10/16] 0.0, 128
      %2446 = vxpose.xlu0.b32.cont [11/16] 0.0, 128
      %2447 = vxpose.xlu0.b32.cont [12/16] 0.0, 128
      %2448 = vxpose.xlu0.b32.cont [13/16] 0.0, 128
      %2449 = vxpose.xlu0.b32.cont [14/16] 0.0, 128
      %2450 = vxpose.xlu0.b32.cont [15/16] 0.0, 128
      %2451 = vxpose.xlu0.b32.end [16/16] 0.0, 128
      %v2452 = vpop.trf.xlu0
      %v2453 = vpop.trf.xlu0
      %v2454 = vpop.trf.xlu0
      %v2455 = vpop.trf.xlu0
      %v2456 = vpop.trf.xlu0
      %v2457 = vpop.trf.xlu0
      %v2458 = vpop.trf.xlu0
      %v2459 = vpop.trf.xlu0
      %v2460 = vpop.trf.xlu0
      %v2461 = vpop.trf.xlu0
      %v2462 = vpop.trf.xlu0
      %v2463 = vpop.trf.xlu0
      %v2464 = vpop.trf.xlu0
      %v2465 = vpop.trf.xlu0
      %v2466 = vpop.trf.xlu0
      %v2467 = vpop.trf.xlu0
      %v2469 = vsel %vm1443, %v2452, 0
      %2471 = vmatprep.subr.mxu0 0.0
      %2472 = vmatpush1.msra.mxu0 %v444
      %2473 = vmatprep.subr.mxu0 0.0
      %2474 = vmatpush1.msra.mxu0 0.0
      %2475 = vmatprep.subr.mxu0 0.0
      %2476 = vmatpush1.msra.mxu0 0.0
      %2477 = vmatprep.subr.mxu0 0.0
      %2478 = vmatpush1.msra.mxu0 0.0
      %2479 = vmatprep.subr.mxu0 0.0
      %2480 = vmatpush1.msra.mxu0 0.0
      %2481 = vmatprep.subr.mxu0 0.0
      %2482 = vmatpush1.msra.mxu0 0.0
      %2483 = vmatprep.subr.mxu0 0.0
      %2484 = vmatpush1.msra.mxu0 0.0
      %2485 = vmatprep.subr.mxu0 0.0
      %2486 = vmatpush1.msra.mxu0 0.0
      %2487 = vmatprep.subr.mxu0 0.0
      %2488 = vmatpush1.msra.mxu0 0.0
      %2489 = vmatprep.subr.mxu0 0.0
      %2490 = vmatpush1.msra.mxu0 0.0
      %2491 = vmatprep.subr.mxu0 0.0
      %2492 = vmatpush1.msra.mxu0 0.0
      %2493 = vmatprep.subr.mxu0 0.0
      %2494 = vmatpush1.msra.mxu0 0.0
      %2495 = vmatprep.subr.mxu0 0.0
      %2496 = vmatpush1.msra.mxu0 0.0
      %2497 = vmatprep.subr.mxu0 0.0
      %2498 = vmatpush1.msra.mxu0 0.0
      %2499 = vmatprep.subr.mxu0 0.0
      %2500 = vmatpush1.msra.mxu0 0.0
      %2501 = vmatprep.subr.mxu0 0.0
      %2502 = vmatpush1.msra.mxu0 0.0
      %2503 = vmatprep.subr.mxu0 0.0
      %2504 = vmatpush1.msra.mxu0 0.0
      %2505 = vmatprep.subr.mxu0 0.0
      %2506 = vmatpush1.msra.mxu0 0.0
      %2507 = vmatprep.subr.mxu0 0.0
      %2508 = vmatpush1.msra.mxu0 0.0
      %2509 = vmatprep.subr.mxu0 0.0
      %2510 = vmatpush1.msra.mxu0 0.0
      %2511 = vmatprep.subr.mxu0 0.0
      %2512 = vmatpush1.msra.mxu0 0.0
      %2513 = vmatprep.subr.mxu0 0.0
      %2514 = vmatpush1.msra.mxu0 0.0
      %2515 = vmatprep.subr.mxu0 0.0
      %2516 = vmatpush1.msra.mxu0 0.0
      %2517 = vmatprep.subr.mxu0 0.0
      %2518 = vmatpush1.msra.mxu0 0.0
      %2519 = vmatprep.subr.mxu0 0.0
      %2520 = vmatpush1.msra.mxu0 0.0
      %2521 = vmatprep.subr.mxu0 0.0
      %2522 = vmatpush1.msra.mxu0 0.0
      %2523 = vmatprep.subr.mxu0 0.0
      %2524 = vmatpush1.msra.mxu0 0.0
      %2525 = vmatprep.subr.mxu0 0.0
      %2526 = vmatpush1.msra.mxu0 0.0
      %2527 = vmatprep.subr.mxu0 0.0
      %2528 = vmatpush1.msra.mxu0 0.0
      %2529 = vmatprep.subr.mxu0 0.0
      %2530 = vmatpush1.msra.mxu0 0.0
      %2531 = vmatprep.subr.mxu0 0.0
      %2532 = vmatpush1.msra.mxu0 0.0
      %2533 = vmatprep.subr.mxu0 0.0
      %2534 = vmatpush1.msra.mxu0 0.0
      %2535 = vmatprep.mubr.f32.mxu0 0.0
      %2536 = vmatmul.mubr.f32.gmra.mrb[0].mxu0 %v2469
      %v2537 = vpop.f32.mrb[0].mxu0
      %v2538 = vadd.f32 0.0, %v2537
      %v2539 = vpop.f32.mrb[0].mxu0
      %2540 = vdwg.mxu0
      %v2541 = vsel %vm1443, %v2318, 0.0
      %v2542 = vrot.slane %v2541, 4
      %v2543 = vadd.f32 %v2541, %v2542
      %v2544 = vrot.slane %v2543, 2
      %v2545 = vadd.f32 %v2543, %v2544
      %v2546 = vrot.slane %v2545, 1
      %v2547 = vadd.f32 %v2545, %v2546
      %2549 = vbcast.lane.b32.xlu0 %v2547, 256
      %v2550 = vpop.permute.xlu0 %2549
      %v2551 = vrcp.pop %v2550
      %v2552 = vmul.f32 %v2538, %v2551
      %v2554 = vsel %vm1443, %v2244, 0
      %2556 = vmatprep.subr.mxu0 0.0
      %2557 = vmatpush1.msra.mxu0 %v446
      %2558 = vmatprep.subr.mxu0 0.0
      %2559 = vmatpush1.msra.mxu0 0.0
      %2560 = vmatprep.subr.mxu0 0.0
      %2561 = vmatpush1.msra.mxu0 0.0
      %2562 = vmatprep.subr.mxu0 0.0
      %2563 = vmatpush1.msra.mxu0 0.0
      %2564 = vmatprep.subr.mxu0 0.0
      %2565 = vmatpush1.msra.mxu0 0.0
      %2566 = vmatprep.subr.mxu0 0.0
      %2567 = vmatpush1.msra.mxu0 0.0
      %2568 = vmatprep.subr.mxu0 0.0
      %2569 = vmatpush1.msra.mxu0 0.0
      %2570 = vmatprep.subr.mxu0 0.0
      %2571 = vmatpush1.msra.mxu0 0.0
      %2572 = vmatprep.subr.mxu0 0.0
      %2573 = vmatpush1.msra.mxu0 0.0
      %2574 = vmatprep.subr.mxu0 0.0
      %2575 = vmatpush1.msra.mxu0 0.0
      %2576 = vmatprep.subr.mxu0 0.0
      %2577 = vmatpush1.msra.mxu0 0.0
      %2578 = vmatprep.subr.mxu0 0.0
      %2579 = vmatpush1.msra.mxu0 0.0
      %2580 = vmatprep.subr.mxu0 0.0
      %2581 = vmatpush1.msra.mxu0 0.0
      %2582 = vmatprep.subr.mxu0 0.0
      %2583 = vmatpush1.msra.mxu0 0.0
      %2584 = vmatprep.subr.mxu0 0.0
      %2585 = vmatpush1.msra.mxu0 0.0
      %2586 = vmatprep.subr.mxu0 0.0
      %2587 = vmatpush1.msra.mxu0 0.0
      %2588 = vmatprep.subr.mxu0 0.0
      %2589 = vmatpush1.msra.mxu0 0.0
      %2590 = vmatprep.subr.mxu0 0.0
      %2591 = vmatpush1.msra.mxu0 0.0
      %2592 = vmatprep.subr.mxu0 0.0
      %2593 = vmatpush1.msra.mxu0 0.0
      %2594 = vmatprep.subr.mxu0 0.0
      %2595 = vmatpush1.msra.mxu0 0.0
      %2596 = vmatprep.subr.mxu0 0.0
      %2597 = vmatpush1.msra.mxu0 0.0
      %2598 = vmatprep.subr.mxu0 0.0
      %2599 = vmatpush1.msra.mxu0 0.0
      %2600 = vmatprep.subr.mxu0 0.0
      %2601 = vmatpush1.msra.mxu0 0.0
      %2602 = vmatprep.subr.mxu0 0.0
      %2603 = vmatpush1.msra.mxu0 0.0
      %2604 = vmatprep.subr.mxu0 0.0
      %2605 = vmatpush1.msra.mxu0 0.0
      %2606 = vmatprep.subr.mxu0 0.0
      %2607 = vmatpush1.msra.mxu0 0.0
      %2608 = vmatprep.subr.mxu0 0.0
      %2609 = vmatpush1.msra.mxu0 0.0
      %2610 = vmatprep.subr.mxu0 0.0
      %2611 = vmatpush1.msra.mxu0 0.0
      %2612 = vmatprep.subr.mxu0 0.0
      %2613 = vmatpush1.msra.mxu0 0.0
      %2614 = vmatprep.subr.mxu0 0.0
      %2615 = vmatpush1.msra.mxu0 0.0
      %2616 = vmatprep.subr.mxu0 0.0
      %2617 = vmatpush1.msra.mxu0 0.0
      %2618 = vmatprep.subr.mxu0 0.0
      %2619 = vmatpush1.msra.mxu0 0.0
      %2620 = vmatprep.mubr.f32.mxu0 0.0
      %2621 = vmatmul.mubr.f32.gmra.mrb[0].mxu0 %v2554
      %v2622 = vpop.f32.mrb[0].mxu0
      %v2623 = vadd.f32 0.0, %v2622
      %v2624 = vpop.f32.mrb[0].mxu0
      %2625 = vdwg.mxu0
      %2626 = vadd.xlane.f32.xlu0 %v2424
      %v2627 = vpop.xlane.xlu0 %2626
      %v2628 = vrcp.pop %v2627
      %v2629 = vmul.f32 %v2623, %v2628
      %v2631 = vsel %vm1443, %v2318, 0
      %2633 = vmatprep.subr.mxu0 0.0
      %2634 = vmatpush1.msra.mxu0 %v446
      %2635 = vmatprep.subr.mxu0 0.0
      %2636 = vmatpush1.msra.mxu0 0.0
      %2637 = vmatprep.subr.mxu0 0.0
      %2638 = vmatpush1.msra.mxu0 0.0
      %2639 = vmatprep.subr.mxu0 0.0
      %2640 = vmatpush1.msra.mxu0 0.0
      %2641 = vmatprep.subr.mxu0 0.0
      %2642 = vmatpush1.msra.mxu0 0.0
      %2643 = vmatprep.subr.mxu0 0.0
      %2644 = vmatpush1.msra.mxu0 0.0
      %2645 = vmatprep.subr.mxu0 0.0
      %2646 = vmatpush1.msra.mxu0 0.0
      %2647 = vmatprep.subr.mxu0 0.0
      %2648 = vmatpush1.msra.mxu0 0.0
      %2649 = vmatprep.subr.mxu0 0.0
      %2650 = vmatpush1.msra.mxu0 0.0
      %2651 = vmatprep.subr.mxu0 0.0
      %2652 = vmatpush1.msra.mxu0 0.0
      %2653 = vmatprep.subr.mxu0 0.0
      %2654 = vmatpush1.msra.mxu0 0.0
      %2655 = vmatprep.subr.mxu0 0.0
      %2656 = vmatpush1.msra.mxu0 0.0
      %2657 = vmatprep.subr.mxu0 0.0
      %2658 = vmatpush1.msra.mxu0 0.0
      %2659 = vmatprep.subr.mxu0 0.0
      %2660 = vmatpush1.msra.mxu0 0.0
      %2661 = vmatprep.subr.mxu0 0.0
      %2662 = vmatpush1.msra.mxu0 0.0
      %2663 = vmatprep.subr.mxu0 0.0
      %2664 = vmatpush1.msra.mxu0 0.0
      %2665 = vmatprep.subr.mxu0 0.0
      %2666 = vmatpush1.msra.mxu0 0.0
      %2667 = vmatprep.subr.mxu0 0.0
      %2668 = vmatpush1.msra.mxu0 0.0
      %2669 = vmatprep.subr.mxu0 0.0
      %2670 = vmatpush1.msra.mxu0 0.0
      %2671 = vmatprep.subr.mxu0 0.0
      %2672 = vmatpush1.msra.mxu0 0.0
      %2673 = vmatprep.subr.mxu0 0.0
      %2674 = vmatpush1.msra.mxu0 0.0
      %2675 = vmatprep.subr.mxu0 0.0
      %2676 = vmatpush1.msra.mxu0 0.0
      %2677 = vmatprep.subr.mxu0 0.0
      %2678 = vmatpush1.msra.mxu0 0.0
      %2679 = vmatprep.subr.mxu0 0.0
      %2680 = vmatpush1.msra.mxu0 0.0
      %2681 = vmatprep.subr.mxu0 0.0
      %2682 = vmatpush1.msra.mxu0 0.0
      %2683 = vmatprep.subr.mxu0 0.0
      %2684 = vmatpush1.msra.mxu0 0.0
      %2685 = vmatprep.subr.mxu0 0.0
      %2686 = vmatpush1.msra.mxu0 0.0
      %2687 = vmatprep.subr.mxu0 0.0
      %2688 = vmatpush1.msra.mxu0 0.0
      %2689 = vmatprep.subr.mxu0 0.0
      %2690 = vmatpush1.msra.mxu0 0.0
      %2691 = vmatprep.subr.mxu0 0.0
      %2692 = vmatpush1.msra.mxu0 0.0
      %2693 = vmatprep.subr.mxu0 0.0
      %2694 = vmatpush1.msra.mxu0 0.0
      %2695 = vmatprep.subr.mxu0 0.0
      %2696 = vmatpush1.msra.mxu0 0.0
      %2697 = vmatprep.mubr.f32.mxu0 0.0
      %2698 = vmatmul.mubr.f32.gmra.mrb[0].mxu0 %v2631
      %v2699 = vpop.f32.mrb[0].mxu0
      %v2700 = vadd.f32 0.0, %v2699
      %v2701 = vpop.f32.mrb[0].mxu0
      %2702 = vdwg.mxu0
      %2703 = vadd.xlane.f32.xlu0 %v2541
      %v2704 = vpop.xlane.xlu0 %2703
      %v2705 = vrcp.pop %v2704
      %v2706 = vmul.f32 %v2700, %v2705
      %v2707 = vmul.f32 %v444, %v2629
      %v2709 = vsel %vm467, %v2707, 0
      %2711 = vmatprep.subr.mxu0 0.0
      %2712 = vmatpush1.msra.mxu0 %v458
      %2713 = vmatprep.subr.mxu0 0.0
      %2714 = vmatpush1.msra.mxu0 %v459
      %2715 = vmatprep.subr.mxu0 0.0
      %2716 = vmatpush1.msra.mxu0 %v460
      %2717 = vmatprep.subr.mxu0 0.0
      %2718 = vmatpush1.msra.mxu0 %v461
      %2719 = vmatprep.subr.mxu0 0.0
      %2720 = vmatpush1.msra.mxu0 0.0
      %2721 = vmatprep.subr.mxu0 0.0
      %2722 = vmatpush1.msra.mxu0 0.0
      %2723 = vmatprep.subr.mxu0 0.0
      %2724 = vmatpush1.msra.mxu0 0.0
      %2725 = vmatprep.subr.mxu0 0.0
      %2726 = vmatpush1.msra.mxu0 0.0
      %2727 = vmatprep.subr.mxu0 0.0
      %2728 = vmatpush1.msra.mxu0 0.0
      %2729 = vmatprep.subr.mxu0 0.0
      %2730 = vmatpush1.msra.mxu0 0.0
      %2731 = vmatprep.subr.mxu0 0.0
      %2732 = vmatpush1.msra.mxu0 0.0
      %2733 = vmatprep.subr.mxu0 0.0
      %2734 = vmatpush1.msra.mxu0 0.0
      %2735 = vmatprep.subr.mxu0 0.0
      %2736 = vmatpush1.msra.mxu0 0.0
      %2737 = vmatprep.subr.mxu0 0.0
      %2738 = vmatpush1.msra.mxu0 0.0
      %2739 = vmatprep.subr.mxu0 0.0
      %2740 = vmatpush1.msra.mxu0 0.0
      %2741 = vmatprep.subr.mxu0 0.0
      %2742 = vmatpush1.msra.mxu0 0.0
      %2743 = vmatprep.subr.mxu0 0.0
      %2744 = vmatpush1.msra.mxu0 0.0
      %2745 = vmatprep.subr.mxu0 0.0
      %2746 = vmatpush1.msra.mxu0 0.0
      %2747 = vmatprep.subr.mxu0 0.0
      %2748 = vmatpush1.msra.mxu0 0.0
      %2749 = vmatprep.subr.mxu0 0.0
      %2750 = vmatpush1.msra.mxu0 0.0
      %2751 = vmatprep.subr.mxu0 0.0
      %2752 = vmatpush1.msra.mxu0 0.0
      %2753 = vmatprep.subr.mxu0 0.0
      %2754 = vmatpush1.msra.mxu0 0.0
      %2755 = vmatprep.subr.mxu0 0.0
      %2756 = vmatpush1.msra.mxu0 0.0
      %2757 = vmatprep.subr.mxu0 0.0
      %2758 = vmatpush1.msra.mxu0 0.0
      %2759 = vmatprep.subr.mxu0 0.0
      %2760 = vmatpush1.msra.mxu0 0.0
      %2761 = vmatprep.subr.mxu0 0.0
      %2762 = vmatpush1.msra.mxu0 0.0
      %2763 = vmatprep.subr.mxu0 0.0
      %2764 = vmatpush1.msra.mxu0 0.0
      %2765 = vmatprep.subr.mxu0 0.0
      %2766 = vmatpush1.msra.mxu0 0.0
      %2767 = vmatprep.subr.mxu0 0.0
      %2768 = vmatpush1.msra.mxu0 0.0
      %2769 = vmatprep.subr.mxu0 0.0
      %2770 = vmatpush1.msra.mxu0 0.0
      %2771 = vmatprep.subr.mxu0 0.0
      %2772 = vmatpush1.msra.mxu0 0.0
      %2773 = vmatprep.subr.mxu0 0.0
      %2774 = vmatpush1.msra.mxu0 0.0
      %2775 = vmatprep.mubr.f32.mxu0 0.0
      %2776 = vmatmul.mubr.f32.gmra.mrb[0].mxu0 %v2709
      %v2777 = vpop.f32.mrb[0].mxu0
      %v2778 = vadd.f32 0.0, %v2777
      %v2779 = vpop.f32.mrb[0].mxu0
      %2780 = vdwg.mxu0
      %2781 = vmatprep.subr.mxu0 0.0
      %2782 = vmatpush1.msra.mxu0 %v458
      %2783 = vmatprep.subr.mxu0 0.0
      %2784 = vmatpush1.msra.mxu0 %v459
      %2785 = vmatprep.subr.mxu0 0.0
      %2786 = vmatpush1.msra.mxu0 %v460
      %2787 = vmatprep.subr.mxu0 0.0
      %2788 = vmatpush1.msra.mxu0 %v461
      %2789 = vmatprep.subr.mxu0 0.0
      %2790 = vmatpush1.msra.mxu0 0.0
      %2791 = vmatprep.subr.mxu0 0.0
      %2792 = vmatpush1.msra.mxu0 0.0
      %2793 = vmatprep.subr.mxu0 0.0
      %2794 = vmatpush1.msra.mxu0 0.0
      %2795 = vmatprep.subr.mxu0 0.0
      %2796 = vmatpush1.msra.mxu0 0.0
      %2797 = vmatprep.subr.mxu0 0.0
      %2798 = vmatpush1.msra.mxu0 0.0
      %2799 = vmatprep.subr.mxu0 0.0
      %2800 = vmatpush1.msra.mxu0 0.0
      %2801 = vmatprep.subr.mxu0 0.0
      %2802 = vmatpush1.msra.mxu0 0.0
      %2803 = vmatprep.subr.mxu0 0.0
      %2804 = vmatpush1.msra.mxu0 0.0
      %2805 = vmatprep.subr.mxu0 0.0
      %2806 = vmatpush1.msra.mxu0 0.0
      %2807 = vmatprep.subr.mxu0 0.0
      %2808 = vmatpush1.msra.mxu0 0.0
      %2809 = vmatprep.subr.mxu0 0.0
      %2810 = vmatpush1.msra.mxu0 0.0
      %2811 = vmatprep.subr.mxu0 0.0
      %2812 = vmatpush1.msra.mxu0 0.0
      %2813 = vmatprep.subr.mxu0 0.0
      %2814 = vmatpush1.msra.mxu0 0.0
      %2815 = vmatprep.subr.mxu0 0.0
      %2816 = vmatpush1.msra.mxu0 0.0
      %2817 = vmatprep.subr.mxu0 0.0
      %2818 = vmatpush1.msra.mxu0 0.0
      %2819 = vmatprep.subr.mxu0 0.0
      %2820 = vmatpush1.msra.mxu0 0.0
      %2821 = vmatprep.subr.mxu0 0.0
      %2822 = vmatpush1.msra.mxu0 0.0
      %2823 = vmatprep.subr.mxu0 0.0
      %2824 = vmatpush1.msra.mxu0 0.0
      %2825 = vmatprep.subr.mxu0 0.0
      %2826 = vmatpush1.msra.mxu0 0.0
      %2827 = vmatprep.subr.mxu0 0.0
      %2828 = vmatpush1.msra.mxu0 0.0
      %2829 = vmatprep.subr.mxu0 0.0
      %2830 = vmatpush1.msra.mxu0 0.0
      %2831 = vmatprep.subr.mxu0 0.0
      %2832 = vmatpush1.msra.mxu0 0.0
      %2833 = vmatprep.subr.mxu0 0.0
      %2834 = vmatpush1.msra.mxu0 0.0
      %2835 = vmatprep.subr.mxu0 0.0
      %2836 = vmatpush1.msra.mxu0 0.0
      %2837 = vmatprep.subr.mxu0 0.0
      %2838 = vmatpush1.msra.mxu0 0.0
      %2839 = vmatprep.subr.mxu0 0.0
      %2840 = vmatpush1.msra.mxu0 0.0
      %2841 = vmatprep.subr.mxu0 0.0
      %2842 = vmatpush1.msra.mxu0 0.0
      %2843 = vmatprep.subr.mxu0 0.0
      %2844 = vmatpush1.msra.mxu0 0.0
      %2845 = vmatprep.mubr.f32.mxu0 0.0
      %2846 = vmatmul.mubr.f32.gmra.mrb[0].mxu0 %v590
      %v2847 = vpop.f32.mrb[0].mxu0
      %v2848 = vadd.f32 0.0, %v2847
      %v2849 = vpop.f32.mrb[0].mxu0
      %2850 = vdwg.mxu0
      %v2851 = vmul.f32 %v2629, %v2629
      %v2853 = vsel %vm467, %v2851, 0
      %2855 = vmatprep.subr.mxu0 0.0
      %2856 = vmatpush1.msra.mxu0 %v458
      %2857 = vmatprep.subr.mxu0 0.0
      %2858 = vmatpush1.msra.mxu0 %v459
      %2859 = vmatprep.subr.mxu0 0.0
      %2860 = vmatpush1.msra.mxu0 %v460
      %2861 = vmatprep.subr.mxu0 0.0
      %2862 = vmatpush1.msra.mxu0 %v461
      %2863 = vmatprep.subr.mxu0 0.0
      %2864 = vmatpush1.msra.mxu0 0.0
      %2865 = vmatprep.subr.mxu0 0.0
      %2866 = vmatpush1.msra.mxu0 0.0
      %2867 = vmatprep.subr.mxu0 0.0
      %2868 = vmatpush1.msra.mxu0 0.0
      %2869 = vmatprep.subr.mxu0 0.0
      %2870 = vmatpush1.msra.mxu0 0.0
      %2871 = vmatprep.subr.mxu0 0.0
      %2872 = vmatpush1.msra.mxu0 0.0
      %2873 = vmatprep.subr.mxu0 0.0
      %2874 = vmatpush1.msra.mxu0 0.0
      %2875 = vmatprep.subr.mxu0 0.0
      %2876 = vmatpush1.msra.mxu0 0.0
      %2877 = vmatprep.subr.mxu0 0.0
      %2878 = vmatpush1.msra.mxu0 0.0
      %2879 = vmatprep.subr.mxu0 0.0
      %2880 = vmatpush1.msra.mxu0 0.0
      %2881 = vmatprep.subr.mxu0 0.0
      %2882 = vmatpush1.msra.mxu0 0.0
      %2883 = vmatprep.subr.mxu0 0.0
      %2884 = vmatpush1.msra.mxu0 0.0
      %2885 = vmatprep.subr.mxu0 0.0
      %2886 = vmatpush1.msra.mxu0 0.0
      %2887 = vmatprep.subr.mxu0 0.0
      %2888 = vmatpush1.msra.mxu0 0.0
      %2889 = vmatprep.subr.mxu0 0.0
      %2890 = vmatpush1.msra.mxu0 0.0
      %2891 = vmatprep.subr.mxu0 0.0
      %2892 = vmatpush1.msra.mxu0 0.0
      %2893 = vmatprep.subr.mxu0 0.0
      %2894 = vmatpush1.msra.mxu0 0.0
      %2895 = vmatprep.subr.mxu0 0.0
      %2896 = vmatpush1.msra.mxu0 0.0
      %2897 = vmatprep.subr.mxu0 0.0
      %2898 = vmatpush1.msra.mxu0 0.0
      %2899 = vmatprep.subr.mxu0 0.0
      %2900 = vmatpush1.msra.mxu0 0.0
      %2901 = vmatprep.subr.mxu0 0.0
      %2902 = vmatpush1.msra.mxu0 0.0
      %2903 = vmatprep.subr.mxu0 0.0
      %2904 = vmatpush1.msra.mxu0 0.0
      %2905 = vmatprep.subr.mxu0 0.0
      %2906 = vmatpush1.msra.mxu0 0.0
      %2907 = vmatprep.subr.mxu0 0.0
      %2908 = vmatpush1.msra.mxu0 0.0
      %2909 = vmatprep.subr.mxu0 0.0
      %2910 = vmatpush1.msra.mxu0 0.0
      %2911 = vmatprep.subr.mxu0 0.0
      %2912 = vmatpush1.msra.mxu0 0.0
      %2913 = vmatprep.subr.mxu0 0.0
      %2914 = vmatpush1.msra.mxu0 0.0
      %2915 = vmatprep.subr.mxu0 0.0
      %2916 = vmatpush1.msra.mxu0 0.0
      %2917 = vmatprep.subr.mxu0 0.0
      %2918 = vmatpush1.msra.mxu0 0.0
      %2919 = vmatprep.mubr.f32.mxu0 0.0
      %2920 = vmatmul.mubr.f32.gmra.mrb[0].mxu0 %v2853
      %v2921 = vpop.f32.mrb[0].mxu0
      %v2922 = vadd.f32 0.0, %v2921
      %v2923 = vpop.f32.mrb[0].mxu0
      %2924 = vdwg.mxu0
      %v2925 = vrsqrt.pop %v2848
      %v2926 = vmul.f32 %v2848, %v2925
      %vm2927 = vcmp.eq.f32.partialorder %v2848, inf
      %v2928 = vsel %vm2927, %v2848, %v2926
      %vm2929 = vcmp.eq.f32.partialorder %v2848, 0.0
      %v2930 = vand.u32 %v2848, 2147483648
      %v2931 = vsel %vm2929, %v2930, %v2928
      %v2932 = vmax.f32 %v2931, 1e-08
      %v2933 = vrsqrt.pop %v2922
      %v2934 = vmul.f32 %v2922, %v2933
      %vm2935 = vcmp.eq.f32.partialorder %v2922, inf
      %v2936 = vsel %vm2935, %v2922, %v2934
      %vm2937 = vcmp.eq.f32.partialorder %v2922, 0.0
      %v2938 = vand.u32 %v2922, 2147483648
      %v2939 = vsel %vm2937, %v2938, %v2936
      %v2940 = vmax.f32 %v2939, 1e-08
      %v2941 = vmul.f32 %v2932, %v2940
      %v2942 = vrcp.pop %v2941
      %v2943 = vmul.f32 %v2778, %v2942
      %v2944 = vmul.f32 %v445, %v2706
      %v2946 = vsel %vm467, %v2944, 0
      %2948 = vmatprep.subr.mxu0 0.0
      %2949 = vmatpush1.msra.mxu0 %v458
      %2950 = vmatprep.subr.mxu0 0.0
      %2951 = vmatpush1.msra.mxu0 %v459
      %2952 = vmatprep.subr.mxu0 0.0
      %2953 = vmatpush1.msra.mxu0 %v460
      %2954 = vmatprep.subr.mxu0 0.0
      %2955 = vmatpush1.msra.mxu0 %v461
      %2956 = vmatprep.subr.mxu0 0.0
      %2957 = vmatpush1.msra.mxu0 0.0
      %2958 = vmatprep.subr.mxu0 0.0
      %2959 = vmatpush1.msra.mxu0 0.0
      %2960 = vmatprep.subr.mxu0 0.0
      %2961 = vmatpush1.msra.mxu0 0.0
      %2962 = vmatprep.subr.mxu0 0.0
      %2963 = vmatpush1.msra.mxu0 0.0
      %2964 = vmatprep.subr.mxu0 0.0
      %2965 = vmatpush1.msra.mxu0 0.0
      %2966 = vmatprep.subr.mxu0 0.0
      %2967 = vmatpush1.msra.mxu0 0.0
      %2968 = vmatprep.subr.mxu0 0.0
      %2969 = vmatpush1.msra.mxu0 0.0
      %2970 = vmatprep.subr.mxu0 0.0
      %2971 = vmatpush1.msra.mxu0 0.0
      %2972 = vmatprep.subr.mxu0 0.0
      %2973 = vmatpush1.msra.mxu0 0.0
      %2974 = vmatprep.subr.mxu0 0.0
      %2975 = vmatpush1.msra.mxu0 0.0
      %2976 = vmatprep.subr.mxu0 0.0
      %2977 = vmatpush1.msra.mxu0 0.0
      %2978 = vmatprep.subr.mxu0 0.0
      %2979 = vmatpush1.msra.mxu0 0.0
      %2980 = vmatprep.subr.mxu0 0.0
      %2981 = vmatpush1.msra.mxu0 0.0
      %2982 = vmatprep.subr.mxu0 0.0
      %2983 = vmatpush1.msra.mxu0 0.0
      %2984 = vmatprep.subr.mxu0 0.0
      %2985 = vmatpush1.msra.mxu0 0.0
      %2986 = vmatprep.subr.mxu0 0.0
      %2987 = vmatpush1.msra.mxu0 0.0
      %2988 = vmatprep.subr.mxu0 0.0
      %2989 = vmatpush1.msra.mxu0 0.0
      %2990 = vmatprep.subr.mxu0 0.0
      %2991 = vmatpush1.msra.mxu0 0.0
      %2992 = vmatprep.subr.mxu0 0.0
      %2993 = vmatpush1.msra.mxu0 0.0
      %2994 = vmatprep.subr.mxu0 0.0
      %2995 = vmatpush1.msra.mxu0 0.0
      %2996 = vmatprep.subr.mxu0 0.0
      %2997 = vmatpush1.msra.mxu0 0.0
      %2998 = vmatprep.subr.mxu0 0.0
      %2999 = vmatpush1.msra.mxu0 0.0
      %3000 = vmatprep.subr.mxu0 0.0
      %3001 = vmatpush1.msra.mxu0 0.0
      %3002 = vmatprep.subr.mxu0 0.0
      %3003 = vmatpush1.msra.mxu0 0.0
      %3004 = vmatprep.subr.mxu0 0.0
      %3005 = vmatpush1.msra.mxu0 0.0
      %3006 = vmatprep.subr.mxu0 0.0
      %3007 = vmatpush1.msra.mxu0 0.0
      %3008 = vmatprep.subr.mxu0 0.0
      %3009 = vmatpush1.msra.mxu0 0.0
      %3010 = vmatprep.subr.mxu0 0.0
      %3011 = vmatpush1.msra.mxu0 0.0
      %3012 = vmatprep.mubr.f32.mxu0 0.0
      %3013 = vmatmul.mubr.f32.gmra.mrb[0].mxu0 %v2946
      %v3014 = vpop.f32.mrb[0].mxu0
      %v3015 = vadd.f32 0.0, %v3014
      %v3016 = vpop.f32.mrb[0].mxu0
      %3017 = vdwg.mxu0
      %3018 = vmatprep.subr.mxu0 0.0
      %3019 = vmatpush1.msra.mxu0 %v458
      %3020 = vmatprep.subr.mxu0 0.0
      %3021 = vmatpush1.msra.mxu0 %v459
      %3022 = vmatprep.subr.mxu0 0.0
      %3023 = vmatpush1.msra.mxu0 %v460
      %3024 = vmatprep.subr.mxu0 0.0
      %3025 = vmatpush1.msra.mxu0 %v461
      %3026 = vmatprep.subr.mxu0 0.0
      %3027 = vmatpush1.msra.mxu0 0.0
      %3028 = vmatprep.subr.mxu0 0.0
      %3029 = vmatpush1.msra.mxu0 0.0
      %3030 = vmatprep.subr.mxu0 0.0
      %3031 = vmatpush1.msra.mxu0 0.0
      %3032 = vmatprep.subr.mxu0 0.0
      %3033 = vmatpush1.msra.mxu0 0.0
      %3034 = vmatprep.subr.mxu0 0.0
      %3035 = vmatpush1.msra.mxu0 0.0
      %3036 = vmatprep.subr.mxu0 0.0
      %3037 = vmatpush1.msra.mxu0 0.0
      %3038 = vmatprep.subr.mxu0 0.0
      %3039 = vmatpush1.msra.mxu0 0.0
      %3040 = vmatprep.subr.mxu0 0.0
      %3041 = vmatpush1.msra.mxu0 0.0
      %3042 = vmatprep.subr.mxu0 0.0
      %3043 = vmatpush1.msra.mxu0 0.0
      %3044 = vmatprep.subr.mxu0 0.0
      %3045 = vmatpush1.msra.mxu0 0.0
      %3046 = vmatprep.subr.mxu0 0.0
      %3047 = vmatpush1.msra.mxu0 0.0
      %3048 = vmatprep.subr.mxu0 0.0
      %3049 = vmatpush1.msra.mxu0 0.0
      %3050 = vmatprep.subr.mxu0 0.0
      %3051 = vmatpush1.msra.mxu0 0.0
      %3052 = vmatprep.subr.mxu0 0.0
      %3053 = vmatpush1.msra.mxu0 0.0
      %3054 = vmatprep.subr.mxu0 0.0
      %3055 = vmatpush1.msra.mxu0 0.0
      %3056 = vmatprep.subr.mxu0 0.0
      %3057 = vmatpush1.msra.mxu0 0.0
      %3058 = vmatprep.subr.mxu0 0.0
      %3059 = vmatpush1.msra.mxu0 0.0
      %3060 = vmatprep.subr.mxu0 0.0
      %3061 = vmatpush1.msra.mxu0 0.0
      %3062 = vmatprep.subr.mxu0 0.0
      %3063 = vmatpush1.msra.mxu0 0.0
      %3064 = vmatprep.subr.mxu0 0.0
      %3065 = vmatpush1.msra.mxu0 0.0
      %3066 = vmatprep.subr.mxu0 0.0
      %3067 = vmatpush1.msra.mxu0 0.0
      %3068 = vmatprep.subr.mxu0 0.0
      %3069 = vmatpush1.msra.mxu0 0.0
      %3070 = vmatprep.subr.mxu0 0.0
      %3071 = vmatpush1.msra.mxu0 0.0
      %3072 = vmatprep.subr.mxu0 0.0
      %3073 = vmatpush1.msra.mxu0 0.0
      %3074 = vmatprep.subr.mxu0 0.0
      %3075 = vmatpush1.msra.mxu0 0.0
      %3076 = vmatprep.subr.mxu0 0.0
      %3077 = vmatpush1.msra.mxu0 0.0
      %3078 = vmatprep.subr.mxu0 0.0
      %3079 = vmatpush1.msra.mxu0 0.0
      %3080 = vmatprep.subr.mxu0 0.0
      %3081 = vmatpush1.msra.mxu0 0.0
      %3082 = vmatprep.mubr.f32.mxu0 0.0
      %3083 = vmatmul.mubr.f32.gmra.mrb[0].mxu0 %v838
      %v3084 = vpop.f32.mrb[0].mxu0
      %v3085 = vadd.f32 0.0, %v3084
      %v3086 = vpop.f32.mrb[0].mxu0
      %3087 = vdwg.mxu0
      %v3088 = vmul.f32 %v2706, %v2706
      %v3090 = vsel %vm467, %v3088, 0
      %3092 = vmatprep.subr.mxu0 0.0
      %3093 = vmatpush1.msra.mxu0 %v458
      %3094 = vmatprep.subr.mxu0 0.0
      %3095 = vmatpush1.msra.mxu0 %v459
      %3096 = vmatprep.subr.mxu0 0.0
      %3097 = vmatpush1.msra.mxu0 %v460
      %3098 = vmatprep.subr.mxu0 0.0
      %3099 = vmatpush1.msra.mxu0 %v461
      %3100 = vmatprep.subr.mxu0 0.0
      %3101 = vmatpush1.msra.mxu0 0.0
      %3102 = vmatprep.subr.mxu0 0.0
      %3103 = vmatpush1.msra.mxu0 0.0
      %3104 = vmatprep.subr.mxu0 0.0
      %3105 = vmatpush1.msra.mxu0 0.0
      %3106 = vmatprep.subr.mxu0 0.0
      %3107 = vmatpush1.msra.mxu0 0.0
      %3108 = vmatprep.subr.mxu0 0.0
      %3109 = vmatpush1.msra.mxu0 0.0
      %3110 = vmatprep.subr.mxu0 0.0
      %3111 = vmatpush1.msra.mxu0 0.0
      %3112 = vmatprep.subr.mxu0 0.0
      %3113 = vmatpush1.msra.mxu0 0.0
      %3114 = vmatprep.subr.mxu0 0.0
      %3115 = vmatpush1.msra.mxu0 0.0
      %3116 = vmatprep.subr.mxu0 0.0
      %3117 = vmatpush1.msra.mxu0 0.0
      %3118 = vmatprep.subr.mxu0 0.0
      %3119 = vmatpush1.msra.mxu0 0.0
      %3120 = vmatprep.subr.mxu0 0.0
      %3121 = vmatpush1.msra.mxu0 0.0
      %3122 = vmatprep.subr.mxu0 0.0
      %3123 = vmatpush1.msra.mxu0 0.0
      %3124 = vmatprep.subr.mxu0 0.0
      %3125 = vmatpush1.msra.mxu0 0.0
      %3126 = vmatprep.subr.mxu0 0.0
      %3127 = vmatpush1.msra.mxu0 0.0
      %3128 = vmatprep.subr.mxu0 0.0
      %3129 = vmatpush1.msra.mxu0 0.0
      %3130 = vmatprep.subr.mxu0 0.0
      %3131 = vmatpush1.msra.mxu0 0.0
      %3132 = vmatprep.subr.mxu0 0.0
      %3133 = vmatpush1.msra.mxu0 0.0
      %3134 = vmatprep.subr.mxu0 0.0
      %3135 = vmatpush1.msra.mxu0 0.0
      %3136 = vmatprep.subr.mxu0 0.0
      %3137 = vmatpush1.msra.mxu0 0.0
      %3138 = vmatprep.subr.mxu0 0.0
      %3139 = vmatpush1.msra.mxu0 0.0
      %3140 = vmatprep.subr.mxu0 0.0
      %3141 = vmatpush1.msra.mxu0 0.0
      %3142 = vmatprep.subr.mxu0 0.0
      %3143 = vmatpush1.msra.mxu0 0.0
      %3144 = vmatprep.subr.mxu0 0.0
      %3145 = vmatpush1.msra.mxu0 0.0
      %3146 = vmatprep.subr.mxu0 0.0
      %3147 = vmatpush1.msra.mxu0 0.0
      %3148 = vmatprep.subr.mxu0 0.0
      %3149 = vmatpush1.msra.mxu0 0.0
      %3150 = vmatprep.subr.mxu0 0.0
      %3151 = vmatpush1.msra.mxu0 0.0
      %3152 = vmatprep.subr.mxu0 0.0
      %3153 = vmatpush1.msra.mxu0 0.0
      %3154 = vmatprep.subr.mxu0 0.0
      %3155 = vmatpush1.msra.mxu0 0.0
      %3156 = vmatprep.mubr.f32.mxu0 0.0
      %3157 = vmatmul.mubr.f32.gmra.mrb[0].mxu0 %v3090
      %v3158 = vpop.f32.mrb[0].mxu0
      %v3159 = vadd.f32 0.0, %v3158
      %v3160 = vpop.f32.mrb[0].mxu0
      %3161 = vdwg.mxu0
      %v3162 = vrsqrt.pop %v3085
      %v3163 = vmul.f32 %v3085, %v3162
      %vm3164 = vcmp.eq.f32.partialorder %v3085, inf
      %v3165 = vsel %vm3164, %v3085, %v3163
      %vm3166 = vcmp.eq.f32.partialorder %v3085, 0.0
      %v3167 = vand.u32 %v3085, 2147483648
      %v3168 = vsel %vm3166, %v3167, %v3165
      %v3169 = vmax.f32 %v3168, 1e-08
      %v3170 = vrsqrt.pop %v3159
      %v3171 = vmul.f32 %v3159, %v3170
      %vm3172 = vcmp.eq.f32.partialorder %v3159, inf
      %v3173 = vsel %vm3172, %v3159, %v3171
      %vm3174 = vcmp.eq.f32.partialorder %v3159, 0.0
      %v3175 = vand.u32 %v3159, 2147483648
      %v3176 = vsel %vm3174, %v3175, %v3173
      %v3177 = vmax.f32 %v3176, 1e-08
      %v3178 = vmul.f32 %v3169, %v3177
      %v3179 = vrcp.pop %v3178
      %v3180 = vmul.f32 %v3015, %v3179
      %v3181 = vmul.f32 %v446, %v2435
      %v3183 = vsel %vm467, %v3181, 0
      %3185 = vmatprep.subr.mxu0 0.0
      %3186 = vmatpush1.msra.mxu0 %v458
      %3187 = vmatprep.subr.mxu0 0.0
      %3188 = vmatpush1.msra.mxu0 %v459
      %3189 = vmatprep.subr.mxu0 0.0
      %3190 = vmatpush1.msra.mxu0 %v460
      %3191 = vmatprep.subr.mxu0 0.0
      %3192 = vmatpush1.msra.mxu0 %v461
      %3193 = vmatprep.subr.mxu0 0.0
      %3194 = vmatpush1.msra.mxu0 0.0
      %3195 = vmatprep.subr.mxu0 0.0
      %3196 = vmatpush1.msra.mxu0 0.0
      %3197 = vmatprep.subr.mxu0 0.0
      %3198 = vmatpush1.msra.mxu0 0.0
      %3199 = vmatprep.subr.mxu0 0.0
      %3200 = vmatpush1.msra.mxu0 0.0
      %3201 = vmatprep.subr.mxu0 0.0
      %3202 = vmatpush1.msra.mxu0 0.0
      %3203 = vmatprep.subr.mxu0 0.0
      %3204 = vmatpush1.msra.mxu0 0.0
      %3205 = vmatprep.subr.mxu0 0.0
      %3206 = vmatpush1.msra.mxu0 0.0
      %3207 = vmatprep.subr.mxu0 0.0
      %3208 = vmatpush1.msra.mxu0 0.0
      %3209 = vmatprep.subr.mxu0 0.0
      %3210 = vmatpush1.msra.mxu0 0.0
      %3211 = vmatprep.subr.mxu0 0.0
      %3212 = vmatpush1.msra.mxu0 0.0
      %3213 = vmatprep.subr.mxu0 0.0
      %3214 = vmatpush1.msra.mxu0 0.0
      %3215 = vmatprep.subr.mxu0 0.0
      %3216 = vmatpush1.msra.mxu0 0.0
      %3217 = vmatprep.subr.mxu0 0.0
      %3218 = vmatpush1.msra.mxu0 0.0
      %3219 = vmatprep.subr.mxu0 0.0
      %3220 = vmatpush1.msra.mxu0 0.0
      %3221 = vmatprep.subr.mxu0 0.0
      %3222 = vmatpush1.msra.mxu0 0.0
      %3223 = vmatprep.subr.mxu0 0.0
      %3224 = vmatpush1.msra.mxu0 0.0
      %3225 = vmatprep.subr.mxu0 0.0
      %3226 = vmatpush1.msra.mxu0 0.0
      %3227 = vmatprep.subr.mxu0 0.0
      %3228 = vmatpush1.msra.mxu0 0.0
      %3229 = vmatprep.subr.mxu0 0.0
      %3230 = vmatpush1.msra.mxu0 0.0
      %3231 = vmatprep.subr.mxu0 0.0
      %3232 = vmatpush1.msra.mxu0 0.0
      %3233 = vmatprep.subr.mxu0 0.0
      %3234 = vmatpush1.msra.mxu0 0.0
      %3235 = vmatprep.subr.mxu0 0.0
      %3236 = vmatpush1.msra.mxu0 0.0
      %3237 = vmatprep.subr.mxu0 0.0
      %3238 = vmatpush1.msra.mxu0 0.0
      %3239 = vmatprep.subr.mxu0 0.0
      %3240 = vmatpush1.msra.mxu0 0.0
      %3241 = vmatprep.subr.mxu0 0.0
      %3242 = vmatpush1.msra.mxu0 0.0
      %3243 = vmatprep.subr.mxu0 0.0
      %3244 = vmatpush1.msra.mxu0 0.0
      %3245 = vmatprep.subr.mxu0 0.0
      %3246 = vmatpush1.msra.mxu0 0.0
      %3247 = vmatprep.subr.mxu0 0.0
      %3248 = vmatpush1.msra.mxu0 0.0
      %3249 = vmatprep.mubr.f32.mxu0 0.0
      %3250 = vmatmul.mubr.f32.gmra.mrb[0].mxu0 %v3183
      %v3251 = vpop.f32.mrb[0].mxu0
      %v3252 = vadd.f32 0.0, %v3251
      %v3253 = vpop.f32.mrb[0].mxu0
      %3254 = vdwg.mxu0
      %3255 = vmatprep.subr.mxu0 0.0
      %3256 = vmatpush1.msra.mxu0 %v458
      %3257 = vmatprep.subr.mxu0 0.0
      %3258 = vmatpush1.msra.mxu0 %v459
      %3259 = vmatprep.subr.mxu0 0.0
      %3260 = vmatpush1.msra.mxu0 %v460
      %3261 = vmatprep.subr.mxu0 0.0
      %3262 = vmatpush1.msra.mxu0 %v461
      %3263 = vmatprep.subr.mxu0 0.0
      %3264 = vmatpush1.msra.mxu0 0.0
      %3265 = vmatprep.subr.mxu0 0.0
      %3266 = vmatpush1.msra.mxu0 0.0
      %3267 = vmatprep.subr.mxu0 0.0
      %3268 = vmatpush1.msra.mxu0 0.0
      %3269 = vmatprep.subr.mxu0 0.0
      %3270 = vmatpush1.msra.mxu0 0.0
      %3271 = vmatprep.subr.mxu0 0.0
      %3272 = vmatpush1.msra.mxu0 0.0
      %3273 = vmatprep.subr.mxu0 0.0
      %3274 = vmatpush1.msra.mxu0 0.0
      %3275 = vmatprep.subr.mxu0 0.0
      %3276 = vmatpush1.msra.mxu0 0.0
      %3277 = vmatprep.subr.mxu0 0.0
      %3278 = vmatpush1.msra.mxu0 0.0
      %3279 = vmatprep.subr.mxu0 0.0
      %3280 = vmatpush1.msra.mxu0 0.0
      %3281 = vmatprep.subr.mxu0 0.0
      %3282 = vmatpush1.msra.mxu0 0.0
      %3283 = vmatprep.subr.mxu0 0.0
      %3284 = vmatpush1.msra.mxu0 0.0
      %3285 = vmatprep.subr.mxu0 0.0
      %3286 = vmatpush1.msra.mxu0 0.0
      %3287 = vmatprep.subr.mxu0 0.0
      %3288 = vmatpush1.msra.mxu0 0.0
      %3289 = vmatprep.subr.mxu0 0.0
      %3290 = vmatpush1.msra.mxu0 0.0
      %3291 = vmatprep.subr.mxu0 0.0
      %3292 = vmatpush1.msra.mxu0 0.0
      %3293 = vmatprep.subr.mxu0 0.0
      %3294 = vmatpush1.msra.mxu0 0.0
      %3295 = vmatprep.subr.mxu0 0.0
      %3296 = vmatpush1.msra.mxu0 0.0
      %3297 = vmatprep.subr.mxu0 0.0
      %3298 = vmatpush1.msra.mxu0 0.0
      %3299 = vmatprep.subr.mxu0 0.0
      %3300 = vmatpush1.msra.mxu0 0.0
      %3301 = vmatprep.subr.mxu0 0.0
      %3302 = vmatpush1.msra.mxu0 0.0
      %3303 = vmatprep.subr.mxu0 0.0
      %3304 = vmatpush1.msra.mxu0 0.0
      %3305 = vmatprep.subr.mxu0 0.0
      %3306 = vmatpush1.msra.mxu0 0.0
      %3307 = vmatprep.subr.mxu0 0.0
      %3308 = vmatpush1.msra.mxu0 0.0
      %3309 = vmatprep.subr.mxu0 0.0
      %3310 = vmatpush1.msra.mxu0 0.0
      %3311 = vmatprep.subr.mxu0 0.0
      %3312 = vmatpush1.msra.mxu0 0.0
      %3313 = vmatprep.subr.mxu0 0.0
      %3314 = vmatpush1.msra.mxu0 0.0
      %3315 = vmatprep.subr.mxu0 0.0
      %3316 = vmatpush1.msra.mxu0 0.0
      %3317 = vmatprep.subr.mxu0 0.0
      %3318 = vmatpush1.msra.mxu0 0.0
      %3319 = vmatprep.mubr.f32.mxu0 0.0
      %3320 = vmatmul.mubr.f32.gmra.mrb[0].mxu0 %v1084
      %v3321 = vpop.f32.mrb[0].mxu0
      %v3322 = vadd.f32 0.0, %v3321
      %v3323 = vpop.f32.mrb[0].mxu0
      %3324 = vdwg.mxu0
      %v3325 = vmul.f32 %v2435, %v2435
      %v3327 = vsel %vm467, %v3325, 0
      %3329 = vmatprep.subr.mxu0 0.0
      %3330 = vmatpush1.msra.mxu0 %v458
      %3331 = vmatprep.subr.mxu0 0.0
      %3332 = vmatpush1.msra.mxu0 %v459
      %3333 = vmatprep.subr.mxu0 0.0
      %3334 = vmatpush1.msra.mxu0 %v460
      %3335 = vmatprep.subr.mxu0 0.0
      %3336 = vmatpush1.msra.mxu0 %v461
      %3337 = vmatprep.subr.mxu0 0.0
      %3338 = vmatpush1.msra.mxu0 0.0
      %3339 = vmatprep.subr.mxu0 0.0
      %3340 = vmatpush1.msra.mxu0 0.0
      %3341 = vmatprep.subr.mxu0 0.0
      %3342 = vmatpush1.msra.mxu0 0.0
      %3343 = vmatprep.subr.mxu0 0.0
      %3344 = vmatpush1.msra.mxu0 0.0
      %3345 = vmatprep.subr.mxu0 0.0
      %3346 = vmatpush1.msra.mxu0 0.0
      %3347 = vmatprep.subr.mxu0 0.0
      %3348 = vmatpush1.msra.mxu0 0.0
      %3349 = vmatprep.subr.mxu0 0.0
      %3350 = vmatpush1.msra.mxu0 0.0
      %3351 = vmatprep.subr.mxu0 0.0
      %3352 = vmatpush1.msra.mxu0 0.0
      %3353 = vmatprep.subr.mxu0 0.0
      %3354 = vmatpush1.msra.mxu0 0.0
      %3355 = vmatprep.subr.mxu0 0.0
      %3356 = vmatpush1.msra.mxu0 0.0
      %3357 = vmatprep.subr.mxu0 0.0
      %3358 = vmatpush1.msra.mxu0 0.0
      %3359 = vmatprep.subr.mxu0 0.0
      %3360 = vmatpush1.msra.mxu0 0.0
      %3361 = vmatprep.subr.mxu0 0.0
      %3362 = vmatpush1.msra.mxu0 0.0
      %3363 = vmatprep.subr.mxu0 0.0
      %3364 = vmatpush1.msra.mxu0 0.0
      %3365 = vmatprep.subr.mxu0 0.0
      %3366 = vmatpush1.msra.mxu0 0.0
      %3367 = vmatprep.subr.mxu0 0.0
      %3368 = vmatpush1.msra.mxu0 0.0
      %3369 = vmatprep.subr.mxu0 0.0
      %3370 = vmatpush1.msra.mxu0 0.0
      %3371 = vmatprep.subr.mxu0 0.0
      %3372 = vmatpush1.msra.mxu0 0.0
      %3373 = vmatprep.subr.mxu0 0.0
      %3374 = vmatpush1.msra.mxu0 0.0
      %3375 = vmatprep.subr.mxu0 0.0
      %3376 = vmatpush1.msra.mxu0 0.0
      %3377 = vmatprep.subr.mxu0 0.0
      %3378 = vmatpush1.msra.mxu0 0.0
      %3379 = vmatprep.subr.mxu0 0.0
      %3380 = vmatpush1.msra.mxu0 0.0
      %3381 = vmatprep.subr.mxu0 0.0
      %3382 = vmatpush1.msra.mxu0 0.0
      %3383 = vmatprep.subr.mxu0 0.0
      %3384 = vmatpush1.msra.mxu0 0.0
      %3385 = vmatprep.subr.mxu0 0.0
      %3386 = vmatpush1.msra.mxu0 0.0
      %3387 = vmatprep.subr.mxu0 0.0
      %3388 = vmatpush1.msra.mxu0 0.0
      %3389 = vmatprep.subr.mxu0 0.0
      %3390 = vmatpush1.msra.mxu0 0.0
      %3391 = vmatprep.subr.mxu0 0.0
      %3392 = vmatpush1.msra.mxu0 0.0
      %3393 = vmatprep.mubr.f32.mxu0 0.0
      %3394 = vmatmul.mubr.f32.gmra.mrb[0].mxu0 %v3327
      %v3395 = vpop.f32.mrb[0].mxu0
      %v3396 = vadd.f32 0.0, %v3395
      %v3397 = vpop.f32.mrb[0].mxu0
      %3398 = vdwg.mxu0
      %v3399 = vrsqrt.pop %v3322
      %v3400 = vmul.f32 %v3322, %v3399
      %vm3401 = vcmp.eq.f32.partialorder %v3322, inf
      %v3402 = vsel %vm3401, %v3322, %v3400
      %vm3403 = vcmp.eq.f32.partialorder %v3322, 0.0
      %v3404 = vand.u32 %v3322, 2147483648
      %v3405 = vsel %vm3403, %v3404, %v3402
      %v3406 = vmax.f32 %v3405, 1e-08
      %v3407 = vrsqrt.pop %v3396
      %v3408 = vmul.f32 %v3396, %v3407
      %vm3409 = vcmp.eq.f32.partialorder %v3396, inf
      %v3410 = vsel %vm3409, %v3396, %v3408
      %vm3411 = vcmp.eq.f32.partialorder %v3396, 0.0
      %v3412 = vand.u32 %v3396, 2147483648
      %v3413 = vsel %vm3411, %v3412, %v3410
      %v3414 = vmax.f32 %v3413, 1e-08
      %v3415 = vmul.f32 %v3406, %v3414
      %v3416 = vrcp.pop %v3415
      %v3417 = vmul.f32 %v3252, %v3416
      %v3418 = vmul.f32 %v447, %v2552
      %v3420 = vsel %vm467, %v3418, 0
      %3422 = vmatprep.subr.mxu0 0.0
      %3423 = vmatpush1.msra.mxu0 %v458
      %3424 = vmatprep.subr.mxu0 0.0
      %3425 = vmatpush1.msra.mxu0 %v459
      %3426 = vmatprep.subr.mxu0 0.0
      %3427 = vmatpush1.msra.mxu0 %v460
      %3428 = vmatprep.subr.mxu0 0.0
      %3429 = vmatpush1.msra.mxu0 %v461
      %3430 = vmatprep.subr.mxu0 0.0
      %3431 = vmatpush1.msra.mxu0 0.0
      %3432 = vmatprep.subr.mxu0 0.0
      %3433 = vmatpush1.msra.mxu0 0.0
      %3434 = vmatprep.subr.mxu0 0.0
      %3435 = vmatpush1.msra.mxu0 0.0
      %3436 = vmatprep.subr.mxu0 0.0
      %3437 = vmatpush1.msra.mxu0 0.0
      %3438 = vmatprep.subr.mxu0 0.0
      %3439 = vmatpush1.msra.mxu0 0.0
      %3440 = vmatprep.subr.mxu0 0.0
      %3441 = vmatpush1.msra.mxu0 0.0
      %3442 = vmatprep.subr.mxu0 0.0
      %3443 = vmatpush1.msra.mxu0 0.0
      %3444 = vmatprep.subr.mxu0 0.0
      %3445 = vmatpush1.msra.mxu0 0.0
      %3446 = vmatprep.subr.mxu0 0.0
      %3447 = vmatpush1.msra.mxu0 0.0
      %3448 = vmatprep.subr.mxu0 0.0
      %3449 = vmatpush1.msra.mxu0 0.0
      %3450 = vmatprep.subr.mxu0 0.0
      %3451 = vmatpush1.msra.mxu0 0.0
      %3452 = vmatprep.subr.mxu0 0.0
      %3453 = vmatpush1.msra.mxu0 0.0
      %3454 = vmatprep.subr.mxu0 0.0
      %3455 = vmatpush1.msra.mxu0 0.0
      %3456 = vmatprep.subr.mxu0 0.0
      %3457 = vmatpush1.msra.mxu0 0.0
      %3458 = vmatprep.subr.mxu0 0.0
      %3459 = vmatpush1.msra.mxu0 0.0
      %3460 = vmatprep.subr.mxu0 0.0
      %3461 = vmatpush1.msra.mxu0 0.0
      %3462 = vmatprep.subr.mxu0 0.0
      %3463 = vmatpush1.msra.mxu0 0.0
      %3464 = vmatprep.subr.mxu0 0.0
      %3465 = vmatpush1.msra.mxu0 0.0
      %3466 = vmatprep.subr.mxu0 0.0
      %3467 = vmatpush1.msra.mxu0 0.0
      %3468 = vmatprep.subr.mxu0 0.0
      %3469 = vmatpush1.msra.mxu0 0.0
      %3470 = vmatprep.subr.mxu0 0.0
      %3471 = vmatpush1.msra.mxu0 0.0
      %3472 = vmatprep.subr.mxu0 0.0
      %3473 = vmatpush1.msra.mxu0 0.0
      %3474 = vmatprep.subr.mxu0 0.0
      %3475 = vmatpush1.msra.mxu0 0.0
      %3476 = vmatprep.subr.mxu0 0.0
      %3477 = vmatpush1.msra.mxu0 0.0
      %3478 = vmatprep.subr.mxu0 0.0
      %3479 = vmatpush1.msra.mxu0 0.0
      %3480 = vmatprep.subr.mxu0 0.0
      %3481 = vmatpush1.msra.mxu0 0.0
      %3482 = vmatprep.subr.mxu0 0.0
      %3483 = vmatpush1.msra.mxu0 0.0
      %3484 = vmatprep.subr.mxu0 0.0
      %3485 = vmatpush1.msra.mxu0 0.0
      %3486 = vmatprep.mubr.f32.mxu0 0.0
      %3487 = vmatmul.mubr.f32.gmra.mrb[0].mxu0 %v3420
      %v3488 = vpop.f32.mrb[0].mxu0
      %v3489 = vadd.f32 0.0, %v3488
      %v3490 = vpop.f32.mrb[0].mxu0
      %3491 = vdwg.mxu0
      %3492 = vmatprep.subr.mxu0 0.0
      %3493 = vmatpush1.msra.mxu0 %v458
      %3494 = vmatprep.subr.mxu0 0.0
      %3495 = vmatpush1.msra.mxu0 %v459
      %3496 = vmatprep.subr.mxu0 0.0
      %3497 = vmatpush1.msra.mxu0 %v460
      %3498 = vmatprep.subr.mxu0 0.0
      %3499 = vmatpush1.msra.mxu0 %v461
      %3500 = vmatprep.subr.mxu0 0.0
      %3501 = vmatpush1.msra.mxu0 0.0
      %3502 = vmatprep.subr.mxu0 0.0
      %3503 = vmatpush1.msra.mxu0 0.0
      %3504 = vmatprep.subr.mxu0 0.0
      %3505 = vmatpush1.msra.mxu0 0.0
      %3506 = vmatprep.subr.mxu0 0.0
      %3507 = vmatpush1.msra.mxu0 0.0
      %3508 = vmatprep.subr.mxu0 0.0
      %3509 = vmatpush1.msra.mxu0 0.0
      %3510 = vmatprep.subr.mxu0 0.0
      %3511 = vmatpush1.msra.mxu0 0.0
      %3512 = vmatprep.subr.mxu0 0.0
      %3513 = vmatpush1.msra.mxu0 0.0
      %3514 = vmatprep.subr.mxu0 0.0
      %3515 = vmatpush1.msra.mxu0 0.0
      %3516 = vmatprep.subr.mxu0 0.0
      %3517 = vmatpush1.msra.mxu0 0.0
      %3518 = vmatprep.subr.mxu0 0.0
      %3519 = vmatpush1.msra.mxu0 0.0
      %3520 = vmatprep.subr.mxu0 0.0
      %3521 = vmatpush1.msra.mxu0 0.0
      %3522 = vmatprep.subr.mxu0 0.0
      %3523 = vmatpush1.msra.mxu0 0.0
      %3524 = vmatprep.subr.mxu0 0.0
      %3525 = vmatpush1.msra.mxu0 0.0
      %3526 = vmatprep.subr.mxu0 0.0
      %3527 = vmatpush1.msra.mxu0 0.0
      %3528 = vmatprep.subr.mxu0 0.0
      %3529 = vmatpush1.msra.mxu0 0.0
      %3530 = vmatprep.subr.mxu0 0.0
      %3531 = vmatpush1.msra.mxu0 0.0
      %3532 = vmatprep.subr.mxu0 0.0
      %3533 = vmatpush1.msra.mxu0 0.0
      %3534 = vmatprep.subr.mxu0 0.0
      %3535 = vmatpush1.msra.mxu0 0.0
      %3536 = vmatprep.subr.mxu0 0.0
      %3537 = vmatpush1.msra.mxu0 0.0
      %3538 = vmatprep.subr.mxu0 0.0
      %3539 = vmatpush1.msra.mxu0 0.0
      %3540 = vmatprep.subr.mxu0 0.0
      %3541 = vmatpush1.msra.mxu0 0.0
      %3542 = vmatprep.subr.mxu0 0.0
      %3543 = vmatpush1.msra.mxu0 0.0
      %3544 = vmatprep.subr.mxu0 0.0
      %3545 = vmatpush1.msra.mxu0 0.0
      %3546 = vmatprep.subr.mxu0 0.0
      %3547 = vmatpush1.msra.mxu0 0.0
      %3548 = vmatprep.subr.mxu0 0.0
      %3549 = vmatpush1.msra.mxu0 0.0
      %3550 = vmatprep.subr.mxu0 0.0
      %3551 = vmatpush1.msra.mxu0 0.0
      %3552 = vmatprep.subr.mxu0 0.0
      %3553 = vmatpush1.msra.mxu0 0.0
      %3554 = vmatprep.subr.mxu0 0.0
      %3555 = vmatpush1.msra.mxu0 0.0
      %3556 = vmatprep.mubr.f32.mxu0 0.0
      %3557 = vmatmul.mubr.f32.gmra.mrb[0].mxu0 %v911
      %v3558 = vpop.f32.mrb[0].mxu0
      %v3559 = vadd.f32 0.0, %v3558
      %v3560 = vpop.f32.mrb[0].mxu0
      %3561 = vdwg.mxu0
      %v3562 = vmul.f32 %v2552, %v2552
      %v3564 = vsel %vm467, %v3562, 0
      %3566 = vmatprep.subr.mxu0 0.0
      %3567 = vmatpush1.msra.mxu0 %v458
      %3568 = vmatprep.subr.mxu0 0.0
      %3569 = vmatpush1.msra.mxu0 %v459
      %3570 = vmatprep.subr.mxu0 0.0
      %3571 = vmatpush1.msra.mxu0 %v460
      %3572 = vmatprep.subr.mxu0 0.0
      %3573 = vmatpush1.msra.mxu0 %v461
      %3574 = vmatprep.subr.mxu0 0.0
      %3575 = vmatpush1.msra.mxu0 0.0
      %3576 = vmatprep.subr.mxu0 0.0
      %3577 = vmatpush1.msra.mxu0 0.0
      %3578 = vmatprep.subr.mxu0 0.0
      %3579 = vmatpush1.msra.mxu0 0.0
      %3580 = vmatprep.subr.mxu0 0.0
      %3581 = vmatpush1.msra.mxu0 0.0
      %3582 = vmatprep.subr.mxu0 0.0
      %3583 = vmatpush1.msra.mxu0 0.0
      %3584 = vmatprep.subr.mxu0 0.0
      %3585 = vmatpush1.msra.mxu0 0.0
      %3586 = vmatprep.subr.mxu0 0.0
      %3587 = vmatpush1.msra.mxu0 0.0
      %3588 = vmatprep.subr.mxu0 0.0
      %3589 = vmatpush1.msra.mxu0 0.0
      %3590 = vmatprep.subr.mxu0 0.0
      %3591 = vmatpush1.msra.mxu0 0.0
      %3592 = vmatprep.subr.mxu0 0.0
      %3593 = vmatpush1.msra.mxu0 0.0
      %3594 = vmatprep.subr.mxu0 0.0
      %3595 = vmatpush1.msra.mxu0 0.0
      %3596 = vmatprep.subr.mxu0 0.0
      %3597 = vmatpush1.msra.mxu0 0.0
      %3598 = vmatprep.subr.mxu0 0.0
      %3599 = vmatpush1.msra.mxu0 0.0
      %3600 = vmatprep.subr.mxu0 0.0
      %3601 = vmatpush1.msra.mxu0 0.0
      %3602 = vmatprep.subr.mxu0 0.0
      %3603 = vmatpush1.msra.mxu0 0.0
      %3604 = vmatprep.subr.mxu0 0.0
      %3605 = vmatpush1.msra.mxu0 0.0
      %3606 = vmatprep.subr.mxu0 0.0
      %3607 = vmatpush1.msra.mxu0 0.0
      %3608 = vmatprep.subr.mxu0 0.0
      %3609 = vmatpush1.msra.mxu0 0.0
      %3610 = vmatprep.subr.mxu0 0.0
      %3611 = vmatpush1.msra.mxu0 0.0
      %3612 = vmatprep.subr.mxu0 0.0
      %3613 = vmatpush1.msra.mxu0 0.0
      %3614 = vmatprep.subr.mxu0 0.0
      %3615 = vmatpush1.msra.mxu0 0.0
      %3616 = vmatprep.subr.mxu0 0.0
      %3617 = vmatpush1.msra.mxu0 0.0
      %3618 = vmatprep.subr.mxu0 0.0
      %3619 = vmatpush1.msra.mxu0 0.0
      %3620 = vmatprep.subr.mxu0 0.0
      %3621 = vmatpush1.msra.mxu0 0.0
      %3622 = vmatprep.subr.mxu0 0.0
      %3623 = vmatpush1.msra.mxu0 0.0
      %3624 = vmatprep.subr.mxu0 0.0
      %3625 = vmatpush1.msra.mxu0 0.0
      %3626 = vmatprep.subr.mxu0 0.0
      %3627 = vmatpush1.msra.mxu0 0.0
      %3628 = vmatprep.subr.mxu0 0.0
      %3629 = vmatpush1.msra.mxu0 0.0
      %3630 = vmatprep.mubr.f32.mxu0 0.0
      %3631 = vmatmul.mubr.f32.gmra.mrb[0].mxu0 %v3564
      %v3632 = vpop.f32.mrb[0].mxu0
      %v3633 = vadd.f32 0.0, %v3632
      %v3634 = vpop.f32.mrb[0].mxu0
      %3635 = vdwg.mxu0
      %v3636 = vrsqrt.pop %v3559
      %v3637 = vmul.f32 %v3559, %v3636
      %vm3638 = vcmp.eq.f32.partialorder %v3559, inf
      %v3639 = vsel %vm3638, %v3559, %v3637
      %vm3640 = vcmp.eq.f32.partialorder %v3559, 0.0
      %v3641 = vand.u32 %v3559, 2147483648
      %v3642 = vsel %vm3640, %v3641, %v3639
      %v3643 = vmax.f32 %v3642, 1e-08
      %v3644 = vrsqrt.pop %v3633
      %v3645 = vmul.f32 %v3633, %v3644
      %vm3646 = vcmp.eq.f32.partialorder %v3633, inf
      %v3647 = vsel %vm3646, %v3633, %v3645
      %vm3648 = vcmp.eq.f32.partialorder %v3633, 0.0
      %v3649 = vand.u32 %v3633, 2147483648
      %v3650 = vsel %vm3648, %v3649, %v3647
      %v3651 = vmax.f32 %v3650, 1e-08
      %v3652 = vmul.f32 %v3643, %v3651
      %v3653 = vrcp.pop %v3652
      %v3654 = vmul.f32 %v3489, %v3653
      %v3655 = vcombine.high %v444, %v444
      %v3657 = vunpack.c.l.s4 1966171168
      %v3658 = vunpack.c.0.s8 %v3657
      %v3659 = vlaneseq
      %v3660 = vshrl.u32 %v3659, 7
      %v3661 = vsub.s32 %v3658, %v3660
      %v3662 = vrot.slane %v444, %v3661
      %v3664 = vunpack.c.l.s4 1966171168
      %v3665 = vunpack.c.0.s8 %v3664
      %v3666 = vlaneseq
      %v3667 = vshrl.u32 %v3666, 7
      %v3668 = vsub.s32 %v3665, %v3667
      %v3669 = vrot.slane %v3655, %v3668
      %v3670 = vcombine.high %v3662, %v3662
      %v3671 = vcombine.high %v3669, %v3669
      %v3673 = vunpack.c.l.s4 1966171168
      %v3674 = vunpack.c.0.s8 %v3673
      %v3675 = vlaneseq
      %v3676 = vshrl.u32 %v3675, 7
      %v3677 = vsub.s32 %v3674, %v3676
      %v3678 = vrot.slane %v3662, %v3677
      %v3680 = vunpack.c.l.s4 1966171168
      %v3681 = vunpack.c.0.s8 %v3680
      %v3682 = vlaneseq
      %v3683 = vshrl.u32 %v3682, 7
      %v3684 = vsub.s32 %v3681, %v3683
      %v3685 = vrot.slane %v3669, %v3684
      %v3687 = vunpack.c.l.s4 1966171168
      %v3688 = vunpack.c.0.s8 %v3687
      %v3689 = vlaneseq
      %v3690 = vshrl.u32 %v3689, 7
      %v3691 = vsub.s32 %v3688, %v3690
      %v3692 = vrot.slane %v3670, %v3691
      %v3694 = vunpack.c.l.s4 1966171168
      %v3695 = vunpack.c.0.s8 %v3694
      %v3696 = vlaneseq
      %v3697 = vshrl.u32 %v3696, 7
      %v3698 = vsub.s32 %v3695, %v3697
      %v3699 = vrot.slane %v3671, %v3698
      %v3700 = vcombine.high %v3678, %v3678
      %v3701 = vcombine.high %v3685, %v3685
      %v3702 = vcombine.high %v3692, %v3692
      %v3703 = vcombine.high %v3699, %v3699
      %v3704 = vlaneseq
      %v3705 = vshrl.u32 %v3704, 7
      %v3706 = vsub.s32 0, %v3705
      %v3707 = vrot.slane %v2244, %v3706
      %3709 = vbcast.lane.b32.xlu0 %v3707, 256
      %v3710 = vpop.permute.xlu0 %3709
      %v3711 = vlaneseq
      %v3712 = vshrl.u32 %v3711, 7
      %v3713 = vsub.s32 1, %v3712
      %v3714 = vrot.slane %v2244, %v3713
      %3716 = vbcast.lane.b32.xlu0 %v3714, 256
      %v3717 = vpop.permute.xlu0 %3716
      %v3718 = vlaneseq
      %v3719 = vshrl.u32 %v3718, 7
      %v3720 = vsub.s32 2, %v3719
      %v3721 = vrot.slane %v2244, %v3720
      %3723 = vbcast.lane.b32.xlu0 %v3721, 256
      %v3724 = vpop.permute.xlu0 %3723
      %v3725 = vlaneseq
      %v3726 = vshrl.u32 %v3725, 7
      %v3727 = vsub.s32 3, %v3726
      %v3728 = vrot.slane %v2244, %v3727
      %3730 = vbcast.lane.b32.xlu0 %v3728, 256
      %v3731 = vpop.permute.xlu0 %3730
      %v3732 = vlaneseq
      %v3733 = vshrl.u32 %v3732, 7
      %v3734 = vsub.s32 4, %v3733
      %v3735 = vrot.slane %v2244, %v3734
      %3737 = vbcast.lane.b32.xlu0 %v3735, 256
      %v3738 = vpop.permute.xlu0 %3737
      %v3739 = vlaneseq
      %v3740 = vshrl.u32 %v3739, 7
      %v3741 = vsub.s32 5, %v3740
      %v3742 = vrot.slane %v2244, %v3741
      %3744 = vbcast.lane.b32.xlu0 %v3742, 256
      %v3745 = vpop.permute.xlu0 %3744
      %v3746 = vlaneseq
      %v3747 = vshrl.u32 %v3746, 7
      %v3748 = vsub.s32 6, %v3747
      %v3749 = vrot.slane %v2244, %v3748
      %3751 = vbcast.lane.b32.xlu0 %v3749, 256
      %v3752 = vpop.permute.xlu0 %3751
      %v3753 = vlaneseq
      %v3754 = vshrl.u32 %v3753, 7
      %v3755 = vsub.s32 7, %v3754
      %v3756 = vrot.slane %v2244, %v3755
      %3758 = vbcast.lane.b32.xlu0 %v3756, 256
      %v3759 = vpop.permute.xlu0 %3758
      %v3760 = vlaneseq
      %v3761 = vshrl.u32 %v3760, 7
      %v3762 = vsub.s32 0, %v3761
      %v3763 = vrot.slane %v3678, %v3762
      %v3764 = vlaneseq
      %v3765 = vshrl.u32 %v3764, 7
      %v3766 = vsub.s32 0, %v3765
      %v3767 = vrot.slane %v3692, %v3766
      %v3768 = vlaneseq
      %v3769 = vshrl.u32 %v3768, 7
      %v3770 = vsub.s32 0, %v3769
      %v3771 = vrot.slane %v3700, %v3770
      %v3772 = vlaneseq
      %v3773 = vshrl.u32 %v3772, 7
      %v3774 = vsub.s32 0, %v3773
      %v3775 = vrot.slane %v3702, %v3774
      %v3776 = vlaneseq
      %v3777 = vshrl.u32 %v3776, 7
      %v3778 = vsub.s32 0, %v3777
      %v3779 = vrot.slane %v3685, %v3778
      %v3780 = vlaneseq
      %v3781 = vshrl.u32 %v3780, 7
      %v3782 = vsub.s32 0, %v3781
      %v3783 = vrot.slane %v3699, %v3782
      %v3784 = vlaneseq
      %v3785 = vshrl.u32 %v3784, 7
      %v3786 = vsub.s32 0, %v3785
      %v3787 = vrot.slane %v3701, %v3786
      %v3788 = vlaneseq
      %v3789 = vshrl.u32 %v3788, 7
      %v3790 = vsub.s32 0, %v3789
      %v3791 = vrot.slane %v3703, %v3790
      %v3800 = vmul.f32 %v3763, %v3710
      %v3801 = vmul.f32 %v3767, %v3717
      %v3802 = vmul.f32 %v3771, %v3724
      %v3803 = vmul.f32 %v3775, %v3731
      %v3804 = vmul.f32 %v3779, %v3738
      %v3805 = vmul.f32 %v3783, %v3745
      %v3806 = vmul.f32 %v3787, %v3752
      %v3807 = vmul.f32 %v3791, %v3759
      %v3808 = vlaneseq
      %v3809 = vshrl.u32 %v3808, 7
      %v3810 = vsub.s32 0, %v3809
      %v3811 = vrot.slane %v2318, %v3810
      %3813 = vbcast.lane.b32.xlu0 %v3811, 256
      %v3814 = vpop.permute.xlu0 %3813
      %v3815 = vlaneseq
      %v3816 = vshrl.u32 %v3815, 7
      %v3817 = vsub.s32 1, %v3816
      %v3818 = vrot.slane %v2318, %v3817
      %3820 = vbcast.lane.b32.xlu0 %v3818, 256
      %v3821 = vpop.permute.xlu0 %3820
      %v3822 = vlaneseq
      %v3823 = vshrl.u32 %v3822, 7
      %v3824 = vsub.s32 2, %v3823
      %v3825 = vrot.slane %v2318, %v3824
      %3827 = vbcast.lane.b32.xlu0 %v3825, 256
      %v3828 = vpop.permute.xlu0 %3827
      %v3829 = vlaneseq
      %v3830 = vshrl.u32 %v3829, 7
      %v3831 = vsub.s32 3, %v3830
      %v3832 = vrot.slane %v2318, %v3831
      %3834 = vbcast.lane.b32.xlu0 %v3832, 256
      %v3835 = vpop.permute.xlu0 %3834
      %v3836 = vlaneseq
      %v3837 = vshrl.u32 %v3836, 7
      %v3838 = vsub.s32 4, %v3837
      %v3839 = vrot.slane %v2318, %v3838
      %3841 = vbcast.lane.b32.xlu0 %v3839, 256
      %v3842 = vpop.permute.xlu0 %3841
      %v3843 = vlaneseq
      %v3844 = vshrl.u32 %v3843, 7
      %v3845 = vsub.s32 5, %v3844
      %v3846 = vrot.slane %v2318, %v3845
      %3848 = vbcast.lane.b32.xlu0 %v3846, 256
      %v3849 = vpop.permute.xlu0 %3848
      %v3850 = vlaneseq
      %v3851 = vshrl.u32 %v3850, 7
      %v3852 = vsub.s32 6, %v3851
      %v3853 = vrot.slane %v2318, %v3852
      %3855 = vbcast.lane.b32.xlu0 %v3853, 256
      %v3856 = vpop.permute.xlu0 %3855
      %v3857 = vlaneseq
      %v3858 = vshrl.u32 %v3857, 7
      %v3859 = vsub.s32 7, %v3858
      %v3860 = vrot.slane %v2318, %v3859
      %3862 = vbcast.lane.b32.xlu0 %v3860, 256
      %v3863 = vpop.permute.xlu0 %3862
      %v3864 = vmul.f32 %v3763, %v3814
      %v3865 = vmul.f32 %v3767, %v3821
      %v3866 = vmul.f32 %v3771, %v3828
      %v3867 = vmul.f32 %v3775, %v3835
      %v3868 = vmul.f32 %v3779, %v3842
      %v3869 = vmul.f32 %v3783, %v3849
      %v3870 = vmul.f32 %v3787, %v3856
      %v3871 = vmul.f32 %v3791, %v3863
      %v3872 = vmul.f32 %v446, %v3710
      %v3873 = vmul.f32 %v446, %v3717
      %v3874 = vmul.f32 %v446, %v3724
      %v3875 = vmul.f32 %v446, %v3731
      %v3876 = vmul.f32 %v446, %v3738
      %v3877 = vmul.f32 %v446, %v3745
      %v3878 = vmul.f32 %v446, %v3752
      %v3879 = vmul.f32 %v446, %v3759
      %v3880 = vmul.f32 %v446, %v3814
      %v3881 = vmul.f32 %v446, %v3821
      %v3882 = vmul.f32 %v446, %v3828
      %v3883 = vmul.f32 %v446, %v3835
      %v3884 = vmul.f32 %v446, %v3842
      %v3885 = vmul.f32 %v446, %v3849
      %v3886 = vmul.f32 %v446, %v3856
      %v3887 = vmul.f32 %v446, %v3863
      %v3888 = vsel %vm467, %v3800, -inf
      %v3889 = vsel %vm467, %v3801, -inf
      %v3890 = vsel %vm467, %v3802, -inf
      %v3891 = vsel %vm467, %v3803, -inf
      %v3892 = vsel %vm467, %v3804, -inf
      %v3893 = vmax.f32 %v3888, %v3892
      %v3894 = vsel %vm467, %v3805, -inf
      %v3895 = vmax.f32 %v3889, %v3894
      %v3896 = vsel %vm467, %v3806, -inf
      %v3897 = vmax.f32 %v3890, %v3896
      %v3898 = vsel %vm467, %v3807, -inf
      %v3899 = vmax.f32 %v3891, %v3898
      %v3900 = vmax.f32 %v3893, %v3895
      %v3901 = vmax.f32 %v3897, %v3899
      %v3902 = vmax.f32 %v3900, %v3901
      %v3903 = vsel %vm467, %v3864, -inf
      %v3904 = vsel %vm467, %v3865, -inf
      %v3905 = vsel %vm467, %v3866, -inf
      %v3906 = vsel %vm467, %v3867, -inf
      %v3907 = vsel %vm467, %v3868, -inf
      %v3908 = vmax.f32 %v3903, %v3907
      %v3909 = vsel %vm467, %v3869, -inf
      %v3910 = vmax.f32 %v3904, %v3909
      %v3911 = vsel %vm467, %v3870, -inf
      %v3912 = vmax.f32 %v3905, %v3911
      %v3913 = vsel %vm467, %v3871, -inf
      %v3914 = vmax.f32 %v3906, %v3913
      %v3915 = vmax.f32 %v3908, %v3910
      %v3916 = vmax.f32 %v3912, %v3914
      %v3917 = vmax.f32 %v3915, %v3916
      %v3918 = vsel %vm467, %v3872, -inf
      %v3919 = vrot.slane %v3918, 4
      %v3920 = vmax.f32 %v3918, %v3919
      %v3921 = vrot.slane %v3920, 2
      %v3922 = vmax.f32 %v3920, %v3921
      %v3923 = vrot.slane %v3922, 1
      %v3924 = vmax.f32 %v3922, %v3923
      %v3925 = vsel %vm467, %v3873, -inf
      %v3926 = vrot.slane %v3925, 4
      %v3927 = vmax.f32 %v3925, %v3926
      %v3928 = vrot.slane %v3927, 2
      %v3929 = vmax.f32 %v3927, %v3928
      %v3930 = vrot.slane %v3929, 1
      %v3931 = vmax.f32 %v3929, %v3930
      %v3932 = vsel %vm467, %v3874, -inf
      %v3933 = vrot.slane %v3932, 4
      %v3934 = vmax.f32 %v3932, %v3933
      %v3935 = vrot.slane %v3934, 2
      %v3936 = vmax.f32 %v3934, %v3935
      %v3937 = vrot.slane %v3936, 1
      %v3938 = vmax.f32 %v3936, %v3937
      %v3939 = vsel %vm467, %v3875, -inf
      %v3940 = vrot.slane %v3939, 4
      %v3941 = vmax.f32 %v3939, %v3940
      %v3942 = vrot.slane %v3941, 2
      %v3943 = vmax.f32 %v3941, %v3942
      %v3944 = vrot.slane %v3943, 1
      %v3945 = vmax.f32 %v3943, %v3944
      %v3946 = vsel %vm467, %v3876, -inf
      %v3947 = vrot.slane %v3946, 4
      %v3948 = vmax.f32 %v3946, %v3947
      %v3949 = vrot.slane %v3948, 2
      %v3950 = vmax.f32 %v3948, %v3949
      %v3951 = vrot.slane %v3950, 1
      %v3952 = vmax.f32 %v3950, %v3951
      %v3953 = vsel %vm467, %v3877, -inf
      %v3954 = vrot.slane %v3953, 4
      %v3955 = vmax.f32 %v3953, %v3954
      %v3956 = vrot.slane %v3955, 2
      %v3957 = vmax.f32 %v3955, %v3956
      %v3958 = vrot.slane %v3957, 1
      %v3959 = vmax.f32 %v3957, %v3958
      %v3960 = vsel %vm467, %v3878, -inf
      %v3961 = vrot.slane %v3960, 4
      %v3962 = vmax.f32 %v3960, %v3961
      %v3963 = vrot.slane %v3962, 2
      %v3964 = vmax.f32 %v3962, %v3963
      %v3965 = vrot.slane %v3964, 1
      %v3966 = vmax.f32 %v3964, %v3965
      %v3967 = vsel %vm467, %v3879, -inf
      %v3968 = vrot.slane %v3967, 4
      %v3969 = vmax.f32 %v3967, %v3968
      %v3970 = vrot.slane %v3969, 2
      %v3971 = vmax.f32 %v3969, %v3970
      %v3972 = vrot.slane %v3971, 1
      %v3973 = vmax.f32 %v3971, %v3972
      %v3974 = vsel %vm467, %v3880, -inf
      %v3975 = vrot.slane %v3974, 4
      %v3976 = vmax.f32 %v3974, %v3975
      %v3977 = vrot.slane %v3976, 2
      %v3978 = vmax.f32 %v3976, %v3977
      %v3979 = vrot.slane %v3978, 1
      %v3980 = vmax.f32 %v3978, %v3979
      %v3981 = vsel %vm467, %v3881, -inf
      %v3982 = vrot.slane %v3981, 4
      %v3983 = vmax.f32 %v3981, %v3982
      %v3984 = vrot.slane %v3983, 2
      %v3985 = vmax.f32 %v3983, %v3984
      %v3986 = vrot.slane %v3985, 1
      %v3987 = vmax.f32 %v3985, %v3986
      %v3988 = vsel %vm467, %v3882, -inf
      %v3989 = vrot.slane %v3988, 4
      %v3990 = vmax.f32 %v3988, %v3989
      %v3991 = vrot.slane %v3990, 2
      %v3992 = vmax.f32 %v3990, %v3991
      %v3993 = vrot.slane %v3992, 1
      %v3994 = vmax.f32 %v3992, %v3993
      %v3995 = vsel %vm467, %v3883, -inf
      %v3996 = vrot.slane %v3995, 4
      %v3997 = vmax.f32 %v3995, %v3996
      %v3998 = vrot.slane %v3997, 2
      %v3999 = vmax.f32 %v3997, %v3998
      %v4000 = vrot.slane %v3999, 1
      %v4001 = vmax.f32 %v3999, %v4000
      %v4002 = vsel %vm467, %v3884, -inf
      %v4003 = vrot.slane %v4002, 4
      %v4004 = vmax.f32 %v4002, %v4003
      %v4005 = vrot.slane %v4004, 2
      %v4006 = vmax.f32 %v4004, %v4005
      %v4007 = vrot.slane %v4006, 1
      %v4008 = vmax.f32 %v4006, %v4007
      %v4009 = vsel %vm467, %v3885, -inf
      %v4010 = vrot.slane %v4009, 4
      %v4011 = vmax.f32 %v4009, %v4010
      %v4012 = vrot.slane %v4011, 2
      %v4013 = vmax.f32 %v4011, %v4012
      %v4014 = vrot.slane %v4013, 1
      %v4015 = vmax.f32 %v4013, %v4014
      %v4016 = vsel %vm467, %v3886, -inf
      %v4017 = vrot.slane %v4016, 4
      %v4018 = vmax.f32 %v4016, %v4017
      %v4019 = vrot.slane %v4018, 2
      %v4020 = vmax.f32 %v4018, %v4019
      %v4021 = vrot.slane %v4020, 1
      %v4022 = vmax.f32 %v4020, %v4021
      %v4023 = vsel %vm467, %v3887, -inf
      %v4024 = vrot.slane %v4023, 4
      %v4025 = vmax.f32 %v4023, %v4024
      %v4026 = vrot.slane %v4025, 2
      %v4027 = vmax.f32 %v4025, %v4026
      %v4028 = vrot.slane %v4027, 1
      %v4029 = vmax.f32 %v4027, %v4028
      %v4038 = vsel %vm1344, %v3931, %v3924
      %v4039 = vsel %vm1345, %v3938, %v4038
      %v4040 = vsel %vm1347, %v3945, %v4039
      %v4041 = vsel %vm1349, %v3952, %v4040
      %v4042 = vsel %vm1351, %v3959, %v4041
      %v4043 = vsel %vm1353, %v3966, %v4042
      %v4044 = vsel %vm1355, %v3973, %v4043
      %v4046 = vmul.f32 %v444, %v4044
      %v4048 = vsel %vm467, %v4046, 0
      %4050 = vmatprep.subr.mxu0 0.0
      %4051 = vmatpush1.msra.mxu0 %v462
      %4052 = vmatprep.subr.mxu0 0.0
      %4053 = vmatpush1.msra.mxu0 %v463
      %4054 = vmatprep.subr.mxu0 0.0
      %4055 = vmatpush1.msra.mxu0 %v464
      %4056 = vmatprep.subr.mxu0 0.0
      %4057 = vmatpush1.msra.mxu0 %v465
      %4058 = vmatprep.subr.mxu0 0.0
      %4059 = vmatpush1.msra.mxu0 0.0
      %4060 = vmatprep.subr.mxu0 0.0
      %4061 = vmatpush1.msra.mxu0 0.0
      %4062 = vmatprep.subr.mxu0 0.0
      %4063 = vmatpush1.msra.mxu0 0.0
      %4064 = vmatprep.subr.mxu0 0.0
      %4065 = vmatpush1.msra.mxu0 0.0
      %4066 = vmatprep.subr.mxu0 0.0
      %4067 = vmatpush1.msra.mxu0 0.0
      %4068 = vmatprep.subr.mxu0 0.0
      %4069 = vmatpush1.msra.mxu0 0.0
      %4070 = vmatprep.subr.mxu0 0.0
      %4071 = vmatpush1.msra.mxu0 0.0
      %4072 = vmatprep.subr.mxu0 0.0
      %4073 = vmatpush1.msra.mxu0 0.0
      %4074 = vmatprep.subr.mxu0 0.0
      %4075 = vmatpush1.msra.mxu0 0.0
      %4076 = vmatprep.subr.mxu0 0.0
      %4077 = vmatpush1.msra.mxu0 0.0
      %4078 = vmatprep.subr.mxu0 0.0
      %4079 = vmatpush1.msra.mxu0 0.0
      %4080 = vmatprep.subr.mxu0 0.0
      %4081 = vmatpush1.msra.mxu0 0.0
      %4082 = vmatprep.subr.mxu0 0.0
      %4083 = vmatpush1.msra.mxu0 0.0
      %4084 = vmatprep.subr.mxu0 0.0
      %4085 = vmatpush1.msra.mxu0 0.0
      %4086 = vmatprep.subr.mxu0 0.0
      %4087 = vmatpush1.msra.mxu0 0.0
      %4088 = vmatprep.subr.mxu0 0.0
      %4089 = vmatpush1.msra.mxu0 0.0
      %4090 = vmatprep.subr.mxu0 0.0
      %4091 = vmatpush1.msra.mxu0 0.0
      %4092 = vmatprep.subr.mxu0 0.0
      %4093 = vmatpush1.msra.mxu0 0.0
      %4094 = vmatprep.subr.mxu0 0.0
      %4095 = vmatpush1.msra.mxu0 0.0
      %4096 = vmatprep.subr.mxu0 0.0
      %4097 = vmatpush1.msra.mxu0 0.0
      %4098 = vmatprep.subr.mxu0 0.0
      %4099 = vmatpush1.msra.mxu0 0.0
      %4100 = vmatprep.subr.mxu0 0.0
      %4101 = vmatpush1.msra.mxu0 0.0
      %4102 = vmatprep.subr.mxu0 0.0
      %4103 = vmatpush1.msra.mxu0 0.0
      %4104 = vmatprep.subr.mxu0 0.0
      %4105 = vmatpush1.msra.mxu0 0.0
      %4106 = vmatprep.subr.mxu0 0.0
      %4107 = vmatpush1.msra.mxu0 0.0
      %4108 = vmatprep.subr.mxu0 0.0
      %4109 = vmatpush1.msra.mxu0 0.0
      %4110 = vmatprep.subr.mxu0 0.0
      %4111 = vmatpush1.msra.mxu0 0.0
      %4112 = vmatprep.subr.mxu0 0.0
      %4113 = vmatpush1.msra.mxu0 0.0
      %4114 = vmatprep.mubr.f32.mxu0 0.0
      %4115 = vmatmul.mubr.f32.gmra.mrb[0].mxu0 %v4048
      %v4116 = vpop.f32.mrb[0].mxu0
      %v4117 = vadd.f32 0.0, %v4116
      %v4118 = vpop.f32.mrb[0].mxu0
      %4119 = vdwg.mxu0
      %4120 = vmatprep.subr.mxu0 0.0
      %4121 = vmatpush1.msra.mxu0 %v462
      %4122 = vmatprep.subr.mxu0 0.0
      %4123 = vmatpush1.msra.mxu0 %v463
      %4124 = vmatprep.subr.mxu0 0.0
      %4125 = vmatpush1.msra.mxu0 %v464
      %4126 = vmatprep.subr.mxu0 0.0
      %4127 = vmatpush1.msra.mxu0 %v465
      %4128 = vmatprep.subr.mxu0 0.0
      %4129 = vmatpush1.msra.mxu0 0.0
      %4130 = vmatprep.subr.mxu0 0.0
      %4131 = vmatpush1.msra.mxu0 0.0
      %4132 = vmatprep.subr.mxu0 0.0
      %4133 = vmatpush1.msra.mxu0 0.0
      %4134 = vmatprep.subr.mxu0 0.0
      %4135 = vmatpush1.msra.mxu0 0.0
      %4136 = vmatprep.subr.mxu0 0.0
      %4137 = vmatpush1.msra.mxu0 0.0
      %4138 = vmatprep.subr.mxu0 0.0
      %4139 = vmatpush1.msra.mxu0 0.0
      %4140 = vmatprep.subr.mxu0 0.0
      %4141 = vmatpush1.msra.mxu0 0.0
      %4142 = vmatprep.subr.mxu0 0.0
      %4143 = vmatpush1.msra.mxu0 0.0
      %4144 = vmatprep.subr.mxu0 0.0
      %4145 = vmatpush1.msra.mxu0 0.0
      %4146 = vmatprep.subr.mxu0 0.0
      %4147 = vmatpush1.msra.mxu0 0.0
      %4148 = vmatprep.subr.mxu0 0.0
      %4149 = vmatpush1.msra.mxu0 0.0
      %4150 = vmatprep.subr.mxu0 0.0
      %4151 = vmatpush1.msra.mxu0 0.0
      %4152 = vmatprep.subr.mxu0 0.0
      %4153 = vmatpush1.msra.mxu0 0.0
      %4154 = vmatprep.subr.mxu0 0.0
      %4155 = vmatpush1.msra.mxu0 0.0
      %4156 = vmatprep.subr.mxu0 0.0
      %4157 = vmatpush1.msra.mxu0 0.0
      %4158 = vmatprep.subr.mxu0 0.0
      %4159 = vmatpush1.msra.mxu0 0.0
      %4160 = vmatprep.subr.mxu0 0.0
      %4161 = vmatpush1.msra.mxu0 0.0
      %4162 = vmatprep.subr.mxu0 0.0
      %4163 = vmatpush1.msra.mxu0 0.0
      %4164 = vmatprep.subr.mxu0 0.0
      %4165 = vmatpush1.msra.mxu0 0.0
      %4166 = vmatprep.subr.mxu0 0.0
      %4167 = vmatpush1.msra.mxu0 0.0
      %4168 = vmatprep.subr.mxu0 0.0
      %4169 = vmatpush1.msra.mxu0 0.0
      %4170 = vmatprep.subr.mxu0 0.0
      %4171 = vmatpush1.msra.mxu0 0.0
      %4172 = vmatprep.subr.mxu0 0.0
      %4173 = vmatpush1.msra.mxu0 0.0
      %4174 = vmatprep.subr.mxu0 0.0
      %4175 = vmatpush1.msra.mxu0 0.0
      %4176 = vmatprep.subr.mxu0 0.0
      %4177 = vmatpush1.msra.mxu0 0.0
      %4178 = vmatprep.subr.mxu0 0.0
      %4179 = vmatpush1.msra.mxu0 0.0
      %4180 = vmatprep.subr.mxu0 0.0
      %4181 = vmatpush1.msra.mxu0 0.0
      %4182 = vmatprep.subr.mxu0 0.0
      %4183 = vmatpush1.msra.mxu0 0.0
      %4184 = vmatprep.mubr.f32.mxu0 0.0
      %4185 = vmatmul.mubr.f32.gmra.mrb[0].mxu0 %v590
      %v4186 = vpop.f32.mrb[0].mxu0
      %v4187 = vadd.f32 0.0, %v4186
      %v4188 = vpop.f32.mrb[0].mxu0
      %4189 = vdwg.mxu0
      %v4190 = vmul.f32 %v3924, %v3924
      %v4191 = vmul.f32 %v3931, %v3931
      %v4192 = vmul.f32 %v3938, %v3938
      %v4193 = vmul.f32 %v3945, %v3945
      %v4194 = vmul.f32 %v3952, %v3952
      %v4195 = vmul.f32 %v3959, %v3959
      %v4196 = vmul.f32 %v3966, %v3966
      %v4197 = vmul.f32 %v3973, %v3973
      %v4206 = vsel %vm1344, %v4191, %v4190
      %v4207 = vsel %vm1345, %v4192, %v4206
      %v4208 = vsel %vm1347, %v4193, %v4207
      %v4209 = vsel %vm1349, %v4194, %v4208
      %v4210 = vsel %vm1351, %v4195, %v4209
      %v4211 = vsel %vm1353, %v4196, %v4210
      %v4212 = vsel %vm1355, %v4197, %v4211
      %v4213 = vsel %vm467, %v4212, 0
      %4215 = vmatprep.subr.mxu0 0.0
      %4216 = vmatpush1.msra.mxu0 %v462
      %4217 = vmatprep.subr.mxu0 0.0
      %4218 = vmatpush1.msra.mxu0 %v463
      %4219 = vmatprep.subr.mxu0 0.0
      %4220 = vmatpush1.msra.mxu0 %v464
      %4221 = vmatprep.subr.mxu0 0.0
      %4222 = vmatpush1.msra.mxu0 %v465
      %4223 = vmatprep.subr.mxu0 0.0
      %4224 = vmatpush1.msra.mxu0 0.0
      %4225 = vmatprep.subr.mxu0 0.0
      %4226 = vmatpush1.msra.mxu0 0.0
      %4227 = vmatprep.subr.mxu0 0.0
      %4228 = vmatpush1.msra.mxu0 0.0
      %4229 = vmatprep.subr.mxu0 0.0
      %4230 = vmatpush1.msra.mxu0 0.0
      %4231 = vmatprep.subr.mxu0 0.0
      %4232 = vmatpush1.msra.mxu0 0.0
      %4233 = vmatprep.subr.mxu0 0.0
      %4234 = vmatpush1.msra.mxu0 0.0
      %4235 = vmatprep.subr.mxu0 0.0
      %4236 = vmatpush1.msra.mxu0 0.0
      %4237 = vmatprep.subr.mxu0 0.0
      %4238 = vmatpush1.msra.mxu0 0.0
      %4239 = vmatprep.subr.mxu0 0.0
      %4240 = vmatpush1.msra.mxu0 0.0
      %4241 = vmatprep.subr.mxu0 0.0
      %4242 = vmatpush1.msra.mxu0 0.0
      %4243 = vmatprep.subr.mxu0 0.0
      %4244 = vmatpush1.msra.mxu0 0.0
      %4245 = vmatprep.subr.mxu0 0.0
      %4246 = vmatpush1.msra.mxu0 0.0
      %4247 = vmatprep.subr.mxu0 0.0
      %4248 = vmatpush1.msra.mxu0 0.0
      %4249 = vmatprep.subr.mxu0 0.0
      %4250 = vmatpush1.msra.mxu0 0.0
      %4251 = vmatprep.subr.mxu0 0.0
      %4252 = vmatpush1.msra.mxu0 0.0
      %4253 = vmatprep.subr.mxu0 0.0
      %4254 = vmatpush1.msra.mxu0 0.0
      %4255 = vmatprep.subr.mxu0 0.0
      %4256 = vmatpush1.msra.mxu0 0.0
      %4257 = vmatprep.subr.mxu0 0.0
      %4258 = vmatpush1.msra.mxu0 0.0
      %4259 = vmatprep.subr.mxu0 0.0
      %4260 = vmatpush1.msra.mxu0 0.0
      %4261 = vmatprep.subr.mxu0 0.0
      %4262 = vmatpush1.msra.mxu0 0.0
      %4263 = vmatprep.subr.mxu0 0.0
      %4264 = vmatpush1.msra.mxu0 0.0
      %4265 = vmatprep.subr.mxu0 0.0
      %4266 = vmatpush1.msra.mxu0 0.0
      %4267 = vmatprep.subr.mxu0 0.0
      %4268 = vmatpush1.msra.mxu0 0.0
      %4269 = vmatprep.subr.mxu0 0.0
      %4270 = vmatpush1.msra.mxu0 0.0
      %4271 = vmatprep.subr.mxu0 0.0
      %4272 = vmatpush1.msra.mxu0 0.0
      %4273 = vmatprep.subr.mxu0 0.0
      %4274 = vmatpush1.msra.mxu0 0.0
      %4275 = vmatprep.subr.mxu0 0.0
      %4276 = vmatpush1.msra.mxu0 0.0
      %4277 = vmatprep.subr.mxu0 0.0
      %4278 = vmatpush1.msra.mxu0 0.0
      %4279 = vmatprep.mubr.f32.mxu0 0.0
      %4280 = vmatmul.mubr.f32.gmra.mrb[0].mxu0 %v4213
      %v4281 = vpop.f32.mrb[0].mxu0
      %v4282 = vadd.f32 0.0, %v4281
      %v4283 = vpop.f32.mrb[0].mxu0
      %4284 = vdwg.mxu0
      %v4285 = vrsqrt.pop %v4187
      %v4286 = vmul.f32 %v4187, %v4285
      %vm4287 = vcmp.eq.f32.partialorder %v4187, inf
      %v4288 = vsel %vm4287, %v4187, %v4286
      %vm4289 = vcmp.eq.f32.partialorder %v4187, 0.0
      %v4290 = vand.u32 %v4187, 2147483648
      %v4291 = vsel %vm4289, %v4290, %v4288
      %v4292 = vmax.f32 %v4291, 1e-08
      %v4293 = vrsqrt.pop %v4282
      %v4294 = vmul.f32 %v4282, %v4293
      %vm4295 = vcmp.eq.f32.partialorder %v4282, inf
      %v4296 = vsel %vm4295, %v4282, %v4294
      %vm4297 = vcmp.eq.f32.partialorder %v4282, 0.0
      %v4298 = vand.u32 %v4282, 2147483648
      %v4299 = vsel %vm4297, %v4298, %v4296
      %v4300 = vmax.f32 %v4299, 1e-08
      %v4301 = vmul.f32 %v4292, %v4300
      %v4302 = vrcp.pop %v4301
      %v4303 = vmul.f32 %v4117, %v4302
      %v4312 = vsel %vm1344, %v3987, %v3980
      %v4313 = vsel %vm1345, %v3994, %v4312
      %v4314 = vsel %vm1347, %v4001, %v4313
      %v4315 = vsel %vm1349, %v4008, %v4314
      %v4316 = vsel %vm1351, %v4015, %v4315
      %v4317 = vsel %vm1353, %v4022, %v4316
      %v4318 = vsel %vm1355, %v4029, %v4317
      %v4320 = vmul.f32 %v445, %v4318
      %v4322 = vsel %vm467, %v4320, 0
      %4324 = vmatprep.subr.mxu0 0.0
      %4325 = vmatpush1.msra.mxu0 %v462
      %4326 = vmatprep.subr.mxu0 0.0
      %4327 = vmatpush1.msra.mxu0 %v463
      %4328 = vmatprep.subr.mxu0 0.0
      %4329 = vmatpush1.msra.mxu0 %v464
      %4330 = vmatprep.subr.mxu0 0.0
      %4331 = vmatpush1.msra.mxu0 %v465
      %4332 = vmatprep.subr.mxu0 0.0
      %4333 = vmatpush1.msra.mxu0 0.0
      %4334 = vmatprep.subr.mxu0 0.0
      %4335 = vmatpush1.msra.mxu0 0.0
      %4336 = vmatprep.subr.mxu0 0.0
      %4337 = vmatpush1.msra.mxu0 0.0
      %4338 = vmatprep.subr.mxu0 0.0
      %4339 = vmatpush1.msra.mxu0 0.0
      %4340 = vmatprep.subr.mxu0 0.0
      %4341 = vmatpush1.msra.mxu0 0.0
      %4342 = vmatprep.subr.mxu0 0.0
      %4343 = vmatpush1.msra.mxu0 0.0
      %4344 = vmatprep.subr.mxu0 0.0
      %4345 = vmatpush1.msra.mxu0 0.0
      %4346 = vmatprep.subr.mxu0 0.0
      %4347 = vmatpush1.msra.mxu0 0.0
      %4348 = vmatprep.subr.mxu0 0.0
      %4349 = vmatpush1.msra.mxu0 0.0
      %4350 = vmatprep.subr.mxu0 0.0
      %4351 = vmatpush1.msra.mxu0 0.0
      %4352 = vmatprep.subr.mxu0 0.0
      %4353 = vmatpush1.msra.mxu0 0.0
      %4354 = vmatprep.subr.mxu0 0.0
      %4355 = vmatpush1.msra.mxu0 0.0
      %4356 = vmatprep.subr.mxu0 0.0
      %4357 = vmatpush1.msra.mxu0 0.0
      %4358 = vmatprep.subr.mxu0 0.0
      %4359 = vmatpush1.msra.mxu0 0.0
      %4360 = vmatprep.subr.mxu0 0.0
      %4361 = vmatpush1.msra.mxu0 0.0
      %4362 = vmatprep.subr.mxu0 0.0
      %4363 = vmatpush1.msra.mxu0 0.0
      %4364 = vmatprep.subr.mxu0 0.0
      %4365 = vmatpush1.msra.mxu0 0.0
      %4366 = vmatprep.subr.mxu0 0.0
      %4367 = vmatpush1.msra.mxu0 0.0
      %4368 = vmatprep.subr.mxu0 0.0
      %4369 = vmatpush1.msra.mxu0 0.0
      %4370 = vmatprep.subr.mxu0 0.0
      %4371 = vmatpush1.msra.mxu0 0.0
      %4372 = vmatprep.subr.mxu0 0.0
      %4373 = vmatpush1.msra.mxu0 0.0
      %4374 = vmatprep.subr.mxu0 0.0
      %4375 = vmatpush1.msra.mxu0 0.0
      %4376 = vmatprep.subr.mxu0 0.0
      %4377 = vmatpush1.msra.mxu0 0.0
      %4378 = vmatprep.subr.mxu0 0.0
      %4379 = vmatpush1.msra.mxu0 0.0
      %4380 = vmatprep.subr.mxu0 0.0
      %4381 = vmatpush1.msra.mxu0 0.0
      %4382 = vmatprep.subr.mxu0 0.0
      %4383 = vmatpush1.msra.mxu0 0.0
      %4384 = vmatprep.subr.mxu0 0.0
      %4385 = vmatpush1.msra.mxu0 0.0
      %4386 = vmatprep.subr.mxu0 0.0
      %4387 = vmatpush1.msra.mxu0 0.0
      %4388 = vmatprep.mubr.f32.mxu0 0.0
      %4389 = vmatmul.mubr.f32.gmra.mrb[0].mxu0 %v4322
      %v4390 = vpop.f32.mrb[0].mxu0
      %v4391 = vadd.f32 0.0, %v4390
      %v4392 = vpop.f32.mrb[0].mxu0
      %4393 = vdwg.mxu0
      %4394 = vmatprep.subr.mxu0 0.0
      %4395 = vmatpush1.msra.mxu0 %v462
      %4396 = vmatprep.subr.mxu0 0.0
      %4397 = vmatpush1.msra.mxu0 %v463
      %4398 = vmatprep.subr.mxu0 0.0
      %4399 = vmatpush1.msra.mxu0 %v464
      %4400 = vmatprep.subr.mxu0 0.0
      %4401 = vmatpush1.msra.mxu0 %v465
      %4402 = vmatprep.subr.mxu0 0.0
      %4403 = vmatpush1.msra.mxu0 0.0
      %4404 = vmatprep.subr.mxu0 0.0
      %4405 = vmatpush1.msra.mxu0 0.0
      %4406 = vmatprep.subr.mxu0 0.0
      %4407 = vmatpush1.msra.mxu0 0.0
      %4408 = vmatprep.subr.mxu0 0.0
      %4409 = vmatpush1.msra.mxu0 0.0
      %4410 = vmatprep.subr.mxu0 0.0
      %4411 = vmatpush1.msra.mxu0 0.0
      %4412 = vmatprep.subr.mxu0 0.0
      %4413 = vmatpush1.msra.mxu0 0.0
      %4414 = vmatprep.subr.mxu0 0.0
      %4415 = vmatpush1.msra.mxu0 0.0
      %4416 = vmatprep.subr.mxu0 0.0
      %4417 = vmatpush1.msra.mxu0 0.0
      %4418 = vmatprep.subr.mxu0 0.0
      %4419 = vmatpush1.msra.mxu0 0.0
      %4420 = vmatprep.subr.mxu0 0.0
      %4421 = vmatpush1.msra.mxu0 0.0
      %4422 = vmatprep.subr.mxu0 0.0
      %4423 = vmatpush1.msra.mxu0 0.0
      %4424 = vmatprep.subr.mxu0 0.0
      %4425 = vmatpush1.msra.mxu0 0.0
      %4426 = vmatprep.subr.mxu0 0.0
      %4427 = vmatpush1.msra.mxu0 0.0
      %4428 = vmatprep.subr.mxu0 0.0
      %4429 = vmatpush1.msra.mxu0 0.0
      %4430 = vmatprep.subr.mxu0 0.0
      %4431 = vmatpush1.msra.mxu0 0.0
      %4432 = vmatprep.subr.mxu0 0.0
      %4433 = vmatpush1.msra.mxu0 0.0
      %4434 = vmatprep.subr.mxu0 0.0
      %4435 = vmatpush1.msra.mxu0 0.0
      %4436 = vmatprep.subr.mxu0 0.0
      %4437 = vmatpush1.msra.mxu0 0.0
      %4438 = vmatprep.subr.mxu0 0.0
      %4439 = vmatpush1.msra.mxu0 0.0
      %4440 = vmatprep.subr.mxu0 0.0
      %4441 = vmatpush1.msra.mxu0 0.0
      %4442 = vmatprep.subr.mxu0 0.0
      %4443 = vmatpush1.msra.mxu0 0.0
      %4444 = vmatprep.subr.mxu0 0.0
      %4445 = vmatpush1.msra.mxu0 0.0
      %4446 = vmatprep.subr.mxu0 0.0
      %4447 = vmatpush1.msra.mxu0 0.0
      %4448 = vmatprep.subr.mxu0 0.0
      %4449 = vmatpush1.msra.mxu0 0.0
      %4450 = vmatprep.subr.mxu0 0.0
      %4451 = vmatpush1.msra.mxu0 0.0
      %4452 = vmatprep.subr.mxu0 0.0
      %4453 = vmatpush1.msra.mxu0 0.0
      %4454 = vmatprep.subr.mxu0 0.0
      %4455 = vmatpush1.msra.mxu0 0.0
      %4456 = vmatprep.subr.mxu0 0.0
      %4457 = vmatpush1.msra.mxu0 0.0
      %4458 = vmatprep.mubr.f32.mxu0 0.0
      %4459 = vmatmul.mubr.f32.gmra.mrb[0].mxu0 %v838
      %v4460 = vpop.f32.mrb[0].mxu0
      %v4461 = vadd.f32 0.0, %v4460
      %v4462 = vpop.f32.mrb[0].mxu0
      %4463 = vdwg.mxu0
      %v4464 = vmul.f32 %v3980, %v3980
      %v4465 = vmul.f32 %v3987, %v3987
      %v4466 = vmul.f32 %v3994, %v3994
      %v4467 = vmul.f32 %v4001, %v4001
      %v4468 = vmul.f32 %v4008, %v4008
      %v4469 = vmul.f32 %v4015, %v4015
      %v4470 = vmul.f32 %v4022, %v4022
      %v4471 = vmul.f32 %v4029, %v4029
      %v4480 = vsel %vm1344, %v4465, %v4464
      %v4481 = vsel %vm1345, %v4466, %v4480
      %v4482 = vsel %vm1347, %v4467, %v4481
      %v4483 = vsel %vm1349, %v4468, %v4482
      %v4484 = vsel %vm1351, %v4469, %v4483
      %v4485 = vsel %vm1353, %v4470, %v4484
      %v4486 = vsel %vm1355, %v4471, %v4485
      %v4487 = vsel %vm467, %v4486, 0
      %4489 = vmatprep.subr.mxu0 0.0
      %4490 = vmatpush1.msra.mxu0 %v462
      %4491 = vmatprep.subr.mxu0 0.0
      %4492 = vmatpush1.msra.mxu0 %v463
      %4493 = vmatprep.subr.mxu0 0.0
      %4494 = vmatpush1.msra.mxu0 %v464
      %4495 = vmatprep.subr.mxu0 0.0
      %4496 = vmatpush1.msra.mxu0 %v465
      %4497 = vmatprep.subr.mxu0 0.0
      %4498 = vmatpush1.msra.mxu0 0.0
      %4499 = vmatprep.subr.mxu0 0.0
      %4500 = vmatpush1.msra.mxu0 0.0
      %4501 = vmatprep.subr.mxu0 0.0
      %4502 = vmatpush1.msra.mxu0 0.0
      %4503 = vmatprep.subr.mxu0 0.0
      %4504 = vmatpush1.msra.mxu0 0.0
      %4505 = vmatprep.subr.mxu0 0.0
      %4506 = vmatpush1.msra.mxu0 0.0
      %4507 = vmatprep.subr.mxu0 0.0
      %4508 = vmatpush1.msra.mxu0 0.0
      %4509 = vmatprep.subr.mxu0 0.0
      %4510 = vmatpush1.msra.mxu0 0.0
      %4511 = vmatprep.subr.mxu0 0.0
      %4512 = vmatpush1.msra.mxu0 0.0
      %4513 = vmatprep.subr.mxu0 0.0
      %4514 = vmatpush1.msra.mxu0 0.0
      %4515 = vmatprep.subr.mxu0 0.0
      %4516 = vmatpush1.msra.mxu0 0.0
      %4517 = vmatprep.subr.mxu0 0.0
      %4518 = vmatpush1.msra.mxu0 0.0
      %4519 = vmatprep.subr.mxu0 0.0
      %4520 = vmatpush1.msra.mxu0 0.0
      %4521 = vmatprep.subr.mxu0 0.0
      %4522 = vmatpush1.msra.mxu0 0.0
      %4523 = vmatprep.subr.mxu0 0.0
      %4524 = vmatpush1.msra.mxu0 0.0
      %4525 = vmatprep.subr.mxu0 0.0
      %4526 = vmatpush1.msra.mxu0 0.0
      %4527 = vmatprep.subr.mxu0 0.0
      %4528 = vmatpush1.msra.mxu0 0.0
      %4529 = vmatprep.subr.mxu0 0.0
      %4530 = vmatpush1.msra.mxu0 0.0
      %4531 = vmatprep.subr.mxu0 0.0
      %4532 = vmatpush1.msra.mxu0 0.0
      %4533 = vmatprep.subr.mxu0 0.0
      %4534 = vmatpush1.msra.mxu0 0.0
      %4535 = vmatprep.subr.mxu0 0.0
      %4536 = vmatpush1.msra.mxu0 0.0
      %4537 = vmatprep.subr.mxu0 0.0
      %4538 = vmatpush1.msra.mxu0 0.0
      %4539 = vmatprep.subr.mxu0 0.0
      %4540 = vmatpush1.msra.mxu0 0.0
      %4541 = vmatprep.subr.mxu0 0.0
      %4542 = vmatpush1.msra.mxu0 0.0
      %4543 = vmatprep.subr.mxu0 0.0
      %4544 = vmatpush1.msra.mxu0 0.0
      %4545 = vmatprep.subr.mxu0 0.0
      %4546 = vmatpush1.msra.mxu0 0.0
      %4547 = vmatprep.subr.mxu0 0.0
      %4548 = vmatpush1.msra.mxu0 0.0
      %4549 = vmatprep.subr.mxu0 0.0
      %4550 = vmatpush1.msra.mxu0 0.0
      %4551 = vmatprep.subr.mxu0 0.0
      %4552 = vmatpush1.msra.mxu0 0.0
      %4553 = vmatprep.mubr.f32.mxu0 0.0
      %4554 = vmatmul.mubr.f32.gmra.mrb[0].mxu0 %v4487
      %v4555 = vpop.f32.mrb[0].mxu0
      %v4556 = vadd.f32 0.0, %v4555
      %v4557 = vpop.f32.mrb[0].mxu0
      %4558 = vdwg.mxu0
      %v4559 = vrsqrt.pop %v4461
      %v4560 = vmul.f32 %v4461, %v4559
      %vm4561 = vcmp.eq.f32.partialorder %v4461, inf
      %v4562 = vsel %vm4561, %v4461, %v4560
      %vm4563 = vcmp.eq.f32.partialorder %v4461, 0.0
      %v4564 = vand.u32 %v4461, 2147483648
      %v4565 = vsel %vm4563, %v4564, %v4562
      %v4566 = vmax.f32 %v4565, 1e-08
      %v4567 = vrsqrt.pop %v4556
      %v4568 = vmul.f32 %v4556, %v4567
      %vm4569 = vcmp.eq.f32.partialorder %v4556, inf
      %v4570 = vsel %vm4569, %v4556, %v4568
      %vm4571 = vcmp.eq.f32.partialorder %v4556, 0.0
      %v4572 = vand.u32 %v4556, 2147483648
      %v4573 = vsel %vm4571, %v4572, %v4570
      %v4574 = vmax.f32 %v4573, 1e-08
      %v4575 = vmul.f32 %v4566, %v4574
      %v4576 = vrcp.pop %v4575
      %v4577 = vmul.f32 %v4391, %v4576
      %v4578 = vmul.f32 %v446, %v3902
      %v4580 = vsel %vm467, %v4578, 0
      %4582 = vmatprep.subr.mxu0 0.0
      %4583 = vmatpush1.msra.mxu0 %v462
      %4584 = vmatprep.subr.mxu0 0.0
      %4585 = vmatpush1.msra.mxu0 %v463
      %4586 = vmatprep.subr.mxu0 0.0
      %4587 = vmatpush1.msra.mxu0 %v464
      %4588 = vmatprep.subr.mxu0 0.0
      %4589 = vmatpush1.msra.mxu0 %v465
      %4590 = vmatprep.subr.mxu0 0.0
      %4591 = vmatpush1.msra.mxu0 0.0
      %4592 = vmatprep.subr.mxu0 0.0
      %4593 = vmatpush1.msra.mxu0 0.0
      %4594 = vmatprep.subr.mxu0 0.0
      %4595 = vmatpush1.msra.mxu0 0.0
      %4596 = vmatprep.subr.mxu0 0.0
      %4597 = vmatpush1.msra.mxu0 0.0
      %4598 = vmatprep.subr.mxu0 0.0
      %4599 = vmatpush1.msra.mxu0 0.0
      %4600 = vmatprep.subr.mxu0 0.0
      %4601 = vmatpush1.msra.mxu0 0.0
      %4602 = vmatprep.subr.mxu0 0.0
      %4603 = vmatpush1.msra.mxu0 0.0
      %4604 = vmatprep.subr.mxu0 0.0
      %4605 = vmatpush1.msra.mxu0 0.0
      %4606 = vmatprep.subr.mxu0 0.0
      %4607 = vmatpush1.msra.mxu0 0.0
      %4608 = vmatprep.subr.mxu0 0.0
      %4609 = vmatpush1.msra.mxu0 0.0
      %4610 = vmatprep.subr.mxu0 0.0
      %4611 = vmatpush1.msra.mxu0 0.0
      %4612 = vmatprep.subr.mxu0 0.0
      %4613 = vmatpush1.msra.mxu0 0.0
      %4614 = vmatprep.subr.mxu0 0.0
      %4615 = vmatpush1.msra.mxu0 0.0
      %4616 = vmatprep.subr.mxu0 0.0
      %4617 = vmatpush1.msra.mxu0 0.0
      %4618 = vmatprep.subr.mxu0 0.0
      %4619 = vmatpush1.msra.mxu0 0.0
      %4620 = vmatprep.subr.mxu0 0.0
      %4621 = vmatpush1.msra.mxu0 0.0
      %4622 = vmatprep.subr.mxu0 0.0
      %4623 = vmatpush1.msra.mxu0 0.0
      %4624 = vmatprep.subr.mxu0 0.0
      %4625 = vmatpush1.msra.mxu0 0.0
      %4626 = vmatprep.subr.mxu0 0.0
      %4627 = vmatpush1.msra.mxu0 0.0
      %4628 = vmatprep.subr.mxu0 0.0
      %4629 = vmatpush1.msra.mxu0 0.0
      %4630 = vmatprep.subr.mxu0 0.0
      %4631 = vmatpush1.msra.mxu0 0.0
      %4632 = vmatprep.subr.mxu0 0.0
      %4633 = vmatpush1.msra.mxu0 0.0
      %4634 = vmatprep.subr.mxu0 0.0
      %4635 = vmatpush1.msra.mxu0 0.0
      %4636 = vmatprep.subr.mxu0 0.0
      %4637 = vmatpush1.msra.mxu0 0.0
      %4638 = vmatprep.subr.mxu0 0.0
      %4639 = vmatpush1.msra.mxu0 0.0
      %4640 = vmatprep.subr.mxu0 0.0
      %4641 = vmatpush1.msra.mxu0 0.0
      %4642 = vmatprep.subr.mxu0 0.0
      %4643 = vmatpush1.msra.mxu0 0.0
      %4644 = vmatprep.subr.mxu0 0.0
      %4645 = vmatpush1.msra.mxu0 0.0
      %4646 = vmatprep.mubr.f32.mxu0 0.0
      %4647 = vmatmul.mubr.f32.gmra.mrb[0].mxu0 %v4580
      %v4648 = vpop.f32.mrb[0].mxu0
      %v4649 = vadd.f32 0.0, %v4648
      %v4650 = vpop.f32.mrb[0].mxu0
      %4651 = vdwg.mxu0
      %4652 = vmatprep.subr.mxu0 0.0
      %4653 = vmatpush1.msra.mxu0 %v462
      %4654 = vmatprep.subr.mxu0 0.0
      %4655 = vmatpush1.msra.mxu0 %v463
      %4656 = vmatprep.subr.mxu0 0.0
      %4657 = vmatpush1.msra.mxu0 %v464
      %4658 = vmatprep.subr.mxu0 0.0
      %4659 = vmatpush1.msra.mxu0 %v465
      %4660 = vmatprep.subr.mxu0 0.0
      %4661 = vmatpush1.msra.mxu0 0.0
      %4662 = vmatprep.subr.mxu0 0.0
      %4663 = vmatpush1.msra.mxu0 0.0
      %4664 = vmatprep.subr.mxu0 0.0
      %4665 = vmatpush1.msra.mxu0 0.0
      %4666 = vmatprep.subr.mxu0 0.0
      %4667 = vmatpush1.msra.mxu0 0.0
      %4668 = vmatprep.subr.mxu0 0.0
      %4669 = vmatpush1.msra.mxu0 0.0
      %4670 = vmatprep.subr.mxu0 0.0
      %4671 = vmatpush1.msra.mxu0 0.0
      %4672 = vmatprep.subr.mxu0 0.0
      %4673 = vmatpush1.msra.mxu0 0.0
      %4674 = vmatprep.subr.mxu0 0.0
      %4675 = vmatpush1.msra.mxu0 0.0
      %4676 = vmatprep.subr.mxu0 0.0
      %4677 = vmatpush1.msra.mxu0 0.0
      %4678 = vmatprep.subr.mxu0 0.0
      %4679 = vmatpush1.msra.mxu0 0.0
      %4680 = vmatprep.subr.mxu0 0.0
      %4681 = vmatpush1.msra.mxu0 0.0
      %4682 = vmatprep.subr.mxu0 0.0
      %4683 = vmatpush1.msra.mxu0 0.0
      %4684 = vmatprep.subr.mxu0 0.0
      %4685 = vmatpush1.msra.mxu0 0.0
      %4686 = vmatprep.subr.mxu0 0.0
      %4687 = vmatpush1.msra.mxu0 0.0
      %4688 = vmatprep.subr.mxu0 0.0
      %4689 = vmatpush1.msra.mxu0 0.0
      %4690 = vmatprep.subr.mxu0 0.0
      %4691 = vmatpush1.msra.mxu0 0.0
      %4692 = vmatprep.subr.mxu0 0.0
      %4693 = vmatpush1.msra.mxu0 0.0
      %4694 = vmatprep.subr.mxu0 0.0
      %4695 = vmatpush1.msra.mxu0 0.0
      %4696 = vmatprep.subr.mxu0 0.0
      %4697 = vmatpush1.msra.mxu0 0.0
      %4698 = vmatprep.subr.mxu0 0.0
      %4699 = vmatpush1.msra.mxu0 0.0
      %4700 = vmatprep.subr.mxu0 0.0
      %4701 = vmatpush1.msra.mxu0 0.0
      %4702 = vmatprep.subr.mxu0 0.0
      %4703 = vmatpush1.msra.mxu0 0.0
      %4704 = vmatprep.subr.mxu0 0.0
      %4705 = vmatpush1.msra.mxu0 0.0
      %4706 = vmatprep.subr.mxu0 0.0
      %4707 = vmatpush1.msra.mxu0 0.0
      %4708 = vmatprep.subr.mxu0 0.0
      %4709 = vmatpush1.msra.mxu0 0.0
      %4710 = vmatprep.subr.mxu0 0.0
      %4711 = vmatpush1.msra.mxu0 0.0
      %4712 = vmatprep.subr.mxu0 0.0
      %4713 = vmatpush1.msra.mxu0 0.0
      %4714 = vmatprep.subr.mxu0 0.0
      %4715 = vmatpush1.msra.mxu0 0.0
      %4716 = vmatprep.mubr.f32.mxu0 0.0
      %4717 = vmatmul.mubr.f32.gmra.mrb[0].mxu0 %v1084
      %v4718 = vpop.f32.mrb[0].mxu0
      %v4719 = vadd.f32 0.0, %v4718
      %v4720 = vpop.f32.mrb[0].mxu0
      %4721 = vdwg.mxu0
      %v4722 = vmul.f32 %v3902, %v3902
      %v4724 = vsel %vm467, %v4722, 0
      %4726 = vmatprep.subr.mxu0 0.0
      %4727 = vmatpush1.msra.mxu0 %v462
      %4728 = vmatprep.subr.mxu0 0.0
      %4729 = vmatpush1.msra.mxu0 %v463
      %4730 = vmatprep.subr.mxu0 0.0
      %4731 = vmatpush1.msra.mxu0 %v464
      %4732 = vmatprep.subr.mxu0 0.0
      %4733 = vmatpush1.msra.mxu0 %v465
      %4734 = vmatprep.subr.mxu0 0.0
      %4735 = vmatpush1.msra.mxu0 0.0
      %4736 = vmatprep.subr.mxu0 0.0
      %4737 = vmatpush1.msra.mxu0 0.0
      %4738 = vmatprep.subr.mxu0 0.0
      %4739 = vmatpush1.msra.mxu0 0.0
      %4740 = vmatprep.subr.mxu0 0.0
      %4741 = vmatpush1.msra.mxu0 0.0
      %4742 = vmatprep.subr.mxu0 0.0
      %4743 = vmatpush1.msra.mxu0 0.0
      %4744 = vmatprep.subr.mxu0 0.0
      %4745 = vmatpush1.msra.mxu0 0.0
      %4746 = vmatprep.subr.mxu0 0.0
      %4747 = vmatpush1.msra.mxu0 0.0
      %4748 = vmatprep.subr.mxu0 0.0
      %4749 = vmatpush1.msra.mxu0 0.0
      %4750 = vmatprep.subr.mxu0 0.0
      %4751 = vmatpush1.msra.mxu0 0.0
      %4752 = vmatprep.subr.mxu0 0.0
      %4753 = vmatpush1.msra.mxu0 0.0
      %4754 = vmatprep.subr.mxu0 0.0
      %4755 = vmatpush1.msra.mxu0 0.0
      %4756 = vmatprep.subr.mxu0 0.0
      %4757 = vmatpush1.msra.mxu0 0.0
      %4758 = vmatprep.subr.mxu0 0.0
      %4759 = vmatpush1.msra.mxu0 0.0
      %4760 = vmatprep.subr.mxu0 0.0
      %4761 = vmatpush1.msra.mxu0 0.0
      %4762 = vmatprep.subr.mxu0 0.0
      %4763 = vmatpush1.msra.mxu0 0.0
      %4764 = vmatprep.subr.mxu0 0.0
      %4765 = vmatpush1.msra.mxu0 0.0
      %4766 = vmatprep.subr.mxu0 0.0
      %4767 = vmatpush1.msra.mxu0 0.0
      %4768 = vmatprep.subr.mxu0 0.0
      %4769 = vmatpush1.msra.mxu0 0.0
      %4770 = vmatprep.subr.mxu0 0.0
      %4771 = vmatpush1.msra.mxu0 0.0
      %4772 = vmatprep.subr.mxu0 0.0
      %4773 = vmatpush1.msra.mxu0 0.0
      %4774 = vmatprep.subr.mxu0 0.0
      %4775 = vmatpush1.msra.mxu0 0.0
      %4776 = vmatprep.subr.mxu0 0.0
      %4777 = vmatpush1.msra.mxu0 0.0
      %4778 = vmatprep.subr.mxu0 0.0
      %4779 = vmatpush1.msra.mxu0 0.0
      %4780 = vmatprep.subr.mxu0 0.0
      %4781 = vmatpush1.msra.mxu0 0.0
      %4782 = vmatprep.subr.mxu0 0.0
      %4783 = vmatpush1.msra.mxu0 0.0
      %4784 = vmatprep.subr.mxu0 0.0
      %4785 = vmatpush1.msra.mxu0 0.0
      %4786 = vmatprep.subr.mxu0 0.0
      %4787 = vmatpush1.msra.mxu0 0.0
      %4788 = vmatprep.subr.mxu0 0.0
      %4789 = vmatpush1.msra.mxu0 0.0
      %4790 = vmatprep.mubr.f32.mxu0 0.0
      %4791 = vmatmul.mubr.f32.gmra.mrb[0].mxu0 %v4724
      %v4792 = vpop.f32.mrb[0].mxu0
      %v4793 = vadd.f32 0.0, %v4792
      %v4794 = vpop.f32.mrb[0].mxu0
      %4795 = vdwg.mxu0
      %v4796 = vrsqrt.pop %v4719
      %v4797 = vmul.f32 %v4719, %v4796
      %vm4798 = vcmp.eq.f32.partialorder %v4719, inf
      %v4799 = vsel %vm4798, %v4719, %v4797
      %vm4800 = vcmp.eq.f32.partialorder %v4719, 0.0
      %v4801 = vand.u32 %v4719, 2147483648
      %v4802 = vsel %vm4800, %v4801, %v4799
      %v4803 = vmax.f32 %v4802, 1e-08
      %v4804 = vrsqrt.pop %v4793
      %v4805 = vmul.f32 %v4793, %v4804
      %vm4806 = vcmp.eq.f32.partialorder %v4793, inf
      %v4807 = vsel %vm4806, %v4793, %v4805
      %vm4808 = vcmp.eq.f32.partialorder %v4793, 0.0
      %v4809 = vand.u32 %v4793, 2147483648
      %v4810 = vsel %vm4808, %v4809, %v4807
      %v4811 = vmax.f32 %v4810, 1e-08
      %v4812 = vmul.f32 %v4803, %v4811
      %v4813 = vrcp.pop %v4812
      %v4814 = vmul.f32 %v4649, %v4813
      %v4815 = vmul.f32 %v447, %v3917
      %v4817 = vsel %vm467, %v4815, 0
      %4819 = vmatprep.subr.mxu0 0.0
      %4820 = vmatpush1.msra.mxu0 %v462
      %4821 = vmatprep.subr.mxu0 0.0
      %4822 = vmatpush1.msra.mxu0 %v463
      %4823 = vmatprep.subr.mxu0 0.0
      %4824 = vmatpush1.msra.mxu0 %v464
      %4825 = vmatprep.subr.mxu0 0.0
      %4826 = vmatpush1.msra.mxu0 %v465
      %4827 = vmatprep.subr.mxu0 0.0
      %4828 = vmatpush1.msra.mxu0 0.0
      %4829 = vmatprep.subr.mxu0 0.0
      %4830 = vmatpush1.msra.mxu0 0.0
      %4831 = vmatprep.subr.mxu0 0.0
      %4832 = vmatpush1.msra.mxu0 0.0
      %4833 = vmatprep.subr.mxu0 0.0
      %4834 = vmatpush1.msra.mxu0 0.0
      %4835 = vmatprep.subr.mxu0 0.0
      %4836 = vmatpush1.msra.mxu0 0.0
      %4837 = vmatprep.subr.mxu0 0.0
      %4838 = vmatpush1.msra.mxu0 0.0
      %4839 = vmatprep.subr.mxu0 0.0
      %4840 = vmatpush1.msra.mxu0 0.0
      %4841 = vmatprep.subr.mxu0 0.0
      %4842 = vmatpush1.msra.mxu0 0.0
      %4843 = vmatprep.subr.mxu0 0.0
      %4844 = vmatpush1.msra.mxu0 0.0
      %4845 = vmatprep.subr.mxu0 0.0
      %4846 = vmatpush1.msra.mxu0 0.0
      %4847 = vmatprep.subr.mxu0 0.0
      %4848 = vmatpush1.msra.mxu0 0.0
      %4849 = vmatprep.subr.mxu0 0.0
      %4850 = vmatpush1.msra.mxu0 0.0
      %4851 = vmatprep.subr.mxu0 0.0
      %4852 = vmatpush1.msra.mxu0 0.0
      %4853 = vmatprep.subr.mxu0 0.0
      %4854 = vmatpush1.msra.mxu0 0.0
      %4855 = vmatprep.subr.mxu0 0.0
      %4856 = vmatpush1.msra.mxu0 0.0
      %4857 = vmatprep.subr.mxu0 0.0
      %4858 = vmatpush1.msra.mxu0 0.0
      %4859 = vmatprep.subr.mxu0 0.0
      %4860 = vmatpush1.msra.mxu0 0.0
      %4861 = vmatprep.subr.mxu0 0.0
      %4862 = vmatpush1.msra.mxu0 0.0
      %4863 = vmatprep.subr.mxu0 0.0
      %4864 = vmatpush1.msra.mxu0 0.0
      %4865 = vmatprep.subr.mxu0 0.0
      %4866 = vmatpush1.msra.mxu0 0.0
      %4867 = vmatprep.subr.mxu0 0.0
      %4868 = vmatpush1.msra.mxu0 0.0
      %4869 = vmatprep.subr.mxu0 0.0
      %4870 = vmatpush1.msra.mxu0 0.0
      %4871 = vmatprep.subr.mxu0 0.0
      %4872 = vmatpush1.msra.mxu0 0.0
      %4873 = vmatprep.subr.mxu0 0.0
      %4874 = vmatpush1.msra.mxu0 0.0
      %4875 = vmatprep.subr.mxu0 0.0
      %4876 = vmatpush1.msra.mxu0 0.0
      %4877 = vmatprep.subr.mxu0 0.0
      %4878 = vmatpush1.msra.mxu0 0.0
      %4879 = vmatprep.subr.mxu0 0.0
      %4880 = vmatpush1.msra.mxu0 0.0
      %4881 = vmatprep.subr.mxu0 0.0
      %4882 = vmatpush1.msra.mxu0 0.0
      %4883 = vmatprep.mubr.f32.mxu0 0.0
      %4884 = vmatmul.mubr.f32.gmra.mrb[0].mxu0 %v4817
      %v4885 = vpop.f32.mrb[0].mxu0
      %v4886 = vadd.f32 0.0, %v4885
      %v4887 = vpop.f32.mrb[0].mxu0
      %4888 = vdwg.mxu0
      %4889 = vmatprep.subr.mxu0 0.0
      %4890 = vmatpush1.msra.mxu0 %v462
      %4891 = vmatprep.subr.mxu0 0.0
      %4892 = vmatpush1.msra.mxu0 %v463
      %4893 = vmatprep.subr.mxu0 0.0
      %4894 = vmatpush1.msra.mxu0 %v464
      %4895 = vmatprep.subr.mxu0 0.0
      %4896 = vmatpush1.msra.mxu0 %v465
      %4897 = vmatprep.subr.mxu0 0.0
      %4898 = vmatpush1.msra.mxu0 0.0
      %4899 = vmatprep.subr.mxu0 0.0
      %4900 = vmatpush1.msra.mxu0 0.0
      %4901 = vmatprep.subr.mxu0 0.0
      %4902 = vmatpush1.msra.mxu0 0.0
      %4903 = vmatprep.subr.mxu0 0.0
      %4904 = vmatpush1.msra.mxu0 0.0
      %4905 = vmatprep.subr.mxu0 0.0
      %4906 = vmatpush1.msra.mxu0 0.0
      %4907 = vmatprep.subr.mxu0 0.0
      %4908 = vmatpush1.msra.mxu0 0.0
      %4909 = vmatprep.subr.mxu0 0.0
      %4910 = vmatpush1.msra.mxu0 0.0
      %4911 = vmatprep.subr.mxu0 0.0
      %4912 = vmatpush1.msra.mxu0 0.0
      %4913 = vmatprep.subr.mxu0 0.0
      %4914 = vmatpush1.msra.mxu0 0.0
      %4915 = vmatprep.subr.mxu0 0.0
      %4916 = vmatpush1.msra.mxu0 0.0
      %4917 = vmatprep.subr.mxu0 0.0
      %4918 = vmatpush1.msra.mxu0 0.0
      %4919 = vmatprep.subr.mxu0 0.0
      %4920 = vmatpush1.msra.mxu0 0.0
      %4921 = vmatprep.subr.mxu0 0.0
      %4922 = vmatpush1.msra.mxu0 0.0
      %4923 = vmatprep.subr.mxu0 0.0
      %4924 = vmatpush1.msra.mxu0 0.0
      %4925 = vmatprep.subr.mxu0 0.0
      %4926 = vmatpush1.msra.mxu0 0.0
      %4927 = vmatprep.subr.mxu0 0.0
      %4928 = vmatpush1.msra.mxu0 0.0
      %4929 = vmatprep.subr.mxu0 0.0
      %4930 = vmatpush1.msra.mxu0 0.0
      %4931 = vmatprep.subr.mxu0 0.0
      %4932 = vmatpush1.msra.mxu0 0.0
      %4933 = vmatprep.subr.mxu0 0.0
      %4934 = vmatpush1.msra.mxu0 0.0
      %4935 = vmatprep.subr.mxu0 0.0
      %4936 = vmatpush1.msra.mxu0 0.0
      %4937 = vmatprep.subr.mxu0 0.0
      %4938 = vmatpush1.msra.mxu0 0.0
      %4939 = vmatprep.subr.mxu0 0.0
      %4940 = vmatpush1.msra.mxu0 0.0
      %4941 = vmatprep.subr.mxu0 0.0
      %4942 = vmatpush1.msra.mxu0 0.0
      %4943 = vmatprep.subr.mxu0 0.0
      %4944 = vmatpush1.msra.mxu0 0.0
      %4945 = vmatprep.subr.mxu0 0.0
      %4946 = vmatpush1.msra.mxu0 0.0
      %4947 = vmatprep.subr.mxu0 0.0
      %4948 = vmatpush1.msra.mxu0 0.0
      %4949 = vmatprep.subr.mxu0 0.0
      %4950 = vmatpush1.msra.mxu0 0.0
      %4951 = vmatprep.subr.mxu0 0.0
      %4952 = vmatpush1.msra.mxu0 0.0
      %4953 = vmatprep.mubr.f32.mxu0 0.0
      %4954 = vmatmul.mubr.f32.gmra.mrb[0].mxu0 %v911
      %v4955 = vpop.f32.mrb[0].mxu0
      %v4956 = vadd.f32 0.0, %v4955
      %v4957 = vpop.f32.mrb[0].mxu0
      %4958 = vdwg.mxu0
      %v4959 = vmul.f32 %v3917, %v3917
      %v4961 = vsel %vm467, %v4959, 0
      %4963 = vmatprep.subr.mxu0 0.0
      %4964 = vmatpush1.msra.mxu0 %v462
      %4965 = vmatprep.subr.mxu0 0.0
      %4966 = vmatpush1.msra.mxu0 %v463
      %4967 = vmatprep.subr.mxu0 0.0
      %4968 = vmatpush1.msra.mxu0 %v464
      %4969 = vmatprep.subr.mxu0 0.0
      %4970 = vmatpush1.msra.mxu0 %v465
      %4971 = vmatprep.subr.mxu0 0.0
      %4972 = vmatpush1.msra.mxu0 0.0
      %4973 = vmatprep.subr.mxu0 0.0
      %4974 = vmatpush1.msra.mxu0 0.0
      %4975 = vmatprep.subr.mxu0 0.0
      %4976 = vmatpush1.msra.mxu0 0.0
      %4977 = vmatprep.subr.mxu0 0.0
      %4978 = vmatpush1.msra.mxu0 0.0
      %4979 = vmatprep.subr.mxu0 0.0
      %4980 = vmatpush1.msra.mxu0 0.0
      %4981 = vmatprep.subr.mxu0 0.0
      %4982 = vmatpush1.msra.mxu0 0.0
      %4983 = vmatprep.subr.mxu0 0.0
      %4984 = vmatpush1.msra.mxu0 0.0
      %4985 = vmatprep.subr.mxu0 0.0
      %4986 = vmatpush1.msra.mxu0 0.0
      %4987 = vmatprep.subr.mxu0 0.0
      %4988 = vmatpush1.msra.mxu0 0.0
      %4989 = vmatprep.subr.mxu0 0.0
      %4990 = vmatpush1.msra.mxu0 0.0
      %4991 = vmatprep.subr.mxu0 0.0
      %4992 = vmatpush1.msra.mxu0 0.0
      %4993 = vmatprep.subr.mxu0 0.0
      %4994 = vmatpush1.msra.mxu0 0.0
      %4995 = vmatprep.subr.mxu0 0.0
      %4996 = vmatpush1.msra.mxu0 0.0
      %4997 = vmatprep.subr.mxu0 0.0
      %4998 = vmatpush1.msra.mxu0 0.0
      %4999 = vmatprep.subr.mxu0 0.0
      %5000 = vmatpush1.msra.mxu0 0.0
      %5001 = vmatprep.subr.mxu0 0.0
      %5002 = vmatpush1.msra.mxu0 0.0
      %5003 = vmatprep.subr.mxu0 0.0
      %5004 = vmatpush1.msra.mxu0 0.0
      %5005 = vmatprep.subr.mxu0 0.0
      %5006 = vmatpush1.msra.mxu0 0.0
      %5007 = vmatprep.subr.mxu0 0.0
      %5008 = vmatpush1.msra.mxu0 0.0
      %5009 = vmatprep.subr.mxu0 0.0
      %5010 = vmatpush1.msra.mxu0 0.0
      %5011 = vmatprep.subr.mxu0 0.0
      %5012 = vmatpush1.msra.mxu0 0.0
      %5013 = vmatprep.subr.mxu0 0.0
      %5014 = vmatpush1.msra.mxu0 0.0
      %5015 = vmatprep.subr.mxu0 0.0
      %5016 = vmatpush1.msra.mxu0 0.0
      %5017 = vmatprep.subr.mxu0 0.0
      %5018 = vmatpush1.msra.mxu0 0.0
      %5019 = vmatprep.subr.mxu0 0.0
      %5020 = vmatpush1.msra.mxu0 0.0
      %5021 = vmatprep.subr.mxu0 0.0
      %5022 = vmatpush1.msra.mxu0 0.0
      %5023 = vmatprep.subr.mxu0 0.0
      %5024 = vmatpush1.msra.mxu0 0.0
      %5025 = vmatprep.subr.mxu0 0.0
      %5026 = vmatpush1.msra.mxu0 0.0
      %5027 = vmatprep.mubr.f32.mxu0 0.0
      %5028 = vmatmul.mubr.f32.gmra.mrb[0].mxu0 %v4961
      %v5029 = vpop.f32.mrb[0].mxu0
      %v5030 = vadd.f32 0.0, %v5029
      %v5031 = vpop.f32.mrb[0].mxu0
      %5032 = vdwg.mxu0
      %v5033 = vrsqrt.pop %v4956
      %v5034 = vmul.f32 %v4956, %v5033
      %vm5035 = vcmp.eq.f32.partialorder %v4956, inf
      %v5036 = vsel %vm5035, %v4956, %v5034
      %vm5037 = vcmp.eq.f32.partialorder %v4956, 0.0
      %v5038 = vand.u32 %v4956, 2147483648
      %v5039 = vsel %vm5037, %v5038, %v5036
      %v5040 = vmax.f32 %v5039, 1e-08
      %v5041 = vrsqrt.pop %v5030
      %v5042 = vmul.f32 %v5030, %v5041
      %vm5043 = vcmp.eq.f32.partialorder %v5030, inf
      %v5044 = vsel %vm5043, %v5030, %v5042
      %vm5045 = vcmp.eq.f32.partialorder %v5030, 0.0
      %v5046 = vand.u32 %v5030, 2147483648
      %v5047 = vsel %vm5045, %v5046, %v5044
      %v5048 = vmax.f32 %v5047, 1e-08
      %v5049 = vmul.f32 %v5040, %v5048
      %v5050 = vrcp.pop %v5049
      %v5051 = vmul.f32 %v4886, %v5050
      %5053 = vrot.lane.b32.xlu0 %v1722, 4
      %v5054 = vpop.permute.xlu0 %5053
      %5057 = vrot.lane.b32.xlu0 %v2943, 8
      %v5058 = vpop.permute.xlu0 %5057
      %5061 = vrot.lane.b32.xlu0 %v4303, 12
      %v5062 = vpop.permute.xlu0 %5061
      %5065 = vrot.lane.b32.xlu0 %v1005, 16
      %v5066 = vpop.permute.xlu0 %5065
      %5069 = vrot.lane.b32.xlu0 %v2118, 20
      %v5070 = vpop.permute.xlu0 %5069
      %5073 = vrot.lane.b32.xlu0 %v3180, 24
      %v5074 = vpop.permute.xlu0 %5073
      %5077 = vrot.lane.b32.xlu0 %v4577, 28
      %v5078 = vpop.permute.xlu0 %5077
      %vm5080 = vcmask 31744
      %v5081 = vsel %vm5080, %v758, %v5054
      %v5082 = vsel %vm1443, %v5081, %v5058
      %vm5083 = vcmask 97280
      %v5084 = vsel %vm5083, %v5082, %v5062
      %vm5085 = vcmask 130048
      %v5086 = vsel %vm5085, %v5084, %v5066
      %vm5087 = vcmask 162816
      %v5088 = vsel %vm5087, %v5086, %v5070
      %vm5089 = vcmask 195584
      %v5090 = vsel %vm5089, %v5088, %v5074
      %vm5091 = vcmask 228352
      %v5092 = vsel %vm5091, %v5090, %v5078
      %5093 = vst.msk [vmem:[%s439] sm:$0xff] %vm467, %v5092
      %5095 = vrot.lane.b32.xlu0 %v1745, 4
      %v5096 = vpop.permute.xlu0 %5095
      %5099 = vrot.lane.b32.xlu0 %v3417, 8
      %v5100 = vpop.permute.xlu0 %5099
      %5103 = vrot.lane.b32.xlu0 %v4814, 12
      %v5104 = vpop.permute.xlu0 %5103
      %5107 = vrot.lane.b32.xlu0 %v1336, 16
      %v5108 = vpop.permute.xlu0 %5107
      %5111 = vrot.lane.b32.xlu0 %v2138, 20
      %v5112 = vpop.permute.xlu0 %5111
      %5115 = vrot.lane.b32.xlu0 %v3654, 24
      %v5116 = vpop.permute.xlu0 %5115
      %5119 = vrot.lane.b32.xlu0 %v5051, 28
      %v5120 = vpop.permute.xlu0 %5119
      %v5122 = vsel %vm5080, %v1251, %v5096
      %v5123 = vsel %vm1443, %v5122, %v5100
      %v5124 = vsel %vm5083, %v5123, %v5104
      %v5125 = vsel %vm5085, %v5124, %v5108
      %v5126 = vsel %vm5087, %v5125, %v5112
      %v5127 = vsel %vm5089, %v5126, %v5116
      %v5128 = vsel %vm5091, %v5127, %v5120
      %5129 = vst.msk [vmem:[%s443] sm:$0xff] %vm467, %v5128
      %p5130 = scmp.lt.s32.totalorder %s23, 1
      %s5131 = scalar_select %p5130, %s23, 1
      %s5132 = smul.addr %s5131, 8
      %s5133 = scalar_lea.vmem %s10, %s5132
      %p5134 = scmp.lt.s32.totalorder %s23, 1
      %s5135 = scalar_select %p5134, %s23, 1
      %s5136 = smul.addr %s5135, 8
      %s5137 = scalar_lea.vmem %s11, %s5136
      // Predicated region
      $region61: #{bimpm_forward.5} parent=59 // pred_check
        %p5138 = pneg %p271
      $region62: #{bimpm_forward.5} parent=59 // pred_check_branch
        %5140 = sbr.rel (%p5138) target = $region64
      $region63: #{bimpm_forward.5} parent=59 // pred_region
        _
      $region64: #{bimpm_forward.5} parent=59 // pred_fallthru
        _
      // Predicated region
      $region65: #{bimpm_forward.5} parent=59 // pred_check
        %p5141 = pneg %p297
      $region66: #{bimpm_forward.5} parent=59 // pred_check_branch
        %5143 = sbr.rel (%p5141) target = $region68
      $region67: #{bimpm_forward.5} parent=59 // pred_region
        _
      $region68: #{bimpm_forward.5} parent=59 // pred_fallthru
        _
    $region60: #{bimpm_forward.5} parent=5 // pred_fallthru
      _
    %p5144 = scmp.le.s32.totalorder 2, %s18
    // Predicated region
    $region69: #{bimpm_forward.5} parent=5 // pred_check
      %p5145 = pneg %p5144
    $region70: #{bimpm_forward.5} parent=5 // pred_check_branch
      %5147 = sbr.rel (%p5145) target = $region72
    $region71: #{bimpm_forward.5} parent=5 // pred_region
      %s5148 = ssub.s32 %s18, 2
      // Predicated region
      $region73: #{bimpm_forward.5} parent=71 // pred_check
        %p5149 = pneg %p277
      $region74: #{bimpm_forward.5} parent=71 // pred_check_branch
        %5151 = sbr.rel (%p5149) target = $region76
      $region75: #{bimpm_forward.5} parent=71 // pred_region
        %p5152 = scmp.lt.s32.totalorder %s24, 1
        %s5153 = scalar_select %p5152, %s24, 1
        %s5154 = smul.addr %s5153, 8
        %s5155 = scalar_lea.vmem %s10, %s5154
      $region76: #{bimpm_forward.5} parent=71 // pred_fallthru
        _
      // Predicated region
      $region77: #{bimpm_forward.5} parent=71 // pred_check
        %p5156 = pneg %p303
      $region78: #{bimpm_forward.5} parent=71 // pred_check_branch
        %5158 = sbr.rel (%p5156) target = $region80
      $region79: #{bimpm_forward.5} parent=71 // pred_region
        %p5159 = scmp.lt.s32.totalorder %s24, 1
        %s5160 = scalar_select %p5159, %s24, 1
        %s5161 = smul.addr %s5160, 8
        %s5162 = scalar_lea.vmem %s11, %s5161
      $region80: #{bimpm_forward.5} parent=71 // pred_fallthru
        _
    $region72: #{bimpm_forward.5} parent=5 // pred_fallthru
      _
  $region6: #{bimpm_forward.5} parent=0 // loop_footer
    %s22 = sadd.s32 1, %s18
  $region7: #{bimpm_forward.5} parent=0 // loop_footer_branch
    %17 = sbr.rel target = $region3
  $region8: #{bimpm_forward.5} parent=0 // loop_exit
    _

</llo_original>
